<compile_context>
chip_gen: v6e
topology: v6e:2x2x1
jax: 0.10.0
libtpu: 0.0.40
codegen_flags: <defaults>
</compile_context>

<pallas_src>
import numpy as np

import jax
import jax.numpy as jnp
from jax import lax
from jax.experimental import pallas as pl
from jax.experimental.pallas import tpu as pltpu

NEG_SLOPE = 0.2
IN_EPS = 1e-5
B_TILE = 4          # samples per grid step (even, so all row counts are 8/16-aligned)


# ------------------------------ kernel helpers -------------------------------

def _leaky(y):
    return jnp.where(y > 0, y, NEG_SLOPE * y)


def _conv4x4(a, sel_ref, m_ref):
    """Batched stride-2 4x4 conv.

    a:       (B*Hin, Win*Cin)      bf16, samples stacked along sublanes.
    sel_ref: (4*B*Ho, B*Hin)       bf16 block-diag row selection, 4 taps on M.
    m_ref:   (4*Win*Cin, Wo*Cout)  bf16 tap matrices stacked along K
                                   (column stride + padding folded in).
    returns  (B*Ho, Wo*Cout) float32.
    """
    bho = sel_ref.shape[0] // 4
    rows = jnp.dot(sel_ref[...], a,
                   preferred_element_type=jnp.float32).astype(jnp.bfloat16)
    cat = jnp.concatenate(
        [rows[0:bho], rows[bho:2 * bho], rows[2 * bho:3 * bho],
         rows[3 * bho:4 * bho]], axis=1)                      # (B*Ho, 4*Win*Cin)
    return jnp.dot(cat, m_ref[...], preferred_element_type=jnp.float32)


def _instance_norm(y, r_ref, bb_ref, rr_ref, ex_ref):
    """Per-sample InstanceNorm2d (affine=False, biased var) on (B*Ho, Wo*C).

    r_ref:  (Wo*C, C)  channel-group lane reduce.
    bb_ref: (C, Wo*C)  channel -> lane broadcast.
    rr_ref: (B, B*Ho)  per-sample row reduce.
    ex_ref: (B*Ho, B)  per-sample row broadcast.
    """
    b = rr_ref.shape[0]
    c = r_ref.shape[1]
    ho = y.shape[0] // b
    wo = y.shape[1] // c
    inv_n = 1.0 / float(ho * wo)

    r = r_ref[...]
    rr = rr_ref[...]
    yc = jnp.dot(y, r, preferred_element_type=jnp.float32)               # (B*Ho, C)
    qc = jnp.dot(y * y, r, preferred_element_type=jnp.float32)           # (B*Ho, C)
    mean = jnp.dot(rr, yc, preferred_element_type=jnp.float32) * inv_n   # (B, C)
    m2 = jnp.dot(rr, qc, preferred_element_type=jnp.float32) * inv_n     # (B, C)
    var = jnp.maximum(m2 - mean * mean, 0.0)
    inv = lax.rsqrt(var + IN_EPS)                                        # (B, C)
    shift = -mean * inv

    bb = bb_ref[...]
    ex = ex_ref[...]
    sc_f = jnp.dot(ex, jnp.dot(inv, bb, preferred_element_type=jnp.float32),
                   preferred_element_type=jnp.float32)                   # (B*Ho, Wo*C)
    sh_f = jnp.dot(ex, jnp.dot(shift, bb, preferred_element_type=jnp.float32),
                   preferred_element_type=jnp.float32)
    return y * sc_f + sh_f


def _critic_kernel(x_ref, sel1, m1, b1,
                   sel2, m2, r2, bb2, rr2, ex2,
                   sel3, m3, r3, bb3, rr3, ex3,
                   sel4, m4, r4, bb4, rr4, ex4,
                   w5t, rfin, b5, o_ref):
    a = x_ref[...]                                            # (B*64, 64*Cin) bf16

    # Layer 1: Conv(k4,s2,p1) + bias + LeakyReLU(0.2)
    y = _conv4x4(a, sel1, m1) + b1[...]                       # (B*32, 32*fd)  f32
    a = _leaky(y).astype(jnp.bfloat16)

    # Blocks 2-4: Conv(k4,s2,p1,bias=False) + InstanceNorm2d + LeakyReLU(0.2)
    y = _instance_norm(_conv4x4(a, sel2, m2), r2, bb2, rr2, ex2)
    a = _leaky(y).astype(jnp.bfloat16)
    y = _instance_norm(_conv4x4(a, sel3, m3), r3, bb3, rr3, ex3)
    a = _leaky(y).astype(jnp.bfloat16)
    y = _instance_norm(_conv4x4(a, sel4, m4), r4, bb4, rr4, ex4)
    y = _leaky(y)                                             # (B*4, 4*8fd)   f32

    # Final Conv(k4,s2,p0) on the per-sample 4x4 map == full dot + bias.
    prod = y * w5t[...]                                       # (B*4, 4*8fd)
    samp = jnp.dot(rfin[...], prod, preferred_element_type=jnp.float32)  # (B, 4*8fd)
    o_ref[0] = jnp.sum(samp, axis=1, keepdims=True) + b5[...]            # (B, 1)


# -------------------------- parameter packing (host) -------------------------

def _make_sel_block(h_in, h_out, pad, b):
    """Block-diagonal fused row selection:
       sel[ki*b*h_out + s*h_out + oi, s*h_in + r] = 1  iff  r == 2*oi + ki - pad."""
    sel = np.zeros((4, b, h_out, b, h_in), np.float32)
    for ki in range(4):
        for oi in range(h_out):
            r = 2 * oi + ki - pad
            if 0 <= r < h_in:
                for s in range(b):
                    sel[ki, s, oi, s, r] = 1.0
    return jnp.asarray(sel.reshape(4 * b * h_out, b * h_in), dtype=jnp.bfloat16)


def _make_tap_mats(wgt, w_in, w_out, pad):
    """Fold conv weight (Cout, Cin, 4, 4) + column stride/padding into one
    K-stacked matrix of shape (4*w_in*Cin, w_out*Cout):
        m[ki*w_in*Cin + w*Cin + ci, oj*Cout + co] = wgt[co, ci, ki, w - 2*oj + pad]."""
    c_out, c_in, _, k_w = wgt.shape
    colsel = np.zeros((k_w, w_in, w_out), np.float32)
    for kj in range(k_w):
        for oj in range(w_out):
            w = 2 * oj + kj - pad
            if 0 <= w < w_in:
                colsel[kj, w, oj] = 1.0
    m = jnp.einsum('jwo,OIkj->kwIoO', jnp.asarray(colsel), wgt)
    return m.reshape(k_w * w_in * c_in, w_out * c_out).astype(jnp.bfloat16)


def init_params(key, in_channels, features_d):
    """PyTorch-layout weights: Conv2d weight (Cout, Cin, kh, kw), bias (Cout,)."""
    fd = features_d
    keys = jax.random.split(key, 7)

    def conv_w(k_, cout, cin):
        return jax.random.normal(k_, (cout, cin, 4, 4), jnp.float32) * 0.05

    return {
        "w1": conv_w(keys[0], fd, in_channels),
        "b1": jax.random.normal(keys[1], (fd,), jnp.float32) * 0.05,
        "w2": conv_w(keys[2], fd * 2, fd),
        "w3": conv_w(keys[3], fd * 4, fd * 2),
        "w4": conv_w(keys[4], fd * 8, fd * 4),
        "w5": conv_w(keys[5], 1, fd * 8),
        "b5": jax.random.normal(keys[6], (1,), jnp.float32) * 0.05,
    }


def pack_params(params, in_channels, features_d, height, width, b_tile=B_TILE):
    # 64x64 spatial is required so the final 4x4 valid conv reduces to 1x1.
    assert height == 64 and width == 64
    assert b_tile >= 2 and b_tile % 2 == 0
    fd = features_d
    c_pad = in_channels + (in_channels % 2)      # even Cin -> 64*Cin lane-aligned
    sizes = [64, 32, 16, 8, 4]
    chans = [c_pad, fd, fd * 2, fd * 4, fd * 8]

    w1 = params["w1"]
    if c_pad > in_channels:
        w1 = jnp.pad(w1, ((0, 0), (0, c_pad - in_channels), (0, 0), (0, 0)))
    ws = [w1, params["w2"], params["w3"], params["w4"]]

    kp = {}
    for li in range(4):                          # conv layers 1..4 (k4, s2, p1)
        kp[f"sel{li + 1}"] = _make_sel_block(sizes[li], sizes[li + 1], 1, b_tile)
        kp[f"m{li + 1}"] = _make_tap_mats(ws[li], sizes[li], sizes[li + 1], 1)
    # layer-1 bias tiled across the (w-major, c-minor) lane layout
    kp["b1"] = jnp.tile(params["b1"], (sizes[1],)).reshape(1, sizes[1] * fd)

    # InstanceNorm reduce / broadcast matrices (blocks 2-4), per-sample.
    for l in (2, 3, 4):
        c = chans[l]
        wo = sizes[l]
        r = np.tile(np.eye(c, dtype=np.float32), (wo, 1))          # (wo*c, c)
        kp[f"r{l}"] = jnp.asarray(r)
        kp[f"bb{l}"] = jnp.asarray(np.ascontiguousarray(r.T))      # (c, wo*c)
        rr = np.zeros((b_tile, b_tile * wo), np.float32)
        for s in range(b_tile):
            rr[s, s * wo:(s + 1) * wo] = 1.0
        kp[f"rr{l}"] = jnp.asarray(rr)                             # (B, B*Ho)
        kp[f"ex{l}"] = jnp.asarray(np.ascontiguousarray(rr.T))     # (B*Ho, B)

    # final 4x4 valid conv folded into an elementwise dot on the (4, 4*8fd) map
    w5 = params["w5"][0]                                           # (8fd, 4, 4)
    w5m = jnp.transpose(w5, (1, 2, 0)).reshape(4, 4 * w5.shape[0])
    kp["w5t"] = jnp.tile(w5m, (b_tile, 1))                         # (B*4, 4*8fd)
    rfin = np.zeros((b_tile, b_tile * 4), np.float32)
    for s in range(b_tile):
        rfin[s, s * 4:(s + 1) * 4] = 1.0
    kp["rfin"] = jnp.asarray(rfin)
    kp["b5"] = params["b5"].reshape(1, 1)
    return kp


# --------------------------------- wrapper ----------------------------------

def critic_forward(x, kp):
    """x: (N, in_channels, 64, 64) float32 -> (N, 1, 1, 1) float32."""
    n, c_in, h, w = x.shape
    assert h == 64 and w == 64
    b_tile = kp["rfin"].shape[0]                 # static (from array shape)
    c_pad = kp["m1"].shape[0] // (4 * w)         # padded input channel count

    n_pad = ((n + b_tile - 1) // b_tile) * b_tile
    # One input-side relayout: NCHW -> (N*H, W*C) lane-dense bf16 slab.
    xt = jnp.transpose(x, (0, 2, 3, 1))
    xt = jnp.pad(xt, ((0, n_pad - n), (0, 0), (0, 0), (0, c_pad - c_in)))
    a1 = xt.reshape(n_pad * h, w * c_pad).astype(jnp.bfloat16)

    operands = (a1,
                kp["sel1"], kp["m1"], kp["b1"],
                kp["sel2"], kp["m2"], kp["r2"], kp["bb2"], kp["rr2"], kp["ex2"],
                kp["sel3"], kp["m3"], kp["r3"], kp["bb3"], kp["rr3"], kp["ex3"],
                kp["sel4"], kp["m4"], kp["r4"], kp["bb4"], kp["rr4"], kp["ex4"],
                kp["w5t"], kp["rfin"], kp["b5"])

    def whole(arr):
        rank = arr.ndim
        return pl.BlockSpec(arr.shape, lambda i, _r=rank: (0,) * _r)

    in_specs = ([pl.BlockSpec((b_tile * h, w * c_pad), lambda i: (i, 0))]
                + [whole(op) for op in operands[1:]])

    steps = n_pad // b_tile
    out = pl.pallas_call(
        _critic_kernel,
        out_shape=jax.ShapeDtypeStruct((steps, b_tile, 1), jnp.float32),
        grid_spec=pltpu.PrefetchScalarGridSpec(
            num_scalar_prefetch=0,
            grid=(steps,),
            in_specs=in_specs,
            out_specs=pl.BlockSpec((1, b_tile, 1), lambda i: (i, 0, 0)),
        ),
        compiler_params=pltpu.CompilerParams(
            dimension_semantics=("parallel",),
            vmem_limit_bytes=32 * 1024 * 1024),
    )(*operands)
    return out.reshape(n_pad, 1)[:n].reshape(n, 1, 1, 1)


if __name__ == "__main__":
    key = jax.random.PRNGKey(0)
    k_param, k_x = jax.random.split(key)

    in_channels, features_d = 3, 8
    x = jax.random.normal(k_x, (8, in_channels, 64, 64), jnp.float32)
    params = init_params(k_param, in_channels, features_d)
    kp = pack_params(params, in_channels, features_d, 64, 64, b_tile=B_TILE)

    fwd = jax.jit(critic_forward)
    out = fwd(x, kp)
    jax.block_until_ready(out)
    assert out.shape == (8, 1, 1, 1), out.shape
    assert bool(jnp.isfinite(out).all())
    print("KERNEL_OK")
</pallas_src>

<mosaic_0001>
module attributes {stable_mosaic.version = 11 : i64} {
  func.func @_critic_kernel(%arg0: i32, %arg1: memref<256x256xbf16, #tpu.memory_space<vmem>>, %arg2: memref<512x256xbf16, #tpu.memory_space<vmem>>, %arg3: memref<1024x256xbf16, #tpu.memory_space<vmem>>, %arg4: memref<1x256xf32, #tpu.memory_space<vmem>>, %arg5: memref<256x128xbf16, #tpu.memory_space<vmem>>, %arg6: memref<1024x256xbf16, #tpu.memory_space<vmem>>, %arg7: memref<256x16xf32, #tpu.memory_space<vmem>>, %arg8: memref<16x256xf32, #tpu.memory_space<vmem>>, %arg9: memref<4x64xf32, #tpu.memory_space<vmem>>, %arg10: memref<64x4xf32, #tpu.memory_space<vmem>>, %arg11: memref<128x64xbf16, #tpu.memory_space<vmem>>, %arg12: memref<1024x256xbf16, #tpu.memory_space<vmem>>, %arg13: memref<256x32xf32, #tpu.memory_space<vmem>>, %arg14: memref<32x256xf32, #tpu.memory_space<vmem>>, %arg15: memref<4x32xf32, #tpu.memory_space<vmem>>, %arg16: memref<32x4xf32, #tpu.memory_space<vmem>>, %arg17: memref<64x32xbf16, #tpu.memory_space<vmem>>, %arg18: memref<1024x256xbf16, #tpu.memory_space<vmem>>, %arg19: memref<256x64xf32, #tpu.memory_space<vmem>>, %arg20: memref<64x256xf32, #tpu.memory_space<vmem>>, %arg21: memref<4x16xf32, #tpu.memory_space<vmem>>, %arg22: memref<16x4xf32, #tpu.memory_space<vmem>>, %arg23: memref<16x256xf32, #tpu.memory_space<vmem>>, %arg24: memref<4x16xf32, #tpu.memory_space<vmem>>, %arg25: memref<1x1xf32, #tpu.memory_space<vmem>>, %arg26: memref<1x4x1xf32, #tpu.memory_space<vmem>>) attributes {dimension_semantics = [#tpu.dimension_semantics<parallel>], iteration_bounds = array<i64: 2>, scalar_prefetch = 0 : i64, scratch_operands = 0 : i64, tpu.core_type = #tpu.core_type<tc>, window_params = [{transform_indices = @transform_0, window_bounds = array<i64: 256, 256>}, {pipeline_mode = #tpu.pipeline_mode<synchronous>, transform_indices = @transform_1, window_bounds = array<i64: 512, 256>}, {pipeline_mode = #tpu.pipeline_mode<synchronous>, transform_indices = @transform_2, window_bounds = array<i64: 1024, 256>}, {pipeline_mode = #tpu.pipeline_mode<synchronous>, transform_indices = @transform_3, window_bounds = array<i64: 1, 256>}, {pipeline_mode = #tpu.pipeline_mode<synchronous>, transform_indices = @transform_4, window_bounds = array<i64: 256, 128>}, {pipeline_mode = #tpu.pipeline_mode<synchronous>, transform_indices = @transform_5, window_bounds = array<i64: 1024, 256>}, {pipeline_mode = #tpu.pipeline_mode<synchronous>, transform_indices = @transform_6, window_bounds = array<i64: 256, 16>}, {pipeline_mode = #tpu.pipeline_mode<synchronous>, transform_indices = @transform_7, window_bounds = array<i64: 16, 256>}, {pipeline_mode = #tpu.pipeline_mode<synchronous>, transform_indices = @transform_8, window_bounds = array<i64: 4, 64>}, {pipeline_mode = #tpu.pipeline_mode<synchronous>, transform_indices = @transform_9, window_bounds = array<i64: 64, 4>}, {pipeline_mode = #tpu.pipeline_mode<synchronous>, transform_indices = @transform_10, window_bounds = array<i64: 128, 64>}, {pipeline_mode = #tpu.pipeline_mode<synchronous>, transform_indices = @transform_11, window_bounds = array<i64: 1024, 256>}, {pipeline_mode = #tpu.pipeline_mode<synchronous>, transform_indices = @transform_12, window_bounds = array<i64: 256, 32>}, {pipeline_mode = #tpu.pipeline_mode<synchronous>, transform_indices = @transform_13, window_bounds = array<i64: 32, 256>}, {pipeline_mode = #tpu.pipeline_mode<synchronous>, transform_indices = @transform_14, window_bounds = array<i64: 4, 32>}, {pipeline_mode = #tpu.pipeline_mode<synchronous>, transform_indices = @transform_15, window_bounds = array<i64: 32, 4>}, {pipeline_mode = #tpu.pipeline_mode<synchronous>, transform_indices = @transform_16, window_bounds = array<i64: 64, 32>}, {pipeline_mode = #tpu.pipeline_mode<synchronous>, transform_indices = @transform_17, window_bounds = array<i64: 1024, 256>}, {pipeline_mode = #tpu.pipeline_mode<synchronous>, transform_indices = @transform_18, window_bounds = array<i64: 256, 64>}, {pipeline_mode = #tpu.pipeline_mode<synchronous>, transform_indices = @transform_19, window_bounds = array<i64: 64, 256>}, {pipeline_mode = #tpu.pipeline_mode<synchronous>, transform_indices = @transform_20, window_bounds = array<i64: 4, 16>}, {pipeline_mode = #tpu.pipeline_mode<synchronous>, transform_indices = @transform_21, window_bounds = array<i64: 16, 4>}, {pipeline_mode = #tpu.pipeline_mode<synchronous>, transform_indices = @transform_22, window_bounds = array<i64: 16, 256>}, {pipeline_mode = #tpu.pipeline_mode<synchronous>, transform_indices = @transform_23, window_bounds = array<i64: 4, 16>}, {pipeline_mode = #tpu.pipeline_mode<synchronous>, transform_indices = @transform_24, window_bounds = array<i64: 1, 1>}, {transform_indices = @transform_25, window_bounds = array<i64: 1, 4, 1>}]} {
    %c0 = arith.constant 0 : index
    %c0_0 = arith.constant 0 : index
    %0 = vector.load %arg1[%c0, %c0_0] : memref<256x256xbf16, #tpu.memory_space<vmem>>, vector<256x256xbf16>
    %c0_1 = arith.constant 0 : index
    %c0_2 = arith.constant 0 : index
    %1 = vector.load %arg2[%c0_1, %c0_2] : memref<512x256xbf16, #tpu.memory_space<vmem>>, vector<512x256xbf16>
    %cst = arith.constant dense<0.000000e+00> : vector<512x256xf32>
    %2 = tpu.matmul %1, %0, %cst {dimension_numbers = #tpu.dot_dimension_numbers<[1], [0], [0], [1], [0, 0, 1, 1], [], []>} : vector<512x256xbf16>, vector<256x256xbf16>, vector<512x256xf32> -> vector<512x256xf32>
    %3 = arith.truncf %2 : vector<512x256xf32> to vector<512x256xbf16>
    %4 = vector.extract_strided_slice %3 {offsets = [0, 0], sizes = [128, 256], strides = [1, 1]} : vector<512x256xbf16> to vector<128x256xbf16>
    %5 = vector.extract_strided_slice %3 {offsets = [128, 0], sizes = [128, 256], strides = [1, 1]} : vector<512x256xbf16> to vector<128x256xbf16>
    %6 = vector.extract_strided_slice %3 {offsets = [256, 0], sizes = [128, 256], strides = [1, 1]} : vector<512x256xbf16> to vector<128x256xbf16>
    %7 = vector.extract_strided_slice %3 {offsets = [384, 0], sizes = [128, 256], strides = [1, 1]} : vector<512x256xbf16> to vector<128x256xbf16>
    %8 = tpu.concatenate %4, %5, %6, %7 in 1 : vector<128x256xbf16>, vector<128x256xbf16>, vector<128x256xbf16>, vector<128x256xbf16> -> vector<128x1024xbf16>
    %c0_3 = arith.constant 0 : index
    %c0_4 = arith.constant 0 : index
    %9 = vector.load %arg3[%c0_3, %c0_4] : memref<1024x256xbf16, #tpu.memory_space<vmem>>, vector<1024x256xbf16>
    %cst_5 = arith.constant dense<0.000000e+00> : vector<128x256xf32>
    %10 = tpu.matmul %8, %9, %cst_5 {dimension_numbers = #tpu.dot_dimension_numbers<[1], [0], [0], [1], [0, 0, 1, 1], [], []>} : vector<128x1024xbf16>, vector<1024x256xbf16>, vector<128x256xf32> -> vector<128x256xf32>
    %c0_6 = arith.constant 0 : index
    %c0_7 = arith.constant 0 : index
    %11 = vector.load %arg4[%c0_6, %c0_7] : memref<1x256xf32, #tpu.memory_space<vmem>>, vector<1x256xf32>
    %12 = vector.broadcast %11 : vector<1x256xf32> to vector<128x256xf32>
    %13 = arith.addf %10, %12 : vector<128x256xf32>
    %cst_8 = arith.constant 0.000000e+00 : f32
    %14 = vector.broadcast %cst_8 : f32 to vector<128x256xf32>
    %15 = arith.cmpf ogt, %13, %14 : vector<128x256xf32>
    %cst_9 = arith.constant 2.000000e-01 : f32
    %16 = vector.broadcast %cst_9 : f32 to vector<128x256xf32>
    %17 = arith.mulf %16, %13 : vector<128x256xf32>
    %18 = arith.select %15, %13, %17 : vector<128x256xi1>, vector<128x256xf32>
    %19 = arith.truncf %18 : vector<128x256xf32> to vector<128x256xbf16>
    %c0_10 = arith.constant 0 : index
    %c0_11 = arith.constant 0 : index
    %20 = vector.load %arg5[%c0_10, %c0_11] : memref<256x128xbf16, #tpu.memory_space<vmem>>, vector<256x128xbf16>
    %cst_12 = arith.constant dense<0.000000e+00> : vector<256x256xf32>
    %21 = tpu.matmul %20, %19, %cst_12 {dimension_numbers = #tpu.dot_dimension_numbers<[1], [0], [0], [1], [0, 0, 1, 1], [], []>} : vector<256x128xbf16>, vector<128x256xbf16>, vector<256x256xf32> -> vector<256x256xf32>
    %22 = arith.truncf %21 : vector<256x256xf32> to vector<256x256xbf16>
    %23 = vector.extract_strided_slice %22 {offsets = [0, 0], sizes = [64, 256], strides = [1, 1]} : vector<256x256xbf16> to vector<64x256xbf16>
    %24 = vector.extract_strided_slice %22 {offsets = [64, 0], sizes = [64, 256], strides = [1, 1]} : vector<256x256xbf16> to vector<64x256xbf16>
    %25 = vector.extract_strided_slice %22 {offsets = [128, 0], sizes = [64, 256], strides = [1, 1]} : vector<256x256xbf16> to vector<64x256xbf16>
    %26 = vector.extract_strided_slice %22 {offsets = [192, 0], sizes = [64, 256], strides = [1, 1]} : vector<256x256xbf16> to vector<64x256xbf16>
    %27 = tpu.concatenate %23, %24, %25, %26 in 1 : vector<64x256xbf16>, vector<64x256xbf16>, vector<64x256xbf16>, vector<64x256xbf16> -> vector<64x1024xbf16>
    %c0_13 = arith.constant 0 : index
    %c0_14 = arith.constant 0 : index
    %28 = vector.load %arg6[%c0_13, %c0_14] : memref<1024x256xbf16, #tpu.memory_space<vmem>>, vector<1024x256xbf16>
    %cst_15 = arith.constant dense<0.000000e+00> : vector<64x256xf32>
    %29 = tpu.matmul %27, %28, %cst_15 {dimension_numbers = #tpu.dot_dimension_numbers<[1], [0], [0], [1], [0, 0, 1, 1], [], []>} : vector<64x1024xbf16>, vector<1024x256xbf16>, vector<64x256xf32> -> vector<64x256xf32>
    %c0_16 = arith.constant 0 : index
    %c0_17 = arith.constant 0 : index
    %30 = vector.load %arg7[%c0_16, %c0_17] : memref<256x16xf32, #tpu.memory_space<vmem>>, vector<256x16xf32>
    %c0_18 = arith.constant 0 : index
    %c0_19 = arith.constant 0 : index
    %31 = vector.load %arg9[%c0_18, %c0_19] : memref<4x64xf32, #tpu.memory_space<vmem>>, vector<4x64xf32>
    %cst_20 = arith.constant dense<0.000000e+00> : vector<64x16xf32>
    %32 = tpu.matmul %29, %30, %cst_20 {dimension_numbers = #tpu.dot_dimension_numbers<[1], [0], [0], [1], [0, 0, 1, 1], [], []>} : vector<64x256xf32>, vector<256x16xf32>, vector<64x16xf32> -> vector<64x16xf32>
    %33 = arith.mulf %29, %29 : vector<64x256xf32>
    %cst_21 = arith.constant dense<0.000000e+00> : vector<64x16xf32>
    %34 = tpu.matmul %33, %30, %cst_21 {dimension_numbers = #tpu.dot_dimension_numbers<[1], [0], [0], [1], [0, 0, 1, 1], [], []>} : vector<64x256xf32>, vector<256x16xf32>, vector<64x16xf32> -> vector<64x16xf32>
    %cst_22 = arith.constant dense<0.000000e+00> : vector<4x16xf32>
    %35 = tpu.matmul %31, %32, %cst_22 {dimension_numbers = #tpu.dot_dimension_numbers<[1], [0], [0], [1], [0, 0, 1, 1], [], []>} : vector<4x64xf32>, vector<64x16xf32>, vector<4x16xf32> -> vector<4x16xf32>
    %cst_23 = arith.constant 3.906250e-03 : f32
    %36 = vector.broadcast %cst_23 : f32 to vector<4x16xf32>
    %37 = arith.mulf %35, %36 : vector<4x16xf32>
    %cst_24 = arith.constant dense<0.000000e+00> : vector<4x16xf32>
    %38 = tpu.matmul %31, %34, %cst_24 {dimension_numbers = #tpu.dot_dimension_numbers<[1], [0], [0], [1], [0, 0, 1, 1], [], []>} : vector<4x64xf32>, vector<64x16xf32>, vector<4x16xf32> -> vector<4x16xf32>
    %cst_25 = arith.constant 3.906250e-03 : f32
    %39 = vector.broadcast %cst_25 : f32 to vector<4x16xf32>
    %40 = arith.mulf %38, %39 : vector<4x16xf32>
    %41 = arith.mulf %37, %37 : vector<4x16xf32>
    %42 = arith.subf %40, %41 : vector<4x16xf32>
    %cst_26 = arith.constant 0.000000e+00 : f32
    %43 = vector.broadcast %cst_26 : f32 to vector<4x16xf32>
    %44 = arith.maximumf %42, %43 : vector<4x16xf32>
    %cst_27 = arith.constant 9.99999974E-6 : f32
    %45 = vector.broadcast %cst_27 : f32 to vector<4x16xf32>
    %46 = arith.addf %44, %45 : vector<4x16xf32>
    %47 = math.rsqrt %46 : vector<4x16xf32>
    %cst_28 = arith.constant 0.000000e+00 : f32
    %48 = vector.broadcast %cst_28 : f32 to vector<4x16xf32>
    %49 = arith.subf %48, %37 : vector<4x16xf32>
    %50 = arith.mulf %49, %47 : vector<4x16xf32>
    %c0_29 = arith.constant 0 : index
    %c0_30 = arith.constant 0 : index
    %51 = vector.load %arg8[%c0_29, %c0_30] : memref<16x256xf32, #tpu.memory_space<vmem>>, vector<16x256xf32>
    %c0_31 = arith.constant 0 : index
    %c0_32 = arith.constant 0 : index
    %52 = vector.load %arg10[%c0_31, %c0_32] : memref<64x4xf32, #tpu.memory_space<vmem>>, vector<64x4xf32>
    %cst_33 = arith.constant dense<0.000000e+00> : vector<4x256xf32>
    %53 = tpu.matmul %47, %51, %cst_33 {dimension_numbers = #tpu.dot_dimension_numbers<[1], [0], [0], [1], [0, 0, 1, 1], [], []>} : vector<4x16xf32>, vector<16x256xf32>, vector<4x256xf32> -> vector<4x256xf32>
    %cst_34 = arith.constant dense<0.000000e+00> : vector<64x256xf32>
    %54 = tpu.matmul %52, %53, %cst_34 {dimension_numbers = #tpu.dot_dimension_numbers<[1], [0], [0], [1], [0, 0, 1, 1], [], []>} : vector<64x4xf32>, vector<4x256xf32>, vector<64x256xf32> -> vector<64x256xf32>
    %cst_35 = arith.constant dense<0.000000e+00> : vector<4x256xf32>
    %55 = tpu.matmul %50, %51, %cst_35 {dimension_numbers = #tpu.dot_dimension_numbers<[1], [0], [0], [1], [0, 0, 1, 1], [], []>} : vector<4x16xf32>, vector<16x256xf32>, vector<4x256xf32> -> vector<4x256xf32>
    %cst_36 = arith.constant dense<0.000000e+00> : vector<64x256xf32>
    %56 = tpu.matmul %52, %55, %cst_36 {dimension_numbers = #tpu.dot_dimension_numbers<[1], [0], [0], [1], [0, 0, 1, 1], [], []>} : vector<64x4xf32>, vector<4x256xf32>, vector<64x256xf32> -> vector<64x256xf32>
    %57 = arith.mulf %29, %54 : vector<64x256xf32>
    %58 = arith.addf %57, %56 : vector<64x256xf32>
    %cst_37 = arith.constant 0.000000e+00 : f32
    %59 = vector.broadcast %cst_37 : f32 to vector<64x256xf32>
    %60 = arith.cmpf ogt, %58, %59 : vector<64x256xf32>
    %cst_38 = arith.constant 2.000000e-01 : f32
    %61 = vector.broadcast %cst_38 : f32 to vector<64x256xf32>
    %62 = arith.mulf %61, %58 : vector<64x256xf32>
    %63 = arith.select %60, %58, %62 : vector<64x256xi1>, vector<64x256xf32>
    %64 = arith.truncf %63 : vector<64x256xf32> to vector<64x256xbf16>
    %c0_39 = arith.constant 0 : index
    %c0_40 = arith.constant 0 : index
    %65 = vector.load %arg11[%c0_39, %c0_40] : memref<128x64xbf16, #tpu.memory_space<vmem>>, vector<128x64xbf16>
    %cst_41 = arith.constant dense<0.000000e+00> : vector<128x256xf32>
    %66 = tpu.matmul %65, %64, %cst_41 {dimension_numbers = #tpu.dot_dimension_numbers<[1], [0], [0], [1], [0, 0, 1, 1], [], []>} : vector<128x64xbf16>, vector<64x256xbf16>, vector<128x256xf32> -> vector<128x256xf32>
    %67 = arith.truncf %66 : vector<128x256xf32> to vector<128x256xbf16>
    %68 = vector.extract_strided_slice %67 {offsets = [0, 0], sizes = [32, 256], strides = [1, 1]} : vector<128x256xbf16> to vector<32x256xbf16>
    %69 = vector.extract_strided_slice %67 {offsets = [32, 0], sizes = [32, 256], strides = [1, 1]} : vector<128x256xbf16> to vector<32x256xbf16>
    %70 = vector.extract_strided_slice %67 {offsets = [64, 0], sizes = [32, 256], strides = [1, 1]} : vector<128x256xbf16> to vector<32x256xbf16>
    %71 = vector.extract_strided_slice %67 {offsets = [96, 0], sizes = [32, 256], strides = [1, 1]} : vector<128x256xbf16> to vector<32x256xbf16>
    %72 = tpu.concatenate %68, %69, %70, %71 in 1 : vector<32x256xbf16>, vector<32x256xbf16>, vector<32x256xbf16>, vector<32x256xbf16> -> vector<32x1024xbf16>
    %c0_42 = arith.constant 0 : index
    %c0_43 = arith.constant 0 : index
    %73 = vector.load %arg12[%c0_42, %c0_43] : memref<1024x256xbf16, #tpu.memory_space<vmem>>, vector<1024x256xbf16>
    %cst_44 = arith.constant dense<0.000000e+00> : vector<32x256xf32>
    %74 = tpu.matmul %72, %73, %cst_44 {dimension_numbers = #tpu.dot_dimension_numbers<[1], [0], [0], [1], [0, 0, 1, 1], [], []>} : vector<32x1024xbf16>, vector<1024x256xbf16>, vector<32x256xf32> -> vector<32x256xf32>
    %c0_45 = arith.constant 0 : index
    %c0_46 = arith.constant 0 : index
    %75 = vector.load %arg13[%c0_45, %c0_46] : memref<256x32xf32, #tpu.memory_space<vmem>>, vector<256x32xf32>
    %c0_47 = arith.constant 0 : index
    %c0_48 = arith.constant 0 : index
    %76 = vector.load %arg15[%c0_47, %c0_48] : memref<4x32xf32, #tpu.memory_space<vmem>>, vector<4x32xf32>
    %cst_49 = arith.constant dense<0.000000e+00> : vector<32x32xf32>
    %77 = tpu.matmul %74, %75, %cst_49 {dimension_numbers = #tpu.dot_dimension_numbers<[1], [0], [0], [1], [0, 0, 1, 1], [], []>} : vector<32x256xf32>, vector<256x32xf32>, vector<32x32xf32> -> vector<32x32xf32>
    %78 = arith.mulf %74, %74 : vector<32x256xf32>
    %cst_50 = arith.constant dense<0.000000e+00> : vector<32x32xf32>
    %79 = tpu.matmul %78, %75, %cst_50 {dimension_numbers = #tpu.dot_dimension_numbers<[1], [0], [0], [1], [0, 0, 1, 1], [], []>} : vector<32x256xf32>, vector<256x32xf32>, vector<32x32xf32> -> vector<32x32xf32>
    %cst_51 = arith.constant dense<0.000000e+00> : vector<4x32xf32>
    %80 = tpu.matmul %76, %77, %cst_51 {dimension_numbers = #tpu.dot_dimension_numbers<[1], [0], [0], [1], [0, 0, 1, 1], [], []>} : vector<4x32xf32>, vector<32x32xf32>, vector<4x32xf32> -> vector<4x32xf32>
    %cst_52 = arith.constant 1.562500e-02 : f32
    %81 = vector.broadcast %cst_52 : f32 to vector<4x32xf32>
    %82 = arith.mulf %80, %81 : vector<4x32xf32>
    %cst_53 = arith.constant dense<0.000000e+00> : vector<4x32xf32>
    %83 = tpu.matmul %76, %79, %cst_53 {dimension_numbers = #tpu.dot_dimension_numbers<[1], [0], [0], [1], [0, 0, 1, 1], [], []>} : vector<4x32xf32>, vector<32x32xf32>, vector<4x32xf32> -> vector<4x32xf32>
    %cst_54 = arith.constant 1.562500e-02 : f32
    %84 = vector.broadcast %cst_54 : f32 to vector<4x32xf32>
    %85 = arith.mulf %83, %84 : vector<4x32xf32>
    %86 = arith.mulf %82, %82 : vector<4x32xf32>
    %87 = arith.subf %85, %86 : vector<4x32xf32>
    %cst_55 = arith.constant 0.000000e+00 : f32
    %88 = vector.broadcast %cst_55 : f32 to vector<4x32xf32>
    %89 = arith.maximumf %87, %88 : vector<4x32xf32>
    %cst_56 = arith.constant 9.99999974E-6 : f32
    %90 = vector.broadcast %cst_56 : f32 to vector<4x32xf32>
    %91 = arith.addf %89, %90 : vector<4x32xf32>
    %92 = math.rsqrt %91 : vector<4x32xf32>
    %cst_57 = arith.constant 0.000000e+00 : f32
    %93 = vector.broadcast %cst_57 : f32 to vector<4x32xf32>
    %94 = arith.subf %93, %82 : vector<4x32xf32>
    %95 = arith.mulf %94, %92 : vector<4x32xf32>
    %c0_58 = arith.constant 0 : index
    %c0_59 = arith.constant 0 : index
    %96 = vector.load %arg14[%c0_58, %c0_59] : memref<32x256xf32, #tpu.memory_space<vmem>>, vector<32x256xf32>
    %c0_60 = arith.constant 0 : index
    %c0_61 = arith.constant 0 : index
    %97 = vector.load %arg16[%c0_60, %c0_61] : memref<32x4xf32, #tpu.memory_space<vmem>>, vector<32x4xf32>
    %cst_62 = arith.constant dense<0.000000e+00> : vector<4x256xf32>
    %98 = tpu.matmul %92, %96, %cst_62 {dimension_numbers = #tpu.dot_dimension_numbers<[1], [0], [0], [1], [0, 0, 1, 1], [], []>} : vector<4x32xf32>, vector<32x256xf32>, vector<4x256xf32> -> vector<4x256xf32>
    %cst_63 = arith.constant dense<0.000000e+00> : vector<32x256xf32>
    %99 = tpu.matmul %97, %98, %cst_63 {dimension_numbers = #tpu.dot_dimension_numbers<[1], [0], [0], [1], [0, 0, 1, 1], [], []>} : vector<32x4xf32>, vector<4x256xf32>, vector<32x256xf32> -> vector<32x256xf32>
    %cst_64 = arith.constant dense<0.000000e+00> : vector<4x256xf32>
    %100 = tpu.matmul %95, %96, %cst_64 {dimension_numbers = #tpu.dot_dimension_numbers<[1], [0], [0], [1], [0, 0, 1, 1], [], []>} : vector<4x32xf32>, vector<32x256xf32>, vector<4x256xf32> -> vector<4x256xf32>
    %cst_65 = arith.constant dense<0.000000e+00> : vector<32x256xf32>
    %101 = tpu.matmul %97, %100, %cst_65 {dimension_numbers = #tpu.dot_dimension_numbers<[1], [0], [0], [1], [0, 0, 1, 1], [], []>} : vector<32x4xf32>, vector<4x256xf32>, vector<32x256xf32> -> vector<32x256xf32>
    %102 = arith.mulf %74, %99 : vector<32x256xf32>
    %103 = arith.addf %102, %101 : vector<32x256xf32>
    %cst_66 = arith.constant 0.000000e+00 : f32
    %104 = vector.broadcast %cst_66 : f32 to vector<32x256xf32>
    %105 = arith.cmpf ogt, %103, %104 : vector<32x256xf32>
    %cst_67 = arith.constant 2.000000e-01 : f32
    %106 = vector.broadcast %cst_67 : f32 to vector<32x256xf32>
    %107 = arith.mulf %106, %103 : vector<32x256xf32>
    %108 = arith.select %105, %103, %107 : vector<32x256xi1>, vector<32x256xf32>
    %109 = arith.truncf %108 : vector<32x256xf32> to vector<32x256xbf16>
    %c0_68 = arith.constant 0 : index
    %c0_69 = arith.constant 0 : index
    %110 = vector.load %arg17[%c0_68, %c0_69] : memref<64x32xbf16, #tpu.memory_space<vmem>>, vector<64x32xbf16>
    %cst_70 = arith.constant dense<0.000000e+00> : vector<64x256xf32>
    %111 = tpu.matmul %110, %109, %cst_70 {dimension_numbers = #tpu.dot_dimension_numbers<[1], [0], [0], [1], [0, 0, 1, 1], [], []>} : vector<64x32xbf16>, vector<32x256xbf16>, vector<64x256xf32> -> vector<64x256xf32>
    %112 = arith.truncf %111 : vector<64x256xf32> to vector<64x256xbf16>
    %113 = vector.extract_strided_slice %112 {offsets = [0, 0], sizes = [16, 256], strides = [1, 1]} : vector<64x256xbf16> to vector<16x256xbf16>
    %114 = vector.extract_strided_slice %112 {offsets = [16, 0], sizes = [16, 256], strides = [1, 1]} : vector<64x256xbf16> to vector<16x256xbf16>
    %115 = vector.extract_strided_slice %112 {offsets = [32, 0], sizes = [16, 256], strides = [1, 1]} : vector<64x256xbf16> to vector<16x256xbf16>
    %116 = vector.extract_strided_slice %112 {offsets = [48, 0], sizes = [16, 256], strides = [1, 1]} : vector<64x256xbf16> to vector<16x256xbf16>
    %117 = tpu.concatenate %113, %114, %115, %116 in 1 : vector<16x256xbf16>, vector<16x256xbf16>, vector<16x256xbf16>, vector<16x256xbf16> -> vector<16x1024xbf16>
    %c0_71 = arith.constant 0 : index
    %c0_72 = arith.constant 0 : index
    %118 = vector.load %arg18[%c0_71, %c0_72] : memref<1024x256xbf16, #tpu.memory_space<vmem>>, vector<1024x256xbf16>
    %cst_73 = arith.constant dense<0.000000e+00> : vector<16x256xf32>
    %119 = tpu.matmul %117, %118, %cst_73 {dimension_numbers = #tpu.dot_dimension_numbers<[1], [0], [0], [1], [0, 0, 1, 1], [], []>} : vector<16x1024xbf16>, vector<1024x256xbf16>, vector<16x256xf32> -> vector<16x256xf32>
    %c0_74 = arith.constant 0 : index
    %c0_75 = arith.constant 0 : index
    %120 = vector.load %arg19[%c0_74, %c0_75] : memref<256x64xf32, #tpu.memory_space<vmem>>, vector<256x64xf32>
    %c0_76 = arith.constant 0 : index
    %c0_77 = arith.constant 0 : index
    %121 = vector.load %arg21[%c0_76, %c0_77] : memref<4x16xf32, #tpu.memory_space<vmem>>, vector<4x16xf32>
    %cst_78 = arith.constant dense<0.000000e+00> : vector<16x64xf32>
    %122 = tpu.matmul %119, %120, %cst_78 {dimension_numbers = #tpu.dot_dimension_numbers<[1], [0], [0], [1], [0, 0, 1, 1], [], []>} : vector<16x256xf32>, vector<256x64xf32>, vector<16x64xf32> -> vector<16x64xf32>
    %123 = arith.mulf %119, %119 : vector<16x256xf32>
    %cst_79 = arith.constant dense<0.000000e+00> : vector<16x64xf32>
    %124 = tpu.matmul %123, %120, %cst_79 {dimension_numbers = #tpu.dot_dimension_numbers<[1], [0], [0], [1], [0, 0, 1, 1], [], []>} : vector<16x256xf32>, vector<256x64xf32>, vector<16x64xf32> -> vector<16x64xf32>
    %cst_80 = arith.constant dense<0.000000e+00> : vector<4x64xf32>
    %125 = tpu.matmul %121, %122, %cst_80 {dimension_numbers = #tpu.dot_dimension_numbers<[1], [0], [0], [1], [0, 0, 1, 1], [], []>} : vector<4x16xf32>, vector<16x64xf32>, vector<4x64xf32> -> vector<4x64xf32>
    %cst_81 = arith.constant 6.250000e-02 : f32
    %126 = vector.broadcast %cst_81 : f32 to vector<4x64xf32>
    %127 = arith.mulf %125, %126 : vector<4x64xf32>
    %cst_82 = arith.constant dense<0.000000e+00> : vector<4x64xf32>
    %128 = tpu.matmul %121, %124, %cst_82 {dimension_numbers = #tpu.dot_dimension_numbers<[1], [0], [0], [1], [0, 0, 1, 1], [], []>} : vector<4x16xf32>, vector<16x64xf32>, vector<4x64xf32> -> vector<4x64xf32>
    %cst_83 = arith.constant 6.250000e-02 : f32
    %129 = vector.broadcast %cst_83 : f32 to vector<4x64xf32>
    %130 = arith.mulf %128, %129 : vector<4x64xf32>
    %131 = arith.mulf %127, %127 : vector<4x64xf32>
    %132 = arith.subf %130, %131 : vector<4x64xf32>
    %cst_84 = arith.constant 0.000000e+00 : f32
    %133 = vector.broadcast %cst_84 : f32 to vector<4x64xf32>
    %134 = arith.maximumf %132, %133 : vector<4x64xf32>
    %cst_85 = arith.constant 9.99999974E-6 : f32
    %135 = vector.broadcast %cst_85 : f32 to vector<4x64xf32>
    %136 = arith.addf %134, %135 : vector<4x64xf32>
    %137 = math.rsqrt %136 : vector<4x64xf32>
    %cst_86 = arith.constant 0.000000e+00 : f32
    %138 = vector.broadcast %cst_86 : f32 to vector<4x64xf32>
    %139 = arith.subf %138, %127 : vector<4x64xf32>
    %140 = arith.mulf %139, %137 : vector<4x64xf32>
    %c0_87 = arith.constant 0 : index
    %c0_88 = arith.constant 0 : index
    %141 = vector.load %arg20[%c0_87, %c0_88] : memref<64x256xf32, #tpu.memory_space<vmem>>, vector<64x256xf32>
    %c0_89 = arith.constant 0 : index
    %c0_90 = arith.constant 0 : index
    %142 = vector.load %arg22[%c0_89, %c0_90] : memref<16x4xf32, #tpu.memory_space<vmem>>, vector<16x4xf32>
    %cst_91 = arith.constant dense<0.000000e+00> : vector<4x256xf32>
    %143 = tpu.matmul %137, %141, %cst_91 {dimension_numbers = #tpu.dot_dimension_numbers<[1], [0], [0], [1], [0, 0, 1, 1], [], []>} : vector<4x64xf32>, vector<64x256xf32>, vector<4x256xf32> -> vector<4x256xf32>
    %cst_92 = arith.constant dense<0.000000e+00> : vector<16x256xf32>
    %144 = tpu.matmul %142, %143, %cst_92 {dimension_numbers = #tpu.dot_dimension_numbers<[1], [0], [0], [1], [0, 0, 1, 1], [], []>} : vector<16x4xf32>, vector<4x256xf32>, vector<16x256xf32> -> vector<16x256xf32>
    %cst_93 = arith.constant dense<0.000000e+00> : vector<4x256xf32>
    %145 = tpu.matmul %140, %141, %cst_93 {dimension_numbers = #tpu.dot_dimension_numbers<[1], [0], [0], [1], [0, 0, 1, 1], [], []>} : vector<4x64xf32>, vector<64x256xf32>, vector<4x256xf32> -> vector<4x256xf32>
    %cst_94 = arith.constant dense<0.000000e+00> : vector<16x256xf32>
    %146 = tpu.matmul %142, %145, %cst_94 {dimension_numbers = #tpu.dot_dimension_numbers<[1], [0], [0], [1], [0, 0, 1, 1], [], []>} : vector<16x4xf32>, vector<4x256xf32>, vector<16x256xf32> -> vector<16x256xf32>
    %147 = arith.mulf %119, %144 : vector<16x256xf32>
    %148 = arith.addf %147, %146 : vector<16x256xf32>
    %cst_95 = arith.constant 0.000000e+00 : f32
    %149 = vector.broadcast %cst_95 : f32 to vector<16x256xf32>
    %150 = arith.cmpf ogt, %148, %149 : vector<16x256xf32>
    %cst_96 = arith.constant 2.000000e-01 : f32
    %151 = vector.broadcast %cst_96 : f32 to vector<16x256xf32>
    %152 = arith.mulf %151, %148 : vector<16x256xf32>
    %153 = arith.select %150, %148, %152 : vector<16x256xi1>, vector<16x256xf32>
    %c0_97 = arith.constant 0 : index
    %c0_98 = arith.constant 0 : index
    %154 = vector.load %arg23[%c0_97, %c0_98] : memref<16x256xf32, #tpu.memory_space<vmem>>, vector<16x256xf32>
    %155 = arith.mulf %153, %154 : vector<16x256xf32>
    %c0_99 = arith.constant 0 : index
    %c0_100 = arith.constant 0 : index
    %156 = vector.load %arg24[%c0_99, %c0_100] : memref<4x16xf32, #tpu.memory_space<vmem>>, vector<4x16xf32>
    %cst_101 = arith.constant dense<0.000000e+00> : vector<4x256xf32>
    %157 = tpu.matmul %156, %155, %cst_101 {dimension_numbers = #tpu.dot_dimension_numbers<[1], [0], [0], [1], [0, 0, 1, 1], [], []>} : vector<4x16xf32>, vector<16x256xf32>, vector<4x256xf32> -> vector<4x256xf32>
    %cst_102 = arith.constant dense<0.000000e+00> : vector<4xf32>
    %158 = vector.multi_reduction <add>, %157, %cst_102 [1] : vector<4x256xf32> to vector<4xf32>
    %159 = vector.shape_cast %158 : vector<4xf32> to vector<4x1xf32>
    %c0_103 = arith.constant 0 : index
    %c0_104 = arith.constant 0 : index
    %160 = vector.load %arg25[%c0_103, %c0_104] : memref<1x1xf32, #tpu.memory_space<vmem>>, vector<1x1xf32>
    %161 = vector.broadcast %160 : vector<1x1xf32> to vector<4x1xf32>
    %162 = arith.addf %159, %161 : vector<4x1xf32>
    %c0_105 = arith.constant 0 : index
    %c0_106 = arith.constant 0 : index
    %c0_107 = arith.constant 0 : index
    %163 = vector.load %arg26[%c0_105, %c0_106, %c0_107] : memref<1x4x1xf32, #tpu.memory_space<vmem>>, vector<1x4x1xf32>
    %164 = vector.shape_cast %163 : vector<1x4x1xf32> to vector<4x1xf32>
    %165 = vector.shape_cast %162 : vector<4x1xf32> to vector<1x4x1xf32>
    tpu.vector_store %arg26[%c0_105, %c0_106, %c0_107], %165 {strides = array<i32>} : memref<1x4x1xf32, #tpu.memory_space<vmem>>, vector<1x4x1xf32>,
    return
  }
  func.func @transform_0(%arg0: i32) -> (i32, i32) {
    %c0_i32 = arith.constant 0 : i32
    %c0_i32_0 = arith.constant 0 : i32
    return %arg0, %c0_i32 : i32, i32
  }
  func.func @transform_1(%arg0: i32) -> (i32, i32) {
    %c0_i32 = arith.constant 0 : i32
    %c0_i32_0 = arith.constant 0 : i32
    %c0_i32_1 = arith.constant 0 : i32
    return %c0_i32, %c0_i32_0 : i32, i32
  }
  func.func @transform_2(%arg0: i32) -> (i32, i32) {
    %c0_i32 = arith.constant 0 : i32
    %c0_i32_0 = arith.constant 0 : i32
    %c0_i32_1 = arith.constant 0 : i32
    return %c0_i32, %c0_i32_0 : i32, i32
  }
  func.func @transform_3(%arg0: i32) -> (i32, i32) {
    %c0_i32 = arith.constant 0 : i32
    %c0_i32_0 = arith.constant 0 : i32
    %c0_i32_1 = arith.constant 0 : i32
    return %c0_i32, %c0_i32_0 : i32, i32
  }
  func.func @transform_4(%arg0: i32) -> (i32, i32) {
    %c0_i32 = arith.constant 0 : i32
    %c0_i32_0 = arith.constant 0 : i32
    %c0_i32_1 = arith.constant 0 : i32
    return %c0_i32, %c0_i32_0 : i32, i32
  }
  func.func @transform_5(%arg0: i32) -> (i32, i32) {
    %c0_i32 = arith.constant 0 : i32
    %c0_i32_0 = arith.constant 0 : i32
    %c0_i32_1 = arith.constant 0 : i32
    return %c0_i32, %c0_i32_0 : i32, i32
  }
  func.func @transform_6(%arg0: i32) -> (i32, i32) {
    %c0_i32 = arith.constant 0 : i32
    %c0_i32_0 = arith.constant 0 : i32
    %c0_i32_1 = arith.constant 0 : i32
    return %c0_i32, %c0_i32_0 : i32, i32
  }
  func.func @transform_7(%arg0: i32) -> (i32, i32) {
    %c0_i32 = arith.constant 0 : i32
    %c0_i32_0 = arith.constant 0 : i32
    %c0_i32_1 = arith.constant 0 : i32
    return %c0_i32, %c0_i32_0 : i32, i32
  }
  func.func @transform_8(%arg0: i32) -> (i32, i32) {
    %c0_i32 = arith.constant 0 : i32
    %c0_i32_0 = arith.constant 0 : i32
    %c0_i32_1 = arith.constant 0 : i32
    return %c0_i32, %c0_i32_0 : i32, i32
  }
  func.func @transform_9(%arg0: i32) -> (i32, i32) {
    %c0_i32 = arith.constant 0 : i32
    %c0_i32_0 = arith.constant 0 : i32
    %c0_i32_1 = arith.constant 0 : i32
    return %c0_i32, %c0_i32_0 : i32, i32
  }
  func.func @transform_10(%arg0: i32) -> (i32, i32) {
    %c0_i32 = arith.constant 0 : i32
    %c0_i32_0 = arith.constant 0 : i32
    %c0_i32_1 = arith.constant 0 : i32
    return %c0_i32, %c0_i32_0 : i32, i32
  }
  func.func @transform_11(%arg0: i32) -> (i32, i32) {
    %c0_i32 = arith.constant 0 : i32
    %c0_i32_0 = arith.constant 0 : i32
    %c0_i32_1 = arith.constant 0 : i32
    return %c0_i32, %c0_i32_0 : i32, i32
  }
  func.func @transform_12(%arg0: i32) -> (i32, i32) {
    %c0_i32 = arith.constant 0 : i32
    %c0_i32_0 = arith.constant 0 : i32
    %c0_i32_1 = arith.constant 0 : i32
    return %c0_i32, %c0_i32_0 : i32, i32
  }
  func.func @transform_13(%arg0: i32) -> (i32, i32) {
    %c0_i32 = arith.constant 0 : i32
    %c0_i32_0 = arith.constant 0 : i32
    %c0_i32_1 = arith.constant 0 : i32
    return %c0_i32, %c0_i32_0 : i32, i32
  }
  func.func @transform_14(%arg0: i32) -> (i32, i32) {
    %c0_i32 = arith.constant 0 : i32
    %c0_i32_0 = arith.constant 0 : i32
    %c0_i32_1 = arith.constant 0 : i32
    return %c0_i32, %c0_i32_0 : i32, i32
  }
  func.func @transform_15(%arg0: i32) -> (i32, i32) {
    %c0_i32 = arith.constant 0 : i32
    %c0_i32_0 = arith.constant 0 : i32
    %c0_i32_1 = arith.constant 0 : i32
    return %c0_i32, %c0_i32_0 : i32, i32
  }
  func.func @transform_16(%arg0: i32) -> (i32, i32) {
    %c0_i32 = arith.constant 0 : i32
    %c0_i32_0 = arith.constant 0 : i32
    %c0_i32_1 = arith.constant 0 : i32
    return %c0_i32, %c0_i32_0 : i32, i32
  }
  func.func @transform_17(%arg0: i32) -> (i32, i32) {
    %c0_i32 = arith.constant 0 : i32
    %c0_i32_0 = arith.constant 0 : i32
    %c0_i32_1 = arith.constant 0 : i32
    return %c0_i32, %c0_i32_0 : i32, i32
  }
  func.func @transform_18(%arg0: i32) -> (i32, i32) {
    %c0_i32 = arith.constant 0 : i32
    %c0_i32_0 = arith.constant 0 : i32
    %c0_i32_1 = arith.constant 0 : i32
    return %c0_i32, %c0_i32_0 : i32, i32
  }
  func.func @transform_19(%arg0: i32) -> (i32, i32) {
    %c0_i32 = arith.constant 0 : i32
    %c0_i32_0 = arith.constant 0 : i32
    %c0_i32_1 = arith.constant 0 : i32
    return %c0_i32, %c0_i32_0 : i32, i32
  }
  func.func @transform_20(%arg0: i32) -> (i32, i32) {
    %c0_i32 = arith.constant 0 : i32
    %c0_i32_0 = arith.constant 0 : i32
    %c0_i32_1 = arith.constant 0 : i32
    return %c0_i32, %c0_i32_0 : i32, i32
  }
  func.func @transform_21(%arg0: i32) -> (i32, i32) {
    %c0_i32 = arith.constant 0 : i32
    %c0_i32_0 = arith.constant 0 : i32
    %c0_i32_1 = arith.constant 0 : i32
    return %c0_i32, %c0_i32_0 : i32, i32
  }
  func.func @transform_22(%arg0: i32) -> (i32, i32) {
    %c0_i32 = arith.constant 0 : i32
    %c0_i32_0 = arith.constant 0 : i32
    %c0_i32_1 = arith.constant 0 : i32
    return %c0_i32, %c0_i32_0 : i32, i32
  }
  func.func @transform_23(%arg0: i32) -> (i32, i32) {
    %c0_i32 = arith.constant 0 : i32
    %c0_i32_0 = arith.constant 0 : i32
    %c0_i32_1 = arith.constant 0 : i32
    return %c0_i32, %c0_i32_0 : i32, i32
  }
  func.func @transform_24(%arg0: i32) -> (i32, i32) {
    %c0_i32 = arith.constant 0 : i32
    %c0_i32_0 = arith.constant 0 : i32
    %c0_i32_1 = arith.constant 0 : i32
    return %c0_i32, %c0_i32_0 : i32, i32
  }
  func.func @transform_25(%arg0: i32) -> (i32, i32, i32) {
    %c0_i32 = arith.constant 0 : i32
    %c0_i32_0 = arith.constant 0 : i32
    %c0_i32_1 = arith.constant 0 : i32
    return %arg0, %c0_i32, %c0_i32_0 : i32, i32, i32
  }
}

</mosaic_0001>

<llo_original>
// kernel: critic_forward.1
$region0: #{critic_forward.1}
  #allocation0 [shape = 'u32[]', space=smem, size = 0x4, offset = 0x4, fixed_abs, tag = 'smem constant byte address 0x4 - core index']
  #allocation1 [shape = 'u32[144,128]{1,0:T(1,128)}', space=vmem, size = 0x12000, scoped, tag = 'internal scratch']
  #allocation2 [shape = 'f32[1,1]{1,0:T(1,128)S(1)}', space=vmem, size = 0x200, scoped, tag = 'scoped memory for critic_forward.1']
  %s0 = inlined_call_operand.vmem [shape: bf16[512,256], index: 0, kind: input, shape index: {}]
  %s1 = inlined_call_operand.vmem [shape: bf16[512,256], index: 1, kind: input, shape index: {}]
  %s2 = inlined_call_operand.vmem [shape: bf16[1024,256], index: 2, kind: input, shape index: {}]
  %s3 = inlined_call_operand.vmem [shape: f32[1,256], index: 3, kind: input, shape index: {}]
  %s4 = inlined_call_operand.vmem [shape: bf16[256,128], index: 4, kind: input, shape index: {}]
  %s5 = inlined_call_operand.vmem [shape: bf16[1024,256], index: 5, kind: input, shape index: {}]
  %s6 = inlined_call_operand.vmem [shape: f32[256,16], index: 6, kind: input, shape index: {}]
  %s7 = inlined_call_operand.vmem [shape: f32[16,256], index: 7, kind: input, shape index: {}]
  %s8 = inlined_call_operand.vmem [shape: f32[4,64], index: 8, kind: input, shape index: {}]
  %s9 = inlined_call_operand.vmem [shape: f32[64,4], index: 9, kind: input, shape index: {}]
  %s10 = inlined_call_operand.vmem [shape: bf16[128,64], index: 10, kind: input, shape index: {}]
  %s11 = inlined_call_operand.vmem [shape: bf16[1024,256], index: 11, kind: input, shape index: {}]
  %s12 = inlined_call_operand.vmem [shape: f32[256,32], index: 12, kind: input, shape index: {}]
  %s13 = inlined_call_operand.vmem [shape: f32[32,256], index: 13, kind: input, shape index: {}]
  %s14 = inlined_call_operand.vmem [shape: f32[4,32], index: 14, kind: input, shape index: {}]
  %s15 = inlined_call_operand.vmem [shape: f32[32,4], index: 15, kind: input, shape index: {}]
  %s16 = inlined_call_operand.vmem [shape: bf16[64,32], index: 16, kind: input, shape index: {}]
  %s17 = inlined_call_operand.vmem [shape: bf16[1024,256], index: 17, kind: input, shape index: {}]
  %s18 = inlined_call_operand.vmem [shape: f32[256,64], index: 18, kind: input, shape index: {}]
  %s19 = inlined_call_operand.vmem [shape: f32[64,256], index: 19, kind: input, shape index: {}]
  %s20 = inlined_call_operand.vmem [shape: f32[4,16], index: 20, kind: input, shape index: {}]
  %s21 = inlined_call_operand.vmem [shape: f32[16,4], index: 21, kind: input, shape index: {}]
  %s22 = inlined_call_operand.vmem [shape: f32[16,256], index: 22, kind: input, shape index: {}]
  %s23 = inlined_call_operand.vmem [shape: f32[4,16], index: 23, kind: input, shape index: {}]
  %s24 = inlined_call_operand.<no memory space> [shape: f32[1,1], index: 24, kind: input, shape index: {}]
  %s25 = inlined_call_operand.vmem [shape: f32[2,4,1], index: 25, kind: output, shape index: {}]
  %s26 = sld [smem:[#allocation0]]
  $region133: #{critic_forward.1} parent=0
    _
  %s28 = ssub.s32 1, %s26
  %s29 = scalar_select 0, %s28, %s26
  %v30 = vstv %s24
  %31 = vst [vmem:[#allocation2] sm:$0x1] %v30
  loop: start=0, step=1, limit=4
  $region2: #{critic_forward.1} parent=0 // loop_pre_header
    _
  $region3: #{critic_forward.1} parent=0 // loop_header
    %s33 = sphi 0, %s37
    %p34 = scmp.ge.s32.totalorder %s33, 4
    %s43 = sphi 0, %s45
    %s46 = sphi 0, %s43
    %s47 = sphi 0, %s46
    %s63 = sphi 0, %s47
    %s67 = sphi 0, %s67
    %s69 = sphi 0, %s67
    %s70 = sphi 0, %s69
    %s84 = sphi 0, %s70
    %s88 = sphi 0, %s88
    %s90 = sphi 0, %s88
    %s91 = sphi 0, %s90
    %s105 = sphi 0, %s91
    %s109 = sphi 0, %s109
    %s111 = sphi 0, %s109
    %s112 = sphi 0, %s111
    %s126 = sphi 0, %s112
    %s130 = sphi 0, %s130
    %s132 = sphi 0, %s130
    %s133 = sphi 0, %s132
    %s147 = sphi 0, %s133
    %s151 = sphi 0, %s151
    %s153 = sphi 0, %s151
    %s154 = sphi 0, %s153
    %s168 = sphi 0, %s154
    %s172 = sphi 0, %s172
    %s174 = sphi 0, %s172
    %s175 = sphi 0, %s174
    %s189 = sphi 0, %s175
    %s193 = sphi 0, %s193
    %s195 = sphi 0, %s193
    %s196 = sphi 0, %s195
    %s210 = sphi 0, %s196
    %s214 = sphi 0, %s214
    %s216 = sphi 0, %s214
    %s217 = sphi 0, %s216
    %s231 = sphi 0, %s217
    %s235 = sphi 0, %s235
    %s237 = sphi 0, %s235
    %s238 = sphi 0, %s237
    %s252 = sphi 0, %s238
    %s256 = sphi 0, %s256
    %s258 = sphi 0, %s256
    %s259 = sphi 0, %s258
    %s273 = sphi 0, %s259
    %s277 = sphi 0, %s277
    %s279 = sphi 0, %s277
    %s280 = sphi 0, %s279
    %s294 = sphi 0, %s280
    %s298 = sphi 0, %s298
    %s300 = sphi 0, %s298
    %s301 = sphi 0, %s300
    %s315 = sphi 0, %s301
    %s319 = sphi 0, %s319
    %s321 = sphi 0, %s319
    %s322 = sphi 0, %s321
    %s336 = sphi 0, %s322
    %s340 = sphi 0, %s340
    %s342 = sphi 0, %s340
    %s343 = sphi 0, %s342
    %s357 = sphi 0, %s343
    %s361 = sphi 0, %s361
    %s363 = sphi 0, %s361
    %s364 = sphi 0, %s363
    %s378 = sphi 0, %s364
    %s382 = sphi 0, %s382
    %s384 = sphi 0, %s382
    %s385 = sphi 0, %s384
    %s399 = sphi 0, %s385
    %s403 = sphi 0, %s403
    %s405 = sphi 0, %s403
    %s406 = sphi 0, %s405
    %s420 = sphi 0, %s406
    %s424 = sphi 0, %s424
    %s426 = sphi 0, %s424
    %s427 = sphi 0, %s426
    %s441 = sphi 0, %s427
    %s445 = sphi 0, %s445
    %s447 = sphi 0, %s445
    %s448 = sphi 0, %s447
    %s462 = sphi 0, %s448
    %s466 = sphi 0, %s466
    %s468 = sphi 0, %s466
    %s469 = sphi 0, %s468
    %s483 = sphi 0, %s469
    %s487 = sphi 0, %s487
    %s489 = sphi 0, %s487
    %s490 = sphi 0, %s489
    %s504 = sphi 0, %s490
    %s508 = sphi 0, %s508
    %s510 = sphi 0, %s508
    %s511 = sphi 0, %s510
    %s525 = sphi 0, %s511
    %s529 = sphi 0, %s529
    %s531 = sphi 0, %s529
    %s532 = sphi 0, %s531
    %s546 = sphi 0, %s532
    %s550 = sphi 0, %s550
    %s552 = sphi 0, %s550
    %s553 = sphi 0, %s552
    %s567 = sphi 0, %s553
    %s573 = sphi 0, %s575
    %s576 = sphi 0, %s573
    %s577 = sphi 0, %s576
    %s593 = sphi 0, %s577
  $region4: #{critic_forward.1} parent=0 // loop_header_branch
    %36 = sbr.rel (%p34) target = $region8
  $region5: #{critic_forward.1} parent=0 // loop_body
    %s38 = ssub.s32 %s33, 1
    %s39 = ssub.s32 %s33, 2
    %s40 = sadd.s32 %s33, 1
    %s41 = ssub.s32 %s33, %s40
    %p42 = scmp.eq.s32.totalorder %s41, 0
    %s44 = sadd.s32 %s43, 1
    %s45 = scalar_select %p42, %s43, %s44
    %p48 = pneg %p42
    %p49 = scmp.eq.s32.totalorder %s33, 1
    %p50 = por %p48, %p49
    %p51 = scmp.ne.s32.totalorder %s43, %s46
    %p52 = scmp.eq.s32.totalorder %s33, 0
    %p53 = por %p51, %p52
    %p54 = scmp.ne.s32.totalorder %s43, %s46
    %p55 = scmp.eq.s32.totalorder %s38, 1
    %p56 = por %p54, %p55
    %p57 = scmp.ne.s32.totalorder %s46, %s47
    %p58 = scmp.eq.s32.totalorder %s38, 0
    %p59 = por %p57, %p58
    %p60 = scmp.ne.s32.totalorder %s46, %s47
    %p61 = scmp.eq.s32.totalorder %s39, 1
    %p62 = por %p60, %p61
    %p64 = scmp.ne.s32.totalorder %s47, %s63
    %p65 = scmp.eq.s32.totalorder %s39, 0
    %p66 = por %p64, %p65
    %s68 = sadd.s32 %s67, 1
    %p71 = scmp.eq.s32.totalorder %s33, 1
    %p72 = scmp.ne.s32.totalorder %s67, %s69
    %p73 = scmp.eq.s32.totalorder %s33, 0
    %p74 = por %p72, %p73
    %p75 = scmp.ne.s32.totalorder %s67, %s69
    %p76 = scmp.eq.s32.totalorder %s38, 1
    %p77 = por %p75, %p76
    %p78 = scmp.ne.s32.totalorder %s69, %s70
    %p79 = scmp.eq.s32.totalorder %s38, 0
    %p80 = por %p78, %p79
    %p81 = scmp.ne.s32.totalorder %s69, %s70
    %p82 = scmp.eq.s32.totalorder %s39, 1
    %p83 = por %p81, %p82
    %p85 = scmp.ne.s32.totalorder %s70, %s84
    %p86 = scmp.eq.s32.totalorder %s39, 0
    %p87 = por %p85, %p86
    %s89 = sadd.s32 %s88, 1
    %p92 = scmp.eq.s32.totalorder %s33, 1
    %p93 = scmp.ne.s32.totalorder %s88, %s90
    %p94 = scmp.eq.s32.totalorder %s33, 0
    %p95 = por %p93, %p94
    %p96 = scmp.ne.s32.totalorder %s88, %s90
    %p97 = scmp.eq.s32.totalorder %s38, 1
    %p98 = por %p96, %p97
    %p99 = scmp.ne.s32.totalorder %s90, %s91
    %p100 = scmp.eq.s32.totalorder %s38, 0
    %p101 = por %p99, %p100
    %p102 = scmp.ne.s32.totalorder %s90, %s91
    %p103 = scmp.eq.s32.totalorder %s39, 1
    %p104 = por %p102, %p103
    %p106 = scmp.ne.s32.totalorder %s91, %s105
    %p107 = scmp.eq.s32.totalorder %s39, 0
    %p108 = por %p106, %p107
    %s110 = sadd.s32 %s109, 1
    %p113 = scmp.eq.s32.totalorder %s33, 1
    %p114 = scmp.ne.s32.totalorder %s109, %s111
    %p115 = scmp.eq.s32.totalorder %s33, 0
    %p116 = por %p114, %p115
    %p117 = scmp.ne.s32.totalorder %s109, %s111
    %p118 = scmp.eq.s32.totalorder %s38, 1
    %p119 = por %p117, %p118
    %p120 = scmp.ne.s32.totalorder %s111, %s112
    %p121 = scmp.eq.s32.totalorder %s38, 0
    %p122 = por %p120, %p121
    %p123 = scmp.ne.s32.totalorder %s111, %s112
    %p124 = scmp.eq.s32.totalorder %s39, 1
    %p125 = por %p123, %p124
    %p127 = scmp.ne.s32.totalorder %s112, %s126
    %p128 = scmp.eq.s32.totalorder %s39, 0
    %p129 = por %p127, %p128
    %s131 = sadd.s32 %s130, 1
    %p134 = scmp.eq.s32.totalorder %s33, 1
    %p135 = scmp.ne.s32.totalorder %s130, %s132
    %p136 = scmp.eq.s32.totalorder %s33, 0
    %p137 = por %p135, %p136
    %p138 = scmp.ne.s32.totalorder %s130, %s132
    %p139 = scmp.eq.s32.totalorder %s38, 1
    %p140 = por %p138, %p139
    %p141 = scmp.ne.s32.totalorder %s132, %s133
    %p142 = scmp.eq.s32.totalorder %s38, 0
    %p143 = por %p141, %p142
    %p144 = scmp.ne.s32.totalorder %s132, %s133
    %p145 = scmp.eq.s32.totalorder %s39, 1
    %p146 = por %p144, %p145
    %p148 = scmp.ne.s32.totalorder %s133, %s147
    %p149 = scmp.eq.s32.totalorder %s39, 0
    %p150 = por %p148, %p149
    %s152 = sadd.s32 %s151, 1
    %p155 = scmp.eq.s32.totalorder %s33, 1
    %p156 = scmp.ne.s32.totalorder %s151, %s153
    %p157 = scmp.eq.s32.totalorder %s33, 0
    %p158 = por %p156, %p157
    %p159 = scmp.ne.s32.totalorder %s151, %s153
    %p160 = scmp.eq.s32.totalorder %s38, 1
    %p161 = por %p159, %p160
    %p162 = scmp.ne.s32.totalorder %s153, %s154
    %p163 = scmp.eq.s32.totalorder %s38, 0
    %p164 = por %p162, %p163
    %p165 = scmp.ne.s32.totalorder %s153, %s154
    %p166 = scmp.eq.s32.totalorder %s39, 1
    %p167 = por %p165, %p166
    %p169 = scmp.ne.s32.totalorder %s154, %s168
    %p170 = scmp.eq.s32.totalorder %s39, 0
    %p171 = por %p169, %p170
    %s173 = sadd.s32 %s172, 1
    %p176 = scmp.eq.s32.totalorder %s33, 1
    %p177 = scmp.ne.s32.totalorder %s172, %s174
    %p178 = scmp.eq.s32.totalorder %s33, 0
    %p179 = por %p177, %p178
    %p180 = scmp.ne.s32.totalorder %s172, %s174
    %p181 = scmp.eq.s32.totalorder %s38, 1
    %p182 = por %p180, %p181
    %p183 = scmp.ne.s32.totalorder %s174, %s175
    %p184 = scmp.eq.s32.totalorder %s38, 0
    %p185 = por %p183, %p184
    %p186 = scmp.ne.s32.totalorder %s174, %s175
    %p187 = scmp.eq.s32.totalorder %s39, 1
    %p188 = por %p186, %p187
    %p190 = scmp.ne.s32.totalorder %s175, %s189
    %p191 = scmp.eq.s32.totalorder %s39, 0
    %p192 = por %p190, %p191
    %s194 = sadd.s32 %s193, 1
    %p197 = scmp.eq.s32.totalorder %s33, 1
    %p198 = scmp.ne.s32.totalorder %s193, %s195
    %p199 = scmp.eq.s32.totalorder %s33, 0
    %p200 = por %p198, %p199
    %p201 = scmp.ne.s32.totalorder %s193, %s195
    %p202 = scmp.eq.s32.totalorder %s38, 1
    %p203 = por %p201, %p202
    %p204 = scmp.ne.s32.totalorder %s195, %s196
    %p205 = scmp.eq.s32.totalorder %s38, 0
    %p206 = por %p204, %p205
    %p207 = scmp.ne.s32.totalorder %s195, %s196
    %p208 = scmp.eq.s32.totalorder %s39, 1
    %p209 = por %p207, %p208
    %p211 = scmp.ne.s32.totalorder %s196, %s210
    %p212 = scmp.eq.s32.totalorder %s39, 0
    %p213 = por %p211, %p212
    %s215 = sadd.s32 %s214, 1
    %p218 = scmp.eq.s32.totalorder %s33, 1
    %p219 = scmp.ne.s32.totalorder %s214, %s216
    %p220 = scmp.eq.s32.totalorder %s33, 0
    %p221 = por %p219, %p220
    %p222 = scmp.ne.s32.totalorder %s214, %s216
    %p223 = scmp.eq.s32.totalorder %s38, 1
    %p224 = por %p222, %p223
    %p225 = scmp.ne.s32.totalorder %s216, %s217
    %p226 = scmp.eq.s32.totalorder %s38, 0
    %p227 = por %p225, %p226
    %p228 = scmp.ne.s32.totalorder %s216, %s217
    %p229 = scmp.eq.s32.totalorder %s39, 1
    %p230 = por %p228, %p229
    %p232 = scmp.ne.s32.totalorder %s217, %s231
    %p233 = scmp.eq.s32.totalorder %s39, 0
    %p234 = por %p232, %p233
    %s236 = sadd.s32 %s235, 1
    %p239 = scmp.eq.s32.totalorder %s33, 1
    %p240 = scmp.ne.s32.totalorder %s235, %s237
    %p241 = scmp.eq.s32.totalorder %s33, 0
    %p242 = por %p240, %p241
    %p243 = scmp.ne.s32.totalorder %s235, %s237
    %p244 = scmp.eq.s32.totalorder %s38, 1
    %p245 = por %p243, %p244
    %p246 = scmp.ne.s32.totalorder %s237, %s238
    %p247 = scmp.eq.s32.totalorder %s38, 0
    %p248 = por %p246, %p247
    %p249 = scmp.ne.s32.totalorder %s237, %s238
    %p250 = scmp.eq.s32.totalorder %s39, 1
    %p251 = por %p249, %p250
    %p253 = scmp.ne.s32.totalorder %s238, %s252
    %p254 = scmp.eq.s32.totalorder %s39, 0
    %p255 = por %p253, %p254
    %s257 = sadd.s32 %s256, 1
    %p260 = scmp.eq.s32.totalorder %s33, 1
    %p261 = scmp.ne.s32.totalorder %s256, %s258
    %p262 = scmp.eq.s32.totalorder %s33, 0
    %p263 = por %p261, %p262
    %p264 = scmp.ne.s32.totalorder %s256, %s258
    %p265 = scmp.eq.s32.totalorder %s38, 1
    %p266 = por %p264, %p265
    %p267 = scmp.ne.s32.totalorder %s258, %s259
    %p268 = scmp.eq.s32.totalorder %s38, 0
    %p269 = por %p267, %p268
    %p270 = scmp.ne.s32.totalorder %s258, %s259
    %p271 = scmp.eq.s32.totalorder %s39, 1
    %p272 = por %p270, %p271
    %p274 = scmp.ne.s32.totalorder %s259, %s273
    %p275 = scmp.eq.s32.totalorder %s39, 0
    %p276 = por %p274, %p275
    %s278 = sadd.s32 %s277, 1
    %p281 = scmp.eq.s32.totalorder %s33, 1
    %p282 = scmp.ne.s32.totalorder %s277, %s279
    %p283 = scmp.eq.s32.totalorder %s33, 0
    %p284 = por %p282, %p283
    %p285 = scmp.ne.s32.totalorder %s277, %s279
    %p286 = scmp.eq.s32.totalorder %s38, 1
    %p287 = por %p285, %p286
    %p288 = scmp.ne.s32.totalorder %s279, %s280
    %p289 = scmp.eq.s32.totalorder %s38, 0
    %p290 = por %p288, %p289
    %p291 = scmp.ne.s32.totalorder %s279, %s280
    %p292 = scmp.eq.s32.totalorder %s39, 1
    %p293 = por %p291, %p292
    %p295 = scmp.ne.s32.totalorder %s280, %s294
    %p296 = scmp.eq.s32.totalorder %s39, 0
    %p297 = por %p295, %p296
    %s299 = sadd.s32 %s298, 1
    %p302 = scmp.eq.s32.totalorder %s33, 1
    %p303 = scmp.ne.s32.totalorder %s298, %s300
    %p304 = scmp.eq.s32.totalorder %s33, 0
    %p305 = por %p303, %p304
    %p306 = scmp.ne.s32.totalorder %s298, %s300
    %p307 = scmp.eq.s32.totalorder %s38, 1
    %p308 = por %p306, %p307
    %p309 = scmp.ne.s32.totalorder %s300, %s301
    %p310 = scmp.eq.s32.totalorder %s38, 0
    %p311 = por %p309, %p310
    %p312 = scmp.ne.s32.totalorder %s300, %s301
    %p313 = scmp.eq.s32.totalorder %s39, 1
    %p314 = por %p312, %p313
    %p316 = scmp.ne.s32.totalorder %s301, %s315
    %p317 = scmp.eq.s32.totalorder %s39, 0
    %p318 = por %p316, %p317
    %s320 = sadd.s32 %s319, 1
    %p323 = scmp.eq.s32.totalorder %s33, 1
    %p324 = scmp.ne.s32.totalorder %s319, %s321
    %p325 = scmp.eq.s32.totalorder %s33, 0
    %p326 = por %p324, %p325
    %p327 = scmp.ne.s32.totalorder %s319, %s321
    %p328 = scmp.eq.s32.totalorder %s38, 1
    %p329 = por %p327, %p328
    %p330 = scmp.ne.s32.totalorder %s321, %s322
    %p331 = scmp.eq.s32.totalorder %s38, 0
    %p332 = por %p330, %p331
    %p333 = scmp.ne.s32.totalorder %s321, %s322
    %p334 = scmp.eq.s32.totalorder %s39, 1
    %p335 = por %p333, %p334
    %p337 = scmp.ne.s32.totalorder %s322, %s336
    %p338 = scmp.eq.s32.totalorder %s39, 0
    %p339 = por %p337, %p338
    %s341 = sadd.s32 %s340, 1
    %p344 = scmp.eq.s32.totalorder %s33, 1
    %p345 = scmp.ne.s32.totalorder %s340, %s342
    %p346 = scmp.eq.s32.totalorder %s33, 0
    %p347 = por %p345, %p346
    %p348 = scmp.ne.s32.totalorder %s340, %s342
    %p349 = scmp.eq.s32.totalorder %s38, 1
    %p350 = por %p348, %p349
    %p351 = scmp.ne.s32.totalorder %s342, %s343
    %p352 = scmp.eq.s32.totalorder %s38, 0
    %p353 = por %p351, %p352
    %p354 = scmp.ne.s32.totalorder %s342, %s343
    %p355 = scmp.eq.s32.totalorder %s39, 1
    %p356 = por %p354, %p355
    %p358 = scmp.ne.s32.totalorder %s343, %s357
    %p359 = scmp.eq.s32.totalorder %s39, 0
    %p360 = por %p358, %p359
    %s362 = sadd.s32 %s361, 1
    %p365 = scmp.eq.s32.totalorder %s33, 1
    %p366 = scmp.ne.s32.totalorder %s361, %s363
    %p367 = scmp.eq.s32.totalorder %s33, 0
    %p368 = por %p366, %p367
    %p369 = scmp.ne.s32.totalorder %s361, %s363
    %p370 = scmp.eq.s32.totalorder %s38, 1
    %p371 = por %p369, %p370
    %p372 = scmp.ne.s32.totalorder %s363, %s364
    %p373 = scmp.eq.s32.totalorder %s38, 0
    %p374 = por %p372, %p373
    %p375 = scmp.ne.s32.totalorder %s363, %s364
    %p376 = scmp.eq.s32.totalorder %s39, 1
    %p377 = por %p375, %p376
    %p379 = scmp.ne.s32.totalorder %s364, %s378
    %p380 = scmp.eq.s32.totalorder %s39, 0
    %p381 = por %p379, %p380
    %s383 = sadd.s32 %s382, 1
    %p386 = scmp.eq.s32.totalorder %s33, 1
    %p387 = scmp.ne.s32.totalorder %s382, %s384
    %p388 = scmp.eq.s32.totalorder %s33, 0
    %p389 = por %p387, %p388
    %p390 = scmp.ne.s32.totalorder %s382, %s384
    %p391 = scmp.eq.s32.totalorder %s38, 1
    %p392 = por %p390, %p391
    %p393 = scmp.ne.s32.totalorder %s384, %s385
    %p394 = scmp.eq.s32.totalorder %s38, 0
    %p395 = por %p393, %p394
    %p396 = scmp.ne.s32.totalorder %s384, %s385
    %p397 = scmp.eq.s32.totalorder %s39, 1
    %p398 = por %p396, %p397
    %p400 = scmp.ne.s32.totalorder %s385, %s399
    %p401 = scmp.eq.s32.totalorder %s39, 0
    %p402 = por %p400, %p401
    %s404 = sadd.s32 %s403, 1
    %p407 = scmp.eq.s32.totalorder %s33, 1
    %p408 = scmp.ne.s32.totalorder %s403, %s405
    %p409 = scmp.eq.s32.totalorder %s33, 0
    %p410 = por %p408, %p409
    %p411 = scmp.ne.s32.totalorder %s403, %s405
    %p412 = scmp.eq.s32.totalorder %s38, 1
    %p413 = por %p411, %p412
    %p414 = scmp.ne.s32.totalorder %s405, %s406
    %p415 = scmp.eq.s32.totalorder %s38, 0
    %p416 = por %p414, %p415
    %p417 = scmp.ne.s32.totalorder %s405, %s406
    %p418 = scmp.eq.s32.totalorder %s39, 1
    %p419 = por %p417, %p418
    %p421 = scmp.ne.s32.totalorder %s406, %s420
    %p422 = scmp.eq.s32.totalorder %s39, 0
    %p423 = por %p421, %p422
    %s425 = sadd.s32 %s424, 1
    %p428 = scmp.eq.s32.totalorder %s33, 1
    %p429 = scmp.ne.s32.totalorder %s424, %s426
    %p430 = scmp.eq.s32.totalorder %s33, 0
    %p431 = por %p429, %p430
    %p432 = scmp.ne.s32.totalorder %s424, %s426
    %p433 = scmp.eq.s32.totalorder %s38, 1
    %p434 = por %p432, %p433
    %p435 = scmp.ne.s32.totalorder %s426, %s427
    %p436 = scmp.eq.s32.totalorder %s38, 0
    %p437 = por %p435, %p436
    %p438 = scmp.ne.s32.totalorder %s426, %s427
    %p439 = scmp.eq.s32.totalorder %s39, 1
    %p440 = por %p438, %p439
    %p442 = scmp.ne.s32.totalorder %s427, %s441
    %p443 = scmp.eq.s32.totalorder %s39, 0
    %p444 = por %p442, %p443
    %s446 = sadd.s32 %s445, 1
    %p449 = scmp.eq.s32.totalorder %s33, 1
    %p450 = scmp.ne.s32.totalorder %s445, %s447
    %p451 = scmp.eq.s32.totalorder %s33, 0
    %p452 = por %p450, %p451
    %p453 = scmp.ne.s32.totalorder %s445, %s447
    %p454 = scmp.eq.s32.totalorder %s38, 1
    %p455 = por %p453, %p454
    %p456 = scmp.ne.s32.totalorder %s447, %s448
    %p457 = scmp.eq.s32.totalorder %s38, 0
    %p458 = por %p456, %p457
    %p459 = scmp.ne.s32.totalorder %s447, %s448
    %p460 = scmp.eq.s32.totalorder %s39, 1
    %p461 = por %p459, %p460
    %p463 = scmp.ne.s32.totalorder %s448, %s462
    %p464 = scmp.eq.s32.totalorder %s39, 0
    %p465 = por %p463, %p464
    %s467 = sadd.s32 %s466, 1
    %p470 = scmp.eq.s32.totalorder %s33, 1
    %p471 = scmp.ne.s32.totalorder %s466, %s468
    %p472 = scmp.eq.s32.totalorder %s33, 0
    %p473 = por %p471, %p472
    %p474 = scmp.ne.s32.totalorder %s466, %s468
    %p475 = scmp.eq.s32.totalorder %s38, 1
    %p476 = por %p474, %p475
    %p477 = scmp.ne.s32.totalorder %s468, %s469
    %p478 = scmp.eq.s32.totalorder %s38, 0
    %p479 = por %p477, %p478
    %p480 = scmp.ne.s32.totalorder %s468, %s469
    %p481 = scmp.eq.s32.totalorder %s39, 1
    %p482 = por %p480, %p481
    %p484 = scmp.ne.s32.totalorder %s469, %s483
    %p485 = scmp.eq.s32.totalorder %s39, 0
    %p486 = por %p484, %p485
    %s488 = sadd.s32 %s487, 1
    %p491 = scmp.eq.s32.totalorder %s33, 1
    %p492 = scmp.ne.s32.totalorder %s487, %s489
    %p493 = scmp.eq.s32.totalorder %s33, 0
    %p494 = por %p492, %p493
    %p495 = scmp.ne.s32.totalorder %s487, %s489
    %p496 = scmp.eq.s32.totalorder %s38, 1
    %p497 = por %p495, %p496
    %p498 = scmp.ne.s32.totalorder %s489, %s490
    %p499 = scmp.eq.s32.totalorder %s38, 0
    %p500 = por %p498, %p499
    %p501 = scmp.ne.s32.totalorder %s489, %s490
    %p502 = scmp.eq.s32.totalorder %s39, 1
    %p503 = por %p501, %p502
    %p505 = scmp.ne.s32.totalorder %s490, %s504
    %p506 = scmp.eq.s32.totalorder %s39, 0
    %p507 = por %p505, %p506
    %s509 = sadd.s32 %s508, 1
    %p512 = scmp.eq.s32.totalorder %s33, 1
    %p513 = scmp.ne.s32.totalorder %s508, %s510
    %p514 = scmp.eq.s32.totalorder %s33, 0
    %p515 = por %p513, %p514
    %p516 = scmp.ne.s32.totalorder %s508, %s510
    %p517 = scmp.eq.s32.totalorder %s38, 1
    %p518 = por %p516, %p517
    %p519 = scmp.ne.s32.totalorder %s510, %s511
    %p520 = scmp.eq.s32.totalorder %s38, 0
    %p521 = por %p519, %p520
    %p522 = scmp.ne.s32.totalorder %s510, %s511
    %p523 = scmp.eq.s32.totalorder %s39, 1
    %p524 = por %p522, %p523
    %p526 = scmp.ne.s32.totalorder %s511, %s525
    %p527 = scmp.eq.s32.totalorder %s39, 0
    %p528 = por %p526, %p527
    %s530 = sadd.s32 %s529, 1
    %p533 = scmp.eq.s32.totalorder %s33, 1
    %p534 = scmp.ne.s32.totalorder %s529, %s531
    %p535 = scmp.eq.s32.totalorder %s33, 0
    %p536 = por %p534, %p535
    %p537 = scmp.ne.s32.totalorder %s529, %s531
    %p538 = scmp.eq.s32.totalorder %s38, 1
    %p539 = por %p537, %p538
    %p540 = scmp.ne.s32.totalorder %s531, %s532
    %p541 = scmp.eq.s32.totalorder %s38, 0
    %p542 = por %p540, %p541
    %p543 = scmp.ne.s32.totalorder %s531, %s532
    %p544 = scmp.eq.s32.totalorder %s39, 1
    %p545 = por %p543, %p544
    %p547 = scmp.ne.s32.totalorder %s532, %s546
    %p548 = scmp.eq.s32.totalorder %s39, 0
    %p549 = por %p547, %p548
    %s551 = sadd.s32 %s550, 1
    %p554 = scmp.eq.s32.totalorder %s33, 1
    %p555 = scmp.ne.s32.totalorder %s550, %s552
    %p556 = scmp.eq.s32.totalorder %s33, 0
    %p557 = por %p555, %p556
    %p558 = scmp.ne.s32.totalorder %s550, %s552
    %p559 = scmp.eq.s32.totalorder %s38, 1
    %p560 = por %p558, %p559
    %p561 = scmp.ne.s32.totalorder %s552, %s553
    %p562 = scmp.eq.s32.totalorder %s38, 0
    %p563 = por %p561, %p562
    %p564 = scmp.ne.s32.totalorder %s552, %s553
    %p565 = scmp.eq.s32.totalorder %s39, 1
    %p566 = por %p564, %p565
    %p568 = scmp.ne.s32.totalorder %s553, %s567
    %p569 = scmp.eq.s32.totalorder %s39, 0
    %p570 = por %p568, %p569
    %s571 = ssub.s32 %s33, %s40
    %p572 = scmp.eq.s32.totalorder %s571, 0
    %s574 = sadd.s32 %s573, 1
    %s575 = scalar_select %p572, %s573, %s574
    %p578 = pneg %p572
    %p579 = scmp.eq.s32.totalorder %s33, 1
    %p580 = por %p578, %p579
    %p581 = scmp.ne.s32.totalorder %s573, %s576
    %p582 = scmp.eq.s32.totalorder %s33, 0
    %p583 = por %p581, %p582
    %p584 = scmp.ne.s32.totalorder %s573, %s576
    %p585 = scmp.eq.s32.totalorder %s38, 1
    %p586 = por %p584, %p585
    %p587 = scmp.ne.s32.totalorder %s576, %s577
    %p588 = scmp.eq.s32.totalorder %s38, 0
    %p589 = por %p587, %p588
    %p590 = scmp.ne.s32.totalorder %s576, %s577
    %p591 = scmp.eq.s32.totalorder %s39, 1
    %p592 = por %p590, %p591
    %p594 = scmp.ne.s32.totalorder %s577, %s593
    %p595 = scmp.eq.s32.totalorder %s39, 0
    %p596 = por %p594, %p595
    %p597 = scmp.le.s32.totalorder 1, %s33
    %p598 = scmp.lt.s32.totalorder %s33, 3
    %p599 = pnand %p597, %p598
    %p600 = pneg %p599
    // Predicated region
    $region9: #{critic_forward.1} parent=5 // pred_check
      _
    $region10: #{critic_forward.1} parent=5 // pred_check_branch
      %602 = sbr.rel (%p599) target = $region12
    $region11: #{critic_forward.1} parent=5 // pred_region
      %s603 = ssub.s32 %s33, 1
      // Predicated region
      $region13: #{critic_forward.1} parent=11 // pred_check
        %p604 = pneg %p80
      $region14: #{critic_forward.1} parent=11 // pred_check_branch
        %606 = sbr.rel (%p604) target = $region16
      $region15: #{critic_forward.1} parent=11 // pred_region
        _
      $region16: #{critic_forward.1} parent=11 // pred_fallthru
        _
      // Predicated region
      $region17: #{critic_forward.1} parent=11 // pred_check
        %p607 = pneg %p101
      $region18: #{critic_forward.1} parent=11 // pred_check_branch
        %609 = sbr.rel (%p607) target = $region20
      $region19: #{critic_forward.1} parent=11 // pred_region
        _
      $region20: #{critic_forward.1} parent=11 // pred_fallthru
        _
      // Predicated region
      $region21: #{critic_forward.1} parent=11 // pred_check
        %p610 = pneg %p122
      $region22: #{critic_forward.1} parent=11 // pred_check_branch
        %612 = sbr.rel (%p610) target = $region24
      $region23: #{critic_forward.1} parent=11 // pred_region
        _
      $region24: #{critic_forward.1} parent=11 // pred_fallthru
        _
      // Predicated region
      $region25: #{critic_forward.1} parent=11 // pred_check
        %p613 = pneg %p143
      $region26: #{critic_forward.1} parent=11 // pred_check_branch
        %615 = sbr.rel (%p613) target = $region28
      $region27: #{critic_forward.1} parent=11 // pred_region
        _
      $region28: #{critic_forward.1} parent=11 // pred_fallthru
        _
      // Predicated region
      $region29: #{critic_forward.1} parent=11 // pred_check
        %p616 = pneg %p164
      $region30: #{critic_forward.1} parent=11 // pred_check_branch
        %618 = sbr.rel (%p616) target = $region32
      $region31: #{critic_forward.1} parent=11 // pred_region
        _
      $region32: #{critic_forward.1} parent=11 // pred_fallthru
        _
      // Predicated region
      $region33: #{critic_forward.1} parent=11 // pred_check
        %p619 = pneg %p185
      $region34: #{critic_forward.1} parent=11 // pred_check_branch
        %621 = sbr.rel (%p619) target = $region36
      $region35: #{critic_forward.1} parent=11 // pred_region
        _
      $region36: #{critic_forward.1} parent=11 // pred_fallthru
        _
      // Predicated region
      $region37: #{critic_forward.1} parent=11 // pred_check
        %p622 = pneg %p206
      $region38: #{critic_forward.1} parent=11 // pred_check_branch
        %624 = sbr.rel (%p622) target = $region40
      $region39: #{critic_forward.1} parent=11 // pred_region
        _
      $region40: #{critic_forward.1} parent=11 // pred_fallthru
        _
      // Predicated region
      $region41: #{critic_forward.1} parent=11 // pred_check
        %p625 = pneg %p227
      $region42: #{critic_forward.1} parent=11 // pred_check_branch
        %627 = sbr.rel (%p625) target = $region44
      $region43: #{critic_forward.1} parent=11 // pred_region
        _
      $region44: #{critic_forward.1} parent=11 // pred_fallthru
        _
      // Predicated region
      $region45: #{critic_forward.1} parent=11 // pred_check
        %p628 = pneg %p248
      $region46: #{critic_forward.1} parent=11 // pred_check_branch
        %630 = sbr.rel (%p628) target = $region48
      $region47: #{critic_forward.1} parent=11 // pred_region
        _
      $region48: #{critic_forward.1} parent=11 // pred_fallthru
        _
      // Predicated region
      $region49: #{critic_forward.1} parent=11 // pred_check
        %p631 = pneg %p269
      $region50: #{critic_forward.1} parent=11 // pred_check_branch
        %633 = sbr.rel (%p631) target = $region52
      $region51: #{critic_forward.1} parent=11 // pred_region
        _
      $region52: #{critic_forward.1} parent=11 // pred_fallthru
        _
      // Predicated region
      $region53: #{critic_forward.1} parent=11 // pred_check
        %p634 = pneg %p290
      $region54: #{critic_forward.1} parent=11 // pred_check_branch
        %636 = sbr.rel (%p634) target = $region56
      $region55: #{critic_forward.1} parent=11 // pred_region
        _
      $region56: #{critic_forward.1} parent=11 // pred_fallthru
        _
      // Predicated region
      $region57: #{critic_forward.1} parent=11 // pred_check
        %p637 = pneg %p311
      $region58: #{critic_forward.1} parent=11 // pred_check_branch
        %639 = sbr.rel (%p637) target = $region60
      $region59: #{critic_forward.1} parent=11 // pred_region
        _
      $region60: #{critic_forward.1} parent=11 // pred_fallthru
        _
      // Predicated region
      $region61: #{critic_forward.1} parent=11 // pred_check
        %p640 = pneg %p332
      $region62: #{critic_forward.1} parent=11 // pred_check_branch
        %642 = sbr.rel (%p640) target = $region64
      $region63: #{critic_forward.1} parent=11 // pred_region
        _
      $region64: #{critic_forward.1} parent=11 // pred_fallthru
        _
      // Predicated region
      $region65: #{critic_forward.1} parent=11 // pred_check
        %p643 = pneg %p353
      $region66: #{critic_forward.1} parent=11 // pred_check_branch
        %645 = sbr.rel (%p643) target = $region68
      $region67: #{critic_forward.1} parent=11 // pred_region
        _
      $region68: #{critic_forward.1} parent=11 // pred_fallthru
        _
      // Predicated region
      $region69: #{critic_forward.1} parent=11 // pred_check
        %p646 = pneg %p374
      $region70: #{critic_forward.1} parent=11 // pred_check_branch
        %648 = sbr.rel (%p646) target = $region72
      $region71: #{critic_forward.1} parent=11 // pred_region
        _
      $region72: #{critic_forward.1} parent=11 // pred_fallthru
        _
      // Predicated region
      $region73: #{critic_forward.1} parent=11 // pred_check
        %p649 = pneg %p395
      $region74: #{critic_forward.1} parent=11 // pred_check_branch
        %651 = sbr.rel (%p649) target = $region76
      $region75: #{critic_forward.1} parent=11 // pred_region
        _
      $region76: #{critic_forward.1} parent=11 // pred_fallthru
        _
      // Predicated region
      $region77: #{critic_forward.1} parent=11 // pred_check
        %p652 = pneg %p416
      $region78: #{critic_forward.1} parent=11 // pred_check_branch
        %654 = sbr.rel (%p652) target = $region80
      $region79: #{critic_forward.1} parent=11 // pred_region
        _
      $region80: #{critic_forward.1} parent=11 // pred_fallthru
        _
      // Predicated region
      $region81: #{critic_forward.1} parent=11 // pred_check
        %p655 = pneg %p437
      $region82: #{critic_forward.1} parent=11 // pred_check_branch
        %657 = sbr.rel (%p655) target = $region84
      $region83: #{critic_forward.1} parent=11 // pred_region
        _
      $region84: #{critic_forward.1} parent=11 // pred_fallthru
        _
      // Predicated region
      $region85: #{critic_forward.1} parent=11 // pred_check
        %p658 = pneg %p458
      $region86: #{critic_forward.1} parent=11 // pred_check_branch
        %660 = sbr.rel (%p658) target = $region88
      $region87: #{critic_forward.1} parent=11 // pred_region
        _
      $region88: #{critic_forward.1} parent=11 // pred_fallthru
        _
      // Predicated region
      $region89: #{critic_forward.1} parent=11 // pred_check
        %p661 = pneg %p479
      $region90: #{critic_forward.1} parent=11 // pred_check_branch
        %663 = sbr.rel (%p661) target = $region92
      $region91: #{critic_forward.1} parent=11 // pred_region
        _
      $region92: #{critic_forward.1} parent=11 // pred_fallthru
        _
      // Predicated region
      $region93: #{critic_forward.1} parent=11 // pred_check
        %p664 = pneg %p500
      $region94: #{critic_forward.1} parent=11 // pred_check_branch
        %666 = sbr.rel (%p664) target = $region96
      $region95: #{critic_forward.1} parent=11 // pred_region
        _
      $region96: #{critic_forward.1} parent=11 // pred_fallthru
        _
      // Predicated region
      $region97: #{critic_forward.1} parent=11 // pred_check
        %p667 = pneg %p521
      $region98: #{critic_forward.1} parent=11 // pred_check_branch
        %669 = sbr.rel (%p667) target = $region100
      $region99: #{critic_forward.1} parent=11 // pred_region
        _
      $region100: #{critic_forward.1} parent=11 // pred_fallthru
        _
      // Predicated region
      $region101: #{critic_forward.1} parent=11 // pred_check
        %p670 = pneg %p542
      $region102: #{critic_forward.1} parent=11 // pred_check_branch
        %672 = sbr.rel (%p670) target = $region104
      $region103: #{critic_forward.1} parent=11 // pred_region
        _
      $region104: #{critic_forward.1} parent=11 // pred_fallthru
        _
      // Predicated region
      $region105: #{critic_forward.1} parent=11 // pred_check
        %p673 = pneg %p563
      $region106: #{critic_forward.1} parent=11 // pred_check_branch
        %675 = sbr.rel (%p673) target = $region108
      $region107: #{critic_forward.1} parent=11 // pred_region
        _
      $region108: #{critic_forward.1} parent=11 // pred_fallthru
        _
    $region12: #{critic_forward.1} parent=5 // pred_fallthru
      _
    %p676 = scmp.lt.s32.totalorder %s33, 2
    // Predicated region
    $region109: #{critic_forward.1} parent=5 // pred_check
      %p677 = pneg %p676
    $region110: #{critic_forward.1} parent=5 // pred_check_branch
      %679 = sbr.rel (%p677) target = $region112
    $region111: #{critic_forward.1} parent=5 // pred_region
      // Predicated region
      $region113: #{critic_forward.1} parent=111 // pred_check
        %p680 = pneg %p53
      $region114: #{critic_forward.1} parent=111 // pred_check_branch
        %682 = sbr.rel (%p680) target = $region116
      $region115: #{critic_forward.1} parent=111 // pred_region
        %s683 = smul.u32 32, %s33
        %p684 = scmp.lt.s32.totalorder %s683, 63
        %s685 = scalar_select %p684, %s683, 63
        %s686 = smul.addr %s685, 2
        %s687 = smul.addr %s686, 4
        %s688 = scalar_lea.vmem %s0, %s687
        %s689 = smul.u32 32, %s33
      $region116: #{critic_forward.1} parent=111 // pred_fallthru
        _
    $region112: #{critic_forward.1} parent=5 // pred_fallthru
      _
    %p690 = scmp.le.s32.totalorder 1, %s33
    %p691 = scmp.lt.s32.totalorder %s33, 3
    %p692 = pnand %p690, %p691
    %p693 = pneg %p692
    // Predicated region
    $region117: #{critic_forward.1} parent=5 // pred_check
      _
    $region118: #{critic_forward.1} parent=5 // pred_check_branch
      %695 = sbr.rel (%p692) target = $region120
    $region119: #{critic_forward.1} parent=5 // pred_region
      %s696 = ssub.s32 %s33, 1
      %s697 = smul.u32 32, %s38
      %p698 = scmp.lt.s32.totalorder %s697, 63
      %s699 = scalar_select %p698, %s697, 63
      %s700 = smul.addr %s699, 2
      %s701 = smul.addr %s700, 4
      %s702 = scalar_lea.vmem %s0, %s701
      %p703 = pneg %p59
      %p704 = pneg %p56
      %p705 = pneg %p80
      %p706 = pneg %p77
      %p707 = pneg %p101
      %p708 = pneg %p98
      %p709 = pneg %p122
      %p710 = pneg %p119
      %p711 = pneg %p143
      %p712 = pneg %p140
      %p713 = pneg %p164
      %p714 = pneg %p161
      %p715 = pneg %p185
      %p716 = pneg %p182
      %p717 = pneg %p206
      %p718 = pneg %p203
      %p719 = pneg %p227
      %p720 = pneg %p224
      %p721 = pneg %p248
      %p722 = pneg %p245
      %p723 = pneg %p269
      %p724 = pneg %p266
      %p725 = pneg %p290
      %p726 = pneg %p287
      %p727 = pneg %p311
      %p728 = pneg %p308
      %p729 = pneg %p332
      %p730 = pneg %p329
      %p731 = pneg %p353
      %p732 = pneg %p350
      %p733 = pneg %p374
      %p734 = pneg %p371
      %p735 = pneg %p395
      %p736 = pneg %p392
      %p737 = pneg %p416
      %p738 = pneg %p413
      %p739 = pneg %p437
      %p740 = pneg %p434
      %p741 = pneg %p458
      %p742 = pneg %p455
      %p743 = pneg %p479
      %p744 = pneg %p476
      %p745 = pneg %p500
      %p746 = pneg %p497
      %p747 = pneg %p521
      %p748 = pneg %p518
      %p749 = pneg %p542
      %p750 = pneg %p539
      %p751 = pneg %p563
      %p752 = pneg %p560
      %p753 = pneg %p589
      %p754 = pneg %p586
      %p755 = scmp.lt.s32.totalorder %s38, 1
      %s756 = scalar_select %p755, %s38, 1
      %s757 = smul.addr %s756, 4
      %s758 = scalar_lea.vmem %s25, %s757
      %s759 = smul.u32 32, %s38
      %p760 = scmp.lt.s32.totalorder %s759, 63
      %s761 = scalar_select %p760, %s759, 63
      %s762 = smul.addr %s761, 2
      %s763 = smul.addr %s762, 4
      %s764 = scalar_lea.vmem %s0, %s763
      %s765 = smul.u32 32, %s38
      %p766 = scmp.lt.s32.totalorder %s38, 1
      %s767 = scalar_select %p766, %s38, 1
      %s768 = smul.addr %s767, 4
      %s769 = scalar_lea.vmem %s25, %s768
      %v771 = vld [vmem:[%s764] sm:$0xff]
      %v772 = vld [vmem:[%s764 + $0x8] sm:$0xff]
      %v773 = vld [vmem:[%s764 + $0x10] sm:$0xff]
      %v774 = vld [vmem:[%s764 + $0x18] sm:$0xff]
      %v775 = vld [vmem:[%s764 + $0x20] sm:$0xff]
      %v776 = vld [vmem:[%s764 + $0x28] sm:$0xff]
      %v777 = vld [vmem:[%s764 + $0x30] sm:$0xff]
      %v778 = vld [vmem:[%s764 + $0x38] sm:$0xff]
      %v779 = vld [vmem:[%s764 + $0x40] sm:$0xff]
      %v780 = vld [vmem:[%s764 + $0x48] sm:$0xff]
      %v781 = vld [vmem:[%s764 + $0x50] sm:$0xff]
      %v782 = vld [vmem:[%s764 + $0x58] sm:$0xff]
      %v783 = vld [vmem:[%s764 + $0x60] sm:$0xff]
      %v784 = vld [vmem:[%s764 + $0x68] sm:$0xff]
      %v785 = vld [vmem:[%s764 + $0x70] sm:$0xff]
      %v786 = vld [vmem:[%s764 + $0x78] sm:$0xff]
      %v787 = vld [vmem:[%s764 + $0x80] sm:$0xff]
      %v788 = vld [vmem:[%s764 + $0x88] sm:$0xff]
      %v789 = vld [vmem:[%s764 + $0x90] sm:$0xff]
      %v790 = vld [vmem:[%s764 + $0x98] sm:$0xff]
      %v791 = vld [vmem:[%s764 + $0xa0] sm:$0xff]
      %v792 = vld [vmem:[%s764 + $0xa8] sm:$0xff]
      %v793 = vld [vmem:[%s764 + $0xb0] sm:$0xff]
      %v794 = vld [vmem:[%s764 + $0xb8] sm:$0xff]
      %v795 = vld [vmem:[%s764 + $0xc0] sm:$0xff]
      %v796 = vld [vmem:[%s764 + $0xc8] sm:$0xff]
      %v797 = vld [vmem:[%s764 + $0xd0] sm:$0xff]
      %v798 = vld [vmem:[%s764 + $0xd8] sm:$0xff]
      %v799 = vld [vmem:[%s764 + $0xe0] sm:$0xff]
      %v800 = vld [vmem:[%s764 + $0xe8] sm:$0xff]
      %v801 = vld [vmem:[%s764 + $0xf0] sm:$0xff]
      %v802 = vld [vmem:[%s764 + $0xf8] sm:$0xff]
      %v803 = vld [vmem:[%s1] sm:$0xff]
      %v804 = vld [vmem:[%s1 + $0x8] sm:$0xff]
      %v805 = vld [vmem:[%s1 + $0x10] sm:$0xff]
      %v806 = vld [vmem:[%s1 + $0x18] sm:$0xff]
      %v807 = vld [vmem:[%s1 + $0x20] sm:$0xff]
      %v808 = vld [vmem:[%s1 + $0x28] sm:$0xff]
      %v809 = vld [vmem:[%s1 + $0x30] sm:$0xff]
      %v810 = vld [vmem:[%s1 + $0x38] sm:$0xff]
      %v811 = vld [vmem:[%s1 + $0x40] sm:$0xff]
      %v812 = vld [vmem:[%s1 + $0x48] sm:$0xff]
      %v813 = vld [vmem:[%s1 + $0x50] sm:$0xff]
      %v814 = vld [vmem:[%s1 + $0x58] sm:$0xff]
      %v815 = vld [vmem:[%s1 + $0x60] sm:$0xff]
      %v816 = vld [vmem:[%s1 + $0x68] sm:$0xff]
      %v817 = vld [vmem:[%s1 + $0x70] sm:$0xff]
      %v818 = vld [vmem:[%s1 + $0x78] sm:$0xff]
      %v819 = vld [vmem:[%s1 + $0x80] sm:$0xff]
      %v820 = vld [vmem:[%s1 + $0x88] sm:$0xff]
      %v821 = vld [vmem:[%s1 + $0x90] sm:$0xff]
      %v822 = vld [vmem:[%s1 + $0x98] sm:$0xff]
      %v823 = vld [vmem:[%s1 + $0xa0] sm:$0xff]
      %v824 = vld [vmem:[%s1 + $0xa8] sm:$0xff]
      %v825 = vld [vmem:[%s1 + $0xb0] sm:$0xff]
      %v826 = vld [vmem:[%s1 + $0xb8] sm:$0xff]
      %v827 = vld [vmem:[%s1 + $0xc0] sm:$0xff]
      %v828 = vld [vmem:[%s1 + $0xc8] sm:$0xff]
      %v829 = vld [vmem:[%s1 + $0xd0] sm:$0xff]
      %v830 = vld [vmem:[%s1 + $0xd8] sm:$0xff]
      %v831 = vld [vmem:[%s1 + $0xe0] sm:$0xff]
      %v832 = vld [vmem:[%s1 + $0xe8] sm:$0xff]
      %v833 = vld [vmem:[%s1 + $0xf0] sm:$0xff]
      %v834 = vld [vmem:[%s1 + $0xf8] sm:$0xff]
      %v835 = vld [vmem:[%s1 + $0x100] sm:$0xff]
      %v836 = vld [vmem:[%s1 + $0x108] sm:$0xff]
      %v837 = vld [vmem:[%s1 + $0x110] sm:$0xff]
      %v838 = vld [vmem:[%s1 + $0x118] sm:$0xff]
      %v839 = vld [vmem:[%s1 + $0x120] sm:$0xff]
      %v840 = vld [vmem:[%s1 + $0x128] sm:$0xff]
      %v841 = vld [vmem:[%s1 + $0x130] sm:$0xff]
      %v842 = vld [vmem:[%s1 + $0x138] sm:$0xff]
      %v843 = vld [vmem:[%s1 + $0x140] sm:$0xff]
      %v844 = vld [vmem:[%s1 + $0x148] sm:$0xff]
      %v845 = vld [vmem:[%s1 + $0x150] sm:$0xff]
      %v846 = vld [vmem:[%s1 + $0x158] sm:$0xff]
      %v847 = vld [vmem:[%s1 + $0x160] sm:$0xff]
      %v848 = vld [vmem:[%s1 + $0x168] sm:$0xff]
      %v849 = vld [vmem:[%s1 + $0x170] sm:$0xff]
      %v850 = vld [vmem:[%s1 + $0x178] sm:$0xff]
      %v851 = vld [vmem:[%s1 + $0x180] sm:$0xff]
      %v852 = vld [vmem:[%s1 + $0x188] sm:$0xff]
      %v853 = vld [vmem:[%s1 + $0x190] sm:$0xff]
      %v854 = vld [vmem:[%s1 + $0x198] sm:$0xff]
      %v855 = vld [vmem:[%s1 + $0x1a0] sm:$0xff]
      %v856 = vld [vmem:[%s1 + $0x1a8] sm:$0xff]
      %v857 = vld [vmem:[%s1 + $0x1b0] sm:$0xff]
      %v858 = vld [vmem:[%s1 + $0x1b8] sm:$0xff]
      %v859 = vld [vmem:[%s1 + $0x1c0] sm:$0xff]
      %v860 = vld [vmem:[%s1 + $0x1c8] sm:$0xff]
      %v861 = vld [vmem:[%s1 + $0x1d0] sm:$0xff]
      %v862 = vld [vmem:[%s1 + $0x1d8] sm:$0xff]
      %v863 = vld [vmem:[%s1 + $0x1e0] sm:$0xff]
      %v864 = vld [vmem:[%s1 + $0x1e8] sm:$0xff]
      %v865 = vld [vmem:[%s1 + $0x1f0] sm:$0xff]
      %v866 = vld [vmem:[%s1 + $0x1f8] sm:$0xff]
      %v931 = vunpack.c.l.b16 %v803
      %v932 = vunpack.c.h.b16 %v803
      %v933 = vunpack.c.l.b16 %v804
      %v934 = vunpack.c.h.b16 %v804
      %v935 = vunpack.c.l.b16 %v805
      %v936 = vunpack.c.h.b16 %v805
      %v937 = vunpack.c.l.b16 %v806
      %v938 = vunpack.c.h.b16 %v806
      %v939 = vunpack.c.l.b16 %v807
      %v940 = vunpack.c.h.b16 %v807
      %v941 = vunpack.c.l.b16 %v808
      %v942 = vunpack.c.h.b16 %v808
      %v943 = vunpack.c.l.b16 %v809
      %v944 = vunpack.c.h.b16 %v809
      %v945 = vunpack.c.l.b16 %v810
      %v946 = vunpack.c.h.b16 %v810
      %v947 = vunpack.c.l.b16 %v811
      %v948 = vunpack.c.h.b16 %v811
      %v949 = vunpack.c.l.b16 %v812
      %v950 = vunpack.c.h.b16 %v812
      %v951 = vunpack.c.l.b16 %v813
      %v952 = vunpack.c.h.b16 %v813
      %v953 = vunpack.c.l.b16 %v814
      %v954 = vunpack.c.h.b16 %v814
      %v955 = vunpack.c.l.b16 %v815
      %v956 = vunpack.c.h.b16 %v815
      %v957 = vunpack.c.l.b16 %v816
      %v958 = vunpack.c.h.b16 %v816
      %v959 = vunpack.c.l.b16 %v817
      %v960 = vunpack.c.h.b16 %v817
      %v961 = vunpack.c.l.b16 %v818
      %v962 = vunpack.c.h.b16 %v818
      %v963 = vunpack.c.l.b16 %v819
      %v964 = vunpack.c.h.b16 %v819
      %v965 = vunpack.c.l.b16 %v820
      %v966 = vunpack.c.h.b16 %v820
      %v967 = vunpack.c.l.b16 %v821
      %v968 = vunpack.c.h.b16 %v821
      %v969 = vunpack.c.l.b16 %v822
      %v970 = vunpack.c.h.b16 %v822
      %v971 = vunpack.c.l.b16 %v823
      %v972 = vunpack.c.h.b16 %v823
      %v973 = vunpack.c.l.b16 %v824
      %v974 = vunpack.c.h.b16 %v824
      %v975 = vunpack.c.l.b16 %v825
      %v976 = vunpack.c.h.b16 %v825
      %v977 = vunpack.c.l.b16 %v826
      %v978 = vunpack.c.h.b16 %v826
      %v979 = vunpack.c.l.b16 %v827
      %v980 = vunpack.c.h.b16 %v827
      %v981 = vunpack.c.l.b16 %v828
      %v982 = vunpack.c.h.b16 %v828
      %v983 = vunpack.c.l.b16 %v829
      %v984 = vunpack.c.h.b16 %v829
      %v985 = vunpack.c.l.b16 %v830
      %v986 = vunpack.c.h.b16 %v830
      %v987 = vunpack.c.l.b16 %v831
      %v988 = vunpack.c.h.b16 %v831
      %v989 = vunpack.c.l.b16 %v832
      %v990 = vunpack.c.h.b16 %v832
      %v991 = vunpack.c.l.b16 %v833
      %v992 = vunpack.c.h.b16 %v833
      %v993 = vunpack.c.l.b16 %v834
      %v994 = vunpack.c.h.b16 %v834
      %v995 = vunpack.c.l.b16 %v835
      %v996 = vunpack.c.h.b16 %v835
      %v997 = vunpack.c.l.b16 %v836
      %v998 = vunpack.c.h.b16 %v836
      %v999 = vunpack.c.l.b16 %v837
      %v1000 = vunpack.c.h.b16 %v837
      %v1001 = vunpack.c.l.b16 %v838
      %v1002 = vunpack.c.h.b16 %v838
      %v1003 = vunpack.c.l.b16 %v839
      %v1004 = vunpack.c.h.b16 %v839
      %v1005 = vunpack.c.l.b16 %v840
      %v1006 = vunpack.c.h.b16 %v840
      %v1007 = vunpack.c.l.b16 %v841
      %v1008 = vunpack.c.h.b16 %v841
      %v1009 = vunpack.c.l.b16 %v842
      %v1010 = vunpack.c.h.b16 %v842
      %v1011 = vunpack.c.l.b16 %v843
      %v1012 = vunpack.c.h.b16 %v843
      %v1013 = vunpack.c.l.b16 %v844
      %v1014 = vunpack.c.h.b16 %v844
      %v1015 = vunpack.c.l.b16 %v845
      %v1016 = vunpack.c.h.b16 %v845
      %v1017 = vunpack.c.l.b16 %v846
      %v1018 = vunpack.c.h.b16 %v846
      %v1019 = vunpack.c.l.b16 %v847
      %v1020 = vunpack.c.h.b16 %v847
      %v1021 = vunpack.c.l.b16 %v848
      %v1022 = vunpack.c.h.b16 %v848
      %v1023 = vunpack.c.l.b16 %v849
      %v1024 = vunpack.c.h.b16 %v849
      %v1025 = vunpack.c.l.b16 %v850
      %v1026 = vunpack.c.h.b16 %v850
      %v1027 = vunpack.c.l.b16 %v851
      %v1028 = vunpack.c.h.b16 %v851
      %v1029 = vunpack.c.l.b16 %v852
      %v1030 = vunpack.c.h.b16 %v852
      %v1031 = vunpack.c.l.b16 %v853
      %v1032 = vunpack.c.h.b16 %v853
      %v1033 = vunpack.c.l.b16 %v854
      %v1034 = vunpack.c.h.b16 %v854
      %v1035 = vunpack.c.l.b16 %v855
      %v1036 = vunpack.c.h.b16 %v855
      %v1037 = vunpack.c.l.b16 %v856
      %v1038 = vunpack.c.h.b16 %v856
      %v1039 = vunpack.c.l.b16 %v857
      %v1040 = vunpack.c.h.b16 %v857
      %v1041 = vunpack.c.l.b16 %v858
      %v1042 = vunpack.c.h.b16 %v858
      %v1043 = vunpack.c.l.b16 %v859
      %v1044 = vunpack.c.h.b16 %v859
      %v1045 = vunpack.c.l.b16 %v860
      %v1046 = vunpack.c.h.b16 %v860
      %v1047 = vunpack.c.l.b16 %v861
      %v1048 = vunpack.c.h.b16 %v861
      %v1049 = vunpack.c.l.b16 %v862
      %v1050 = vunpack.c.h.b16 %v862
      %v1051 = vunpack.c.l.b16 %v863
      %v1052 = vunpack.c.h.b16 %v863
      %v1053 = vunpack.c.l.b16 %v864
      %v1054 = vunpack.c.h.b16 %v864
      %v1055 = vunpack.c.l.b16 %v865
      %v1056 = vunpack.c.h.b16 %v865
      %v1057 = vunpack.c.l.b16 %v866
      %v1058 = vunpack.c.h.b16 %v866
      %v1059 = vpack.c.b16 %v933, %v931
      %v1060 = vpack.c.b16 %v934, %v932
      %v1061 = vpack.c.b16 %v937, %v935
      %v1062 = vpack.c.b16 %v938, %v936
      %v1063 = vpack.c.b16 %v941, %v939
      %v1064 = vpack.c.b16 %v942, %v940
      %v1065 = vpack.c.b16 %v945, %v943
      %v1066 = vpack.c.b16 %v946, %v944
      %v1067 = vpack.c.b16 %v949, %v947
      %v1068 = vpack.c.b16 %v950, %v948
      %v1069 = vpack.c.b16 %v953, %v951
      %v1070 = vpack.c.b16 %v954, %v952
      %v1071 = vpack.c.b16 %v957, %v955
      %v1072 = vpack.c.b16 %v958, %v956
      %v1073 = vpack.c.b16 %v961, %v959
      %v1074 = vpack.c.b16 %v962, %v960
      %v1075 = vpack.c.b16 %v965, %v963
      %v1076 = vpack.c.b16 %v966, %v964
      %v1077 = vpack.c.b16 %v969, %v967
      %v1078 = vpack.c.b16 %v970, %v968
      %v1079 = vpack.c.b16 %v973, %v971
      %v1080 = vpack.c.b16 %v974, %v972
      %v1081 = vpack.c.b16 %v977, %v975
      %v1082 = vpack.c.b16 %v978, %v976
      %v1083 = vpack.c.b16 %v981, %v979
      %v1084 = vpack.c.b16 %v982, %v980
      %v1085 = vpack.c.b16 %v985, %v983
      %v1086 = vpack.c.b16 %v986, %v984
      %v1087 = vpack.c.b16 %v989, %v987
      %v1088 = vpack.c.b16 %v990, %v988
      %v1089 = vpack.c.b16 %v993, %v991
      %v1090 = vpack.c.b16 %v994, %v992
      %v1091 = vpack.c.b16 %v997, %v995
      %v1092 = vpack.c.b16 %v998, %v996
      %v1093 = vpack.c.b16 %v1001, %v999
      %v1094 = vpack.c.b16 %v1002, %v1000
      %v1095 = vpack.c.b16 %v1005, %v1003
      %v1096 = vpack.c.b16 %v1006, %v1004
      %v1097 = vpack.c.b16 %v1009, %v1007
      %v1098 = vpack.c.b16 %v1010, %v1008
      %v1099 = vpack.c.b16 %v1013, %v1011
      %v1100 = vpack.c.b16 %v1014, %v1012
      %v1101 = vpack.c.b16 %v1017, %v1015
      %v1102 = vpack.c.b16 %v1018, %v1016
      %v1103 = vpack.c.b16 %v1021, %v1019
      %v1104 = vpack.c.b16 %v1022, %v1020
      %v1105 = vpack.c.b16 %v1025, %v1023
      %v1106 = vpack.c.b16 %v1026, %v1024
      %v1107 = vpack.c.b16 %v1029, %v1027
      %v1108 = vpack.c.b16 %v1030, %v1028
      %v1109 = vpack.c.b16 %v1033, %v1031
      %v1110 = vpack.c.b16 %v1034, %v1032
      %v1111 = vpack.c.b16 %v1037, %v1035
      %v1112 = vpack.c.b16 %v1038, %v1036
      %v1113 = vpack.c.b16 %v1041, %v1039
      %v1114 = vpack.c.b16 %v1042, %v1040
      %v1115 = vpack.c.b16 %v1045, %v1043
      %v1116 = vpack.c.b16 %v1046, %v1044
      %v1117 = vpack.c.b16 %v1049, %v1047
      %v1118 = vpack.c.b16 %v1050, %v1048
      %v1119 = vpack.c.b16 %v1053, %v1051
      %v1120 = vpack.c.b16 %v1054, %v1052
      %v1121 = vpack.c.b16 %v1057, %v1055
      %v1122 = vpack.c.b16 %v1058, %v1056
      %v1219 = vunpack.c.l.b16 %v771
      %v1220 = vunpack.c.h.b16 %v771
      %v1221 = vunpack.c.l.b16 %v772
      %v1222 = vunpack.c.h.b16 %v772
      %v1223 = vunpack.c.l.b16 %v773
      %v1224 = vunpack.c.h.b16 %v773
      %v1225 = vunpack.c.l.b16 %v774
      %v1226 = vunpack.c.h.b16 %v774
      %v1227 = vunpack.c.l.b16 %v775
      %v1228 = vunpack.c.h.b16 %v775
      %v1229 = vunpack.c.l.b16 %v776
      %v1230 = vunpack.c.h.b16 %v776
      %v1231 = vunpack.c.l.b16 %v777
      %v1232 = vunpack.c.h.b16 %v777
      %v1233 = vunpack.c.l.b16 %v778
      %v1234 = vunpack.c.h.b16 %v778
      %v1235 = vunpack.c.l.b16 %v779
      %v1236 = vunpack.c.h.b16 %v779
      %v1237 = vunpack.c.l.b16 %v780
      %v1238 = vunpack.c.h.b16 %v780
      %v1239 = vunpack.c.l.b16 %v781
      %v1240 = vunpack.c.h.b16 %v781
      %v1241 = vunpack.c.l.b16 %v782
      %v1242 = vunpack.c.h.b16 %v782
      %v1243 = vunpack.c.l.b16 %v783
      %v1244 = vunpack.c.h.b16 %v783
      %v1245 = vunpack.c.l.b16 %v784
      %v1246 = vunpack.c.h.b16 %v784
      %v1247 = vunpack.c.l.b16 %v785
      %v1248 = vunpack.c.h.b16 %v785
      %v1249 = vunpack.c.l.b16 %v786
      %v1250 = vunpack.c.h.b16 %v786
      %v1251 = vunpack.c.l.b16 %v787
      %v1252 = vunpack.c.h.b16 %v787
      %v1253 = vunpack.c.l.b16 %v788
      %v1254 = vunpack.c.h.b16 %v788
      %v1255 = vunpack.c.l.b16 %v789
      %v1256 = vunpack.c.h.b16 %v789
      %v1257 = vunpack.c.l.b16 %v790
      %v1258 = vunpack.c.h.b16 %v790
      %v1259 = vunpack.c.l.b16 %v791
      %v1260 = vunpack.c.h.b16 %v791
      %v1261 = vunpack.c.l.b16 %v792
      %v1262 = vunpack.c.h.b16 %v792
      %v1263 = vunpack.c.l.b16 %v793
      %v1264 = vunpack.c.h.b16 %v793
      %v1265 = vunpack.c.l.b16 %v794
      %v1266 = vunpack.c.h.b16 %v794
      %v1267 = vunpack.c.l.b16 %v795
      %v1268 = vunpack.c.h.b16 %v795
      %v1269 = vunpack.c.l.b16 %v796
      %v1270 = vunpack.c.h.b16 %v796
      %v1271 = vunpack.c.l.b16 %v797
      %v1272 = vunpack.c.h.b16 %v797
      %v1273 = vunpack.c.l.b16 %v798
      %v1274 = vunpack.c.h.b16 %v798
      %v1275 = vunpack.c.l.b16 %v799
      %v1276 = vunpack.c.h.b16 %v799
      %v1277 = vunpack.c.l.b16 %v800
      %v1278 = vunpack.c.h.b16 %v800
      %v1279 = vunpack.c.l.b16 %v801
      %v1280 = vunpack.c.h.b16 %v801
      %v1281 = vunpack.c.l.b16 %v802
      %v1282 = vunpack.c.h.b16 %v802
      %v1283 = vpack.c.b16 %v1221, %v1219
      %v1284 = vpack.c.b16 %v1222, %v1220
      %v1285 = vpack.c.b16 %v1225, %v1223
      %v1286 = vpack.c.b16 %v1226, %v1224
      %v1287 = vpack.c.b16 %v1229, %v1227
      %v1288 = vpack.c.b16 %v1230, %v1228
      %v1289 = vpack.c.b16 %v1233, %v1231
      %v1290 = vpack.c.b16 %v1234, %v1232
      %v1291 = vpack.c.b16 %v1237, %v1235
      %v1292 = vpack.c.b16 %v1238, %v1236
      %v1293 = vpack.c.b16 %v1241, %v1239
      %v1294 = vpack.c.b16 %v1242, %v1240
      %v1295 = vpack.c.b16 %v1245, %v1243
      %v1296 = vpack.c.b16 %v1246, %v1244
      %v1297 = vpack.c.b16 %v1249, %v1247
      %v1298 = vpack.c.b16 %v1250, %v1248
      %v1299 = vpack.c.b16 %v1253, %v1251
      %v1300 = vpack.c.b16 %v1254, %v1252
      %v1301 = vpack.c.b16 %v1257, %v1255
      %v1302 = vpack.c.b16 %v1258, %v1256
      %v1303 = vpack.c.b16 %v1261, %v1259
      %v1304 = vpack.c.b16 %v1262, %v1260
      %v1305 = vpack.c.b16 %v1265, %v1263
      %v1306 = vpack.c.b16 %v1266, %v1264
      %v1307 = vpack.c.b16 %v1269, %v1267
      %v1308 = vpack.c.b16 %v1270, %v1268
      %v1309 = vpack.c.b16 %v1273, %v1271
      %v1310 = vpack.c.b16 %v1274, %v1272
      %v1311 = vpack.c.b16 %v1277, %v1275
      %v1312 = vpack.c.b16 %v1278, %v1276
      %v1313 = vpack.c.b16 %v1281, %v1279
      %v1314 = vpack.c.b16 %v1282, %v1280
      %1347 = vmatprep.subr.bf16.mxu0 %v1298
      %1348 = vmatpush1.bf16.msra.mxu0 %v1297
      %1349 = vmatprep.subr.bf16.mxu0 %v1296
      %1350 = vmatpush1.bf16.msra.mxu0 %v1295
      %1351 = vmatprep.subr.bf16.mxu0 %v1294
      %1352 = vmatpush1.bf16.msra.mxu0 %v1293
      %1353 = vmatprep.subr.bf16.mxu0 %v1292
      %1354 = vmatpush1.bf16.msra.mxu0 %v1291
      %1355 = vmatprep.subr.bf16.mxu0 %v1290
      %1356 = vmatpush1.bf16.msra.mxu0 %v1289
      %1357 = vmatprep.subr.bf16.mxu0 %v1288
      %1358 = vmatpush1.bf16.msra.mxu0 %v1287
      %1359 = vmatprep.subr.bf16.mxu0 %v1286
      %1360 = vmatpush1.bf16.msra.mxu0 %v1285
      %1361 = vmatprep.subr.bf16.mxu0 %v1284
      %1362 = vmatpush1.bf16.msra.mxu0 %v1283
      %1363 = vmatprep.subr.bf16.mxu0 %v1314
      %1364 = vmatpush2.bf16.msra.mxu0 %v1313
      %1365 = vmatprep.subr.bf16.mxu0 %v1312
      %1366 = vmatpush2.bf16.msra.mxu0 %v1311
      %1367 = vmatprep.subr.bf16.mxu0 %v1310
      %1368 = vmatpush2.bf16.msra.mxu0 %v1309
      %1369 = vmatprep.subr.bf16.mxu0 %v1308
      %1370 = vmatpush2.bf16.msra.mxu0 %v1307
      %1371 = vmatprep.subr.bf16.mxu0 %v1306
      %1372 = vmatpush2.bf16.msra.mxu0 %v1305
      %1373 = vmatprep.subr.bf16.mxu0 %v1304
      %1374 = vmatpush2.bf16.msra.mxu0 %v1303
      %1375 = vmatprep.subr.bf16.mxu0 %v1302
      %1376 = vmatpush2.bf16.msra.mxu0 %v1301
      %1377 = vmatprep.subr.bf16.mxu0 %v1300
      %1378 = vmatpush2.bf16.msra.mxu0 %v1299
      %1379 = vmatprep.mubr.bf16.mxu0 %v1060
      %1380 = vmatmul.mubr.bf16.gmra.mxu0 %v1059
      %v1381 = vpop.f32.mrf.mxu0
      %v1382 = vadd.f32 0.0, %v1381
      %v1383 = vpop.f32.mrf.mxu0
      %v1384 = vadd.f32 0.0, %v1383
      %v1385 = vpop.f32.mrf.mxu0
      %v1386 = vadd.f32 0.0, %v1385
      %v1387 = vpop.f32.mrf.mxu0
      %v1388 = vadd.f32 0.0, %v1387
      %1389 = vmatprep.mubr.bf16.mxu0 %v1062
      %1390 = vmatmul.mubr.bf16.gmra.mxu0 %v1061
      %v1391 = vpop.f32.mrf.mxu0
      %v1392 = vadd.f32 0.0, %v1391
      %v1393 = vpop.f32.mrf.mxu0
      %v1394 = vadd.f32 0.0, %v1393
      %v1395 = vpop.f32.mrf.mxu0
      %v1396 = vadd.f32 0.0, %v1395
      %v1397 = vpop.f32.mrf.mxu0
      %v1398 = vadd.f32 0.0, %v1397
      %1399 = vmatprep.mubr.bf16.mxu0 %v1064
      %1400 = vmatmul.mubr.bf16.gmra.mxu0 %v1063
      %v1401 = vpop.f32.mrf.mxu0
      %v1402 = vadd.f32 0.0, %v1401
      %v1403 = vpop.f32.mrf.mxu0
      %v1404 = vadd.f32 0.0, %v1403
      %v1405 = vpop.f32.mrf.mxu0
      %v1406 = vadd.f32 0.0, %v1405
      %v1407 = vpop.f32.mrf.mxu0
      %v1408 = vadd.f32 0.0, %v1407
      %1409 = vmatprep.mubr.bf16.mxu0 %v1066
      %1410 = vmatmul.mubr.bf16.gmra.mxu0 %v1065
      %v1411 = vpop.f32.mrf.mxu0
      %v1412 = vadd.f32 0.0, %v1411
      %v1413 = vpop.f32.mrf.mxu0
      %v1414 = vadd.f32 0.0, %v1413
      %v1415 = vpop.f32.mrf.mxu0
      %v1416 = vadd.f32 0.0, %v1415
      %v1417 = vpop.f32.mrf.mxu0
      %v1418 = vadd.f32 0.0, %v1417
      %1419 = vmatprep.mubr.bf16.mxu0 %v1068
      %1420 = vmatmul.mubr.bf16.gmra.mxu0 %v1067
      %v1421 = vpop.f32.mrf.mxu0
      %v1422 = vadd.f32 0.0, %v1421
      %v1423 = vpop.f32.mrf.mxu0
      %v1424 = vadd.f32 0.0, %v1423
      %v1425 = vpop.f32.mrf.mxu0
      %v1426 = vadd.f32 0.0, %v1425
      %v1427 = vpop.f32.mrf.mxu0
      %v1428 = vadd.f32 0.0, %v1427
      %1429 = vmatprep.mubr.bf16.mxu0 %v1070
      %1430 = vmatmul.mubr.bf16.gmra.mxu0 %v1069
      %v1431 = vpop.f32.mrf.mxu0
      %v1432 = vadd.f32 0.0, %v1431
      %v1433 = vpop.f32.mrf.mxu0
      %v1434 = vadd.f32 0.0, %v1433
      %v1435 = vpop.f32.mrf.mxu0
      %v1436 = vadd.f32 0.0, %v1435
      %v1437 = vpop.f32.mrf.mxu0
      %v1438 = vadd.f32 0.0, %v1437
      %1439 = vmatprep.mubr.bf16.mxu0 %v1072
      %1440 = vmatmul.mubr.bf16.gmra.mxu0 %v1071
      %v1441 = vpop.f32.mrf.mxu0
      %v1442 = vadd.f32 0.0, %v1441
      %v1443 = vpop.f32.mrf.mxu0
      %v1444 = vadd.f32 0.0, %v1443
      %v1445 = vpop.f32.mrf.mxu0
      %v1446 = vadd.f32 0.0, %v1445
      %v1447 = vpop.f32.mrf.mxu0
      %v1448 = vadd.f32 0.0, %v1447
      %1449 = vmatprep.mubr.bf16.mxu0 %v1074
      %1450 = vmatmul.mubr.bf16.gmra.mxu0 %v1073
      %v1451 = vpop.f32.mrf.mxu0
      %v1452 = vadd.f32 0.0, %v1451
      %v1453 = vpop.f32.mrf.mxu0
      %v1454 = vadd.f32 0.0, %v1453
      %v1455 = vpop.f32.mrf.mxu0
      %v1456 = vadd.f32 0.0, %v1455
      %v1457 = vpop.f32.mrf.mxu0
      %v1458 = vadd.f32 0.0, %v1457
      %1459 = vmatprep.mubr.bf16.mxu0 %v1076
      %1460 = vmatmul.mubr.bf16.gmra.mxu0 %v1075
      %v1461 = vpop.f32.mrf.mxu0
      %v1462 = vadd.f32 0.0, %v1461
      %v1463 = vpop.f32.mrf.mxu0
      %v1464 = vadd.f32 0.0, %v1463
      %v1465 = vpop.f32.mrf.mxu0
      %v1466 = vadd.f32 0.0, %v1465
      %v1467 = vpop.f32.mrf.mxu0
      %v1468 = vadd.f32 0.0, %v1467
      %1469 = vmatprep.mubr.bf16.mxu0 %v1078
      %1470 = vmatmul.mubr.bf16.gmra.mxu0 %v1077
      %v1471 = vpop.f32.mrf.mxu0
      %v1472 = vadd.f32 0.0, %v1471
      %v1473 = vpop.f32.mrf.mxu0
      %v1474 = vadd.f32 0.0, %v1473
      %v1475 = vpop.f32.mrf.mxu0
      %v1476 = vadd.f32 0.0, %v1475
      %v1477 = vpop.f32.mrf.mxu0
      %v1478 = vadd.f32 0.0, %v1477
      %1479 = vmatprep.mubr.bf16.mxu0 %v1080
      %1480 = vmatmul.mubr.bf16.gmra.mxu0 %v1079
      %v1481 = vpop.f32.mrf.mxu0
      %v1482 = vadd.f32 0.0, %v1481
      %v1483 = vpop.f32.mrf.mxu0
      %v1484 = vadd.f32 0.0, %v1483
      %v1485 = vpop.f32.mrf.mxu0
      %v1486 = vadd.f32 0.0, %v1485
      %v1487 = vpop.f32.mrf.mxu0
      %v1488 = vadd.f32 0.0, %v1487
      %1489 = vmatprep.mubr.bf16.mxu0 %v1082
      %1490 = vmatmul.mubr.bf16.gmra.mxu0 %v1081
      %v1491 = vpop.f32.mrf.mxu0
      %v1492 = vadd.f32 0.0, %v1491
      %v1493 = vpop.f32.mrf.mxu0
      %v1494 = vadd.f32 0.0, %v1493
      %v1495 = vpop.f32.mrf.mxu0
      %v1496 = vadd.f32 0.0, %v1495
      %v1497 = vpop.f32.mrf.mxu0
      %v1498 = vadd.f32 0.0, %v1497
      %1499 = vmatprep.mubr.bf16.mxu0 %v1084
      %1500 = vmatmul.mubr.bf16.gmra.mxu0 %v1083
      %v1501 = vpop.f32.mrf.mxu0
      %v1502 = vadd.f32 0.0, %v1501
      %v1503 = vpop.f32.mrf.mxu0
      %v1504 = vadd.f32 0.0, %v1503
      %v1505 = vpop.f32.mrf.mxu0
      %v1506 = vadd.f32 0.0, %v1505
      %v1507 = vpop.f32.mrf.mxu0
      %v1508 = vadd.f32 0.0, %v1507
      %1509 = vmatprep.mubr.bf16.mxu0 %v1086
      %1510 = vmatmul.mubr.bf16.gmra.mxu0 %v1085
      %v1511 = vpop.f32.mrf.mxu0
      %v1512 = vadd.f32 0.0, %v1511
      %v1513 = vpop.f32.mrf.mxu0
      %v1514 = vadd.f32 0.0, %v1513
      %v1515 = vpop.f32.mrf.mxu0
      %v1516 = vadd.f32 0.0, %v1515
      %v1517 = vpop.f32.mrf.mxu0
      %v1518 = vadd.f32 0.0, %v1517
      %1519 = vmatprep.mubr.bf16.mxu0 %v1088
      %1520 = vmatmul.mubr.bf16.gmra.mxu0 %v1087
      %v1521 = vpop.f32.mrf.mxu0
      %v1522 = vadd.f32 0.0, %v1521
      %v1523 = vpop.f32.mrf.mxu0
      %v1524 = vadd.f32 0.0, %v1523
      %v1525 = vpop.f32.mrf.mxu0
      %v1526 = vadd.f32 0.0, %v1525
      %v1527 = vpop.f32.mrf.mxu0
      %v1528 = vadd.f32 0.0, %v1527
      %1529 = vmatprep.mubr.bf16.mxu0 %v1090
      %1530 = vmatmul.mubr.bf16.gmra.mxu0 %v1089
      %v1531 = vpop.f32.mrf.mxu0
      %v1532 = vadd.f32 0.0, %v1531
      %v1533 = vpop.f32.mrf.mxu0
      %v1534 = vadd.f32 0.0, %v1533
      %v1535 = vpop.f32.mrf.mxu0
      %v1536 = vadd.f32 0.0, %v1535
      %v1537 = vpop.f32.mrf.mxu0
      %v1538 = vadd.f32 0.0, %v1537
      %1539 = vmatprep.mubr.bf16.mxu0 %v1092
      %1540 = vmatmul.mubr.bf16.gmra.mxu0 %v1091
      %v1541 = vpop.f32.mrf.mxu0
      %v1542 = vadd.f32 0.0, %v1541
      %v1543 = vpop.f32.mrf.mxu0
      %v1544 = vadd.f32 0.0, %v1543
      %v1545 = vpop.f32.mrf.mxu0
      %v1546 = vadd.f32 0.0, %v1545
      %v1547 = vpop.f32.mrf.mxu0
      %v1548 = vadd.f32 0.0, %v1547
      %1549 = vmatprep.mubr.bf16.mxu0 %v1094
      %1550 = vmatmul.mubr.bf16.gmra.mxu0 %v1093
      %v1551 = vpop.f32.mrf.mxu0
      %v1552 = vadd.f32 0.0, %v1551
      %v1553 = vpop.f32.mrf.mxu0
      %v1554 = vadd.f32 0.0, %v1553
      %v1555 = vpop.f32.mrf.mxu0
      %v1556 = vadd.f32 0.0, %v1555
      %v1557 = vpop.f32.mrf.mxu0
      %v1558 = vadd.f32 0.0, %v1557
      %1559 = vmatprep.mubr.bf16.mxu0 %v1096
      %1560 = vmatmul.mubr.bf16.gmra.mxu0 %v1095
      %v1561 = vpop.f32.mrf.mxu0
      %v1562 = vadd.f32 0.0, %v1561
      %v1563 = vpop.f32.mrf.mxu0
      %v1564 = vadd.f32 0.0, %v1563
      %v1565 = vpop.f32.mrf.mxu0
      %v1566 = vadd.f32 0.0, %v1565
      %v1567 = vpop.f32.mrf.mxu0
      %v1568 = vadd.f32 0.0, %v1567
      %1569 = vmatprep.mubr.bf16.mxu0 %v1098
      %1570 = vmatmul.mubr.bf16.gmra.mxu0 %v1097
      %v1571 = vpop.f32.mrf.mxu0
      %v1572 = vadd.f32 0.0, %v1571
      %v1573 = vpop.f32.mrf.mxu0
      %v1574 = vadd.f32 0.0, %v1573
      %v1575 = vpop.f32.mrf.mxu0
      %v1576 = vadd.f32 0.0, %v1575
      %v1577 = vpop.f32.mrf.mxu0
      %v1578 = vadd.f32 0.0, %v1577
      %1579 = vmatprep.mubr.bf16.mxu0 %v1100
      %1580 = vmatmul.mubr.bf16.gmra.mxu0 %v1099
      %v1581 = vpop.f32.mrf.mxu0
      %v1582 = vadd.f32 0.0, %v1581
      %v1583 = vpop.f32.mrf.mxu0
      %v1584 = vadd.f32 0.0, %v1583
      %v1585 = vpop.f32.mrf.mxu0
      %v1586 = vadd.f32 0.0, %v1585
      %v1587 = vpop.f32.mrf.mxu0
      %v1588 = vadd.f32 0.0, %v1587
      %1589 = vmatprep.mubr.bf16.mxu0 %v1102
      %1590 = vmatmul.mubr.bf16.gmra.mxu0 %v1101
      %v1591 = vpop.f32.mrf.mxu0
      %v1592 = vadd.f32 0.0, %v1591
      %v1593 = vpop.f32.mrf.mxu0
      %v1594 = vadd.f32 0.0, %v1593
      %v1595 = vpop.f32.mrf.mxu0
      %v1596 = vadd.f32 0.0, %v1595
      %v1597 = vpop.f32.mrf.mxu0
      %v1598 = vadd.f32 0.0, %v1597
      %1599 = vmatprep.mubr.bf16.mxu0 %v1104
      %1600 = vmatmul.mubr.bf16.gmra.mxu0 %v1103
      %v1601 = vpop.f32.mrf.mxu0
      %v1602 = vadd.f32 0.0, %v1601
      %v1603 = vpop.f32.mrf.mxu0
      %v1604 = vadd.f32 0.0, %v1603
      %v1605 = vpop.f32.mrf.mxu0
      %v1606 = vadd.f32 0.0, %v1605
      %v1607 = vpop.f32.mrf.mxu0
      %v1608 = vadd.f32 0.0, %v1607
      %1609 = vmatprep.mubr.bf16.mxu0 %v1106
      %1610 = vmatmul.mubr.bf16.gmra.mxu0 %v1105
      %v1611 = vpop.f32.mrf.mxu0
      %v1612 = vadd.f32 0.0, %v1611
      %v1613 = vpop.f32.mrf.mxu0
      %v1614 = vadd.f32 0.0, %v1613
      %v1615 = vpop.f32.mrf.mxu0
      %v1616 = vadd.f32 0.0, %v1615
      %v1617 = vpop.f32.mrf.mxu0
      %v1618 = vadd.f32 0.0, %v1617
      %1619 = vmatprep.mubr.bf16.mxu0 %v1108
      %1620 = vmatmul.mubr.bf16.gmra.mxu0 %v1107
      %v1621 = vpop.f32.mrf.mxu0
      %v1622 = vadd.f32 0.0, %v1621
      %v1623 = vpop.f32.mrf.mxu0
      %v1624 = vadd.f32 0.0, %v1623
      %v1625 = vpop.f32.mrf.mxu0
      %v1626 = vadd.f32 0.0, %v1625
      %v1627 = vpop.f32.mrf.mxu0
      %v1628 = vadd.f32 0.0, %v1627
      %1629 = vmatprep.mubr.bf16.mxu0 %v1110
      %1630 = vmatmul.mubr.bf16.gmra.mxu0 %v1109
      %v1631 = vpop.f32.mrf.mxu0
      %v1632 = vadd.f32 0.0, %v1631
      %v1633 = vpop.f32.mrf.mxu0
      %v1634 = vadd.f32 0.0, %v1633
      %v1635 = vpop.f32.mrf.mxu0
      %v1636 = vadd.f32 0.0, %v1635
      %v1637 = vpop.f32.mrf.mxu0
      %v1638 = vadd.f32 0.0, %v1637
      %1639 = vmatprep.mubr.bf16.mxu0 %v1112
      %1640 = vmatmul.mubr.bf16.gmra.mxu0 %v1111
      %v1641 = vpop.f32.mrf.mxu0
      %v1642 = vadd.f32 0.0, %v1641
      %v1643 = vpop.f32.mrf.mxu0
      %v1644 = vadd.f32 0.0, %v1643
      %v1645 = vpop.f32.mrf.mxu0
      %v1646 = vadd.f32 0.0, %v1645
      %v1647 = vpop.f32.mrf.mxu0
      %v1648 = vadd.f32 0.0, %v1647
      %1649 = vmatprep.mubr.bf16.mxu0 %v1114
      %1650 = vmatmul.mubr.bf16.gmra.mxu0 %v1113
      %v1651 = vpop.f32.mrf.mxu0
      %v1652 = vadd.f32 0.0, %v1651
      %v1653 = vpop.f32.mrf.mxu0
      %v1654 = vadd.f32 0.0, %v1653
      %v1655 = vpop.f32.mrf.mxu0
      %v1656 = vadd.f32 0.0, %v1655
      %v1657 = vpop.f32.mrf.mxu0
      %v1658 = vadd.f32 0.0, %v1657
      %1659 = vmatprep.mubr.bf16.mxu0 %v1116
      %1660 = vmatmul.mubr.bf16.gmra.mxu0 %v1115
      %v1661 = vpop.f32.mrf.mxu0
      %v1662 = vadd.f32 0.0, %v1661
      %v1663 = vpop.f32.mrf.mxu0
      %v1664 = vadd.f32 0.0, %v1663
      %v1665 = vpop.f32.mrf.mxu0
      %v1666 = vadd.f32 0.0, %v1665
      %v1667 = vpop.f32.mrf.mxu0
      %v1668 = vadd.f32 0.0, %v1667
      %1669 = vmatprep.mubr.bf16.mxu0 %v1118
      %1670 = vmatmul.mubr.bf16.gmra.mxu0 %v1117
      %v1671 = vpop.f32.mrf.mxu0
      %v1672 = vadd.f32 0.0, %v1671
      %v1673 = vpop.f32.mrf.mxu0
      %v1674 = vadd.f32 0.0, %v1673
      %v1675 = vpop.f32.mrf.mxu0
      %v1676 = vadd.f32 0.0, %v1675
      %v1677 = vpop.f32.mrf.mxu0
      %v1678 = vadd.f32 0.0, %v1677
      %1679 = vmatprep.mubr.bf16.mxu0 %v1120
      %1680 = vmatmul.mubr.bf16.gmra.mxu0 %v1119
      %v1681 = vpop.f32.mrf.mxu0
      %v1682 = vadd.f32 0.0, %v1681
      %v1683 = vpop.f32.mrf.mxu0
      %v1684 = vadd.f32 0.0, %v1683
      %v1685 = vpop.f32.mrf.mxu0
      %v1686 = vadd.f32 0.0, %v1685
      %v1687 = vpop.f32.mrf.mxu0
      %v1688 = vadd.f32 0.0, %v1687
      %1689 = vmatprep.mubr.bf16.mxu0 %v1122
      %1690 = vmatmul.mubr.bf16.gmra.mxu0 %v1121
      %v1691 = vpop.f32.mrf.mxu0
      %v1692 = vadd.f32 0.0, %v1691
      %v1693 = vpop.f32.mrf.mxu0
      %v1694 = vadd.f32 0.0, %v1693
      %v1695 = vpop.f32.mrf.mxu0
      %v1696 = vadd.f32 0.0, %v1695
      %v1697 = vpop.f32.mrf.mxu0
      %v1698 = vadd.f32 0.0, %v1697
      %1699 = vdwg.mxu0
      %v1700 = vpack.c.bf16 %v1386, %v1382
      %v1701 = vpack.c.bf16 %v1388, %v1384
      %v1702 = vpack.c.bf16 %v1396, %v1392
      %v1703 = vpack.c.bf16 %v1398, %v1394
      %v1704 = vpack.c.bf16 %v1406, %v1402
      %v1705 = vpack.c.bf16 %v1408, %v1404
      %v1706 = vpack.c.bf16 %v1416, %v1412
      %v1707 = vpack.c.bf16 %v1418, %v1414
      %v1708 = vpack.c.bf16 %v1426, %v1422
      %v1709 = vpack.c.bf16 %v1428, %v1424
      %v1710 = vpack.c.bf16 %v1436, %v1432
      %v1711 = vpack.c.bf16 %v1438, %v1434
      %v1712 = vpack.c.bf16 %v1446, %v1442
      %v1713 = vpack.c.bf16 %v1448, %v1444
      %v1714 = vpack.c.bf16 %v1456, %v1452
      %v1715 = vpack.c.bf16 %v1458, %v1454
      %v1716 = vpack.c.bf16 %v1466, %v1462
      %v1717 = vpack.c.bf16 %v1468, %v1464
      %v1718 = vpack.c.bf16 %v1476, %v1472
      %v1719 = vpack.c.bf16 %v1478, %v1474
      %v1720 = vpack.c.bf16 %v1486, %v1482
      %v1721 = vpack.c.bf16 %v1488, %v1484
      %v1722 = vpack.c.bf16 %v1496, %v1492
      %v1723 = vpack.c.bf16 %v1498, %v1494
      %v1724 = vpack.c.bf16 %v1506, %v1502
      %v1725 = vpack.c.bf16 %v1508, %v1504
      %v1726 = vpack.c.bf16 %v1516, %v1512
      %v1727 = vpack.c.bf16 %v1518, %v1514
      %v1728 = vpack.c.bf16 %v1526, %v1522
      %v1729 = vpack.c.bf16 %v1528, %v1524
      %v1730 = vpack.c.bf16 %v1536, %v1532
      %v1731 = vpack.c.bf16 %v1538, %v1534
      %v1732 = vpack.c.bf16 %v1546, %v1542
      %v1733 = vpack.c.bf16 %v1548, %v1544
      %v1734 = vpack.c.bf16 %v1556, %v1552
      %v1735 = vpack.c.bf16 %v1558, %v1554
      %v1736 = vpack.c.bf16 %v1566, %v1562
      %v1737 = vpack.c.bf16 %v1568, %v1564
      %v1738 = vpack.c.bf16 %v1576, %v1572
      %v1739 = vpack.c.bf16 %v1578, %v1574
      %v1740 = vpack.c.bf16 %v1586, %v1582
      %v1741 = vpack.c.bf16 %v1588, %v1584
      %v1742 = vpack.c.bf16 %v1596, %v1592
      %v1743 = vpack.c.bf16 %v1598, %v1594
      %v1744 = vpack.c.bf16 %v1606, %v1602
      %v1745 = vpack.c.bf16 %v1608, %v1604
      %v1746 = vpack.c.bf16 %v1616, %v1612
      %v1747 = vpack.c.bf16 %v1618, %v1614
      %v1748 = vpack.c.bf16 %v1626, %v1622
      %v1749 = vpack.c.bf16 %v1628, %v1624
      %v1750 = vpack.c.bf16 %v1636, %v1632
      %v1751 = vpack.c.bf16 %v1638, %v1634
      %v1752 = vpack.c.bf16 %v1646, %v1642
      %v1753 = vpack.c.bf16 %v1648, %v1644
      %v1754 = vpack.c.bf16 %v1656, %v1652
      %v1755 = vpack.c.bf16 %v1658, %v1654
      %v1756 = vpack.c.bf16 %v1666, %v1662
      %v1757 = vpack.c.bf16 %v1668, %v1664
      %v1758 = vpack.c.bf16 %v1676, %v1672
      %v1759 = vpack.c.bf16 %v1678, %v1674
      %v1760 = vpack.c.bf16 %v1686, %v1682
      %v1761 = vpack.c.bf16 %v1688, %v1684
      %v1762 = vpack.c.bf16 %v1696, %v1692
      %v1763 = vpack.c.bf16 %v1698, %v1694
      %v1764 = vld [vmem:[%s2] sm:$0xff]
      %v1765 = vld [vmem:[%s2 + $0x8] sm:$0xff]
      %v1766 = vld [vmem:[%s2 + $0x10] sm:$0xff]
      %v1767 = vld [vmem:[%s2 + $0x18] sm:$0xff]
      %v1768 = vld [vmem:[%s2 + $0x20] sm:$0xff]
      %v1769 = vld [vmem:[%s2 + $0x28] sm:$0xff]
      %v1770 = vld [vmem:[%s2 + $0x30] sm:$0xff]
      %v1771 = vld [vmem:[%s2 + $0x38] sm:$0xff]
      %v1772 = vld [vmem:[%s2 + $0x40] sm:$0xff]
      %v1773 = vld [vmem:[%s2 + $0x48] sm:$0xff]
      %v1774 = vld [vmem:[%s2 + $0x50] sm:$0xff]
      %v1775 = vld [vmem:[%s2 + $0x58] sm:$0xff]
      %v1776 = vld [vmem:[%s2 + $0x60] sm:$0xff]
      %v1777 = vld [vmem:[%s2 + $0x68] sm:$0xff]
      %v1778 = vld [vmem:[%s2 + $0x70] sm:$0xff]
      %v1779 = vld [vmem:[%s2 + $0x78] sm:$0xff]
      %v1780 = vld [vmem:[%s2 + $0x80] sm:$0xff]
      %v1781 = vld [vmem:[%s2 + $0x88] sm:$0xff]
      %v1782 = vld [vmem:[%s2 + $0x90] sm:$0xff]
      %v1783 = vld [vmem:[%s2 + $0x98] sm:$0xff]
      %v1784 = vld [vmem:[%s2 + $0xa0] sm:$0xff]
      %v1785 = vld [vmem:[%s2 + $0xa8] sm:$0xff]
      %v1786 = vld [vmem:[%s2 + $0xb0] sm:$0xff]
      %v1787 = vld [vmem:[%s2 + $0xb8] sm:$0xff]
      %v1788 = vld [vmem:[%s2 + $0xc0] sm:$0xff]
      %v1789 = vld [vmem:[%s2 + $0xc8] sm:$0xff]
      %v1790 = vld [vmem:[%s2 + $0xd0] sm:$0xff]
      %v1791 = vld [vmem:[%s2 + $0xd8] sm:$0xff]
      %v1792 = vld [vmem:[%s2 + $0xe0] sm:$0xff]
      %v1793 = vld [vmem:[%s2 + $0xe8] sm:$0xff]
      %v1794 = vld [vmem:[%s2 + $0xf0] sm:$0xff]
      %v1795 = vld [vmem:[%s2 + $0xf8] sm:$0xff]
      %v1796 = vld [vmem:[%s2 + $0x100] sm:$0xff]
      %v1797 = vld [vmem:[%s2 + $0x108] sm:$0xff]
      %v1798 = vld [vmem:[%s2 + $0x110] sm:$0xff]
      %v1799 = vld [vmem:[%s2 + $0x118] sm:$0xff]
      %v1800 = vld [vmem:[%s2 + $0x120] sm:$0xff]
      %v1801 = vld [vmem:[%s2 + $0x128] sm:$0xff]
      %v1802 = vld [vmem:[%s2 + $0x130] sm:$0xff]
      %v1803 = vld [vmem:[%s2 + $0x138] sm:$0xff]
      %v1804 = vld [vmem:[%s2 + $0x140] sm:$0xff]
      %v1805 = vld [vmem:[%s2 + $0x148] sm:$0xff]
      %v1806 = vld [vmem:[%s2 + $0x150] sm:$0xff]
      %v1807 = vld [vmem:[%s2 + $0x158] sm:$0xff]
      %v1808 = vld [vmem:[%s2 + $0x160] sm:$0xff]
      %v1809 = vld [vmem:[%s2 + $0x168] sm:$0xff]
      %v1810 = vld [vmem:[%s2 + $0x170] sm:$0xff]
      %v1811 = vld [vmem:[%s2 + $0x178] sm:$0xff]
      %v1812 = vld [vmem:[%s2 + $0x180] sm:$0xff]
      %v1813 = vld [vmem:[%s2 + $0x188] sm:$0xff]
      %v1814 = vld [vmem:[%s2 + $0x190] sm:$0xff]
      %v1815 = vld [vmem:[%s2 + $0x198] sm:$0xff]
      %v1816 = vld [vmem:[%s2 + $0x1a0] sm:$0xff]
      %v1817 = vld [vmem:[%s2 + $0x1a8] sm:$0xff]
      %v1818 = vld [vmem:[%s2 + $0x1b0] sm:$0xff]
      %v1819 = vld [vmem:[%s2 + $0x1b8] sm:$0xff]
      %v1820 = vld [vmem:[%s2 + $0x1c0] sm:$0xff]
      %v1821 = vld [vmem:[%s2 + $0x1c8] sm:$0xff]
      %v1822 = vld [vmem:[%s2 + $0x1d0] sm:$0xff]
      %v1823 = vld [vmem:[%s2 + $0x1d8] sm:$0xff]
      %v1824 = vld [vmem:[%s2 + $0x1e0] sm:$0xff]
      %v1825 = vld [vmem:[%s2 + $0x1e8] sm:$0xff]
      %v1826 = vld [vmem:[%s2 + $0x1f0] sm:$0xff]
      %v1827 = vld [vmem:[%s2 + $0x1f8] sm:$0xff]
      %v1828 = vld [vmem:[%s2 + $0x200] sm:$0xff]
      %v1829 = vld [vmem:[%s2 + $0x208] sm:$0xff]
      %v1830 = vld [vmem:[%s2 + $0x210] sm:$0xff]
      %v1831 = vld [vmem:[%s2 + $0x218] sm:$0xff]
      %v1832 = vld [vmem:[%s2 + $0x220] sm:$0xff]
      %v1833 = vld [vmem:[%s2 + $0x228] sm:$0xff]
      %v1834 = vld [vmem:[%s2 + $0x230] sm:$0xff]
      %v1835 = vld [vmem:[%s2 + $0x238] sm:$0xff]
      %v1836 = vld [vmem:[%s2 + $0x240] sm:$0xff]
      %v1837 = vld [vmem:[%s2 + $0x248] sm:$0xff]
      %v1838 = vld [vmem:[%s2 + $0x250] sm:$0xff]
      %v1839 = vld [vmem:[%s2 + $0x258] sm:$0xff]
      %v1840 = vld [vmem:[%s2 + $0x260] sm:$0xff]
      %v1841 = vld [vmem:[%s2 + $0x268] sm:$0xff]
      %v1842 = vld [vmem:[%s2 + $0x270] sm:$0xff]
      %v1843 = vld [vmem:[%s2 + $0x278] sm:$0xff]
      %v1844 = vld [vmem:[%s2 + $0x280] sm:$0xff]
      %v1845 = vld [vmem:[%s2 + $0x288] sm:$0xff]
      %v1846 = vld [vmem:[%s2 + $0x290] sm:$0xff]
      %v1847 = vld [vmem:[%s2 + $0x298] sm:$0xff]
      %v1848 = vld [vmem:[%s2 + $0x2a0] sm:$0xff]
      %v1849 = vld [vmem:[%s2 + $0x2a8] sm:$0xff]
      %v1850 = vld [vmem:[%s2 + $0x2b0] sm:$0xff]
      %v1851 = vld [vmem:[%s2 + $0x2b8] sm:$0xff]
      %v1852 = vld [vmem:[%s2 + $0x2c0] sm:$0xff]
      %v1853 = vld [vmem:[%s2 + $0x2c8] sm:$0xff]
      %v1854 = vld [vmem:[%s2 + $0x2d0] sm:$0xff]
      %v1855 = vld [vmem:[%s2 + $0x2d8] sm:$0xff]
      %v1856 = vld [vmem:[%s2 + $0x2e0] sm:$0xff]
      %v1857 = vld [vmem:[%s2 + $0x2e8] sm:$0xff]
      %v1858 = vld [vmem:[%s2 + $0x2f0] sm:$0xff]
      %v1859 = vld [vmem:[%s2 + $0x2f8] sm:$0xff]
      %v1860 = vld [vmem:[%s2 + $0x300] sm:$0xff]
      %v1861 = vld [vmem:[%s2 + $0x308] sm:$0xff]
      %v1862 = vld [vmem:[%s2 + $0x310] sm:$0xff]
      %v1863 = vld [vmem:[%s2 + $0x318] sm:$0xff]
      %v1864 = vld [vmem:[%s2 + $0x320] sm:$0xff]
      %v1865 = vld [vmem:[%s2 + $0x328] sm:$0xff]
      %v1866 = vld [vmem:[%s2 + $0x330] sm:$0xff]
      %v1867 = vld [vmem:[%s2 + $0x338] sm:$0xff]
      %v1868 = vld [vmem:[%s2 + $0x340] sm:$0xff]
      %v1869 = vld [vmem:[%s2 + $0x348] sm:$0xff]
      %v1870 = vld [vmem:[%s2 + $0x350] sm:$0xff]
      %v1871 = vld [vmem:[%s2 + $0x358] sm:$0xff]
      %v1872 = vld [vmem:[%s2 + $0x360] sm:$0xff]
      %v1873 = vld [vmem:[%s2 + $0x368] sm:$0xff]
      %v1874 = vld [vmem:[%s2 + $0x370] sm:$0xff]
      %v1875 = vld [vmem:[%s2 + $0x378] sm:$0xff]
      %v1876 = vld [vmem:[%s2 + $0x380] sm:$0xff]
      %v1877 = vld [vmem:[%s2 + $0x388] sm:$0xff]
      %v1878 = vld [vmem:[%s2 + $0x390] sm:$0xff]
      %v1879 = vld [vmem:[%s2 + $0x398] sm:$0xff]
      %v1880 = vld [vmem:[%s2 + $0x3a0] sm:$0xff]
      %v1881 = vld [vmem:[%s2 + $0x3a8] sm:$0xff]
      %v1882 = vld [vmem:[%s2 + $0x3b0] sm:$0xff]
      %v1883 = vld [vmem:[%s2 + $0x3b8] sm:$0xff]
      %v1884 = vld [vmem:[%s2 + $0x3c0] sm:$0xff]
      %v1885 = vld [vmem:[%s2 + $0x3c8] sm:$0xff]
      %v1886 = vld [vmem:[%s2 + $0x3d0] sm:$0xff]
      %v1887 = vld [vmem:[%s2 + $0x3d8] sm:$0xff]
      %v1888 = vld [vmem:[%s2 + $0x3e0] sm:$0xff]
      %v1889 = vld [vmem:[%s2 + $0x3e8] sm:$0xff]
      %v1890 = vld [vmem:[%s2 + $0x3f0] sm:$0xff]
      %v1891 = vld [vmem:[%s2 + $0x3f8] sm:$0xff]
      %v1892 = vld [vmem:[%s3] sm:$0x3]
      %v1894 = vlaneseq
      %v1895 = vshrl.u32 %v1894, 7
      %v1896 = vsub.s32 0, %v1895
      %v1897 = vrot.slane %v1892, %v1896
      %v1898 = vlaneseq
      %v1899 = vshrl.u32 %v1898, 7
      %v1900 = vsub.s32 1, %v1899
      %v1901 = vrot.slane %v1892, %v1900
      %v2032 = vunpack.c.l.b16 %v1764
      %v2033 = vunpack.c.h.b16 %v1764
      %v2034 = vunpack.c.l.b16 %v1765
      %v2035 = vunpack.c.h.b16 %v1765
      %v2036 = vunpack.c.l.b16 %v1766
      %v2037 = vunpack.c.h.b16 %v1766
      %v2038 = vunpack.c.l.b16 %v1767
      %v2039 = vunpack.c.h.b16 %v1767
      %v2040 = vunpack.c.l.b16 %v1768
      %v2041 = vunpack.c.h.b16 %v1768
      %v2042 = vunpack.c.l.b16 %v1769
      %v2043 = vunpack.c.h.b16 %v1769
      %v2044 = vunpack.c.l.b16 %v1770
      %v2045 = vunpack.c.h.b16 %v1770
      %v2046 = vunpack.c.l.b16 %v1771
      %v2047 = vunpack.c.h.b16 %v1771
      %v2048 = vunpack.c.l.b16 %v1772
      %v2049 = vunpack.c.h.b16 %v1772
      %v2050 = vunpack.c.l.b16 %v1773
      %v2051 = vunpack.c.h.b16 %v1773
      %v2052 = vunpack.c.l.b16 %v1774
      %v2053 = vunpack.c.h.b16 %v1774
      %v2054 = vunpack.c.l.b16 %v1775
      %v2055 = vunpack.c.h.b16 %v1775
      %v2056 = vunpack.c.l.b16 %v1776
      %v2057 = vunpack.c.h.b16 %v1776
      %v2058 = vunpack.c.l.b16 %v1777
      %v2059 = vunpack.c.h.b16 %v1777
      %v2060 = vunpack.c.l.b16 %v1778
      %v2061 = vunpack.c.h.b16 %v1778
      %v2062 = vunpack.c.l.b16 %v1779
      %v2063 = vunpack.c.h.b16 %v1779
      %v2064 = vunpack.c.l.b16 %v1780
      %v2065 = vunpack.c.h.b16 %v1780
      %v2066 = vunpack.c.l.b16 %v1781
      %v2067 = vunpack.c.h.b16 %v1781
      %v2068 = vunpack.c.l.b16 %v1782
      %v2069 = vunpack.c.h.b16 %v1782
      %v2070 = vunpack.c.l.b16 %v1783
      %v2071 = vunpack.c.h.b16 %v1783
      %v2072 = vunpack.c.l.b16 %v1784
      %v2073 = vunpack.c.h.b16 %v1784
      %v2074 = vunpack.c.l.b16 %v1785
      %v2075 = vunpack.c.h.b16 %v1785
      %v2076 = vunpack.c.l.b16 %v1786
      %v2077 = vunpack.c.h.b16 %v1786
      %v2078 = vunpack.c.l.b16 %v1787
      %v2079 = vunpack.c.h.b16 %v1787
      %v2080 = vunpack.c.l.b16 %v1788
      %v2081 = vunpack.c.h.b16 %v1788
      %v2082 = vunpack.c.l.b16 %v1789
      %v2083 = vunpack.c.h.b16 %v1789
      %v2084 = vunpack.c.l.b16 %v1790
      %v2085 = vunpack.c.h.b16 %v1790
      %v2086 = vunpack.c.l.b16 %v1791
      %v2087 = vunpack.c.h.b16 %v1791
      %v2088 = vunpack.c.l.b16 %v1792
      %v2089 = vunpack.c.h.b16 %v1792
      %v2090 = vunpack.c.l.b16 %v1793
      %v2091 = vunpack.c.h.b16 %v1793
      %v2092 = vunpack.c.l.b16 %v1794
      %v2093 = vunpack.c.h.b16 %v1794
      %v2094 = vunpack.c.l.b16 %v1795
      %v2095 = vunpack.c.h.b16 %v1795
      %v2096 = vunpack.c.l.b16 %v1796
      %v2097 = vunpack.c.h.b16 %v1796
      %v2098 = vunpack.c.l.b16 %v1797
      %v2099 = vunpack.c.h.b16 %v1797
      %v2100 = vunpack.c.l.b16 %v1798
      %v2101 = vunpack.c.h.b16 %v1798
      %v2102 = vunpack.c.l.b16 %v1799
      %v2103 = vunpack.c.h.b16 %v1799
      %v2104 = vunpack.c.l.b16 %v1800
      %v2105 = vunpack.c.h.b16 %v1800
      %v2106 = vunpack.c.l.b16 %v1801
      %v2107 = vunpack.c.h.b16 %v1801
      %v2108 = vunpack.c.l.b16 %v1802
      %v2109 = vunpack.c.h.b16 %v1802
      %v2110 = vunpack.c.l.b16 %v1803
      %v2111 = vunpack.c.h.b16 %v1803
      %v2112 = vunpack.c.l.b16 %v1804
      %v2113 = vunpack.c.h.b16 %v1804
      %v2114 = vunpack.c.l.b16 %v1805
      %v2115 = vunpack.c.h.b16 %v1805
      %v2116 = vunpack.c.l.b16 %v1806
      %v2117 = vunpack.c.h.b16 %v1806
      %v2118 = vunpack.c.l.b16 %v1807
      %v2119 = vunpack.c.h.b16 %v1807
      %v2120 = vunpack.c.l.b16 %v1808
      %v2121 = vunpack.c.h.b16 %v1808
      %v2122 = vunpack.c.l.b16 %v1809
      %v2123 = vunpack.c.h.b16 %v1809
      %v2124 = vunpack.c.l.b16 %v1810
      %v2125 = vunpack.c.h.b16 %v1810
      %v2126 = vunpack.c.l.b16 %v1811
      %v2127 = vunpack.c.h.b16 %v1811
      %v2128 = vunpack.c.l.b16 %v1812
      %v2129 = vunpack.c.h.b16 %v1812
      %v2130 = vunpack.c.l.b16 %v1813
      %v2131 = vunpack.c.h.b16 %v1813
      %v2132 = vunpack.c.l.b16 %v1814
      %v2133 = vunpack.c.h.b16 %v1814
      %v2134 = vunpack.c.l.b16 %v1815
      %v2135 = vunpack.c.h.b16 %v1815
      %v2136 = vunpack.c.l.b16 %v1816
      %v2137 = vunpack.c.h.b16 %v1816
      %v2138 = vunpack.c.l.b16 %v1817
      %v2139 = vunpack.c.h.b16 %v1817
      %v2140 = vunpack.c.l.b16 %v1818
      %v2141 = vunpack.c.h.b16 %v1818
      %v2142 = vunpack.c.l.b16 %v1819
      %v2143 = vunpack.c.h.b16 %v1819
      %v2144 = vunpack.c.l.b16 %v1820
      %v2145 = vunpack.c.h.b16 %v1820
      %v2146 = vunpack.c.l.b16 %v1821
      %v2147 = vunpack.c.h.b16 %v1821
      %v2148 = vunpack.c.l.b16 %v1822
      %v2149 = vunpack.c.h.b16 %v1822
      %v2150 = vunpack.c.l.b16 %v1823
      %v2151 = vunpack.c.h.b16 %v1823
      %v2152 = vunpack.c.l.b16 %v1824
      %v2153 = vunpack.c.h.b16 %v1824
      %v2154 = vunpack.c.l.b16 %v1825
      %v2155 = vunpack.c.h.b16 %v1825
      %v2156 = vunpack.c.l.b16 %v1826
      %v2157 = vunpack.c.h.b16 %v1826
      %v2158 = vunpack.c.l.b16 %v1827
      %v2159 = vunpack.c.h.b16 %v1827
      %v2160 = vunpack.c.l.b16 %v1828
      %v2161 = vunpack.c.h.b16 %v1828
      %v2162 = vunpack.c.l.b16 %v1829
      %v2163 = vunpack.c.h.b16 %v1829
      %v2164 = vunpack.c.l.b16 %v1830
      %v2165 = vunpack.c.h.b16 %v1830
      %v2166 = vunpack.c.l.b16 %v1831
      %v2167 = vunpack.c.h.b16 %v1831
      %v2168 = vunpack.c.l.b16 %v1832
      %v2169 = vunpack.c.h.b16 %v1832
      %v2170 = vunpack.c.l.b16 %v1833
      %v2171 = vunpack.c.h.b16 %v1833
      %v2172 = vunpack.c.l.b16 %v1834
      %v2173 = vunpack.c.h.b16 %v1834
      %v2174 = vunpack.c.l.b16 %v1835
      %v2175 = vunpack.c.h.b16 %v1835
      %v2176 = vunpack.c.l.b16 %v1836
      %v2177 = vunpack.c.h.b16 %v1836
      %v2178 = vunpack.c.l.b16 %v1837
      %v2179 = vunpack.c.h.b16 %v1837
      %v2180 = vunpack.c.l.b16 %v1838
      %v2181 = vunpack.c.h.b16 %v1838
      %v2182 = vunpack.c.l.b16 %v1839
      %v2183 = vunpack.c.h.b16 %v1839
      %v2184 = vunpack.c.l.b16 %v1840
      %v2185 = vunpack.c.h.b16 %v1840
      %v2186 = vunpack.c.l.b16 %v1841
      %v2187 = vunpack.c.h.b16 %v1841
      %v2188 = vunpack.c.l.b16 %v1842
      %v2189 = vunpack.c.h.b16 %v1842
      %v2190 = vunpack.c.l.b16 %v1843
      %v2191 = vunpack.c.h.b16 %v1843
      %v2192 = vunpack.c.l.b16 %v1844
      %v2193 = vunpack.c.h.b16 %v1844
      %v2194 = vunpack.c.l.b16 %v1845
      %v2195 = vunpack.c.h.b16 %v1845
      %v2196 = vunpack.c.l.b16 %v1846
      %v2197 = vunpack.c.h.b16 %v1846
      %v2198 = vunpack.c.l.b16 %v1847
      %v2199 = vunpack.c.h.b16 %v1847
      %v2200 = vunpack.c.l.b16 %v1848
      %v2201 = vunpack.c.h.b16 %v1848
      %v2202 = vunpack.c.l.b16 %v1849
      %v2203 = vunpack.c.h.b16 %v1849
      %v2204 = vunpack.c.l.b16 %v1850
      %v2205 = vunpack.c.h.b16 %v1850
      %v2206 = vunpack.c.l.b16 %v1851
      %v2207 = vunpack.c.h.b16 %v1851
      %v2208 = vunpack.c.l.b16 %v1852
      %v2209 = vunpack.c.h.b16 %v1852
      %v2210 = vunpack.c.l.b16 %v1853
      %v2211 = vunpack.c.h.b16 %v1853
      %v2212 = vunpack.c.l.b16 %v1854
      %v2213 = vunpack.c.h.b16 %v1854
      %v2214 = vunpack.c.l.b16 %v1855
      %v2215 = vunpack.c.h.b16 %v1855
      %v2216 = vunpack.c.l.b16 %v1856
      %v2217 = vunpack.c.h.b16 %v1856
      %v2218 = vunpack.c.l.b16 %v1857
      %v2219 = vunpack.c.h.b16 %v1857
      %v2220 = vunpack.c.l.b16 %v1858
      %v2221 = vunpack.c.h.b16 %v1858
      %v2222 = vunpack.c.l.b16 %v1859
      %v2223 = vunpack.c.h.b16 %v1859
      %v2224 = vunpack.c.l.b16 %v1860
      %v2225 = vunpack.c.h.b16 %v1860
      %v2226 = vunpack.c.l.b16 %v1861
      %v2227 = vunpack.c.h.b16 %v1861
      %v2228 = vunpack.c.l.b16 %v1862
      %v2229 = vunpack.c.h.b16 %v1862
      %v2230 = vunpack.c.l.b16 %v1863
      %v2231 = vunpack.c.h.b16 %v1863
      %v2232 = vunpack.c.l.b16 %v1864
      %v2233 = vunpack.c.h.b16 %v1864
      %v2234 = vunpack.c.l.b16 %v1865
      %v2235 = vunpack.c.h.b16 %v1865
      %v2236 = vunpack.c.l.b16 %v1866
      %v2237 = vunpack.c.h.b16 %v1866
      %v2238 = vunpack.c.l.b16 %v1867
      %v2239 = vunpack.c.h.b16 %v1867
      %v2240 = vunpack.c.l.b16 %v1868
      %v2241 = vunpack.c.h.b16 %v1868
      %v2242 = vunpack.c.l.b16 %v1869
      %v2243 = vunpack.c.h.b16 %v1869
      %v2244 = vunpack.c.l.b16 %v1870
      %v2245 = vunpack.c.h.b16 %v1870
      %v2246 = vunpack.c.l.b16 %v1871
      %v2247 = vunpack.c.h.b16 %v1871
      %v2248 = vunpack.c.l.b16 %v1872
      %v2249 = vunpack.c.h.b16 %v1872
      %v2250 = vunpack.c.l.b16 %v1873
      %v2251 = vunpack.c.h.b16 %v1873
      %v2252 = vunpack.c.l.b16 %v1874
      %v2253 = vunpack.c.h.b16 %v1874
      %v2254 = vunpack.c.l.b16 %v1875
      %v2255 = vunpack.c.h.b16 %v1875
      %v2256 = vunpack.c.l.b16 %v1876
      %v2257 = vunpack.c.h.b16 %v1876
      %v2258 = vunpack.c.l.b16 %v1877
      %v2259 = vunpack.c.h.b16 %v1877
      %v2260 = vunpack.c.l.b16 %v1878
      %v2261 = vunpack.c.h.b16 %v1878
      %v2262 = vunpack.c.l.b16 %v1879
      %v2263 = vunpack.c.h.b16 %v1879
      %v2264 = vunpack.c.l.b16 %v1880
      %v2265 = vunpack.c.h.b16 %v1880
      %v2266 = vunpack.c.l.b16 %v1881
      %v2267 = vunpack.c.h.b16 %v1881
      %v2268 = vunpack.c.l.b16 %v1882
      %v2269 = vunpack.c.h.b16 %v1882
      %v2270 = vunpack.c.l.b16 %v1883
      %v2271 = vunpack.c.h.b16 %v1883
      %v2272 = vunpack.c.l.b16 %v1884
      %v2273 = vunpack.c.h.b16 %v1884
      %v2274 = vunpack.c.l.b16 %v1885
      %v2275 = vunpack.c.h.b16 %v1885
      %v2276 = vunpack.c.l.b16 %v1886
      %v2277 = vunpack.c.h.b16 %v1886
      %v2278 = vunpack.c.l.b16 %v1887
      %v2279 = vunpack.c.h.b16 %v1887
      %v2280 = vunpack.c.l.b16 %v1888
      %v2281 = vunpack.c.h.b16 %v1888
      %v2282 = vunpack.c.l.b16 %v1889
      %v2283 = vunpack.c.h.b16 %v1889
      %v2284 = vunpack.c.l.b16 %v1890
      %v2285 = vunpack.c.h.b16 %v1890
      %v2286 = vunpack.c.l.b16 %v1891
      %v2287 = vunpack.c.h.b16 %v1891
      %v2288 = vpack.c.b16 %v2034, %v2032
      %v2289 = vpack.c.b16 %v2035, %v2033
      %v2290 = vpack.c.b16 %v2038, %v2036
      %v2291 = vpack.c.b16 %v2039, %v2037
      %v2292 = vpack.c.b16 %v2042, %v2040
      %v2293 = vpack.c.b16 %v2043, %v2041
      %v2294 = vpack.c.b16 %v2046, %v2044
      %v2295 = vpack.c.b16 %v2047, %v2045
      %v2296 = vpack.c.b16 %v2050, %v2048
      %v2297 = vpack.c.b16 %v2051, %v2049
      %v2298 = vpack.c.b16 %v2054, %v2052
      %v2299 = vpack.c.b16 %v2055, %v2053
      %v2300 = vpack.c.b16 %v2058, %v2056
      %v2301 = vpack.c.b16 %v2059, %v2057
      %v2302 = vpack.c.b16 %v2062, %v2060
      %v2303 = vpack.c.b16 %v2063, %v2061
      %v2304 = vpack.c.b16 %v2066, %v2064
      %v2305 = vpack.c.b16 %v2067, %v2065
      %v2306 = vpack.c.b16 %v2070, %v2068
      %v2307 = vpack.c.b16 %v2071, %v2069
      %v2308 = vpack.c.b16 %v2074, %v2072
      %v2309 = vpack.c.b16 %v2075, %v2073
      %v2310 = vpack.c.b16 %v2078, %v2076
      %v2311 = vpack.c.b16 %v2079, %v2077
      %v2312 = vpack.c.b16 %v2082, %v2080
      %v2313 = vpack.c.b16 %v2083, %v2081
      %v2314 = vpack.c.b16 %v2086, %v2084
      %v2315 = vpack.c.b16 %v2087, %v2085
      %v2316 = vpack.c.b16 %v2090, %v2088
      %v2317 = vpack.c.b16 %v2091, %v2089
      %v2318 = vpack.c.b16 %v2094, %v2092
      %v2319 = vpack.c.b16 %v2095, %v2093
      %v2320 = vpack.c.b16 %v2098, %v2096
      %v2321 = vpack.c.b16 %v2099, %v2097
      %v2322 = vpack.c.b16 %v2102, %v2100
      %v2323 = vpack.c.b16 %v2103, %v2101
      %v2324 = vpack.c.b16 %v2106, %v2104
      %v2325 = vpack.c.b16 %v2107, %v2105
      %v2326 = vpack.c.b16 %v2110, %v2108
      %v2327 = vpack.c.b16 %v2111, %v2109
      %v2328 = vpack.c.b16 %v2114, %v2112
      %v2329 = vpack.c.b16 %v2115, %v2113
      %v2330 = vpack.c.b16 %v2118, %v2116
      %v2331 = vpack.c.b16 %v2119, %v2117
      %v2332 = vpack.c.b16 %v2122, %v2120
      %v2333 = vpack.c.b16 %v2123, %v2121
      %v2334 = vpack.c.b16 %v2126, %v2124
      %v2335 = vpack.c.b16 %v2127, %v2125
      %v2336 = vpack.c.b16 %v2130, %v2128
      %v2337 = vpack.c.b16 %v2131, %v2129
      %v2338 = vpack.c.b16 %v2134, %v2132
      %v2339 = vpack.c.b16 %v2135, %v2133
      %v2340 = vpack.c.b16 %v2138, %v2136
      %v2341 = vpack.c.b16 %v2139, %v2137
      %v2342 = vpack.c.b16 %v2142, %v2140
      %v2343 = vpack.c.b16 %v2143, %v2141
      %v2344 = vpack.c.b16 %v2146, %v2144
      %v2345 = vpack.c.b16 %v2147, %v2145
      %v2346 = vpack.c.b16 %v2150, %v2148
      %v2347 = vpack.c.b16 %v2151, %v2149
      %v2348 = vpack.c.b16 %v2154, %v2152
      %v2349 = vpack.c.b16 %v2155, %v2153
      %v2350 = vpack.c.b16 %v2158, %v2156
      %v2351 = vpack.c.b16 %v2159, %v2157
      %v2352 = vpack.c.b16 %v2162, %v2160
      %v2353 = vpack.c.b16 %v2163, %v2161
      %v2354 = vpack.c.b16 %v2166, %v2164
      %v2355 = vpack.c.b16 %v2167, %v2165
      %v2356 = vpack.c.b16 %v2170, %v2168
      %v2357 = vpack.c.b16 %v2171, %v2169
      %v2358 = vpack.c.b16 %v2174, %v2172
      %v2359 = vpack.c.b16 %v2175, %v2173
      %v2360 = vpack.c.b16 %v2178, %v2176
      %v2361 = vpack.c.b16 %v2179, %v2177
      %v2362 = vpack.c.b16 %v2182, %v2180
      %v2363 = vpack.c.b16 %v2183, %v2181
      %v2364 = vpack.c.b16 %v2186, %v2184
      %v2365 = vpack.c.b16 %v2187, %v2185
      %v2366 = vpack.c.b16 %v2190, %v2188
      %v2367 = vpack.c.b16 %v2191, %v2189
      %v2368 = vpack.c.b16 %v2194, %v2192
      %v2369 = vpack.c.b16 %v2195, %v2193
      %v2370 = vpack.c.b16 %v2198, %v2196
      %v2371 = vpack.c.b16 %v2199, %v2197
      %v2372 = vpack.c.b16 %v2202, %v2200
      %v2373 = vpack.c.b16 %v2203, %v2201
      %v2374 = vpack.c.b16 %v2206, %v2204
      %v2375 = vpack.c.b16 %v2207, %v2205
      %v2376 = vpack.c.b16 %v2210, %v2208
      %v2377 = vpack.c.b16 %v2211, %v2209
      %v2378 = vpack.c.b16 %v2214, %v2212
      %v2379 = vpack.c.b16 %v2215, %v2213
      %v2380 = vpack.c.b16 %v2218, %v2216
      %v2381 = vpack.c.b16 %v2219, %v2217
      %v2382 = vpack.c.b16 %v2222, %v2220
      %v2383 = vpack.c.b16 %v2223, %v2221
      %v2384 = vpack.c.b16 %v2226, %v2224
      %v2385 = vpack.c.b16 %v2227, %v2225
      %v2386 = vpack.c.b16 %v2230, %v2228
      %v2387 = vpack.c.b16 %v2231, %v2229
      %v2388 = vpack.c.b16 %v2234, %v2232
      %v2389 = vpack.c.b16 %v2235, %v2233
      %v2390 = vpack.c.b16 %v2238, %v2236
      %v2391 = vpack.c.b16 %v2239, %v2237
      %v2392 = vpack.c.b16 %v2242, %v2240
      %v2393 = vpack.c.b16 %v2243, %v2241
      %v2394 = vpack.c.b16 %v2246, %v2244
      %v2395 = vpack.c.b16 %v2247, %v2245
      %v2396 = vpack.c.b16 %v2250, %v2248
      %v2397 = vpack.c.b16 %v2251, %v2249
      %v2398 = vpack.c.b16 %v2254, %v2252
      %v2399 = vpack.c.b16 %v2255, %v2253
      %v2400 = vpack.c.b16 %v2258, %v2256
      %v2401 = vpack.c.b16 %v2259, %v2257
      %v2402 = vpack.c.b16 %v2262, %v2260
      %v2403 = vpack.c.b16 %v2263, %v2261
      %v2404 = vpack.c.b16 %v2266, %v2264
      %v2405 = vpack.c.b16 %v2267, %v2265
      %v2406 = vpack.c.b16 %v2270, %v2268
      %v2407 = vpack.c.b16 %v2271, %v2269
      %v2408 = vpack.c.b16 %v2274, %v2272
      %v2409 = vpack.c.b16 %v2275, %v2273
      %v2410 = vpack.c.b16 %v2278, %v2276
      %v2411 = vpack.c.b16 %v2279, %v2277
      %v2412 = vpack.c.b16 %v2282, %v2280
      %v2413 = vpack.c.b16 %v2283, %v2281
      %v2414 = vpack.c.b16 %v2286, %v2284
      %v2415 = vpack.c.b16 %v2287, %v2285
      %2544 = vmatprep.subr.bf16.mxu0 %v2303
      %2545 = vmatpush1.bf16.msra.mxu0 %v2302
      %2546 = vmatprep.subr.bf16.mxu0 %v2301
      %2547 = vmatpush1.bf16.msra.mxu0 %v2300
      %2548 = vmatprep.subr.bf16.mxu0 %v2299
      %2549 = vmatpush1.bf16.msra.mxu0 %v2298
      %2550 = vmatprep.subr.bf16.mxu0 %v2297
      %2551 = vmatpush1.bf16.msra.mxu0 %v2296
      %2552 = vmatprep.subr.bf16.mxu0 %v2295
      %2553 = vmatpush1.bf16.msra.mxu0 %v2294
      %2554 = vmatprep.subr.bf16.mxu0 %v2293
      %2555 = vmatpush1.bf16.msra.mxu0 %v2292
      %2556 = vmatprep.subr.bf16.mxu0 %v2291
      %2557 = vmatpush1.bf16.msra.mxu0 %v2290
      %2558 = vmatprep.subr.bf16.mxu0 %v2289
      %2559 = vmatpush1.bf16.msra.mxu0 %v2288
      %2560 = vmatprep.subr.bf16.mxu0 %v2319
      %2561 = vmatpush2.bf16.msra.mxu0 %v2318
      %2562 = vmatprep.subr.bf16.mxu0 %v2317
      %2563 = vmatpush2.bf16.msra.mxu0 %v2316
      %2564 = vmatprep.subr.bf16.mxu0 %v2315
      %2565 = vmatpush2.bf16.msra.mxu0 %v2314
      %2566 = vmatprep.subr.bf16.mxu0 %v2313
      %2567 = vmatpush2.bf16.msra.mxu0 %v2312
      %2568 = vmatprep.subr.bf16.mxu0 %v2311
      %2569 = vmatpush2.bf16.msra.mxu0 %v2310
      %2570 = vmatprep.subr.bf16.mxu0 %v2309
      %2571 = vmatpush2.bf16.msra.mxu0 %v2308
      %2572 = vmatprep.subr.bf16.mxu0 %v2307
      %2573 = vmatpush2.bf16.msra.mxu0 %v2306
      %2574 = vmatprep.subr.bf16.mxu0 %v2305
      %2575 = vmatpush2.bf16.msra.mxu0 %v2304
      %2576 = vmatprep.mubr.bf16.mxu0 %v1701
      %2577 = vmatmul.mubr.bf16.gmra.mxu0 %v1700
      %v2578 = vpop.f32.mrf.mxu0
      %v2579 = vadd.f32 %v1897, %v2578
      %v2580 = vpop.f32.mrf.mxu0
      %v2581 = vadd.f32 %v1901, %v2580
      %v2582 = vpop.f32.mrf.mxu0
      %v2583 = vadd.f32 %v1897, %v2582
      %v2584 = vpop.f32.mrf.mxu0
      %v2585 = vadd.f32 %v1901, %v2584
      %2586 = vmatprep.mubr.bf16.mxu0 %v1703
      %2587 = vmatmul.mubr.bf16.gmra.mxu0 %v1702
      %v2588 = vpop.f32.mrf.mxu0
      %v2589 = vadd.f32 %v1897, %v2588
      %v2590 = vpop.f32.mrf.mxu0
      %v2591 = vadd.f32 %v1901, %v2590
      %v2592 = vpop.f32.mrf.mxu0
      %v2593 = vadd.f32 %v1897, %v2592
      %v2594 = vpop.f32.mrf.mxu0
      %v2595 = vadd.f32 %v1901, %v2594
      %2596 = vmatprep.mubr.bf16.mxu0 %v1705
      %2597 = vmatmul.mubr.bf16.gmra.mxu0 %v1704
      %v2598 = vpop.f32.mrf.mxu0
      %v2599 = vadd.f32 %v1897, %v2598
      %v2600 = vpop.f32.mrf.mxu0
      %v2601 = vadd.f32 %v1901, %v2600
      %v2602 = vpop.f32.mrf.mxu0
      %v2603 = vadd.f32 %v1897, %v2602
      %v2604 = vpop.f32.mrf.mxu0
      %v2605 = vadd.f32 %v1901, %v2604
      %2606 = vmatprep.mubr.bf16.mxu0 %v1707
      %2607 = vmatmul.mubr.bf16.gmra.mxu0 %v1706
      %v2608 = vpop.f32.mrf.mxu0
      %v2609 = vadd.f32 %v1897, %v2608
      %v2610 = vpop.f32.mrf.mxu0
      %v2611 = vadd.f32 %v1901, %v2610
      %v2612 = vpop.f32.mrf.mxu0
      %v2613 = vadd.f32 %v1897, %v2612
      %v2614 = vpop.f32.mrf.mxu0
      %v2615 = vadd.f32 %v1901, %v2614
      %2616 = vmatprep.mubr.bf16.mxu0 %v1709
      %2617 = vmatmul.mubr.bf16.gmra.mxu0 %v1708
      %v2618 = vpop.f32.mrf.mxu0
      %v2619 = vadd.f32 %v1897, %v2618
      %v2620 = vpop.f32.mrf.mxu0
      %v2621 = vadd.f32 %v1901, %v2620
      %v2622 = vpop.f32.mrf.mxu0
      %v2623 = vadd.f32 %v1897, %v2622
      %v2624 = vpop.f32.mrf.mxu0
      %v2625 = vadd.f32 %v1901, %v2624
      %2626 = vmatprep.mubr.bf16.mxu0 %v1711
      %2627 = vmatmul.mubr.bf16.gmra.mxu0 %v1710
      %v2628 = vpop.f32.mrf.mxu0
      %v2629 = vadd.f32 %v1897, %v2628
      %v2630 = vpop.f32.mrf.mxu0
      %v2631 = vadd.f32 %v1901, %v2630
      %v2632 = vpop.f32.mrf.mxu0
      %v2633 = vadd.f32 %v1897, %v2632
      %v2634 = vpop.f32.mrf.mxu0
      %v2635 = vadd.f32 %v1901, %v2634
      %2636 = vmatprep.mubr.bf16.mxu0 %v1713
      %2637 = vmatmul.mubr.bf16.gmra.mxu0 %v1712
      %v2638 = vpop.f32.mrf.mxu0
      %v2639 = vadd.f32 %v1897, %v2638
      %v2640 = vpop.f32.mrf.mxu0
      %v2641 = vadd.f32 %v1901, %v2640
      %v2642 = vpop.f32.mrf.mxu0
      %v2643 = vadd.f32 %v1897, %v2642
      %v2644 = vpop.f32.mrf.mxu0
      %v2645 = vadd.f32 %v1901, %v2644
      %2646 = vmatprep.mubr.bf16.mxu0 %v1715
      %2647 = vmatmul.mubr.bf16.gmra.mxu0 %v1714
      %v2648 = vpop.f32.mrf.mxu0
      %v2649 = vadd.f32 %v1897, %v2648
      %v2650 = vpop.f32.mrf.mxu0
      %v2651 = vadd.f32 %v1901, %v2650
      %v2652 = vpop.f32.mrf.mxu0
      %v2653 = vadd.f32 %v1897, %v2652
      %v2654 = vpop.f32.mrf.mxu0
      %v2655 = vadd.f32 %v1901, %v2654
      %2656 = vdwg.mxu0
      %2657 = vmatprep.subr.bf16.mxu0 %v2335
      %2658 = vmatpush1.bf16.msra.mxu0 %v2334
      %2659 = vmatprep.subr.bf16.mxu0 %v2333
      %2660 = vmatpush1.bf16.msra.mxu0 %v2332
      %2661 = vmatprep.subr.bf16.mxu0 %v2331
      %2662 = vmatpush1.bf16.msra.mxu0 %v2330
      %2663 = vmatprep.subr.bf16.mxu0 %v2329
      %2664 = vmatpush1.bf16.msra.mxu0 %v2328
      %2665 = vmatprep.subr.bf16.mxu0 %v2327
      %2666 = vmatpush1.bf16.msra.mxu0 %v2326
      %2667 = vmatprep.subr.bf16.mxu0 %v2325
      %2668 = vmatpush1.bf16.msra.mxu0 %v2324
      %2669 = vmatprep.subr.bf16.mxu0 %v2323
      %2670 = vmatpush1.bf16.msra.mxu0 %v2322
      %2671 = vmatprep.subr.bf16.mxu0 %v2321
      %2672 = vmatpush1.bf16.msra.mxu0 %v2320
      %2673 = vmatprep.subr.bf16.mxu0 %v2351
      %2674 = vmatpush2.bf16.msra.mxu0 %v2350
      %2675 = vmatprep.subr.bf16.mxu0 %v2349
      %2676 = vmatpush2.bf16.msra.mxu0 %v2348
      %2677 = vmatprep.subr.bf16.mxu0 %v2347
      %2678 = vmatpush2.bf16.msra.mxu0 %v2346
      %2679 = vmatprep.subr.bf16.mxu0 %v2345
      %2680 = vmatpush2.bf16.msra.mxu0 %v2344
      %2681 = vmatprep.subr.bf16.mxu0 %v2343
      %2682 = vmatpush2.bf16.msra.mxu0 %v2342
      %2683 = vmatprep.subr.bf16.mxu0 %v2341
      %2684 = vmatpush2.bf16.msra.mxu0 %v2340
      %2685 = vmatprep.subr.bf16.mxu0 %v2339
      %2686 = vmatpush2.bf16.msra.mxu0 %v2338
      %2687 = vmatprep.subr.bf16.mxu0 %v2337
      %2688 = vmatpush2.bf16.msra.mxu0 %v2336
      %2689 = vmatprep.mubr.bf16.mxu0 %v1717
      %2690 = vmatmul.mubr.bf16.gmra.mxu0 %v1716
      %v2691 = vpop.f32.mrf.mxu0
      %v2692 = vadd.f32 %v2579, %v2691
      %v2693 = vpop.f32.mrf.mxu0
      %v2694 = vadd.f32 %v2581, %v2693
      %v2695 = vpop.f32.mrf.mxu0
      %v2696 = vadd.f32 %v2583, %v2695
      %v2697 = vpop.f32.mrf.mxu0
      %v2698 = vadd.f32 %v2585, %v2697
      %2699 = vmatprep.mubr.bf16.mxu0 %v1719
      %2700 = vmatmul.mubr.bf16.gmra.mxu0 %v1718
      %v2701 = vpop.f32.mrf.mxu0
      %v2702 = vadd.f32 %v2589, %v2701
      %v2703 = vpop.f32.mrf.mxu0
      %v2704 = vadd.f32 %v2591, %v2703
      %v2705 = vpop.f32.mrf.mxu0
      %v2706 = vadd.f32 %v2593, %v2705
      %v2707 = vpop.f32.mrf.mxu0
      %v2708 = vadd.f32 %v2595, %v2707
      %2709 = vmatprep.mubr.bf16.mxu0 %v1721
      %2710 = vmatmul.mubr.bf16.gmra.mxu0 %v1720
      %v2711 = vpop.f32.mrf.mxu0
      %v2712 = vadd.f32 %v2599, %v2711
      %v2713 = vpop.f32.mrf.mxu0
      %v2714 = vadd.f32 %v2601, %v2713
      %v2715 = vpop.f32.mrf.mxu0
      %v2716 = vadd.f32 %v2603, %v2715
      %v2717 = vpop.f32.mrf.mxu0
      %v2718 = vadd.f32 %v2605, %v2717
      %2719 = vmatprep.mubr.bf16.mxu0 %v1723
      %2720 = vmatmul.mubr.bf16.gmra.mxu0 %v1722
      %v2721 = vpop.f32.mrf.mxu0
      %v2722 = vadd.f32 %v2609, %v2721
      %v2723 = vpop.f32.mrf.mxu0
      %v2724 = vadd.f32 %v2611, %v2723
      %v2725 = vpop.f32.mrf.mxu0
      %v2726 = vadd.f32 %v2613, %v2725
      %v2727 = vpop.f32.mrf.mxu0
      %v2728 = vadd.f32 %v2615, %v2727
      %2729 = vmatprep.mubr.bf16.mxu0 %v1725
      %2730 = vmatmul.mubr.bf16.gmra.mxu0 %v1724
      %v2731 = vpop.f32.mrf.mxu0
      %v2732 = vadd.f32 %v2619, %v2731
      %v2733 = vpop.f32.mrf.mxu0
      %v2734 = vadd.f32 %v2621, %v2733
      %v2735 = vpop.f32.mrf.mxu0
      %v2736 = vadd.f32 %v2623, %v2735
      %v2737 = vpop.f32.mrf.mxu0
      %v2738 = vadd.f32 %v2625, %v2737
      %2739 = vmatprep.mubr.bf16.mxu0 %v1727
      %2740 = vmatmul.mubr.bf16.gmra.mxu0 %v1726
      %v2741 = vpop.f32.mrf.mxu0
      %v2742 = vadd.f32 %v2629, %v2741
      %v2743 = vpop.f32.mrf.mxu0
      %v2744 = vadd.f32 %v2631, %v2743
      %v2745 = vpop.f32.mrf.mxu0
      %v2746 = vadd.f32 %v2633, %v2745
      %v2747 = vpop.f32.mrf.mxu0
      %v2748 = vadd.f32 %v2635, %v2747
      %2749 = vmatprep.mubr.bf16.mxu0 %v1729
      %2750 = vmatmul.mubr.bf16.gmra.mxu0 %v1728
      %v2751 = vpop.f32.mrf.mxu0
      %v2752 = vadd.f32 %v2639, %v2751
      %v2753 = vpop.f32.mrf.mxu0
      %v2754 = vadd.f32 %v2641, %v2753
      %v2755 = vpop.f32.mrf.mxu0
      %v2756 = vadd.f32 %v2643, %v2755
      %v2757 = vpop.f32.mrf.mxu0
      %v2758 = vadd.f32 %v2645, %v2757
      %2759 = vmatprep.mubr.bf16.mxu0 %v1731
      %2760 = vmatmul.mubr.bf16.gmra.mxu0 %v1730
      %v2761 = vpop.f32.mrf.mxu0
      %v2762 = vadd.f32 %v2649, %v2761
      %v2763 = vpop.f32.mrf.mxu0
      %v2764 = vadd.f32 %v2651, %v2763
      %v2765 = vpop.f32.mrf.mxu0
      %v2766 = vadd.f32 %v2653, %v2765
      %v2767 = vpop.f32.mrf.mxu0
      %v2768 = vadd.f32 %v2655, %v2767
      %2769 = vdwg.mxu0
      %2770 = vmatprep.subr.bf16.mxu0 %v2367
      %2771 = vmatpush1.bf16.msra.mxu0 %v2366
      %2772 = vmatprep.subr.bf16.mxu0 %v2365
      %2773 = vmatpush1.bf16.msra.mxu0 %v2364
      %2774 = vmatprep.subr.bf16.mxu0 %v2363
      %2775 = vmatpush1.bf16.msra.mxu0 %v2362
      %2776 = vmatprep.subr.bf16.mxu0 %v2361
      %2777 = vmatpush1.bf16.msra.mxu0 %v2360
      %2778 = vmatprep.subr.bf16.mxu0 %v2359
      %2779 = vmatpush1.bf16.msra.mxu0 %v2358
      %2780 = vmatprep.subr.bf16.mxu0 %v2357
      %2781 = vmatpush1.bf16.msra.mxu0 %v2356
      %2782 = vmatprep.subr.bf16.mxu0 %v2355
      %2783 = vmatpush1.bf16.msra.mxu0 %v2354
      %2784 = vmatprep.subr.bf16.mxu0 %v2353
      %2785 = vmatpush1.bf16.msra.mxu0 %v2352
      %2786 = vmatprep.subr.bf16.mxu0 %v2383
      %2787 = vmatpush2.bf16.msra.mxu0 %v2382
      %2788 = vmatprep.subr.bf16.mxu0 %v2381
      %2789 = vmatpush2.bf16.msra.mxu0 %v2380
      %2790 = vmatprep.subr.bf16.mxu0 %v2379
      %2791 = vmatpush2.bf16.msra.mxu0 %v2378
      %2792 = vmatprep.subr.bf16.mxu0 %v2377
      %2793 = vmatpush2.bf16.msra.mxu0 %v2376
      %2794 = vmatprep.subr.bf16.mxu0 %v2375
      %2795 = vmatpush2.bf16.msra.mxu0 %v2374
      %2796 = vmatprep.subr.bf16.mxu0 %v2373
      %2797 = vmatpush2.bf16.msra.mxu0 %v2372
      %2798 = vmatprep.subr.bf16.mxu0 %v2371
      %2799 = vmatpush2.bf16.msra.mxu0 %v2370
      %2800 = vmatprep.subr.bf16.mxu0 %v2369
      %2801 = vmatpush2.bf16.msra.mxu0 %v2368
      %2802 = vmatprep.mubr.bf16.mxu0 %v1733
      %2803 = vmatmul.mubr.bf16.gmra.mxu0 %v1732
      %v2804 = vpop.f32.mrf.mxu0
      %v2805 = vadd.f32 %v2692, %v2804
      %v2806 = vpop.f32.mrf.mxu0
      %v2807 = vadd.f32 %v2694, %v2806
      %v2808 = vpop.f32.mrf.mxu0
      %v2809 = vadd.f32 %v2696, %v2808
      %v2810 = vpop.f32.mrf.mxu0
      %v2811 = vadd.f32 %v2698, %v2810
      %2812 = vmatprep.mubr.bf16.mxu0 %v1735
      %2813 = vmatmul.mubr.bf16.gmra.mxu0 %v1734
      %v2814 = vpop.f32.mrf.mxu0
      %v2815 = vadd.f32 %v2702, %v2814
      %v2816 = vpop.f32.mrf.mxu0
      %v2817 = vadd.f32 %v2704, %v2816
      %v2818 = vpop.f32.mrf.mxu0
      %v2819 = vadd.f32 %v2706, %v2818
      %v2820 = vpop.f32.mrf.mxu0
      %v2821 = vadd.f32 %v2708, %v2820
      %2822 = vmatprep.mubr.bf16.mxu0 %v1737
      %2823 = vmatmul.mubr.bf16.gmra.mxu0 %v1736
      %v2824 = vpop.f32.mrf.mxu0
      %v2825 = vadd.f32 %v2712, %v2824
      %v2826 = vpop.f32.mrf.mxu0
      %v2827 = vadd.f32 %v2714, %v2826
      %v2828 = vpop.f32.mrf.mxu0
      %v2829 = vadd.f32 %v2716, %v2828
      %v2830 = vpop.f32.mrf.mxu0
      %v2831 = vadd.f32 %v2718, %v2830
      %2832 = vmatprep.mubr.bf16.mxu0 %v1739
      %2833 = vmatmul.mubr.bf16.gmra.mxu0 %v1738
      %v2834 = vpop.f32.mrf.mxu0
      %v2835 = vadd.f32 %v2722, %v2834
      %v2836 = vpop.f32.mrf.mxu0
      %v2837 = vadd.f32 %v2724, %v2836
      %v2838 = vpop.f32.mrf.mxu0
      %v2839 = vadd.f32 %v2726, %v2838
      %v2840 = vpop.f32.mrf.mxu0
      %v2841 = vadd.f32 %v2728, %v2840
      %2842 = vmatprep.mubr.bf16.mxu0 %v1741
      %2843 = vmatmul.mubr.bf16.gmra.mxu0 %v1740
      %v2844 = vpop.f32.mrf.mxu0
      %v2845 = vadd.f32 %v2732, %v2844
      %v2846 = vpop.f32.mrf.mxu0
      %v2847 = vadd.f32 %v2734, %v2846
      %v2848 = vpop.f32.mrf.mxu0
      %v2849 = vadd.f32 %v2736, %v2848
      %v2850 = vpop.f32.mrf.mxu0
      %v2851 = vadd.f32 %v2738, %v2850
      %2852 = vmatprep.mubr.bf16.mxu0 %v1743
      %2853 = vmatmul.mubr.bf16.gmra.mxu0 %v1742
      %v2854 = vpop.f32.mrf.mxu0
      %v2855 = vadd.f32 %v2742, %v2854
      %v2856 = vpop.f32.mrf.mxu0
      %v2857 = vadd.f32 %v2744, %v2856
      %v2858 = vpop.f32.mrf.mxu0
      %v2859 = vadd.f32 %v2746, %v2858
      %v2860 = vpop.f32.mrf.mxu0
      %v2861 = vadd.f32 %v2748, %v2860
      %2862 = vmatprep.mubr.bf16.mxu0 %v1745
      %2863 = vmatmul.mubr.bf16.gmra.mxu0 %v1744
      %v2864 = vpop.f32.mrf.mxu0
      %v2865 = vadd.f32 %v2752, %v2864
      %v2866 = vpop.f32.mrf.mxu0
      %v2867 = vadd.f32 %v2754, %v2866
      %v2868 = vpop.f32.mrf.mxu0
      %v2869 = vadd.f32 %v2756, %v2868
      %v2870 = vpop.f32.mrf.mxu0
      %v2871 = vadd.f32 %v2758, %v2870
      %2872 = vmatprep.mubr.bf16.mxu0 %v1747
      %2873 = vmatmul.mubr.bf16.gmra.mxu0 %v1746
      %v2874 = vpop.f32.mrf.mxu0
      %v2875 = vadd.f32 %v2762, %v2874
      %v2876 = vpop.f32.mrf.mxu0
      %v2877 = vadd.f32 %v2764, %v2876
      %v2878 = vpop.f32.mrf.mxu0
      %v2879 = vadd.f32 %v2766, %v2878
      %v2880 = vpop.f32.mrf.mxu0
      %v2881 = vadd.f32 %v2768, %v2880
      %2882 = vdwg.mxu0
      %2883 = vmatprep.subr.bf16.mxu0 %v2399
      %2884 = vmatpush1.bf16.msra.mxu0 %v2398
      %2885 = vmatprep.subr.bf16.mxu0 %v2397
      %2886 = vmatpush1.bf16.msra.mxu0 %v2396
      %2887 = vmatprep.subr.bf16.mxu0 %v2395
      %2888 = vmatpush1.bf16.msra.mxu0 %v2394
      %2889 = vmatprep.subr.bf16.mxu0 %v2393
      %2890 = vmatpush1.bf16.msra.mxu0 %v2392
      %2891 = vmatprep.subr.bf16.mxu0 %v2391
      %2892 = vmatpush1.bf16.msra.mxu0 %v2390
      %2893 = vmatprep.subr.bf16.mxu0 %v2389
      %2894 = vmatpush1.bf16.msra.mxu0 %v2388
      %2895 = vmatprep.subr.bf16.mxu0 %v2387
      %2896 = vmatpush1.bf16.msra.mxu0 %v2386
      %2897 = vmatprep.subr.bf16.mxu0 %v2385
      %2898 = vmatpush1.bf16.msra.mxu0 %v2384
      %2899 = vmatprep.subr.bf16.mxu0 %v2415
      %2900 = vmatpush2.bf16.msra.mxu0 %v2414
      %2901 = vmatprep.subr.bf16.mxu0 %v2413
      %2902 = vmatpush2.bf16.msra.mxu0 %v2412
      %2903 = vmatprep.subr.bf16.mxu0 %v2411
      %2904 = vmatpush2.bf16.msra.mxu0 %v2410
      %2905 = vmatprep.subr.bf16.mxu0 %v2409
      %2906 = vmatpush2.bf16.msra.mxu0 %v2408
      %2907 = vmatprep.subr.bf16.mxu0 %v2407
      %2908 = vmatpush2.bf16.msra.mxu0 %v2406
      %2909 = vmatprep.subr.bf16.mxu0 %v2405
      %2910 = vmatpush2.bf16.msra.mxu0 %v2404
      %2911 = vmatprep.subr.bf16.mxu0 %v2403
      %2912 = vmatpush2.bf16.msra.mxu0 %v2402
      %2913 = vmatprep.subr.bf16.mxu0 %v2401
      %2914 = vmatpush2.bf16.msra.mxu0 %v2400
      %2915 = vmatprep.mubr.bf16.mxu0 %v1749
      %2916 = vmatmul.mubr.bf16.gmra.mxu0 %v1748
      %v2917 = vpop.f32.mrf.mxu0
      %v2918 = vadd.f32 %v2805, %v2917
      %v2919 = vpop.f32.mrf.mxu0
      %v2920 = vadd.f32 %v2807, %v2919
      %v2921 = vpop.f32.mrf.mxu0
      %v2922 = vadd.f32 %v2809, %v2921
      %v2923 = vpop.f32.mrf.mxu0
      %v2924 = vadd.f32 %v2811, %v2923
      %2925 = vmatprep.mubr.bf16.mxu0 %v1751
      %2926 = vmatmul.mubr.bf16.gmra.mxu0 %v1750
      %v2927 = vpop.f32.mrf.mxu0
      %v2928 = vadd.f32 %v2815, %v2927
      %v2929 = vpop.f32.mrf.mxu0
      %v2930 = vadd.f32 %v2817, %v2929
      %v2931 = vpop.f32.mrf.mxu0
      %v2932 = vadd.f32 %v2819, %v2931
      %v2933 = vpop.f32.mrf.mxu0
      %v2934 = vadd.f32 %v2821, %v2933
      %2935 = vmatprep.mubr.bf16.mxu0 %v1753
      %2936 = vmatmul.mubr.bf16.gmra.mxu0 %v1752
      %v2937 = vpop.f32.mrf.mxu0
      %v2938 = vadd.f32 %v2825, %v2937
      %v2939 = vpop.f32.mrf.mxu0
      %v2940 = vadd.f32 %v2827, %v2939
      %v2941 = vpop.f32.mrf.mxu0
      %v2942 = vadd.f32 %v2829, %v2941
      %v2943 = vpop.f32.mrf.mxu0
      %v2944 = vadd.f32 %v2831, %v2943
      %2945 = vmatprep.mubr.bf16.mxu0 %v1755
      %2946 = vmatmul.mubr.bf16.gmra.mxu0 %v1754
      %v2947 = vpop.f32.mrf.mxu0
      %v2948 = vadd.f32 %v2835, %v2947
      %v2949 = vpop.f32.mrf.mxu0
      %v2950 = vadd.f32 %v2837, %v2949
      %v2951 = vpop.f32.mrf.mxu0
      %v2952 = vadd.f32 %v2839, %v2951
      %v2953 = vpop.f32.mrf.mxu0
      %v2954 = vadd.f32 %v2841, %v2953
      %2955 = vmatprep.mubr.bf16.mxu0 %v1757
      %2956 = vmatmul.mubr.bf16.gmra.mxu0 %v1756
      %v2957 = vpop.f32.mrf.mxu0
      %v2958 = vadd.f32 %v2845, %v2957
      %v2959 = vpop.f32.mrf.mxu0
      %v2960 = vadd.f32 %v2847, %v2959
      %v2961 = vpop.f32.mrf.mxu0
      %v2962 = vadd.f32 %v2849, %v2961
      %v2963 = vpop.f32.mrf.mxu0
      %v2964 = vadd.f32 %v2851, %v2963
      %2965 = vmatprep.mubr.bf16.mxu0 %v1759
      %2966 = vmatmul.mubr.bf16.gmra.mxu0 %v1758
      %v2967 = vpop.f32.mrf.mxu0
      %v2968 = vadd.f32 %v2855, %v2967
      %v2969 = vpop.f32.mrf.mxu0
      %v2970 = vadd.f32 %v2857, %v2969
      %v2971 = vpop.f32.mrf.mxu0
      %v2972 = vadd.f32 %v2859, %v2971
      %v2973 = vpop.f32.mrf.mxu0
      %v2974 = vadd.f32 %v2861, %v2973
      %2975 = vmatprep.mubr.bf16.mxu0 %v1761
      %2976 = vmatmul.mubr.bf16.gmra.mxu0 %v1760
      %v2977 = vpop.f32.mrf.mxu0
      %v2978 = vadd.f32 %v2865, %v2977
      %v2979 = vpop.f32.mrf.mxu0
      %v2980 = vadd.f32 %v2867, %v2979
      %v2981 = vpop.f32.mrf.mxu0
      %v2982 = vadd.f32 %v2869, %v2981
      %v2983 = vpop.f32.mrf.mxu0
      %v2984 = vadd.f32 %v2871, %v2983
      %2985 = vmatprep.mubr.bf16.mxu0 %v1763
      %2986 = vmatmul.mubr.bf16.gmra.mxu0 %v1762
      %v2987 = vpop.f32.mrf.mxu0
      %v2988 = vadd.f32 %v2875, %v2987
      %v2989 = vpop.f32.mrf.mxu0
      %v2990 = vadd.f32 %v2877, %v2989
      %v2991 = vpop.f32.mrf.mxu0
      %v2992 = vadd.f32 %v2879, %v2991
      %v2993 = vpop.f32.mrf.mxu0
      %v2994 = vadd.f32 %v2881, %v2993
      %2995 = vdwg.mxu0
      %vm2996 = vcmp.gt.f32.partialorder %v2918, 0.0
      %vm2997 = vcmp.gt.f32.partialorder %v2920, 0.0
      %vm2998 = vcmp.gt.f32.partialorder %v2922, 0.0
      %vm2999 = vcmp.gt.f32.partialorder %v2924, 0.0
      %vm3000 = vcmp.gt.f32.partialorder %v2928, 0.0
      %vm3001 = vcmp.gt.f32.partialorder %v2930, 0.0
      %vm3002 = vcmp.gt.f32.partialorder %v2932, 0.0
      %vm3003 = vcmp.gt.f32.partialorder %v2934, 0.0
      %vm3004 = vcmp.gt.f32.partialorder %v2938, 0.0
      %vm3005 = vcmp.gt.f32.partialorder %v2940, 0.0
      %vm3006 = vcmp.gt.f32.partialorder %v2942, 0.0
      %vm3007 = vcmp.gt.f32.partialorder %v2944, 0.0
      %vm3008 = vcmp.gt.f32.partialorder %v2948, 0.0
      %vm3009 = vcmp.gt.f32.partialorder %v2950, 0.0
      %vm3010 = vcmp.gt.f32.partialorder %v2952, 0.0
      %vm3011 = vcmp.gt.f32.partialorder %v2954, 0.0
      %vm3012 = vcmp.gt.f32.partialorder %v2958, 0.0
      %vm3013 = vcmp.gt.f32.partialorder %v2960, 0.0
      %vm3014 = vcmp.gt.f32.partialorder %v2962, 0.0
      %vm3015 = vcmp.gt.f32.partialorder %v2964, 0.0
      %vm3016 = vcmp.gt.f32.partialorder %v2968, 0.0
      %vm3017 = vcmp.gt.f32.partialorder %v2970, 0.0
      %vm3018 = vcmp.gt.f32.partialorder %v2972, 0.0
      %vm3019 = vcmp.gt.f32.partialorder %v2974, 0.0
      %vm3020 = vcmp.gt.f32.partialorder %v2978, 0.0
      %vm3021 = vcmp.gt.f32.partialorder %v2980, 0.0
      %vm3022 = vcmp.gt.f32.partialorder %v2982, 0.0
      %vm3023 = vcmp.gt.f32.partialorder %v2984, 0.0
      %vm3024 = vcmp.gt.f32.partialorder %v2988, 0.0
      %vm3025 = vcmp.gt.f32.partialorder %v2990, 0.0
      %vm3026 = vcmp.gt.f32.partialorder %v2992, 0.0
      %vm3027 = vcmp.gt.f32.partialorder %v2994, 0.0
      %v3028 = vmul.f32 %v2918, 0.2
      %v3029 = vmul.f32 %v2920, 0.2
      %v3030 = vmul.f32 %v2922, 0.2
      %v3031 = vmul.f32 %v2924, 0.2
      %v3032 = vmul.f32 %v2928, 0.2
      %v3033 = vmul.f32 %v2930, 0.2
      %v3034 = vmul.f32 %v2932, 0.2
      %v3035 = vmul.f32 %v2934, 0.2
      %v3036 = vmul.f32 %v2938, 0.2
      %v3037 = vmul.f32 %v2940, 0.2
      %v3038 = vmul.f32 %v2942, 0.2
      %v3039 = vmul.f32 %v2944, 0.2
      %v3040 = vmul.f32 %v2948, 0.2
      %v3041 = vmul.f32 %v2950, 0.2
      %v3042 = vmul.f32 %v2952, 0.2
      %v3043 = vmul.f32 %v2954, 0.2
      %v3044 = vmul.f32 %v2958, 0.2
      %v3045 = vmul.f32 %v2960, 0.2
      %v3046 = vmul.f32 %v2962, 0.2
      %v3047 = vmul.f32 %v2964, 0.2
      %v3048 = vmul.f32 %v2968, 0.2
      %v3049 = vmul.f32 %v2970, 0.2
      %v3050 = vmul.f32 %v2972, 0.2
      %v3051 = vmul.f32 %v2974, 0.2
      %v3052 = vmul.f32 %v2978, 0.2
      %v3053 = vmul.f32 %v2980, 0.2
      %v3054 = vmul.f32 %v2982, 0.2
      %v3055 = vmul.f32 %v2984, 0.2
      %v3056 = vmul.f32 %v2988, 0.2
      %v3057 = vmul.f32 %v2990, 0.2
      %v3058 = vmul.f32 %v2992, 0.2
      %v3059 = vmul.f32 %v2994, 0.2
      %v3060 = vsel %vm2996, %v2918, %v3028
      %v3061 = vsel %vm2997, %v2920, %v3029
      %v3062 = vsel %vm2998, %v2922, %v3030
      %v3063 = vsel %vm2999, %v2924, %v3031
      %v3064 = vsel %vm3000, %v2928, %v3032
      %v3065 = vsel %vm3001, %v2930, %v3033
      %v3066 = vsel %vm3002, %v2932, %v3034
      %v3067 = vsel %vm3003, %v2934, %v3035
      %v3068 = vsel %vm3004, %v2938, %v3036
      %v3069 = vsel %vm3005, %v2940, %v3037
      %v3070 = vsel %vm3006, %v2942, %v3038
      %v3071 = vsel %vm3007, %v2944, %v3039
      %v3072 = vsel %vm3008, %v2948, %v3040
      %v3073 = vsel %vm3009, %v2950, %v3041
      %v3074 = vsel %vm3010, %v2952, %v3042
      %v3075 = vsel %vm3011, %v2954, %v3043
      %v3076 = vsel %vm3012, %v2958, %v3044
      %v3077 = vsel %vm3013, %v2960, %v3045
      %v3078 = vsel %vm3014, %v2962, %v3046
      %v3079 = vsel %vm3015, %v2964, %v3047
      %v3080 = vsel %vm3016, %v2968, %v3048
      %v3081 = vsel %vm3017, %v2970, %v3049
      %v3082 = vsel %vm3018, %v2972, %v3050
      %v3083 = vsel %vm3019, %v2974, %v3051
      %v3084 = vsel %vm3020, %v2978, %v3052
      %v3085 = vsel %vm3021, %v2980, %v3053
      %v3086 = vsel %vm3022, %v2982, %v3054
      %v3087 = vsel %vm3023, %v2984, %v3055
      %v3088 = vsel %vm3024, %v2988, %v3056
      %v3089 = vsel %vm3025, %v2990, %v3057
      %v3090 = vsel %vm3026, %v2992, %v3058
      %v3091 = vsel %vm3027, %v2994, %v3059
      %v3092 = vpack.c.bf16 %v3062, %v3060
      %v3093 = vpack.c.bf16 %v3063, %v3061
      %v3094 = vpack.c.bf16 %v3066, %v3064
      %v3095 = vpack.c.bf16 %v3067, %v3065
      %v3096 = vpack.c.bf16 %v3070, %v3068
      %v3097 = vpack.c.bf16 %v3071, %v3069
      %v3098 = vpack.c.bf16 %v3074, %v3072
      %v3099 = vpack.c.bf16 %v3075, %v3073
      %v3100 = vpack.c.bf16 %v3078, %v3076
      %v3101 = vpack.c.bf16 %v3079, %v3077
      %v3102 = vpack.c.bf16 %v3082, %v3080
      %v3103 = vpack.c.bf16 %v3083, %v3081
      %v3104 = vpack.c.bf16 %v3086, %v3084
      %v3105 = vpack.c.bf16 %v3087, %v3085
      %v3106 = vpack.c.bf16 %v3090, %v3088
      %v3107 = vpack.c.bf16 %v3091, %v3089
      %v3108 = vld [vmem:[%s4] sm:$0xf]
      %v3109 = vld [vmem:[%s4 + $0x4] sm:$0xf]
      %v3110 = vld [vmem:[%s4 + $0x8] sm:$0xf]
      %v3111 = vld [vmem:[%s4 + $0xc] sm:$0xf]
      %v3112 = vld [vmem:[%s4 + $0x10] sm:$0xf]
      %v3113 = vld [vmem:[%s4 + $0x14] sm:$0xf]
      %v3114 = vld [vmem:[%s4 + $0x18] sm:$0xf]
      %v3115 = vld [vmem:[%s4 + $0x1c] sm:$0xf]
      %v3116 = vld [vmem:[%s4 + $0x20] sm:$0xf]
      %v3117 = vld [vmem:[%s4 + $0x24] sm:$0xf]
      %v3118 = vld [vmem:[%s4 + $0x28] sm:$0xf]
      %v3119 = vld [vmem:[%s4 + $0x2c] sm:$0xf]
      %v3120 = vld [vmem:[%s4 + $0x30] sm:$0xf]
      %v3121 = vld [vmem:[%s4 + $0x34] sm:$0xf]
      %v3122 = vld [vmem:[%s4 + $0x38] sm:$0xf]
      %v3123 = vld [vmem:[%s4 + $0x3c] sm:$0xf]
      %v3124 = vld [vmem:[%s4 + $0x40] sm:$0xf]
      %v3125 = vld [vmem:[%s4 + $0x44] sm:$0xf]
      %v3126 = vld [vmem:[%s4 + $0x48] sm:$0xf]
      %v3127 = vld [vmem:[%s4 + $0x4c] sm:$0xf]
      %v3128 = vld [vmem:[%s4 + $0x50] sm:$0xf]
      %v3129 = vld [vmem:[%s4 + $0x54] sm:$0xf]
      %v3130 = vld [vmem:[%s4 + $0x58] sm:$0xf]
      %v3131 = vld [vmem:[%s4 + $0x5c] sm:$0xf]
      %v3132 = vld [vmem:[%s4 + $0x60] sm:$0xf]
      %v3133 = vld [vmem:[%s4 + $0x64] sm:$0xf]
      %v3134 = vld [vmem:[%s4 + $0x68] sm:$0xf]
      %v3135 = vld [vmem:[%s4 + $0x6c] sm:$0xf]
      %v3136 = vld [vmem:[%s4 + $0x70] sm:$0xf]
      %v3137 = vld [vmem:[%s4 + $0x74] sm:$0xf]
      %v3138 = vld [vmem:[%s4 + $0x78] sm:$0xf]
      %v3139 = vld [vmem:[%s4 + $0x7c] sm:$0xf]
      %v3172 = vunpack.c.l.b16 %v3108
      %v3173 = vunpack.c.l.b16 %v3109
      %v3174 = vunpack.c.l.b16 %v3110
      %v3175 = vunpack.c.l.b16 %v3111
      %v3176 = vunpack.c.l.b16 %v3112
      %v3177 = vunpack.c.l.b16 %v3113
      %v3178 = vunpack.c.l.b16 %v3114
      %v3179 = vunpack.c.l.b16 %v3115
      %v3180 = vunpack.c.l.b16 %v3116
      %v3181 = vunpack.c.l.b16 %v3117
      %v3182 = vunpack.c.l.b16 %v3118
      %v3183 = vunpack.c.l.b16 %v3119
      %v3184 = vunpack.c.l.b16 %v3120
      %v3185 = vunpack.c.l.b16 %v3121
      %v3186 = vunpack.c.l.b16 %v3122
      %v3187 = vunpack.c.l.b16 %v3123
      %v3188 = vunpack.c.l.b16 %v3124
      %v3189 = vunpack.c.l.b16 %v3125
      %v3190 = vunpack.c.l.b16 %v3126
      %v3191 = vunpack.c.l.b16 %v3127
      %v3192 = vunpack.c.l.b16 %v3128
      %v3193 = vunpack.c.l.b16 %v3129
      %v3194 = vunpack.c.l.b16 %v3130
      %v3195 = vunpack.c.l.b16 %v3131
      %v3196 = vunpack.c.l.b16 %v3132
      %v3197 = vunpack.c.l.b16 %v3133
      %v3198 = vunpack.c.l.b16 %v3134
      %v3199 = vunpack.c.l.b16 %v3135
      %v3200 = vunpack.c.l.b16 %v3136
      %v3201 = vunpack.c.l.b16 %v3137
      %v3202 = vunpack.c.l.b16 %v3138
      %v3203 = vunpack.c.l.b16 %v3139
      %v3204 = vpack.c.b16 %v3173, %v3172
      %v3205 = vpack.c.b16 %v3175, %v3174
      %v3206 = vpack.c.b16 %v3177, %v3176
      %v3207 = vpack.c.b16 %v3179, %v3178
      %v3208 = vpack.c.b16 %v3181, %v3180
      %v3209 = vpack.c.b16 %v3183, %v3182
      %v3210 = vpack.c.b16 %v3185, %v3184
      %v3211 = vpack.c.b16 %v3187, %v3186
      %v3212 = vpack.c.b16 %v3189, %v3188
      %v3213 = vpack.c.b16 %v3191, %v3190
      %v3214 = vpack.c.b16 %v3193, %v3192
      %v3215 = vpack.c.b16 %v3195, %v3194
      %v3216 = vpack.c.b16 %v3197, %v3196
      %v3217 = vpack.c.b16 %v3199, %v3198
      %v3218 = vpack.c.b16 %v3201, %v3200
      %v3219 = vpack.c.b16 %v3203, %v3202
      %3236 = vmatprep.subr.bf16.mxu0 %v3107
      %3237 = vmatpush1.bf16.msra.mxu0 %v3106
      %3238 = vmatprep.subr.bf16.mxu0 %v3105
      %3239 = vmatpush1.bf16.msra.mxu0 %v3104
      %3240 = vmatprep.subr.bf16.mxu0 %v3103
      %3241 = vmatpush1.bf16.msra.mxu0 %v3102
      %3242 = vmatprep.subr.bf16.mxu0 %v3101
      %3243 = vmatpush1.bf16.msra.mxu0 %v3100
      %3244 = vmatprep.subr.bf16.mxu0 %v3099
      %3245 = vmatpush1.bf16.msra.mxu0 %v3098
      %3246 = vmatprep.subr.bf16.mxu0 %v3097
      %3247 = vmatpush1.bf16.msra.mxu0 %v3096
      %3248 = vmatprep.subr.bf16.mxu0 %v3095
      %3249 = vmatpush1.bf16.msra.mxu0 %v3094
      %3250 = vmatprep.subr.bf16.mxu0 %v3093
      %3251 = vmatpush1.bf16.msra.mxu0 %v3092
      %3252 = vmatprep.subr.bf16.mxu0 0
      %3253 = vmatpush2.bf16.msra.mxu0 0
      %3254 = vmatprep.subr.bf16.mxu0 0
      %3255 = vmatpush2.bf16.msra.mxu0 0
      %3256 = vmatprep.subr.bf16.mxu0 0
      %3257 = vmatpush2.bf16.msra.mxu0 0
      %3258 = vmatprep.subr.bf16.mxu0 0
      %3259 = vmatpush2.bf16.msra.mxu0 0
      %3260 = vmatprep.subr.bf16.mxu0 0
      %3261 = vmatpush2.bf16.msra.mxu0 0
      %3262 = vmatprep.subr.bf16.mxu0 0
      %3263 = vmatpush2.bf16.msra.mxu0 0
      %3264 = vmatprep.subr.bf16.mxu0 0
      %3265 = vmatpush2.bf16.msra.mxu0 0
      %3266 = vmatprep.subr.bf16.mxu0 0
      %3267 = vmatpush2.bf16.msra.mxu0 0
      %3268 = vmatprep.mubr.bf16.mxu0 0
      %3269 = vmatmul.mubr.bf16.gmra.mxu0 %v3204
      %v3270 = vpop.f32.mrf.mxu0
      %v3271 = vadd.f32 0.0, %v3270
      %v3272 = vpop.f32.mrf.mxu0
      %v3273 = vadd.f32 0.0, %v3272
      %v3274 = vpop.f32.mrf.mxu0
      %v3275 = vadd.f32 0.0, %v3274
      %v3276 = vpop.f32.mrf.mxu0
      %v3277 = vadd.f32 0.0, %v3276
      %3278 = vmatprep.mubr.bf16.mxu0 0
      %3279 = vmatmul.mubr.bf16.gmra.mxu0 %v3205
      %v3280 = vpop.f32.mrf.mxu0
      %v3281 = vadd.f32 0.0, %v3280
      %v3282 = vpop.f32.mrf.mxu0
      %v3283 = vadd.f32 0.0, %v3282
      %v3284 = vpop.f32.mrf.mxu0
      %v3285 = vadd.f32 0.0, %v3284
      %v3286 = vpop.f32.mrf.mxu0
      %v3287 = vadd.f32 0.0, %v3286
      %3288 = vmatprep.mubr.bf16.mxu0 0
      %3289 = vmatmul.mubr.bf16.gmra.mxu0 %v3206
      %v3290 = vpop.f32.mrf.mxu0
      %v3291 = vadd.f32 0.0, %v3290
      %v3292 = vpop.f32.mrf.mxu0
      %v3293 = vadd.f32 0.0, %v3292
      %v3294 = vpop.f32.mrf.mxu0
      %v3295 = vadd.f32 0.0, %v3294
      %v3296 = vpop.f32.mrf.mxu0
      %v3297 = vadd.f32 0.0, %v3296
      %3298 = vmatprep.mubr.bf16.mxu0 0
      %3299 = vmatmul.mubr.bf16.gmra.mxu0 %v3207
      %v3300 = vpop.f32.mrf.mxu0
      %v3301 = vadd.f32 0.0, %v3300
      %v3302 = vpop.f32.mrf.mxu0
      %v3303 = vadd.f32 0.0, %v3302
      %v3304 = vpop.f32.mrf.mxu0
      %v3305 = vadd.f32 0.0, %v3304
      %v3306 = vpop.f32.mrf.mxu0
      %v3307 = vadd.f32 0.0, %v3306
      %3308 = vmatprep.mubr.bf16.mxu0 0
      %3309 = vmatmul.mubr.bf16.gmra.mxu0 %v3208
      %v3310 = vpop.f32.mrf.mxu0
      %v3311 = vadd.f32 0.0, %v3310
      %v3312 = vpop.f32.mrf.mxu0
      %v3313 = vadd.f32 0.0, %v3312
      %v3314 = vpop.f32.mrf.mxu0
      %v3315 = vadd.f32 0.0, %v3314
      %v3316 = vpop.f32.mrf.mxu0
      %v3317 = vadd.f32 0.0, %v3316
      %3318 = vmatprep.mubr.bf16.mxu0 0
      %3319 = vmatmul.mubr.bf16.gmra.mxu0 %v3209
      %v3320 = vpop.f32.mrf.mxu0
      %v3321 = vadd.f32 0.0, %v3320
      %v3322 = vpop.f32.mrf.mxu0
      %v3323 = vadd.f32 0.0, %v3322
      %v3324 = vpop.f32.mrf.mxu0
      %v3325 = vadd.f32 0.0, %v3324
      %v3326 = vpop.f32.mrf.mxu0
      %v3327 = vadd.f32 0.0, %v3326
      %3328 = vmatprep.mubr.bf16.mxu0 0
      %3329 = vmatmul.mubr.bf16.gmra.mxu0 %v3210
      %v3330 = vpop.f32.mrf.mxu0
      %v3331 = vadd.f32 0.0, %v3330
      %v3332 = vpop.f32.mrf.mxu0
      %v3333 = vadd.f32 0.0, %v3332
      %v3334 = vpop.f32.mrf.mxu0
      %v3335 = vadd.f32 0.0, %v3334
      %v3336 = vpop.f32.mrf.mxu0
      %v3337 = vadd.f32 0.0, %v3336
      %3338 = vmatprep.mubr.bf16.mxu0 0
      %3339 = vmatmul.mubr.bf16.gmra.mxu0 %v3211
      %v3340 = vpop.f32.mrf.mxu0
      %v3341 = vadd.f32 0.0, %v3340
      %v3342 = vpop.f32.mrf.mxu0
      %v3343 = vadd.f32 0.0, %v3342
      %v3344 = vpop.f32.mrf.mxu0
      %v3345 = vadd.f32 0.0, %v3344
      %v3346 = vpop.f32.mrf.mxu0
      %v3347 = vadd.f32 0.0, %v3346
      %3348 = vmatprep.mubr.bf16.mxu0 0
      %3349 = vmatmul.mubr.bf16.gmra.mxu0 %v3212
      %v3350 = vpop.f32.mrf.mxu0
      %v3351 = vadd.f32 0.0, %v3350
      %v3352 = vpop.f32.mrf.mxu0
      %v3353 = vadd.f32 0.0, %v3352
      %v3354 = vpop.f32.mrf.mxu0
      %v3355 = vadd.f32 0.0, %v3354
      %v3356 = vpop.f32.mrf.mxu0
      %v3357 = vadd.f32 0.0, %v3356
      %3358 = vmatprep.mubr.bf16.mxu0 0
      %3359 = vmatmul.mubr.bf16.gmra.mxu0 %v3213
      %v3360 = vpop.f32.mrf.mxu0
      %v3361 = vadd.f32 0.0, %v3360
      %v3362 = vpop.f32.mrf.mxu0
      %v3363 = vadd.f32 0.0, %v3362
      %v3364 = vpop.f32.mrf.mxu0
      %v3365 = vadd.f32 0.0, %v3364
      %v3366 = vpop.f32.mrf.mxu0
      %v3367 = vadd.f32 0.0, %v3366
      %3368 = vmatprep.mubr.bf16.mxu0 0
      %3369 = vmatmul.mubr.bf16.gmra.mxu0 %v3214
      %v3370 = vpop.f32.mrf.mxu0
      %v3371 = vadd.f32 0.0, %v3370
      %v3372 = vpop.f32.mrf.mxu0
      %v3373 = vadd.f32 0.0, %v3372
      %v3374 = vpop.f32.mrf.mxu0
      %v3375 = vadd.f32 0.0, %v3374
      %v3376 = vpop.f32.mrf.mxu0
      %v3377 = vadd.f32 0.0, %v3376
      %3378 = vmatprep.mubr.bf16.mxu0 0
      %3379 = vmatmul.mubr.bf16.gmra.mxu0 %v3215
      %v3380 = vpop.f32.mrf.mxu0
      %v3381 = vadd.f32 0.0, %v3380
      %v3382 = vpop.f32.mrf.mxu0
      %v3383 = vadd.f32 0.0, %v3382
      %v3384 = vpop.f32.mrf.mxu0
      %v3385 = vadd.f32 0.0, %v3384
      %v3386 = vpop.f32.mrf.mxu0
      %v3387 = vadd.f32 0.0, %v3386
      %3388 = vmatprep.mubr.bf16.mxu0 0
      %3389 = vmatmul.mubr.bf16.gmra.mxu0 %v3216
      %v3390 = vpop.f32.mrf.mxu0
      %v3391 = vadd.f32 0.0, %v3390
      %v3392 = vpop.f32.mrf.mxu0
      %v3393 = vadd.f32 0.0, %v3392
      %v3394 = vpop.f32.mrf.mxu0
      %v3395 = vadd.f32 0.0, %v3394
      %v3396 = vpop.f32.mrf.mxu0
      %v3397 = vadd.f32 0.0, %v3396
      %3398 = vmatprep.mubr.bf16.mxu0 0
      %3399 = vmatmul.mubr.bf16.gmra.mxu0 %v3217
      %v3400 = vpop.f32.mrf.mxu0
      %v3401 = vadd.f32 0.0, %v3400
      %v3402 = vpop.f32.mrf.mxu0
      %v3403 = vadd.f32 0.0, %v3402
      %v3404 = vpop.f32.mrf.mxu0
      %v3405 = vadd.f32 0.0, %v3404
      %v3406 = vpop.f32.mrf.mxu0
      %v3407 = vadd.f32 0.0, %v3406
      %3408 = vmatprep.mubr.bf16.mxu0 0
      %3409 = vmatmul.mubr.bf16.gmra.mxu0 %v3218
      %v3410 = vpop.f32.mrf.mxu0
      %v3411 = vadd.f32 0.0, %v3410
      %v3412 = vpop.f32.mrf.mxu0
      %v3413 = vadd.f32 0.0, %v3412
      %v3414 = vpop.f32.mrf.mxu0
      %v3415 = vadd.f32 0.0, %v3414
      %v3416 = vpop.f32.mrf.mxu0
      %v3417 = vadd.f32 0.0, %v3416
      %3418 = vmatprep.mubr.bf16.mxu0 0
      %3419 = vmatmul.mubr.bf16.gmra.mxu0 %v3219
      %v3420 = vpop.f32.mrf.mxu0
      %v3421 = vadd.f32 0.0, %v3420
      %v3422 = vpop.f32.mrf.mxu0
      %v3423 = vadd.f32 0.0, %v3422
      %v3424 = vpop.f32.mrf.mxu0
      %v3425 = vadd.f32 0.0, %v3424
      %v3426 = vpop.f32.mrf.mxu0
      %v3427 = vadd.f32 0.0, %v3426
      %3428 = vdwg.mxu0
      %v3429 = vpack.c.bf16 %v3275, %v3271
      %v3430 = vpack.c.bf16 %v3277, %v3273
      %v3431 = vpack.c.bf16 %v3285, %v3281
      %v3432 = vpack.c.bf16 %v3287, %v3283
      %v3433 = vpack.c.bf16 %v3295, %v3291
      %v3434 = vpack.c.bf16 %v3297, %v3293
      %v3435 = vpack.c.bf16 %v3305, %v3301
      %v3436 = vpack.c.bf16 %v3307, %v3303
      %v3437 = vpack.c.bf16 %v3315, %v3311
      %v3438 = vpack.c.bf16 %v3317, %v3313
      %v3439 = vpack.c.bf16 %v3325, %v3321
      %v3440 = vpack.c.bf16 %v3327, %v3323
      %v3441 = vpack.c.bf16 %v3335, %v3331
      %v3442 = vpack.c.bf16 %v3337, %v3333
      %v3443 = vpack.c.bf16 %v3345, %v3341
      %v3444 = vpack.c.bf16 %v3347, %v3343
      %v3445 = vpack.c.bf16 %v3355, %v3351
      %v3446 = vpack.c.bf16 %v3357, %v3353
      %v3447 = vpack.c.bf16 %v3365, %v3361
      %v3448 = vpack.c.bf16 %v3367, %v3363
      %v3449 = vpack.c.bf16 %v3375, %v3371
      %v3450 = vpack.c.bf16 %v3377, %v3373
      %v3451 = vpack.c.bf16 %v3385, %v3381
      %v3452 = vpack.c.bf16 %v3387, %v3383
      %v3453 = vpack.c.bf16 %v3395, %v3391
      %v3454 = vpack.c.bf16 %v3397, %v3393
      %v3455 = vpack.c.bf16 %v3405, %v3401
      %v3456 = vpack.c.bf16 %v3407, %v3403
      %v3457 = vpack.c.bf16 %v3415, %v3411
      %v3458 = vpack.c.bf16 %v3417, %v3413
      %v3459 = vpack.c.bf16 %v3425, %v3421
      %v3460 = vpack.c.bf16 %v3427, %v3423
      %v3461 = vld [vmem:[%s5] sm:$0xff]
      %v3462 = vld [vmem:[%s5 + $0x8] sm:$0xff]
      %v3463 = vld [vmem:[%s5 + $0x10] sm:$0xff]
      %v3464 = vld [vmem:[%s5 + $0x18] sm:$0xff]
      %v3465 = vld [vmem:[%s5 + $0x20] sm:$0xff]
      %v3466 = vld [vmem:[%s5 + $0x28] sm:$0xff]
      %v3467 = vld [vmem:[%s5 + $0x30] sm:$0xff]
      %v3468 = vld [vmem:[%s5 + $0x38] sm:$0xff]
      %v3469 = vld [vmem:[%s5 + $0x40] sm:$0xff]
      %v3470 = vld [vmem:[%s5 + $0x48] sm:$0xff]
      %v3471 = vld [vmem:[%s5 + $0x50] sm:$0xff]
      %v3472 = vld [vmem:[%s5 + $0x58] sm:$0xff]
      %v3473 = vld [vmem:[%s5 + $0x60] sm:$0xff]
      %v3474 = vld [vmem:[%s5 + $0x68] sm:$0xff]
      %v3475 = vld [vmem:[%s5 + $0x70] sm:$0xff]
      %v3476 = vld [vmem:[%s5 + $0x78] sm:$0xff]
      %v3477 = vld [vmem:[%s5 + $0x80] sm:$0xff]
      %v3478 = vld [vmem:[%s5 + $0x88] sm:$0xff]
      %v3479 = vld [vmem:[%s5 + $0x90] sm:$0xff]
      %v3480 = vld [vmem:[%s5 + $0x98] sm:$0xff]
      %v3481 = vld [vmem:[%s5 + $0xa0] sm:$0xff]
      %v3482 = vld [vmem:[%s5 + $0xa8] sm:$0xff]
      %v3483 = vld [vmem:[%s5 + $0xb0] sm:$0xff]
      %v3484 = vld [vmem:[%s5 + $0xb8] sm:$0xff]
      %v3485 = vld [vmem:[%s5 + $0xc0] sm:$0xff]
      %v3486 = vld [vmem:[%s5 + $0xc8] sm:$0xff]
      %v3487 = vld [vmem:[%s5 + $0xd0] sm:$0xff]
      %v3488 = vld [vmem:[%s5 + $0xd8] sm:$0xff]
      %v3489 = vld [vmem:[%s5 + $0xe0] sm:$0xff]
      %v3490 = vld [vmem:[%s5 + $0xe8] sm:$0xff]
      %v3491 = vld [vmem:[%s5 + $0xf0] sm:$0xff]
      %v3492 = vld [vmem:[%s5 + $0xf8] sm:$0xff]
      %v3493 = vld [vmem:[%s5 + $0x100] sm:$0xff]
      %v3494 = vld [vmem:[%s5 + $0x108] sm:$0xff]
      %v3495 = vld [vmem:[%s5 + $0x110] sm:$0xff]
      %v3496 = vld [vmem:[%s5 + $0x118] sm:$0xff]
      %v3497 = vld [vmem:[%s5 + $0x120] sm:$0xff]
      %v3498 = vld [vmem:[%s5 + $0x128] sm:$0xff]
      %v3499 = vld [vmem:[%s5 + $0x130] sm:$0xff]
      %v3500 = vld [vmem:[%s5 + $0x138] sm:$0xff]
      %v3501 = vld [vmem:[%s5 + $0x140] sm:$0xff]
      %v3502 = vld [vmem:[%s5 + $0x148] sm:$0xff]
      %v3503 = vld [vmem:[%s5 + $0x150] sm:$0xff]
      %v3504 = vld [vmem:[%s5 + $0x158] sm:$0xff]
      %v3505 = vld [vmem:[%s5 + $0x160] sm:$0xff]
      %v3506 = vld [vmem:[%s5 + $0x168] sm:$0xff]
      %v3507 = vld [vmem:[%s5 + $0x170] sm:$0xff]
      %v3508 = vld [vmem:[%s5 + $0x178] sm:$0xff]
      %v3509 = vld [vmem:[%s5 + $0x180] sm:$0xff]
      %v3510 = vld [vmem:[%s5 + $0x188] sm:$0xff]
      %v3511 = vld [vmem:[%s5 + $0x190] sm:$0xff]
      %v3512 = vld [vmem:[%s5 + $0x198] sm:$0xff]
      %v3513 = vld [vmem:[%s5 + $0x1a0] sm:$0xff]
      %v3514 = vld [vmem:[%s5 + $0x1a8] sm:$0xff]
      %v3515 = vld [vmem:[%s5 + $0x1b0] sm:$0xff]
      %v3516 = vld [vmem:[%s5 + $0x1b8] sm:$0xff]
      %v3517 = vld [vmem:[%s5 + $0x1c0] sm:$0xff]
      %v3518 = vld [vmem:[%s5 + $0x1c8] sm:$0xff]
      %v3519 = vld [vmem:[%s5 + $0x1d0] sm:$0xff]
      %v3520 = vld [vmem:[%s5 + $0x1d8] sm:$0xff]
      %v3521 = vld [vmem:[%s5 + $0x1e0] sm:$0xff]
      %v3522 = vld [vmem:[%s5 + $0x1e8] sm:$0xff]
      %v3523 = vld [vmem:[%s5 + $0x1f0] sm:$0xff]
      %v3524 = vld [vmem:[%s5 + $0x1f8] sm:$0xff]
      %v3525 = vld [vmem:[%s5 + $0x200] sm:$0xff]
      %v3526 = vld [vmem:[%s5 + $0x208] sm:$0xff]
      %v3527 = vld [vmem:[%s5 + $0x210] sm:$0xff]
      %v3528 = vld [vmem:[%s5 + $0x218] sm:$0xff]
      %v3529 = vld [vmem:[%s5 + $0x220] sm:$0xff]
      %v3530 = vld [vmem:[%s5 + $0x228] sm:$0xff]
      %v3531 = vld [vmem:[%s5 + $0x230] sm:$0xff]
      %v3532 = vld [vmem:[%s5 + $0x238] sm:$0xff]
      %v3533 = vld [vmem:[%s5 + $0x240] sm:$0xff]
      %v3534 = vld [vmem:[%s5 + $0x248] sm:$0xff]
      %v3535 = vld [vmem:[%s5 + $0x250] sm:$0xff]
      %v3536 = vld [vmem:[%s5 + $0x258] sm:$0xff]
      %v3537 = vld [vmem:[%s5 + $0x260] sm:$0xff]
      %v3538 = vld [vmem:[%s5 + $0x268] sm:$0xff]
      %v3539 = vld [vmem:[%s5 + $0x270] sm:$0xff]
      %v3540 = vld [vmem:[%s5 + $0x278] sm:$0xff]
      %v3541 = vld [vmem:[%s5 + $0x280] sm:$0xff]
      %v3542 = vld [vmem:[%s5 + $0x288] sm:$0xff]
      %v3543 = vld [vmem:[%s5 + $0x290] sm:$0xff]
      %v3544 = vld [vmem:[%s5 + $0x298] sm:$0xff]
      %v3545 = vld [vmem:[%s5 + $0x2a0] sm:$0xff]
      %v3546 = vld [vmem:[%s5 + $0x2a8] sm:$0xff]
      %v3547 = vld [vmem:[%s5 + $0x2b0] sm:$0xff]
      %v3548 = vld [vmem:[%s5 + $0x2b8] sm:$0xff]
      %v3549 = vld [vmem:[%s5 + $0x2c0] sm:$0xff]
      %v3550 = vld [vmem:[%s5 + $0x2c8] sm:$0xff]
      %v3551 = vld [vmem:[%s5 + $0x2d0] sm:$0xff]
      %v3552 = vld [vmem:[%s5 + $0x2d8] sm:$0xff]
      %v3553 = vld [vmem:[%s5 + $0x2e0] sm:$0xff]
      %v3554 = vld [vmem:[%s5 + $0x2e8] sm:$0xff]
      %v3555 = vld [vmem:[%s5 + $0x2f0] sm:$0xff]
      %v3556 = vld [vmem:[%s5 + $0x2f8] sm:$0xff]
      %v3557 = vld [vmem:[%s5 + $0x300] sm:$0xff]
      %v3558 = vld [vmem:[%s5 + $0x308] sm:$0xff]
      %v3559 = vld [vmem:[%s5 + $0x310] sm:$0xff]
      %v3560 = vld [vmem:[%s5 + $0x318] sm:$0xff]
      %v3561 = vld [vmem:[%s5 + $0x320] sm:$0xff]
      %v3562 = vld [vmem:[%s5 + $0x328] sm:$0xff]
      %v3563 = vld [vmem:[%s5 + $0x330] sm:$0xff]
      %v3564 = vld [vmem:[%s5 + $0x338] sm:$0xff]
      %v3565 = vld [vmem:[%s5 + $0x340] sm:$0xff]
      %v3566 = vld [vmem:[%s5 + $0x348] sm:$0xff]
      %v3567 = vld [vmem:[%s5 + $0x350] sm:$0xff]
      %v3568 = vld [vmem:[%s5 + $0x358] sm:$0xff]
      %v3569 = vld [vmem:[%s5 + $0x360] sm:$0xff]
      %v3570 = vld [vmem:[%s5 + $0x368] sm:$0xff]
      %v3571 = vld [vmem:[%s5 + $0x370] sm:$0xff]
      %v3572 = vld [vmem:[%s5 + $0x378] sm:$0xff]
      %v3573 = vld [vmem:[%s5 + $0x380] sm:$0xff]
      %v3574 = vld [vmem:[%s5 + $0x388] sm:$0xff]
      %v3575 = vld [vmem:[%s5 + $0x390] sm:$0xff]
      %v3576 = vld [vmem:[%s5 + $0x398] sm:$0xff]
      %v3577 = vld [vmem:[%s5 + $0x3a0] sm:$0xff]
      %v3578 = vld [vmem:[%s5 + $0x3a8] sm:$0xff]
      %v3579 = vld [vmem:[%s5 + $0x3b0] sm:$0xff]
      %v3580 = vld [vmem:[%s5 + $0x3b8] sm:$0xff]
      %v3581 = vld [vmem:[%s5 + $0x3c0] sm:$0xff]
      %v3582 = vld [vmem:[%s5 + $0x3c8] sm:$0xff]
      %v3583 = vld [vmem:[%s5 + $0x3d0] sm:$0xff]
      %v3584 = vld [vmem:[%s5 + $0x3d8] sm:$0xff]
      %v3585 = vld [vmem:[%s5 + $0x3e0] sm:$0xff]
      %v3586 = vld [vmem:[%s5 + $0x3e8] sm:$0xff]
      %v3587 = vld [vmem:[%s5 + $0x3f0] sm:$0xff]
      %v3588 = vld [vmem:[%s5 + $0x3f8] sm:$0xff]
      %v3717 = vunpack.c.l.b16 %v3461
      %v3718 = vunpack.c.h.b16 %v3461
      %v3719 = vunpack.c.l.b16 %v3462
      %v3720 = vunpack.c.h.b16 %v3462
      %v3721 = vunpack.c.l.b16 %v3463
      %v3722 = vunpack.c.h.b16 %v3463
      %v3723 = vunpack.c.l.b16 %v3464
      %v3724 = vunpack.c.h.b16 %v3464
      %v3725 = vunpack.c.l.b16 %v3465
      %v3726 = vunpack.c.h.b16 %v3465
      %v3727 = vunpack.c.l.b16 %v3466
      %v3728 = vunpack.c.h.b16 %v3466
      %v3729 = vunpack.c.l.b16 %v3467
      %v3730 = vunpack.c.h.b16 %v3467
      %v3731 = vunpack.c.l.b16 %v3468
      %v3732 = vunpack.c.h.b16 %v3468
      %v3733 = vunpack.c.l.b16 %v3469
      %v3734 = vunpack.c.h.b16 %v3469
      %v3735 = vunpack.c.l.b16 %v3470
      %v3736 = vunpack.c.h.b16 %v3470
      %v3737 = vunpack.c.l.b16 %v3471
      %v3738 = vunpack.c.h.b16 %v3471
      %v3739 = vunpack.c.l.b16 %v3472
      %v3740 = vunpack.c.h.b16 %v3472
      %v3741 = vunpack.c.l.b16 %v3473
      %v3742 = vunpack.c.h.b16 %v3473
      %v3743 = vunpack.c.l.b16 %v3474
      %v3744 = vunpack.c.h.b16 %v3474
      %v3745 = vunpack.c.l.b16 %v3475
      %v3746 = vunpack.c.h.b16 %v3475
      %v3747 = vunpack.c.l.b16 %v3476
      %v3748 = vunpack.c.h.b16 %v3476
      %v3749 = vunpack.c.l.b16 %v3477
      %v3750 = vunpack.c.h.b16 %v3477
      %v3751 = vunpack.c.l.b16 %v3478
      %v3752 = vunpack.c.h.b16 %v3478
      %v3753 = vunpack.c.l.b16 %v3479
      %v3754 = vunpack.c.h.b16 %v3479
      %v3755 = vunpack.c.l.b16 %v3480
      %v3756 = vunpack.c.h.b16 %v3480
      %v3757 = vunpack.c.l.b16 %v3481
      %v3758 = vunpack.c.h.b16 %v3481
      %v3759 = vunpack.c.l.b16 %v3482
      %v3760 = vunpack.c.h.b16 %v3482
      %v3761 = vunpack.c.l.b16 %v3483
      %v3762 = vunpack.c.h.b16 %v3483
      %v3763 = vunpack.c.l.b16 %v3484
      %v3764 = vunpack.c.h.b16 %v3484
      %v3765 = vunpack.c.l.b16 %v3485
      %v3766 = vunpack.c.h.b16 %v3485
      %v3767 = vunpack.c.l.b16 %v3486
      %v3768 = vunpack.c.h.b16 %v3486
      %v3769 = vunpack.c.l.b16 %v3487
      %v3770 = vunpack.c.h.b16 %v3487
      %v3771 = vunpack.c.l.b16 %v3488
      %v3772 = vunpack.c.h.b16 %v3488
      %v3773 = vunpack.c.l.b16 %v3489
      %v3774 = vunpack.c.h.b16 %v3489
      %v3775 = vunpack.c.l.b16 %v3490
      %v3776 = vunpack.c.h.b16 %v3490
      %v3777 = vunpack.c.l.b16 %v3491
      %v3778 = vunpack.c.h.b16 %v3491
      %v3779 = vunpack.c.l.b16 %v3492
      %v3780 = vunpack.c.h.b16 %v3492
      %v3781 = vunpack.c.l.b16 %v3493
      %v3782 = vunpack.c.h.b16 %v3493
      %v3783 = vunpack.c.l.b16 %v3494
      %v3784 = vunpack.c.h.b16 %v3494
      %v3785 = vunpack.c.l.b16 %v3495
      %v3786 = vunpack.c.h.b16 %v3495
      %v3787 = vunpack.c.l.b16 %v3496
      %v3788 = vunpack.c.h.b16 %v3496
      %v3789 = vunpack.c.l.b16 %v3497
      %v3790 = vunpack.c.h.b16 %v3497
      %v3791 = vunpack.c.l.b16 %v3498
      %v3792 = vunpack.c.h.b16 %v3498
      %v3793 = vunpack.c.l.b16 %v3499
      %v3794 = vunpack.c.h.b16 %v3499
      %v3795 = vunpack.c.l.b16 %v3500
      %v3796 = vunpack.c.h.b16 %v3500
      %v3797 = vunpack.c.l.b16 %v3501
      %v3798 = vunpack.c.h.b16 %v3501
      %v3799 = vunpack.c.l.b16 %v3502
      %v3800 = vunpack.c.h.b16 %v3502
      %v3801 = vunpack.c.l.b16 %v3503
      %v3802 = vunpack.c.h.b16 %v3503
      %v3803 = vunpack.c.l.b16 %v3504
      %v3804 = vunpack.c.h.b16 %v3504
      %v3805 = vunpack.c.l.b16 %v3505
      %v3806 = vunpack.c.h.b16 %v3505
      %v3807 = vunpack.c.l.b16 %v3506
      %v3808 = vunpack.c.h.b16 %v3506
      %v3809 = vunpack.c.l.b16 %v3507
      %v3810 = vunpack.c.h.b16 %v3507
      %v3811 = vunpack.c.l.b16 %v3508
      %v3812 = vunpack.c.h.b16 %v3508
      %v3813 = vunpack.c.l.b16 %v3509
      %v3814 = vunpack.c.h.b16 %v3509
      %v3815 = vunpack.c.l.b16 %v3510
      %v3816 = vunpack.c.h.b16 %v3510
      %v3817 = vunpack.c.l.b16 %v3511
      %v3818 = vunpack.c.h.b16 %v3511
      %v3819 = vunpack.c.l.b16 %v3512
      %v3820 = vunpack.c.h.b16 %v3512
      %v3821 = vunpack.c.l.b16 %v3513
      %v3822 = vunpack.c.h.b16 %v3513
      %v3823 = vunpack.c.l.b16 %v3514
      %v3824 = vunpack.c.h.b16 %v3514
      %v3825 = vunpack.c.l.b16 %v3515
      %v3826 = vunpack.c.h.b16 %v3515
      %v3827 = vunpack.c.l.b16 %v3516
      %v3828 = vunpack.c.h.b16 %v3516
      %v3829 = vunpack.c.l.b16 %v3517
      %v3830 = vunpack.c.h.b16 %v3517
      %v3831 = vunpack.c.l.b16 %v3518
      %v3832 = vunpack.c.h.b16 %v3518
      %v3833 = vunpack.c.l.b16 %v3519
      %v3834 = vunpack.c.h.b16 %v3519
      %v3835 = vunpack.c.l.b16 %v3520
      %v3836 = vunpack.c.h.b16 %v3520
      %v3837 = vunpack.c.l.b16 %v3521
      %v3838 = vunpack.c.h.b16 %v3521
      %v3839 = vunpack.c.l.b16 %v3522
      %v3840 = vunpack.c.h.b16 %v3522
      %v3841 = vunpack.c.l.b16 %v3523
      %v3842 = vunpack.c.h.b16 %v3523
      %v3843 = vunpack.c.l.b16 %v3524
      %v3844 = vunpack.c.h.b16 %v3524
      %v3845 = vunpack.c.l.b16 %v3525
      %v3846 = vunpack.c.h.b16 %v3525
      %v3847 = vunpack.c.l.b16 %v3526
      %v3848 = vunpack.c.h.b16 %v3526
      %v3849 = vunpack.c.l.b16 %v3527
      %v3850 = vunpack.c.h.b16 %v3527
      %v3851 = vunpack.c.l.b16 %v3528
      %v3852 = vunpack.c.h.b16 %v3528
      %v3853 = vunpack.c.l.b16 %v3529
      %v3854 = vunpack.c.h.b16 %v3529
      %v3855 = vunpack.c.l.b16 %v3530
      %v3856 = vunpack.c.h.b16 %v3530
      %v3857 = vunpack.c.l.b16 %v3531
      %v3858 = vunpack.c.h.b16 %v3531
      %v3859 = vunpack.c.l.b16 %v3532
      %v3860 = vunpack.c.h.b16 %v3532
      %v3861 = vunpack.c.l.b16 %v3533
      %v3862 = vunpack.c.h.b16 %v3533
      %v3863 = vunpack.c.l.b16 %v3534
      %v3864 = vunpack.c.h.b16 %v3534
      %v3865 = vunpack.c.l.b16 %v3535
      %v3866 = vunpack.c.h.b16 %v3535
      %v3867 = vunpack.c.l.b16 %v3536
      %v3868 = vunpack.c.h.b16 %v3536
      %v3869 = vunpack.c.l.b16 %v3537
      %v3870 = vunpack.c.h.b16 %v3537
      %v3871 = vunpack.c.l.b16 %v3538
      %v3872 = vunpack.c.h.b16 %v3538
      %v3873 = vunpack.c.l.b16 %v3539
      %v3874 = vunpack.c.h.b16 %v3539
      %v3875 = vunpack.c.l.b16 %v3540
      %v3876 = vunpack.c.h.b16 %v3540
      %v3877 = vunpack.c.l.b16 %v3541
      %v3878 = vunpack.c.h.b16 %v3541
      %v3879 = vunpack.c.l.b16 %v3542
      %v3880 = vunpack.c.h.b16 %v3542
      %v3881 = vunpack.c.l.b16 %v3543
      %v3882 = vunpack.c.h.b16 %v3543
      %v3883 = vunpack.c.l.b16 %v3544
      %v3884 = vunpack.c.h.b16 %v3544
      %v3885 = vunpack.c.l.b16 %v3545
      %v3886 = vunpack.c.h.b16 %v3545
      %v3887 = vunpack.c.l.b16 %v3546
      %v3888 = vunpack.c.h.b16 %v3546
      %v3889 = vunpack.c.l.b16 %v3547
      %v3890 = vunpack.c.h.b16 %v3547
      %v3891 = vunpack.c.l.b16 %v3548
      %v3892 = vunpack.c.h.b16 %v3548
      %v3893 = vunpack.c.l.b16 %v3549
      %v3894 = vunpack.c.h.b16 %v3549
      %v3895 = vunpack.c.l.b16 %v3550
      %v3896 = vunpack.c.h.b16 %v3550
      %v3897 = vunpack.c.l.b16 %v3551
      %v3898 = vunpack.c.h.b16 %v3551
      %v3899 = vunpack.c.l.b16 %v3552
      %v3900 = vunpack.c.h.b16 %v3552
      %v3901 = vunpack.c.l.b16 %v3553
      %v3902 = vunpack.c.h.b16 %v3553
      %v3903 = vunpack.c.l.b16 %v3554
      %v3904 = vunpack.c.h.b16 %v3554
      %v3905 = vunpack.c.l.b16 %v3555
      %v3906 = vunpack.c.h.b16 %v3555
      %v3907 = vunpack.c.l.b16 %v3556
      %v3908 = vunpack.c.h.b16 %v3556
      %v3909 = vunpack.c.l.b16 %v3557
      %v3910 = vunpack.c.h.b16 %v3557
      %v3911 = vunpack.c.l.b16 %v3558
      %v3912 = vunpack.c.h.b16 %v3558
      %v3913 = vunpack.c.l.b16 %v3559
      %v3914 = vunpack.c.h.b16 %v3559
      %v3915 = vunpack.c.l.b16 %v3560
      %v3916 = vunpack.c.h.b16 %v3560
      %v3917 = vunpack.c.l.b16 %v3561
      %v3918 = vunpack.c.h.b16 %v3561
      %v3919 = vunpack.c.l.b16 %v3562
      %v3920 = vunpack.c.h.b16 %v3562
      %v3921 = vunpack.c.l.b16 %v3563
      %v3922 = vunpack.c.h.b16 %v3563
      %v3923 = vunpack.c.l.b16 %v3564
      %v3924 = vunpack.c.h.b16 %v3564
      %v3925 = vunpack.c.l.b16 %v3565
      %v3926 = vunpack.c.h.b16 %v3565
      %v3927 = vunpack.c.l.b16 %v3566
      %v3928 = vunpack.c.h.b16 %v3566
      %v3929 = vunpack.c.l.b16 %v3567
      %v3930 = vunpack.c.h.b16 %v3567
      %v3931 = vunpack.c.l.b16 %v3568
      %v3932 = vunpack.c.h.b16 %v3568
      %v3933 = vunpack.c.l.b16 %v3569
      %v3934 = vunpack.c.h.b16 %v3569
      %v3935 = vunpack.c.l.b16 %v3570
      %v3936 = vunpack.c.h.b16 %v3570
      %v3937 = vunpack.c.l.b16 %v3571
      %v3938 = vunpack.c.h.b16 %v3571
      %v3939 = vunpack.c.l.b16 %v3572
      %v3940 = vunpack.c.h.b16 %v3572
      %v3941 = vunpack.c.l.b16 %v3573
      %v3942 = vunpack.c.h.b16 %v3573
      %v3943 = vunpack.c.l.b16 %v3574
      %v3944 = vunpack.c.h.b16 %v3574
      %v3945 = vunpack.c.l.b16 %v3575
      %v3946 = vunpack.c.h.b16 %v3575
      %v3947 = vunpack.c.l.b16 %v3576
      %v3948 = vunpack.c.h.b16 %v3576
      %v3949 = vunpack.c.l.b16 %v3577
      %v3950 = vunpack.c.h.b16 %v3577
      %v3951 = vunpack.c.l.b16 %v3578
      %v3952 = vunpack.c.h.b16 %v3578
      %v3953 = vunpack.c.l.b16 %v3579
      %v3954 = vunpack.c.h.b16 %v3579
      %v3955 = vunpack.c.l.b16 %v3580
      %v3956 = vunpack.c.h.b16 %v3580
      %v3957 = vunpack.c.l.b16 %v3581
      %v3958 = vunpack.c.h.b16 %v3581
      %v3959 = vunpack.c.l.b16 %v3582
      %v3960 = vunpack.c.h.b16 %v3582
      %v3961 = vunpack.c.l.b16 %v3583
      %v3962 = vunpack.c.h.b16 %v3583
      %v3963 = vunpack.c.l.b16 %v3584
      %v3964 = vunpack.c.h.b16 %v3584
      %v3965 = vunpack.c.l.b16 %v3585
      %v3966 = vunpack.c.h.b16 %v3585
      %v3967 = vunpack.c.l.b16 %v3586
      %v3968 = vunpack.c.h.b16 %v3586
      %v3969 = vunpack.c.l.b16 %v3587
      %v3970 = vunpack.c.h.b16 %v3587
      %v3971 = vunpack.c.l.b16 %v3588
      %v3972 = vunpack.c.h.b16 %v3588
      %v3973 = vpack.c.b16 %v3719, %v3717
      %v3974 = vpack.c.b16 %v3720, %v3718
      %v3975 = vpack.c.b16 %v3723, %v3721
      %v3976 = vpack.c.b16 %v3724, %v3722
      %v3977 = vpack.c.b16 %v3727, %v3725
      %v3978 = vpack.c.b16 %v3728, %v3726
      %v3979 = vpack.c.b16 %v3731, %v3729
      %v3980 = vpack.c.b16 %v3732, %v3730
      %v3981 = vpack.c.b16 %v3735, %v3733
      %v3982 = vpack.c.b16 %v3736, %v3734
      %v3983 = vpack.c.b16 %v3739, %v3737
      %v3984 = vpack.c.b16 %v3740, %v3738
      %v3985 = vpack.c.b16 %v3743, %v3741
      %v3986 = vpack.c.b16 %v3744, %v3742
      %v3987 = vpack.c.b16 %v3747, %v3745
      %v3988 = vpack.c.b16 %v3748, %v3746
      %v3989 = vpack.c.b16 %v3751, %v3749
      %v3990 = vpack.c.b16 %v3752, %v3750
      %v3991 = vpack.c.b16 %v3755, %v3753
      %v3992 = vpack.c.b16 %v3756, %v3754
      %v3993 = vpack.c.b16 %v3759, %v3757
      %v3994 = vpack.c.b16 %v3760, %v3758
      %v3995 = vpack.c.b16 %v3763, %v3761
      %v3996 = vpack.c.b16 %v3764, %v3762
      %v3997 = vpack.c.b16 %v3767, %v3765
      %v3998 = vpack.c.b16 %v3768, %v3766
      %v3999 = vpack.c.b16 %v3771, %v3769
      %v4000 = vpack.c.b16 %v3772, %v3770
      %v4001 = vpack.c.b16 %v3775, %v3773
      %v4002 = vpack.c.b16 %v3776, %v3774
      %v4003 = vpack.c.b16 %v3779, %v3777
      %v4004 = vpack.c.b16 %v3780, %v3778
      %v4005 = vpack.c.b16 %v3783, %v3781
      %v4006 = vpack.c.b16 %v3784, %v3782
      %v4007 = vpack.c.b16 %v3787, %v3785
      %v4008 = vpack.c.b16 %v3788, %v3786
      %v4009 = vpack.c.b16 %v3791, %v3789
      %v4010 = vpack.c.b16 %v3792, %v3790
      %v4011 = vpack.c.b16 %v3795, %v3793
      %v4012 = vpack.c.b16 %v3796, %v3794
      %v4013 = vpack.c.b16 %v3799, %v3797
      %v4014 = vpack.c.b16 %v3800, %v3798
      %v4015 = vpack.c.b16 %v3803, %v3801
      %v4016 = vpack.c.b16 %v3804, %v3802
      %v4017 = vpack.c.b16 %v3807, %v3805
      %v4018 = vpack.c.b16 %v3808, %v3806
      %v4019 = vpack.c.b16 %v3811, %v3809
      %v4020 = vpack.c.b16 %v3812, %v3810
      %v4021 = vpack.c.b16 %v3815, %v3813
      %v4022 = vpack.c.b16 %v3816, %v3814
      %v4023 = vpack.c.b16 %v3819, %v3817
      %v4024 = vpack.c.b16 %v3820, %v3818
      %v4025 = vpack.c.b16 %v3823, %v3821
      %v4026 = vpack.c.b16 %v3824, %v3822
      %v4027 = vpack.c.b16 %v3827, %v3825
      %v4028 = vpack.c.b16 %v3828, %v3826
      %v4029 = vpack.c.b16 %v3831, %v3829
      %v4030 = vpack.c.b16 %v3832, %v3830
      %v4031 = vpack.c.b16 %v3835, %v3833
      %v4032 = vpack.c.b16 %v3836, %v3834
      %v4033 = vpack.c.b16 %v3839, %v3837
      %v4034 = vpack.c.b16 %v3840, %v3838
      %v4035 = vpack.c.b16 %v3843, %v3841
      %v4036 = vpack.c.b16 %v3844, %v3842
      %v4037 = vpack.c.b16 %v3847, %v3845
      %v4038 = vpack.c.b16 %v3848, %v3846
      %v4039 = vpack.c.b16 %v3851, %v3849
      %v4040 = vpack.c.b16 %v3852, %v3850
      %v4041 = vpack.c.b16 %v3855, %v3853
      %v4042 = vpack.c.b16 %v3856, %v3854
      %v4043 = vpack.c.b16 %v3859, %v3857
      %v4044 = vpack.c.b16 %v3860, %v3858
      %v4045 = vpack.c.b16 %v3863, %v3861
      %v4046 = vpack.c.b16 %v3864, %v3862
      %v4047 = vpack.c.b16 %v3867, %v3865
      %v4048 = vpack.c.b16 %v3868, %v3866
      %v4049 = vpack.c.b16 %v3871, %v3869
      %v4050 = vpack.c.b16 %v3872, %v3870
      %v4051 = vpack.c.b16 %v3875, %v3873
      %v4052 = vpack.c.b16 %v3876, %v3874
      %v4053 = vpack.c.b16 %v3879, %v3877
      %v4054 = vpack.c.b16 %v3880, %v3878
      %v4055 = vpack.c.b16 %v3883, %v3881
      %v4056 = vpack.c.b16 %v3884, %v3882
      %v4057 = vpack.c.b16 %v3887, %v3885
      %v4058 = vpack.c.b16 %v3888, %v3886
      %v4059 = vpack.c.b16 %v3891, %v3889
      %v4060 = vpack.c.b16 %v3892, %v3890
      %v4061 = vpack.c.b16 %v3895, %v3893
      %v4062 = vpack.c.b16 %v3896, %v3894
      %v4063 = vpack.c.b16 %v3899, %v3897
      %v4064 = vpack.c.b16 %v3900, %v3898
      %v4065 = vpack.c.b16 %v3903, %v3901
      %v4066 = vpack.c.b16 %v3904, %v3902
      %v4067 = vpack.c.b16 %v3907, %v3905
      %v4068 = vpack.c.b16 %v3908, %v3906
      %v4069 = vpack.c.b16 %v3911, %v3909
      %v4070 = vpack.c.b16 %v3912, %v3910
      %v4071 = vpack.c.b16 %v3915, %v3913
      %v4072 = vpack.c.b16 %v3916, %v3914
      %v4073 = vpack.c.b16 %v3919, %v3917
      %v4074 = vpack.c.b16 %v3920, %v3918
      %v4075 = vpack.c.b16 %v3923, %v3921
      %v4076 = vpack.c.b16 %v3924, %v3922
      %v4077 = vpack.c.b16 %v3927, %v3925
      %v4078 = vpack.c.b16 %v3928, %v3926
      %v4079 = vpack.c.b16 %v3931, %v3929
      %v4080 = vpack.c.b16 %v3932, %v3930
      %v4081 = vpack.c.b16 %v3935, %v3933
      %v4082 = vpack.c.b16 %v3936, %v3934
      %v4083 = vpack.c.b16 %v3939, %v3937
      %v4084 = vpack.c.b16 %v3940, %v3938
      %v4085 = vpack.c.b16 %v3943, %v3941
      %v4086 = vpack.c.b16 %v3944, %v3942
      %v4087 = vpack.c.b16 %v3947, %v3945
      %v4088 = vpack.c.b16 %v3948, %v3946
      %v4089 = vpack.c.b16 %v3951, %v3949
      %v4090 = vpack.c.b16 %v3952, %v3950
      %v4091 = vpack.c.b16 %v3955, %v3953
      %v4092 = vpack.c.b16 %v3956, %v3954
      %v4093 = vpack.c.b16 %v3959, %v3957
      %v4094 = vpack.c.b16 %v3960, %v3958
      %v4095 = vpack.c.b16 %v3963, %v3961
      %v4096 = vpack.c.b16 %v3964, %v3962
      %v4097 = vpack.c.b16 %v3967, %v3965
      %v4098 = vpack.c.b16 %v3968, %v3966
      %v4099 = vpack.c.b16 %v3971, %v3969
      %v4100 = vpack.c.b16 %v3972, %v3970
      %4229 = vmatprep.subr.bf16.mxu0 %v3988
      %4230 = vmatpush1.bf16.msra.mxu0 %v3987
      %4231 = vmatprep.subr.bf16.mxu0 %v3986
      %4232 = vmatpush1.bf16.msra.mxu0 %v3985
      %4233 = vmatprep.subr.bf16.mxu0 %v3984
      %4234 = vmatpush1.bf16.msra.mxu0 %v3983
      %4235 = vmatprep.subr.bf16.mxu0 %v3982
      %4236 = vmatpush1.bf16.msra.mxu0 %v3981
      %4237 = vmatprep.subr.bf16.mxu0 %v3980
      %4238 = vmatpush1.bf16.msra.mxu0 %v3979
      %4239 = vmatprep.subr.bf16.mxu0 %v3978
      %4240 = vmatpush1.bf16.msra.mxu0 %v3977
      %4241 = vmatprep.subr.bf16.mxu0 %v3976
      %4242 = vmatpush1.bf16.msra.mxu0 %v3975
      %4243 = vmatprep.subr.bf16.mxu0 %v3974
      %4244 = vmatpush1.bf16.msra.mxu0 %v3973
      %4245 = vmatprep.subr.bf16.mxu0 %v4004
      %4246 = vmatpush2.bf16.msra.mxu0 %v4003
      %4247 = vmatprep.subr.bf16.mxu0 %v4002
      %4248 = vmatpush2.bf16.msra.mxu0 %v4001
      %4249 = vmatprep.subr.bf16.mxu0 %v4000
      %4250 = vmatpush2.bf16.msra.mxu0 %v3999
      %4251 = vmatprep.subr.bf16.mxu0 %v3998
      %4252 = vmatpush2.bf16.msra.mxu0 %v3997
      %4253 = vmatprep.subr.bf16.mxu0 %v3996
      %4254 = vmatpush2.bf16.msra.mxu0 %v3995
      %4255 = vmatprep.subr.bf16.mxu0 %v3994
      %4256 = vmatpush2.bf16.msra.mxu0 %v3993
      %4257 = vmatprep.subr.bf16.mxu0 %v3992
      %4258 = vmatpush2.bf16.msra.mxu0 %v3991
      %4259 = vmatprep.subr.bf16.mxu0 %v3990
      %4260 = vmatpush2.bf16.msra.mxu0 %v3989
      %4261 = vmatprep.mubr.bf16.mxu0 %v3430
      %4262 = vmatmul.mubr.bf16.gmra.mxu0 %v3429
      %v4263 = vpop.f32.mrf.mxu0
      %v4264 = vadd.f32 0.0, %v4263
      %v4265 = vpop.f32.mrf.mxu0
      %v4266 = vadd.f32 0.0, %v4265
      %v4267 = vpop.f32.mrf.mxu0
      %v4268 = vadd.f32 0.0, %v4267
      %v4269 = vpop.f32.mrf.mxu0
      %v4270 = vadd.f32 0.0, %v4269
      %4271 = vmatprep.mubr.bf16.mxu0 %v3432
      %4272 = vmatmul.mubr.bf16.gmra.mxu0 %v3431
      %v4273 = vpop.f32.mrf.mxu0
      %v4274 = vadd.f32 0.0, %v4273
      %v4275 = vpop.f32.mrf.mxu0
      %v4276 = vadd.f32 0.0, %v4275
      %v4277 = vpop.f32.mrf.mxu0
      %v4278 = vadd.f32 0.0, %v4277
      %v4279 = vpop.f32.mrf.mxu0
      %v4280 = vadd.f32 0.0, %v4279
      %4281 = vmatprep.mubr.bf16.mxu0 %v3434
      %4282 = vmatmul.mubr.bf16.gmra.mxu0 %v3433
      %v4283 = vpop.f32.mrf.mxu0
      %v4284 = vadd.f32 0.0, %v4283
      %v4285 = vpop.f32.mrf.mxu0
      %v4286 = vadd.f32 0.0, %v4285
      %v4287 = vpop.f32.mrf.mxu0
      %v4288 = vadd.f32 0.0, %v4287
      %v4289 = vpop.f32.mrf.mxu0
      %v4290 = vadd.f32 0.0, %v4289
      %4291 = vmatprep.mubr.bf16.mxu0 %v3436
      %4292 = vmatmul.mubr.bf16.gmra.mxu0 %v3435
      %v4293 = vpop.f32.mrf.mxu0
      %v4294 = vadd.f32 0.0, %v4293
      %v4295 = vpop.f32.mrf.mxu0
      %v4296 = vadd.f32 0.0, %v4295
      %v4297 = vpop.f32.mrf.mxu0
      %v4298 = vadd.f32 0.0, %v4297
      %v4299 = vpop.f32.mrf.mxu0
      %v4300 = vadd.f32 0.0, %v4299
      %4301 = vdwg.mxu0
      %4302 = vmatprep.subr.bf16.mxu0 %v4020
      %4303 = vmatpush1.bf16.msra.mxu0 %v4019
      %4304 = vmatprep.subr.bf16.mxu0 %v4018
      %4305 = vmatpush1.bf16.msra.mxu0 %v4017
      %4306 = vmatprep.subr.bf16.mxu0 %v4016
      %4307 = vmatpush1.bf16.msra.mxu0 %v4015
      %4308 = vmatprep.subr.bf16.mxu0 %v4014
      %4309 = vmatpush1.bf16.msra.mxu0 %v4013
      %4310 = vmatprep.subr.bf16.mxu0 %v4012
      %4311 = vmatpush1.bf16.msra.mxu0 %v4011
      %4312 = vmatprep.subr.bf16.mxu0 %v4010
      %4313 = vmatpush1.bf16.msra.mxu0 %v4009
      %4314 = vmatprep.subr.bf16.mxu0 %v4008
      %4315 = vmatpush1.bf16.msra.mxu0 %v4007
      %4316 = vmatprep.subr.bf16.mxu0 %v4006
      %4317 = vmatpush1.bf16.msra.mxu0 %v4005
      %4318 = vmatprep.subr.bf16.mxu0 %v4036
      %4319 = vmatpush2.bf16.msra.mxu0 %v4035
      %4320 = vmatprep.subr.bf16.mxu0 %v4034
      %4321 = vmatpush2.bf16.msra.mxu0 %v4033
      %4322 = vmatprep.subr.bf16.mxu0 %v4032
      %4323 = vmatpush2.bf16.msra.mxu0 %v4031
      %4324 = vmatprep.subr.bf16.mxu0 %v4030
      %4325 = vmatpush2.bf16.msra.mxu0 %v4029
      %4326 = vmatprep.subr.bf16.mxu0 %v4028
      %4327 = vmatpush2.bf16.msra.mxu0 %v4027
      %4328 = vmatprep.subr.bf16.mxu0 %v4026
      %4329 = vmatpush2.bf16.msra.mxu0 %v4025
      %4330 = vmatprep.subr.bf16.mxu0 %v4024
      %4331 = vmatpush2.bf16.msra.mxu0 %v4023
      %4332 = vmatprep.subr.bf16.mxu0 %v4022
      %4333 = vmatpush2.bf16.msra.mxu0 %v4021
      %4334 = vmatprep.mubr.bf16.mxu0 %v3438
      %4335 = vmatmul.mubr.bf16.gmra.mxu0 %v3437
      %v4336 = vpop.f32.mrf.mxu0
      %v4337 = vadd.f32 %v4264, %v4336
      %v4338 = vpop.f32.mrf.mxu0
      %v4339 = vadd.f32 %v4266, %v4338
      %v4340 = vpop.f32.mrf.mxu0
      %v4341 = vadd.f32 %v4268, %v4340
      %v4342 = vpop.f32.mrf.mxu0
      %v4343 = vadd.f32 %v4270, %v4342
      %4344 = vmatprep.mubr.bf16.mxu0 %v3440
      %4345 = vmatmul.mubr.bf16.gmra.mxu0 %v3439
      %v4346 = vpop.f32.mrf.mxu0
      %v4347 = vadd.f32 %v4274, %v4346
      %v4348 = vpop.f32.mrf.mxu0
      %v4349 = vadd.f32 %v4276, %v4348
      %v4350 = vpop.f32.mrf.mxu0
      %v4351 = vadd.f32 %v4278, %v4350
      %v4352 = vpop.f32.mrf.mxu0
      %v4353 = vadd.f32 %v4280, %v4352
      %4354 = vmatprep.mubr.bf16.mxu0 %v3442
      %4355 = vmatmul.mubr.bf16.gmra.mxu0 %v3441
      %v4356 = vpop.f32.mrf.mxu0
      %v4357 = vadd.f32 %v4284, %v4356
      %v4358 = vpop.f32.mrf.mxu0
      %v4359 = vadd.f32 %v4286, %v4358
      %v4360 = vpop.f32.mrf.mxu0
      %v4361 = vadd.f32 %v4288, %v4360
      %v4362 = vpop.f32.mrf.mxu0
      %v4363 = vadd.f32 %v4290, %v4362
      %4364 = vmatprep.mubr.bf16.mxu0 %v3444
      %4365 = vmatmul.mubr.bf16.gmra.mxu0 %v3443
      %v4366 = vpop.f32.mrf.mxu0
      %v4367 = vadd.f32 %v4294, %v4366
      %v4368 = vpop.f32.mrf.mxu0
      %v4369 = vadd.f32 %v4296, %v4368
      %v4370 = vpop.f32.mrf.mxu0
      %v4371 = vadd.f32 %v4298, %v4370
      %v4372 = vpop.f32.mrf.mxu0
      %v4373 = vadd.f32 %v4300, %v4372
      %4374 = vdwg.mxu0
      %4375 = vmatprep.subr.bf16.mxu0 %v4052
      %4376 = vmatpush1.bf16.msra.mxu0 %v4051
      %4377 = vmatprep.subr.bf16.mxu0 %v4050
      %4378 = vmatpush1.bf16.msra.mxu0 %v4049
      %4379 = vmatprep.subr.bf16.mxu0 %v4048
      %4380 = vmatpush1.bf16.msra.mxu0 %v4047
      %4381 = vmatprep.subr.bf16.mxu0 %v4046
      %4382 = vmatpush1.bf16.msra.mxu0 %v4045
      %4383 = vmatprep.subr.bf16.mxu0 %v4044
      %4384 = vmatpush1.bf16.msra.mxu0 %v4043
      %4385 = vmatprep.subr.bf16.mxu0 %v4042
      %4386 = vmatpush1.bf16.msra.mxu0 %v4041
      %4387 = vmatprep.subr.bf16.mxu0 %v4040
      %4388 = vmatpush1.bf16.msra.mxu0 %v4039
      %4389 = vmatprep.subr.bf16.mxu0 %v4038
      %4390 = vmatpush1.bf16.msra.mxu0 %v4037
      %4391 = vmatprep.subr.bf16.mxu0 %v4068
      %4392 = vmatpush2.bf16.msra.mxu0 %v4067
      %4393 = vmatprep.subr.bf16.mxu0 %v4066
      %4394 = vmatpush2.bf16.msra.mxu0 %v4065
      %4395 = vmatprep.subr.bf16.mxu0 %v4064
      %4396 = vmatpush2.bf16.msra.mxu0 %v4063
      %4397 = vmatprep.subr.bf16.mxu0 %v4062
      %4398 = vmatpush2.bf16.msra.mxu0 %v4061
      %4399 = vmatprep.subr.bf16.mxu0 %v4060
      %4400 = vmatpush2.bf16.msra.mxu0 %v4059
      %4401 = vmatprep.subr.bf16.mxu0 %v4058
      %4402 = vmatpush2.bf16.msra.mxu0 %v4057
      %4403 = vmatprep.subr.bf16.mxu0 %v4056
      %4404 = vmatpush2.bf16.msra.mxu0 %v4055
      %4405 = vmatprep.subr.bf16.mxu0 %v4054
      %4406 = vmatpush2.bf16.msra.mxu0 %v4053
      %4407 = vmatprep.mubr.bf16.mxu0 %v3446
      %4408 = vmatmul.mubr.bf16.gmra.mxu0 %v3445
      %v4409 = vpop.f32.mrf.mxu0
      %v4410 = vadd.f32 %v4337, %v4409
      %v4411 = vpop.f32.mrf.mxu0
      %v4412 = vadd.f32 %v4339, %v4411
      %v4413 = vpop.f32.mrf.mxu0
      %v4414 = vadd.f32 %v4341, %v4413
      %v4415 = vpop.f32.mrf.mxu0
      %v4416 = vadd.f32 %v4343, %v4415
      %4417 = vmatprep.mubr.bf16.mxu0 %v3448
      %4418 = vmatmul.mubr.bf16.gmra.mxu0 %v3447
      %v4419 = vpop.f32.mrf.mxu0
      %v4420 = vadd.f32 %v4347, %v4419
      %v4421 = vpop.f32.mrf.mxu0
      %v4422 = vadd.f32 %v4349, %v4421
      %v4423 = vpop.f32.mrf.mxu0
      %v4424 = vadd.f32 %v4351, %v4423
      %v4425 = vpop.f32.mrf.mxu0
      %v4426 = vadd.f32 %v4353, %v4425
      %4427 = vmatprep.mubr.bf16.mxu0 %v3450
      %4428 = vmatmul.mubr.bf16.gmra.mxu0 %v3449
      %v4429 = vpop.f32.mrf.mxu0
      %v4430 = vadd.f32 %v4357, %v4429
      %v4431 = vpop.f32.mrf.mxu0
      %v4432 = vadd.f32 %v4359, %v4431
      %v4433 = vpop.f32.mrf.mxu0
      %v4434 = vadd.f32 %v4361, %v4433
      %v4435 = vpop.f32.mrf.mxu0
      %v4436 = vadd.f32 %v4363, %v4435
      %4437 = vmatprep.mubr.bf16.mxu0 %v3452
      %4438 = vmatmul.mubr.bf16.gmra.mxu0 %v3451
      %v4439 = vpop.f32.mrf.mxu0
      %v4440 = vadd.f32 %v4367, %v4439
      %v4441 = vpop.f32.mrf.mxu0
      %v4442 = vadd.f32 %v4369, %v4441
      %v4443 = vpop.f32.mrf.mxu0
      %v4444 = vadd.f32 %v4371, %v4443
      %v4445 = vpop.f32.mrf.mxu0
      %v4446 = vadd.f32 %v4373, %v4445
      %4447 = vdwg.mxu0
      %4448 = vmatprep.subr.bf16.mxu0 %v4084
      %4449 = vmatpush1.bf16.msra.mxu0 %v4083
      %4450 = vmatprep.subr.bf16.mxu0 %v4082
      %4451 = vmatpush1.bf16.msra.mxu0 %v4081
      %4452 = vmatprep.subr.bf16.mxu0 %v4080
      %4453 = vmatpush1.bf16.msra.mxu0 %v4079
      %4454 = vmatprep.subr.bf16.mxu0 %v4078
      %4455 = vmatpush1.bf16.msra.mxu0 %v4077
      %4456 = vmatprep.subr.bf16.mxu0 %v4076
      %4457 = vmatpush1.bf16.msra.mxu0 %v4075
      %4458 = vmatprep.subr.bf16.mxu0 %v4074
      %4459 = vmatpush1.bf16.msra.mxu0 %v4073
      %4460 = vmatprep.subr.bf16.mxu0 %v4072
      %4461 = vmatpush1.bf16.msra.mxu0 %v4071
      %4462 = vmatprep.subr.bf16.mxu0 %v4070
      %4463 = vmatpush1.bf16.msra.mxu0 %v4069
      %4464 = vmatprep.subr.bf16.mxu0 %v4100
      %4465 = vmatpush2.bf16.msra.mxu0 %v4099
      %4466 = vmatprep.subr.bf16.mxu0 %v4098
      %4467 = vmatpush2.bf16.msra.mxu0 %v4097
      %4468 = vmatprep.subr.bf16.mxu0 %v4096
      %4469 = vmatpush2.bf16.msra.mxu0 %v4095
      %4470 = vmatprep.subr.bf16.mxu0 %v4094
      %4471 = vmatpush2.bf16.msra.mxu0 %v4093
      %4472 = vmatprep.subr.bf16.mxu0 %v4092
      %4473 = vmatpush2.bf16.msra.mxu0 %v4091
      %4474 = vmatprep.subr.bf16.mxu0 %v4090
      %4475 = vmatpush2.bf16.msra.mxu0 %v4089
      %4476 = vmatprep.subr.bf16.mxu0 %v4088
      %4477 = vmatpush2.bf16.msra.mxu0 %v4087
      %4478 = vmatprep.subr.bf16.mxu0 %v4086
      %4479 = vmatpush2.bf16.msra.mxu0 %v4085
      %4480 = vmatprep.mubr.bf16.mxu0 %v3454
      %4481 = vmatmul.mubr.bf16.gmra.mxu0 %v3453
      %v4482 = vpop.f32.mrf.mxu0
      %v4483 = vadd.f32 %v4410, %v4482
      %v4484 = vpop.f32.mrf.mxu0
      %v4485 = vadd.f32 %v4412, %v4484
      %v4486 = vpop.f32.mrf.mxu0
      %v4487 = vadd.f32 %v4414, %v4486
      %v4488 = vpop.f32.mrf.mxu0
      %v4489 = vadd.f32 %v4416, %v4488
      %4490 = vmatprep.mubr.bf16.mxu0 %v3456
      %4491 = vmatmul.mubr.bf16.gmra.mxu0 %v3455
      %v4492 = vpop.f32.mrf.mxu0
      %v4493 = vadd.f32 %v4420, %v4492
      %v4494 = vpop.f32.mrf.mxu0
      %v4495 = vadd.f32 %v4422, %v4494
      %v4496 = vpop.f32.mrf.mxu0
      %v4497 = vadd.f32 %v4424, %v4496
      %v4498 = vpop.f32.mrf.mxu0
      %v4499 = vadd.f32 %v4426, %v4498
      %4500 = vmatprep.mubr.bf16.mxu0 %v3458
      %4501 = vmatmul.mubr.bf16.gmra.mxu0 %v3457
      %v4502 = vpop.f32.mrf.mxu0
      %v4503 = vadd.f32 %v4430, %v4502
      %v4504 = vpop.f32.mrf.mxu0
      %v4505 = vadd.f32 %v4432, %v4504
      %v4506 = vpop.f32.mrf.mxu0
      %v4507 = vadd.f32 %v4434, %v4506
      %v4508 = vpop.f32.mrf.mxu0
      %v4509 = vadd.f32 %v4436, %v4508
      %4510 = vmatprep.mubr.bf16.mxu0 %v3460
      %4511 = vmatmul.mubr.bf16.gmra.mxu0 %v3459
      %v4512 = vpop.f32.mrf.mxu0
      %v4513 = vadd.f32 %v4440, %v4512
      %v4514 = vpop.f32.mrf.mxu0
      %v4515 = vadd.f32 %v4442, %v4514
      %v4516 = vpop.f32.mrf.mxu0
      %v4517 = vadd.f32 %v4444, %v4516
      %v4518 = vpop.f32.mrf.mxu0
      %v4519 = vadd.f32 %v4446, %v4518
      %4520 = vdwg.mxu0
      %v4521 = vld [vmem:[%s6] sm:$0xff]
      %v4522 = vld [vmem:[%s6 + $0x8] sm:$0xff]
      %v4523 = vld [vmem:[%s6 + $0x10] sm:$0xff]
      %v4524 = vld [vmem:[%s6 + $0x18] sm:$0xff]
      %v4525 = vld [vmem:[%s6 + $0x20] sm:$0xff]
      %v4526 = vld [vmem:[%s6 + $0x28] sm:$0xff]
      %v4527 = vld [vmem:[%s6 + $0x30] sm:$0xff]
      %v4528 = vld [vmem:[%s6 + $0x38] sm:$0xff]
      %v4529 = vld [vmem:[%s6 + $0x40] sm:$0xff]
      %v4530 = vld [vmem:[%s6 + $0x48] sm:$0xff]
      %v4531 = vld [vmem:[%s6 + $0x50] sm:$0xff]
      %v4532 = vld [vmem:[%s6 + $0x58] sm:$0xff]
      %v4533 = vld [vmem:[%s6 + $0x60] sm:$0xff]
      %v4534 = vld [vmem:[%s6 + $0x68] sm:$0xff]
      %v4535 = vld [vmem:[%s6 + $0x70] sm:$0xff]
      %v4536 = vld [vmem:[%s6 + $0x78] sm:$0xff]
      %v4537 = vld [vmem:[%s6 + $0x80] sm:$0xff]
      %v4538 = vld [vmem:[%s6 + $0x88] sm:$0xff]
      %v4539 = vld [vmem:[%s6 + $0x90] sm:$0xff]
      %v4540 = vld [vmem:[%s6 + $0x98] sm:$0xff]
      %v4541 = vld [vmem:[%s6 + $0xa0] sm:$0xff]
      %v4542 = vld [vmem:[%s6 + $0xa8] sm:$0xff]
      %v4543 = vld [vmem:[%s6 + $0xb0] sm:$0xff]
      %v4544 = vld [vmem:[%s6 + $0xb8] sm:$0xff]
      %v4545 = vld [vmem:[%s6 + $0xc0] sm:$0xff]
      %v4546 = vld [vmem:[%s6 + $0xc8] sm:$0xff]
      %v4547 = vld [vmem:[%s6 + $0xd0] sm:$0xff]
      %v4548 = vld [vmem:[%s6 + $0xd8] sm:$0xff]
      %v4549 = vld [vmem:[%s6 + $0xe0] sm:$0xff]
      %v4550 = vld [vmem:[%s6 + $0xe8] sm:$0xff]
      %v4551 = vld [vmem:[%s6 + $0xf0] sm:$0xff]
      %v4552 = vld [vmem:[%s6 + $0xf8] sm:$0xff]
      %v4553 = vld [vmem:[%s8] sm:$0xf]
      %4554 = vmatprep.subr.mxu0 0.0
      %4555 = vmatpush1.msra.mxu0 %v4536
      %4556 = vmatprep.subr.mxu0 0.0
      %4557 = vmatpush1.msra.mxu0 %v4535
      %4558 = vmatprep.subr.mxu0 0.0
      %4559 = vmatpush1.msra.mxu0 %v4534
      %4560 = vmatprep.subr.mxu0 0.0
      %4561 = vmatpush1.msra.mxu0 %v4533
      %4562 = vmatprep.subr.mxu0 0.0
      %4563 = vmatpush1.msra.mxu0 %v4532
      %4564 = vmatprep.subr.mxu0 0.0
      %4565 = vmatpush1.msra.mxu0 %v4531
      %4566 = vmatprep.subr.mxu0 0.0
      %4567 = vmatpush1.msra.mxu0 %v4530
      %4568 = vmatprep.subr.mxu0 0.0
      %4569 = vmatpush1.msra.mxu0 %v4529
      %4570 = vmatprep.subr.mxu0 0.0
      %4571 = vmatpush1.msra.mxu0 %v4528
      %4572 = vmatprep.subr.mxu0 0.0
      %4573 = vmatpush1.msra.mxu0 %v4527
      %4574 = vmatprep.subr.mxu0 0.0
      %4575 = vmatpush1.msra.mxu0 %v4526
      %4576 = vmatprep.subr.mxu0 0.0
      %4577 = vmatpush1.msra.mxu0 %v4525
      %4578 = vmatprep.subr.mxu0 0.0
      %4579 = vmatpush1.msra.mxu0 %v4524
      %4580 = vmatprep.subr.mxu0 0.0
      %4581 = vmatpush1.msra.mxu0 %v4523
      %4582 = vmatprep.subr.mxu0 0.0
      %4583 = vmatpush1.msra.mxu0 %v4522
      %4584 = vmatprep.subr.mxu0 0.0
      %4585 = vmatpush1.msra.mxu0 %v4521
      %4586 = vmatprep.subr.mxu0 0.0
      %4587 = vmatpush2.msra.mxu0 %v4552
      %4588 = vmatprep.subr.mxu0 0.0
      %4589 = vmatpush2.msra.mxu0 %v4551
      %4590 = vmatprep.subr.mxu0 0.0
      %4591 = vmatpush2.msra.mxu0 %v4550
      %4592 = vmatprep.subr.mxu0 0.0
      %4593 = vmatpush2.msra.mxu0 %v4549
      %4594 = vmatprep.subr.mxu0 0.0
      %4595 = vmatpush2.msra.mxu0 %v4548
      %4596 = vmatprep.subr.mxu0 0.0
      %4597 = vmatpush2.msra.mxu0 %v4547
      %4598 = vmatprep.subr.mxu0 0.0
      %4599 = vmatpush2.msra.mxu0 %v4546
      %4600 = vmatprep.subr.mxu0 0.0
      %4601 = vmatpush2.msra.mxu0 %v4545
      %4602 = vmatprep.subr.mxu0 0.0
      %4603 = vmatpush2.msra.mxu0 %v4544
      %4604 = vmatprep.subr.mxu0 0.0
      %4605 = vmatpush2.msra.mxu0 %v4543
      %4606 = vmatprep.subr.mxu0 0.0
      %4607 = vmatpush2.msra.mxu0 %v4542
      %4608 = vmatprep.subr.mxu0 0.0
      %4609 = vmatpush2.msra.mxu0 %v4541
      %4610 = vmatprep.subr.mxu0 0.0
      %4611 = vmatpush2.msra.mxu0 %v4540
      %4612 = vmatprep.subr.mxu0 0.0
      %4613 = vmatpush2.msra.mxu0 %v4539
      %4614 = vmatprep.subr.mxu0 0.0
      %4615 = vmatpush2.msra.mxu0 %v4538
      %4616 = vmatprep.subr.mxu0 0.0
      %4617 = vmatpush2.msra.mxu0 %v4537
      %4618 = vmatprep.mubr.f32.mxu0 %v4485
      %4619 = vmatmul.mubr.f32.gmra.mxu0 %v4483
      %v4620 = vpop.f32.mrf.mxu0
      %v4621 = vadd.f32 0.0, %v4620
      %v4622 = vpop.f32.mrf.mxu0
      %4623 = vmatprep.mubr.f32.mxu0 %v4489
      %4624 = vmatmul.mubr.f32.gmra.mxu0 %v4487
      %v4625 = vpop.f32.mrf.mxu0
      %v4626 = vadd.f32 0.0, %v4625
      %v4627 = vpop.f32.mrf.mxu0
      %4628 = vmatprep.mubr.f32.mxu0 %v4495
      %4629 = vmatmul.mubr.f32.gmra.mxu0 %v4493
      %v4630 = vpop.f32.mrf.mxu0
      %v4631 = vadd.f32 0.0, %v4630
      %v4632 = vpop.f32.mrf.mxu0
      %4633 = vmatprep.mubr.f32.mxu0 %v4499
      %4634 = vmatmul.mubr.f32.gmra.mxu0 %v4497
      %v4635 = vpop.f32.mrf.mxu0
      %v4636 = vadd.f32 0.0, %v4635
      %v4637 = vpop.f32.mrf.mxu0
      %4638 = vmatprep.mubr.f32.mxu0 %v4505
      %4639 = vmatmul.mubr.f32.gmra.mxu0 %v4503
      %v4640 = vpop.f32.mrf.mxu0
      %v4641 = vadd.f32 0.0, %v4640
      %v4642 = vpop.f32.mrf.mxu0
      %4643 = vmatprep.mubr.f32.mxu0 %v4509
      %4644 = vmatmul.mubr.f32.gmra.mxu0 %v4507
      %v4645 = vpop.f32.mrf.mxu0
      %v4646 = vadd.f32 0.0, %v4645
      %v4647 = vpop.f32.mrf.mxu0
      %4648 = vmatprep.mubr.f32.mxu0 %v4515
      %4649 = vmatmul.mubr.f32.gmra.mxu0 %v4513
      %v4650 = vpop.f32.mrf.mxu0
      %v4651 = vadd.f32 0.0, %v4650
      %v4652 = vpop.f32.mrf.mxu0
      %4653 = vmatprep.mubr.f32.mxu0 %v4519
      %4654 = vmatmul.mubr.f32.gmra.mxu0 %v4517
      %v4655 = vpop.f32.mrf.mxu0
      %v4656 = vadd.f32 0.0, %v4655
      %v4657 = vpop.f32.mrf.mxu0
      %4658 = vdwg.mxu0
      %v4659 = vmul.f32 %v4483, %v4483
      %v4660 = vmul.f32 %v4485, %v4485
      %v4661 = vmul.f32 %v4487, %v4487
      %v4662 = vmul.f32 %v4489, %v4489
      %v4663 = vmul.f32 %v4493, %v4493
      %v4664 = vmul.f32 %v4495, %v4495
      %v4665 = vmul.f32 %v4497, %v4497
      %v4666 = vmul.f32 %v4499, %v4499
      %v4667 = vmul.f32 %v4503, %v4503
      %v4668 = vmul.f32 %v4505, %v4505
      %v4669 = vmul.f32 %v4507, %v4507
      %v4670 = vmul.f32 %v4509, %v4509
      %v4671 = vmul.f32 %v4513, %v4513
      %v4672 = vmul.f32 %v4515, %v4515
      %v4673 = vmul.f32 %v4517, %v4517
      %v4674 = vmul.f32 %v4519, %v4519
      %4675 = vmatprep.subr.mxu0 0.0
      %4676 = vmatpush1.msra.mxu0 %v4536
      %4677 = vmatprep.subr.mxu0 0.0
      %4678 = vmatpush1.msra.mxu0 %v4535
      %4679 = vmatprep.subr.mxu0 0.0
      %4680 = vmatpush1.msra.mxu0 %v4534
      %4681 = vmatprep.subr.mxu0 0.0
      %4682 = vmatpush1.msra.mxu0 %v4533
      %4683 = vmatprep.subr.mxu0 0.0
      %4684 = vmatpush1.msra.mxu0 %v4532
      %4685 = vmatprep.subr.mxu0 0.0
      %4686 = vmatpush1.msra.mxu0 %v4531
      %4687 = vmatprep.subr.mxu0 0.0
      %4688 = vmatpush1.msra.mxu0 %v4530
      %4689 = vmatprep.subr.mxu0 0.0
      %4690 = vmatpush1.msra.mxu0 %v4529
      %4691 = vmatprep.subr.mxu0 0.0
      %4692 = vmatpush1.msra.mxu0 %v4528
      %4693 = vmatprep.subr.mxu0 0.0
      %4694 = vmatpush1.msra.mxu0 %v4527
      %4695 = vmatprep.subr.mxu0 0.0
      %4696 = vmatpush1.msra.mxu0 %v4526
      %4697 = vmatprep.subr.mxu0 0.0
      %4698 = vmatpush1.msra.mxu0 %v4525
      %4699 = vmatprep.subr.mxu0 0.0
      %4700 = vmatpush1.msra.mxu0 %v4524
      %4701 = vmatprep.subr.mxu0 0.0
      %4702 = vmatpush1.msra.mxu0 %v4523
      %4703 = vmatprep.subr.mxu0 0.0
      %4704 = vmatpush1.msra.mxu0 %v4522
      %4705 = vmatprep.subr.mxu0 0.0
      %4706 = vmatpush1.msra.mxu0 %v4521
      %4707 = vmatprep.subr.mxu0 0.0
      %4708 = vmatpush2.msra.mxu0 %v4552
      %4709 = vmatprep.subr.mxu0 0.0
      %4710 = vmatpush2.msra.mxu0 %v4551
      %4711 = vmatprep.subr.mxu0 0.0
      %4712 = vmatpush2.msra.mxu0 %v4550
      %4713 = vmatprep.subr.mxu0 0.0
      %4714 = vmatpush2.msra.mxu0 %v4549
      %4715 = vmatprep.subr.mxu0 0.0
      %4716 = vmatpush2.msra.mxu0 %v4548
      %4717 = vmatprep.subr.mxu0 0.0
      %4718 = vmatpush2.msra.mxu0 %v4547
      %4719 = vmatprep.subr.mxu0 0.0
      %4720 = vmatpush2.msra.mxu0 %v4546
      %4721 = vmatprep.subr.mxu0 0.0
      %4722 = vmatpush2.msra.mxu0 %v4545
      %4723 = vmatprep.subr.mxu0 0.0
      %4724 = vmatpush2.msra.mxu0 %v4544
      %4725 = vmatprep.subr.mxu0 0.0
      %4726 = vmatpush2.msra.mxu0 %v4543
      %4727 = vmatprep.subr.mxu0 0.0
      %4728 = vmatpush2.msra.mxu0 %v4542
      %4729 = vmatprep.subr.mxu0 0.0
      %4730 = vmatpush2.msra.mxu0 %v4541
      %4731 = vmatprep.subr.mxu0 0.0
      %4732 = vmatpush2.msra.mxu0 %v4540
      %4733 = vmatprep.subr.mxu0 0.0
      %4734 = vmatpush2.msra.mxu0 %v4539
      %4735 = vmatprep.subr.mxu0 0.0
      %4736 = vmatpush2.msra.mxu0 %v4538
      %4737 = vmatprep.subr.mxu0 0.0
      %4738 = vmatpush2.msra.mxu0 %v4537
      %4739 = vmatprep.mubr.f32.mxu0 %v4660
      %4740 = vmatmul.mubr.f32.gmra.mxu0 %v4659
      %v4741 = vpop.f32.mrf.mxu0
      %v4742 = vadd.f32 0.0, %v4741
      %v4743 = vpop.f32.mrf.mxu0
      %4744 = vmatprep.mubr.f32.mxu0 %v4662
      %4745 = vmatmul.mubr.f32.gmra.mxu0 %v4661
      %v4746 = vpop.f32.mrf.mxu0
      %v4747 = vadd.f32 0.0, %v4746
      %v4748 = vpop.f32.mrf.mxu0
      %4749 = vmatprep.mubr.f32.mxu0 %v4664
      %4750 = vmatmul.mubr.f32.gmra.mxu0 %v4663
      %v4751 = vpop.f32.mrf.mxu0
      %v4752 = vadd.f32 0.0, %v4751
      %v4753 = vpop.f32.mrf.mxu0
      %4754 = vmatprep.mubr.f32.mxu0 %v4666
      %4755 = vmatmul.mubr.f32.gmra.mxu0 %v4665
      %v4756 = vpop.f32.mrf.mxu0
      %v4757 = vadd.f32 0.0, %v4756
      %v4758 = vpop.f32.mrf.mxu0
      %4759 = vmatprep.mubr.f32.mxu0 %v4668
      %4760 = vmatmul.mubr.f32.gmra.mxu0 %v4667
      %v4761 = vpop.f32.mrf.mxu0
      %v4762 = vadd.f32 0.0, %v4761
      %v4763 = vpop.f32.mrf.mxu0
      %4764 = vmatprep.mubr.f32.mxu0 %v4670
      %4765 = vmatmul.mubr.f32.gmra.mxu0 %v4669
      %v4766 = vpop.f32.mrf.mxu0
      %v4767 = vadd.f32 0.0, %v4766
      %v4768 = vpop.f32.mrf.mxu0
      %4769 = vmatprep.mubr.f32.mxu0 %v4672
      %4770 = vmatmul.mubr.f32.gmra.mxu0 %v4671
      %v4771 = vpop.f32.mrf.mxu0
      %v4772 = vadd.f32 0.0, %v4771
      %v4773 = vpop.f32.mrf.mxu0
      %4774 = vmatprep.mubr.f32.mxu0 %v4674
      %4775 = vmatmul.mubr.f32.gmra.mxu0 %v4673
      %v4776 = vpop.f32.mrf.mxu0
      %v4777 = vadd.f32 0.0, %v4776
      %v4778 = vpop.f32.mrf.mxu0
      %4779 = vdwg.mxu0
      %vm4780 = vcmask 523264
      %v4782 = vsel %vm4780, %v4553, 0
      %4784 = vmatprep.subr.mxu0 0.0
      %4785 = vmatpush1.msra.mxu0 0.0
      %4786 = vmatprep.subr.mxu0 0.0
      %4787 = vmatpush1.msra.mxu0 0.0
      %4788 = vmatprep.subr.mxu0 0.0
      %4789 = vmatpush1.msra.mxu0 0.0
      %4790 = vmatprep.subr.mxu0 0.0
      %4791 = vmatpush1.msra.mxu0 0.0
      %4792 = vmatprep.subr.mxu0 0.0
      %4793 = vmatpush1.msra.mxu0 0.0
      %4794 = vmatprep.subr.mxu0 0.0
      %4795 = vmatpush1.msra.mxu0 0.0
      %4796 = vmatprep.subr.mxu0 0.0
      %4797 = vmatpush1.msra.mxu0 0.0
      %4798 = vmatprep.subr.mxu0 0.0
      %4799 = vmatpush1.msra.mxu0 0.0
      %4800 = vmatprep.subr.mxu0 0.0
      %4801 = vmatpush1.msra.mxu0 %v4656
      %4802 = vmatprep.subr.mxu0 0.0
      %4803 = vmatpush1.msra.mxu0 %v4651
      %4804 = vmatprep.subr.mxu0 0.0
      %4805 = vmatpush1.msra.mxu0 %v4646
      %4806 = vmatprep.subr.mxu0 0.0
      %4807 = vmatpush1.msra.mxu0 %v4641
      %4808 = vmatprep.subr.mxu0 0.0
      %4809 = vmatpush1.msra.mxu0 %v4636
      %4810 = vmatprep.subr.mxu0 0.0
      %4811 = vmatpush1.msra.mxu0 %v4631
      %4812 = vmatprep.subr.mxu0 0.0
      %4813 = vmatpush1.msra.mxu0 %v4626
      %4814 = vmatprep.subr.mxu0 0.0
      %4815 = vmatpush1.msra.mxu0 %v4621
      %4816 = vmatprep.subr.mxu0 0.0
      %4817 = vmatpush2.msra.mxu0 0.0
      %4818 = vmatprep.subr.mxu0 0.0
      %4819 = vmatpush2.msra.mxu0 0.0
      %4820 = vmatprep.subr.mxu0 0.0
      %4821 = vmatpush2.msra.mxu0 0.0
      %4822 = vmatprep.subr.mxu0 0.0
      %4823 = vmatpush2.msra.mxu0 0.0
      %4824 = vmatprep.subr.mxu0 0.0
      %4825 = vmatpush2.msra.mxu0 0.0
      %4826 = vmatprep.subr.mxu0 0.0
      %4827 = vmatpush2.msra.mxu0 0.0
      %4828 = vmatprep.subr.mxu0 0.0
      %4829 = vmatpush2.msra.mxu0 0.0
      %4830 = vmatprep.subr.mxu0 0.0
      %4831 = vmatpush2.msra.mxu0 0.0
      %4832 = vmatprep.subr.mxu0 0.0
      %4833 = vmatpush2.msra.mxu0 0.0
      %4834 = vmatprep.subr.mxu0 0.0
      %4835 = vmatpush2.msra.mxu0 0.0
      %4836 = vmatprep.subr.mxu0 0.0
      %4837 = vmatpush2.msra.mxu0 0.0
      %4838 = vmatprep.subr.mxu0 0.0
      %4839 = vmatpush2.msra.mxu0 0.0
      %4840 = vmatprep.subr.mxu0 0.0
      %4841 = vmatpush2.msra.mxu0 0.0
      %4842 = vmatprep.subr.mxu0 0.0
      %4843 = vmatpush2.msra.mxu0 0.0
      %4844 = vmatprep.subr.mxu0 0.0
      %4845 = vmatpush2.msra.mxu0 0.0
      %4846 = vmatprep.subr.mxu0 0.0
      %4847 = vmatpush2.msra.mxu0 0.0
      %4848 = vmatprep.mubr.f32.mxu0 0.0
      %4849 = vmatmul.mubr.f32.gmra.mxu0 %v4782
      %v4850 = vpop.f32.mrf.mxu0
      %v4851 = vadd.f32 0.0, %v4850
      %v4852 = vpop.f32.mrf.mxu0
      %4853 = vdwg.mxu0
      %v4854 = vmul.f32 %v4851, 0.00390625
      %4855 = vmatprep.subr.mxu0 0.0
      %4856 = vmatpush1.msra.mxu0 0.0
      %4857 = vmatprep.subr.mxu0 0.0
      %4858 = vmatpush1.msra.mxu0 0.0
      %4859 = vmatprep.subr.mxu0 0.0
      %4860 = vmatpush1.msra.mxu0 0.0
      %4861 = vmatprep.subr.mxu0 0.0
      %4862 = vmatpush1.msra.mxu0 0.0
      %4863 = vmatprep.subr.mxu0 0.0
      %4864 = vmatpush1.msra.mxu0 0.0
      %4865 = vmatprep.subr.mxu0 0.0
      %4866 = vmatpush1.msra.mxu0 0.0
      %4867 = vmatprep.subr.mxu0 0.0
      %4868 = vmatpush1.msra.mxu0 0.0
      %4869 = vmatprep.subr.mxu0 0.0
      %4870 = vmatpush1.msra.mxu0 0.0
      %4871 = vmatprep.subr.mxu0 0.0
      %4872 = vmatpush1.msra.mxu0 %v4777
      %4873 = vmatprep.subr.mxu0 0.0
      %4874 = vmatpush1.msra.mxu0 %v4772
      %4875 = vmatprep.subr.mxu0 0.0
      %4876 = vmatpush1.msra.mxu0 %v4767
      %4877 = vmatprep.subr.mxu0 0.0
      %4878 = vmatpush1.msra.mxu0 %v4762
      %4879 = vmatprep.subr.mxu0 0.0
      %4880 = vmatpush1.msra.mxu0 %v4757
      %4881 = vmatprep.subr.mxu0 0.0
      %4882 = vmatpush1.msra.mxu0 %v4752
      %4883 = vmatprep.subr.mxu0 0.0
      %4884 = vmatpush1.msra.mxu0 %v4747
      %4885 = vmatprep.subr.mxu0 0.0
      %4886 = vmatpush1.msra.mxu0 %v4742
      %4887 = vmatprep.subr.mxu0 0.0
      %4888 = vmatpush2.msra.mxu0 0.0
      %4889 = vmatprep.subr.mxu0 0.0
      %4890 = vmatpush2.msra.mxu0 0.0
      %4891 = vmatprep.subr.mxu0 0.0
      %4892 = vmatpush2.msra.mxu0 0.0
      %4893 = vmatprep.subr.mxu0 0.0
      %4894 = vmatpush2.msra.mxu0 0.0
      %4895 = vmatprep.subr.mxu0 0.0
      %4896 = vmatpush2.msra.mxu0 0.0
      %4897 = vmatprep.subr.mxu0 0.0
      %4898 = vmatpush2.msra.mxu0 0.0
      %4899 = vmatprep.subr.mxu0 0.0
      %4900 = vmatpush2.msra.mxu0 0.0
      %4901 = vmatprep.subr.mxu0 0.0
      %4902 = vmatpush2.msra.mxu0 0.0
      %4903 = vmatprep.subr.mxu0 0.0
      %4904 = vmatpush2.msra.mxu0 0.0
      %4905 = vmatprep.subr.mxu0 0.0
      %4906 = vmatpush2.msra.mxu0 0.0
      %4907 = vmatprep.subr.mxu0 0.0
      %4908 = vmatpush2.msra.mxu0 0.0
      %4909 = vmatprep.subr.mxu0 0.0
      %4910 = vmatpush2.msra.mxu0 0.0
      %4911 = vmatprep.subr.mxu0 0.0
      %4912 = vmatpush2.msra.mxu0 0.0
      %4913 = vmatprep.subr.mxu0 0.0
      %4914 = vmatpush2.msra.mxu0 0.0
      %4915 = vmatprep.subr.mxu0 0.0
      %4916 = vmatpush2.msra.mxu0 0.0
      %4917 = vmatprep.subr.mxu0 0.0
      %4918 = vmatpush2.msra.mxu0 0.0
      %4919 = vmatprep.mubr.f32.mxu0 0.0
      %4920 = vmatmul.mubr.f32.gmra.mxu0 %v4782
      %v4921 = vpop.f32.mrf.mxu0
      %v4922 = vadd.f32 0.0, %v4921
      %v4923 = vpop.f32.mrf.mxu0
      %4924 = vdwg.mxu0
      %v4925 = vmul.f32 %v4922, 0.00390625
      %v4926 = vmul.f32 %v4854, %v4854
      %v4927 = vsub.f32 %v4925, %v4926
      %v4928 = vmax.f32 %v4927, 0.0
      %v4929 = vadd.f32 %v4928, 1e-05
      %v4930 = vrsqrt.pop %v4929
      %v4931 = vsub.f32 0.0, %v4854
      %v4932 = vmul.f32 %v4931, %v4930
      %v4933 = vld [vmem:[%s7] sm:$0xff]
      %v4934 = vld [vmem:[%s7 + $0x8] sm:$0xff]
      %v4935 = vld [vmem:[%s7 + $0x10] sm:$0xff]
      %v4936 = vld [vmem:[%s7 + $0x18] sm:$0xff]
      %v4937 = vld [vmem:[%s9] sm:$0xff]
      %v4938 = vld [vmem:[%s9 + $0x8] sm:$0xff]
      %v4939 = vld [vmem:[%s9 + $0x10] sm:$0xff]
      %v4940 = vld [vmem:[%s9 + $0x18] sm:$0xff]
      %v4941 = vld [vmem:[%s9 + $0x20] sm:$0xff]
      %v4942 = vld [vmem:[%s9 + $0x28] sm:$0xff]
      %v4943 = vld [vmem:[%s9 + $0x30] sm:$0xff]
      %v4944 = vld [vmem:[%s9 + $0x38] sm:$0xff]
      %vm4945 = vcmask 130048
      %v4947 = vsel %vm4945, %v4930, 0
      %4949 = vmatprep.subr.mxu0 0.0
      %4950 = vmatpush1.msra.mxu0 0.0
      %4951 = vmatprep.subr.mxu0 0.0
      %4952 = vmatpush1.msra.mxu0 0.0
      %4953 = vmatprep.subr.mxu0 0.0
      %4954 = vmatpush1.msra.mxu0 0.0
      %4955 = vmatprep.subr.mxu0 0.0
      %4956 = vmatpush1.msra.mxu0 0.0
      %4957 = vmatprep.subr.mxu0 0.0
      %4958 = vmatpush1.msra.mxu0 0.0
      %4959 = vmatprep.subr.mxu0 0.0
      %4960 = vmatpush1.msra.mxu0 0.0
      %4961 = vmatprep.subr.mxu0 0.0
      %4962 = vmatpush1.msra.mxu0 0.0
      %4963 = vmatprep.subr.mxu0 0.0
      %4964 = vmatpush1.msra.mxu0 0.0
      %4965 = vmatprep.subr.mxu0 0.0
      %4966 = vmatpush1.msra.mxu0 0.0
      %4967 = vmatprep.subr.mxu0 0.0
      %4968 = vmatpush1.msra.mxu0 0.0
      %4969 = vmatprep.subr.mxu0 0.0
      %4970 = vmatpush1.msra.mxu0 0.0
      %4971 = vmatprep.subr.mxu0 0.0
      %4972 = vmatpush1.msra.mxu0 0.0
      %4973 = vmatprep.subr.mxu0 0.0
      %4974 = vmatpush1.msra.mxu0 0.0
      %4975 = vmatprep.subr.mxu0 0.0
      %4976 = vmatpush1.msra.mxu0 0.0
      %4977 = vmatprep.subr.mxu0 %v4936
      %4978 = vmatpush1.msra.mxu0 %v4935
      %4979 = vmatprep.subr.mxu0 %v4934
      %4980 = vmatpush1.msra.mxu0 %v4933
      %4981 = vmatprep.subr.mxu0 0.0
      %4982 = vmatpush2.msra.mxu0 0.0
      %4983 = vmatprep.subr.mxu0 0.0
      %4984 = vmatpush2.msra.mxu0 0.0
      %4985 = vmatprep.subr.mxu0 0.0
      %4986 = vmatpush2.msra.mxu0 0.0
      %4987 = vmatprep.subr.mxu0 0.0
      %4988 = vmatpush2.msra.mxu0 0.0
      %4989 = vmatprep.subr.mxu0 0.0
      %4990 = vmatpush2.msra.mxu0 0.0
      %4991 = vmatprep.subr.mxu0 0.0
      %4992 = vmatpush2.msra.mxu0 0.0
      %4993 = vmatprep.subr.mxu0 0.0
      %4994 = vmatpush2.msra.mxu0 0.0
      %4995 = vmatprep.subr.mxu0 0.0
      %4996 = vmatpush2.msra.mxu0 0.0
      %4997 = vmatprep.subr.mxu0 0.0
      %4998 = vmatpush2.msra.mxu0 0.0
      %4999 = vmatprep.subr.mxu0 0.0
      %5000 = vmatpush2.msra.mxu0 0.0
      %5001 = vmatprep.subr.mxu0 0.0
      %5002 = vmatpush2.msra.mxu0 0.0
      %5003 = vmatprep.subr.mxu0 0.0
      %5004 = vmatpush2.msra.mxu0 0.0
      %5005 = vmatprep.subr.mxu0 0.0
      %5006 = vmatpush2.msra.mxu0 0.0
      %5007 = vmatprep.subr.mxu0 0.0
      %5008 = vmatpush2.msra.mxu0 0.0
      %5009 = vmatprep.subr.mxu0 0.0
      %5010 = vmatpush2.msra.mxu0 0.0
      %5011 = vmatprep.subr.mxu0 0.0
      %5012 = vmatpush2.msra.mxu0 0.0
      %5013 = vmatprep.mubr.f32.mxu0 0.0
      %5014 = vmatmul.mubr.f32.gmra.mxu0 %v4947
      %v5015 = vpop.f32.mrf.mxu0
      %v5016 = vadd.f32 0.0, %v5015
      %v5017 = vpop.f32.mrf.mxu0
      %v5018 = vadd.f32 0.0, %v5017
      %5019 = vdwg.mxu0
      %vm5020 = vcmask 31744
      %v5022 = vsel %vm5020, %v4937, 0
      %v5025 = vsel %vm5020, %v4938, 0
      %v5028 = vsel %vm5020, %v4939, 0
      %v5031 = vsel %vm5020, %v4940, 0
      %v5034 = vsel %vm5020, %v4941, 0
      %v5037 = vsel %vm5020, %v4942, 0
      %v5040 = vsel %vm5020, %v4943, 0
      %v5043 = vsel %vm5020, %v4944, 0
      %vm5045 = vcmask 1043456
      %v5047 = vsel %vm5045, %v5016, 0
      %v5050 = vsel %vm5045, %v5018, 0
      %5052 = vmatprep.subr.mxu0 0.0
      %5053 = vmatpush1.msra.mxu0 0.0
      %5054 = vmatprep.subr.mxu0 0.0
      %5055 = vmatpush1.msra.mxu0 0.0
      %5056 = vmatprep.subr.mxu0 0.0
      %5057 = vmatpush1.msra.mxu0 0.0
      %5058 = vmatprep.subr.mxu0 0.0
      %5059 = vmatpush1.msra.mxu0 0.0
      %5060 = vmatprep.subr.mxu0 0.0
      %5061 = vmatpush1.msra.mxu0 0.0
      %5062 = vmatprep.subr.mxu0 0.0
      %5063 = vmatpush1.msra.mxu0 0.0
      %5064 = vmatprep.subr.mxu0 0.0
      %5065 = vmatpush1.msra.mxu0 0.0
      %5066 = vmatprep.subr.mxu0 0.0
      %5067 = vmatpush1.msra.mxu0 0.0
      %5068 = vmatprep.subr.mxu0 0.0
      %5069 = vmatpush1.msra.mxu0 0.0
      %5070 = vmatprep.subr.mxu0 0.0
      %5071 = vmatpush1.msra.mxu0 0.0
      %5072 = vmatprep.subr.mxu0 0.0
      %5073 = vmatpush1.msra.mxu0 0.0
      %5074 = vmatprep.subr.mxu0 0.0
      %5075 = vmatpush1.msra.mxu0 0.0
      %5076 = vmatprep.subr.mxu0 0.0
      %5077 = vmatpush1.msra.mxu0 0.0
      %5078 = vmatprep.subr.mxu0 0.0
      %5079 = vmatpush1.msra.mxu0 0.0
      %5080 = vmatprep.subr.mxu0 0.0
      %5081 = vmatpush1.msra.mxu0 0.0
      %5082 = vmatprep.subr.mxu0 %v5050
      %5083 = vmatpush1.msra.mxu0 %v5047
      %5084 = vmatprep.subr.mxu0 0.0
      %5085 = vmatpush2.msra.mxu0 0.0
      %5086 = vmatprep.subr.mxu0 0.0
      %5087 = vmatpush2.msra.mxu0 0.0
      %5088 = vmatprep.subr.mxu0 0.0
      %5089 = vmatpush2.msra.mxu0 0.0
      %5090 = vmatprep.subr.mxu0 0.0
      %5091 = vmatpush2.msra.mxu0 0.0
      %5092 = vmatprep.subr.mxu0 0.0
      %5093 = vmatpush2.msra.mxu0 0.0
      %5094 = vmatprep.subr.mxu0 0.0
      %5095 = vmatpush2.msra.mxu0 0.0
      %5096 = vmatprep.subr.mxu0 0.0
      %5097 = vmatpush2.msra.mxu0 0.0
      %5098 = vmatprep.subr.mxu0 0.0
      %5099 = vmatpush2.msra.mxu0 0.0
      %5100 = vmatprep.subr.mxu0 0.0
      %5101 = vmatpush2.msra.mxu0 0.0
      %5102 = vmatprep.subr.mxu0 0.0
      %5103 = vmatpush2.msra.mxu0 0.0
      %5104 = vmatprep.subr.mxu0 0.0
      %5105 = vmatpush2.msra.mxu0 0.0
      %5106 = vmatprep.subr.mxu0 0.0
      %5107 = vmatpush2.msra.mxu0 0.0
      %5108 = vmatprep.subr.mxu0 0.0
      %5109 = vmatpush2.msra.mxu0 0.0
      %5110 = vmatprep.subr.mxu0 0.0
      %5111 = vmatpush2.msra.mxu0 0.0
      %5112 = vmatprep.subr.mxu0 0.0
      %5113 = vmatpush2.msra.mxu0 0.0
      %5114 = vmatprep.subr.mxu0 0.0
      %5115 = vmatpush2.msra.mxu0 0.0
      %5116 = vmatprep.mubr.f32.mxu0 0.0
      %5117 = vmatmul.mubr.f32.gmra.mxu0 %v5022
      %v5118 = vpop.f32.mrf.mxu0
      %v5119 = vadd.f32 0.0, %v5118
      %v5120 = vpop.f32.mrf.mxu0
      %v5121 = vadd.f32 0.0, %v5120
      %5122 = vmatprep.mubr.f32.mxu0 0.0
      %5123 = vmatmul.mubr.f32.gmra.mxu0 %v5025
      %v5124 = vpop.f32.mrf.mxu0
      %v5125 = vadd.f32 0.0, %v5124
      %v5126 = vpop.f32.mrf.mxu0
      %v5127 = vadd.f32 0.0, %v5126
      %5128 = vmatprep.mubr.f32.mxu0 0.0
      %5129 = vmatmul.mubr.f32.gmra.mxu0 %v5028
      %v5130 = vpop.f32.mrf.mxu0
      %v5131 = vadd.f32 0.0, %v5130
      %v5132 = vpop.f32.mrf.mxu0
      %v5133 = vadd.f32 0.0, %v5132
      %5134 = vmatprep.mubr.f32.mxu0 0.0
      %5135 = vmatmul.mubr.f32.gmra.mxu0 %v5031
      %v5136 = vpop.f32.mrf.mxu0
      %v5137 = vadd.f32 0.0, %v5136
      %v5138 = vpop.f32.mrf.mxu0
      %v5139 = vadd.f32 0.0, %v5138
      %5140 = vmatprep.mubr.f32.mxu0 0.0
      %5141 = vmatmul.mubr.f32.gmra.mxu0 %v5034
      %v5142 = vpop.f32.mrf.mxu0
      %v5143 = vadd.f32 0.0, %v5142
      %v5144 = vpop.f32.mrf.mxu0
      %v5145 = vadd.f32 0.0, %v5144
      %5146 = vmatprep.mubr.f32.mxu0 0.0
      %5147 = vmatmul.mubr.f32.gmra.mxu0 %v5037
      %v5148 = vpop.f32.mrf.mxu0
      %v5149 = vadd.f32 0.0, %v5148
      %v5150 = vpop.f32.mrf.mxu0
      %v5151 = vadd.f32 0.0, %v5150
      %5152 = vmatprep.mubr.f32.mxu0 0.0
      %5153 = vmatmul.mubr.f32.gmra.mxu0 %v5040
      %v5154 = vpop.f32.mrf.mxu0
      %v5155 = vadd.f32 0.0, %v5154
      %v5156 = vpop.f32.mrf.mxu0
      %v5157 = vadd.f32 0.0, %v5156
      %5158 = vmatprep.mubr.f32.mxu0 0.0
      %5159 = vmatmul.mubr.f32.gmra.mxu0 %v5043
      %v5160 = vpop.f32.mrf.mxu0
      %v5161 = vadd.f32 0.0, %v5160
      %v5162 = vpop.f32.mrf.mxu0
      %v5163 = vadd.f32 0.0, %v5162
      %5164 = vdwg.mxu0
      %v5166 = vsel %vm4945, %v4932, 0
      %5168 = vmatprep.subr.mxu0 0.0
      %5169 = vmatpush1.msra.mxu0 0.0
      %5170 = vmatprep.subr.mxu0 0.0
      %5171 = vmatpush1.msra.mxu0 0.0
      %5172 = vmatprep.subr.mxu0 0.0
      %5173 = vmatpush1.msra.mxu0 0.0
      %5174 = vmatprep.subr.mxu0 0.0
      %5175 = vmatpush1.msra.mxu0 0.0
      %5176 = vmatprep.subr.mxu0 0.0
      %5177 = vmatpush1.msra.mxu0 0.0
      %5178 = vmatprep.subr.mxu0 0.0
      %5179 = vmatpush1.msra.mxu0 0.0
      %5180 = vmatprep.subr.mxu0 0.0
      %5181 = vmatpush1.msra.mxu0 0.0
      %5182 = vmatprep.subr.mxu0 0.0
      %5183 = vmatpush1.msra.mxu0 0.0
      %5184 = vmatprep.subr.mxu0 0.0
      %5185 = vmatpush1.msra.mxu0 0.0
      %5186 = vmatprep.subr.mxu0 0.0
      %5187 = vmatpush1.msra.mxu0 0.0
      %5188 = vmatprep.subr.mxu0 0.0
      %5189 = vmatpush1.msra.mxu0 0.0
      %5190 = vmatprep.subr.mxu0 0.0
      %5191 = vmatpush1.msra.mxu0 0.0
      %5192 = vmatprep.subr.mxu0 0.0
      %5193 = vmatpush1.msra.mxu0 0.0
      %5194 = vmatprep.subr.mxu0 0.0
      %5195 = vmatpush1.msra.mxu0 0.0
      %5196 = vmatprep.subr.mxu0 %v4936
      %5197 = vmatpush1.msra.mxu0 %v4935
      %5198 = vmatprep.subr.mxu0 %v4934
      %5199 = vmatpush1.msra.mxu0 %v4933
      %5200 = vmatprep.subr.mxu0 0.0
      %5201 = vmatpush2.msra.mxu0 0.0
      %5202 = vmatprep.subr.mxu0 0.0
      %5203 = vmatpush2.msra.mxu0 0.0
      %5204 = vmatprep.subr.mxu0 0.0
      %5205 = vmatpush2.msra.mxu0 0.0
      %5206 = vmatprep.subr.mxu0 0.0
      %5207 = vmatpush2.msra.mxu0 0.0
      %5208 = vmatprep.subr.mxu0 0.0
      %5209 = vmatpush2.msra.mxu0 0.0
      %5210 = vmatprep.subr.mxu0 0.0
      %5211 = vmatpush2.msra.mxu0 0.0
      %5212 = vmatprep.subr.mxu0 0.0
      %5213 = vmatpush2.msra.mxu0 0.0
      %5214 = vmatprep.subr.mxu0 0.0
      %5215 = vmatpush2.msra.mxu0 0.0
      %5216 = vmatprep.subr.mxu0 0.0
      %5217 = vmatpush2.msra.mxu0 0.0
      %5218 = vmatprep.subr.mxu0 0.0
      %5219 = vmatpush2.msra.mxu0 0.0
      %5220 = vmatprep.subr.mxu0 0.0
      %5221 = vmatpush2.msra.mxu0 0.0
      %5222 = vmatprep.subr.mxu0 0.0
      %5223 = vmatpush2.msra.mxu0 0.0
      %5224 = vmatprep.subr.mxu0 0.0
      %5225 = vmatpush2.msra.mxu0 0.0
      %5226 = vmatprep.subr.mxu0 0.0
      %5227 = vmatpush2.msra.mxu0 0.0
      %5228 = vmatprep.subr.mxu0 0.0
      %5229 = vmatpush2.msra.mxu0 0.0
      %5230 = vmatprep.subr.mxu0 0.0
      %5231 = vmatpush2.msra.mxu0 0.0
      %5232 = vmatprep.mubr.f32.mxu0 0.0
      %5233 = vmatmul.mubr.f32.gmra.mxu0 %v5166
      %v5234 = vpop.f32.mrf.mxu0
      %v5235 = vadd.f32 0.0, %v5234
      %v5236 = vpop.f32.mrf.mxu0
      %v5237 = vadd.f32 0.0, %v5236
      %5238 = vdwg.mxu0
      %v5240 = vsel %vm5045, %v5235, 0
      %v5243 = vsel %vm5045, %v5237, 0
      %5245 = vmatprep.subr.mxu0 0.0
      %5246 = vmatpush1.msra.mxu0 0.0
      %5247 = vmatprep.subr.mxu0 0.0
      %5248 = vmatpush1.msra.mxu0 0.0
      %5249 = vmatprep.subr.mxu0 0.0
      %5250 = vmatpush1.msra.mxu0 0.0
      %5251 = vmatprep.subr.mxu0 0.0
      %5252 = vmatpush1.msra.mxu0 0.0
      %5253 = vmatprep.subr.mxu0 0.0
      %5254 = vmatpush1.msra.mxu0 0.0
      %5255 = vmatprep.subr.mxu0 0.0
      %5256 = vmatpush1.msra.mxu0 0.0
      %5257 = vmatprep.subr.mxu0 0.0
      %5258 = vmatpush1.msra.mxu0 0.0
      %5259 = vmatprep.subr.mxu0 0.0
      %5260 = vmatpush1.msra.mxu0 0.0
      %5261 = vmatprep.subr.mxu0 0.0
      %5262 = vmatpush1.msra.mxu0 0.0
      %5263 = vmatprep.subr.mxu0 0.0
      %5264 = vmatpush1.msra.mxu0 0.0
      %5265 = vmatprep.subr.mxu0 0.0
      %5266 = vmatpush1.msra.mxu0 0.0
      %5267 = vmatprep.subr.mxu0 0.0
      %5268 = vmatpush1.msra.mxu0 0.0
      %5269 = vmatprep.subr.mxu0 0.0
      %5270 = vmatpush1.msra.mxu0 0.0
      %5271 = vmatprep.subr.mxu0 0.0
      %5272 = vmatpush1.msra.mxu0 0.0
      %5273 = vmatprep.subr.mxu0 0.0
      %5274 = vmatpush1.msra.mxu0 0.0
      %5275 = vmatprep.subr.mxu0 %v5243
      %5276 = vmatpush1.msra.mxu0 %v5240
      %5277 = vmatprep.subr.mxu0 0.0
      %5278 = vmatpush2.msra.mxu0 0.0
      %5279 = vmatprep.subr.mxu0 0.0
      %5280 = vmatpush2.msra.mxu0 0.0
      %5281 = vmatprep.subr.mxu0 0.0
      %5282 = vmatpush2.msra.mxu0 0.0
      %5283 = vmatprep.subr.mxu0 0.0
      %5284 = vmatpush2.msra.mxu0 0.0
      %5285 = vmatprep.subr.mxu0 0.0
      %5286 = vmatpush2.msra.mxu0 0.0
      %5287 = vmatprep.subr.mxu0 0.0
      %5288 = vmatpush2.msra.mxu0 0.0
      %5289 = vmatprep.subr.mxu0 0.0
      %5290 = vmatpush2.msra.mxu0 0.0
      %5291 = vmatprep.subr.mxu0 0.0
      %5292 = vmatpush2.msra.mxu0 0.0
      %5293 = vmatprep.subr.mxu0 0.0
      %5294 = vmatpush2.msra.mxu0 0.0
      %5295 = vmatprep.subr.mxu0 0.0
      %5296 = vmatpush2.msra.mxu0 0.0
      %5297 = vmatprep.subr.mxu0 0.0
      %5298 = vmatpush2.msra.mxu0 0.0
      %5299 = vmatprep.subr.mxu0 0.0
      %5300 = vmatpush2.msra.mxu0 0.0
      %5301 = vmatprep.subr.mxu0 0.0
      %5302 = vmatpush2.msra.mxu0 0.0
      %5303 = vmatprep.subr.mxu0 0.0
      %5304 = vmatpush2.msra.mxu0 0.0
      %5305 = vmatprep.subr.mxu0 0.0
      %5306 = vmatpush2.msra.mxu0 0.0
      %5307 = vmatprep.subr.mxu0 0.0
      %5308 = vmatpush2.msra.mxu0 0.0
      %5309 = vmatprep.mubr.f32.mxu0 0.0
      %5310 = vmatmul.mubr.f32.gmra.mxu0 %v5022
      %v5311 = vpop.f32.mrf.mxu0
      %v5312 = vadd.f32 0.0, %v5311
      %v5313 = vpop.f32.mrf.mxu0
      %v5314 = vadd.f32 0.0, %v5313
      %5315 = vmatprep.mubr.f32.mxu0 0.0
      %5316 = vmatmul.mubr.f32.gmra.mxu0 %v5025
      %v5317 = vpop.f32.mrf.mxu0
      %v5318 = vadd.f32 0.0, %v5317
      %v5319 = vpop.f32.mrf.mxu0
      %v5320 = vadd.f32 0.0, %v5319
      %5321 = vmatprep.mubr.f32.mxu0 0.0
      %5322 = vmatmul.mubr.f32.gmra.mxu0 %v5028
      %v5323 = vpop.f32.mrf.mxu0
      %v5324 = vadd.f32 0.0, %v5323
      %v5325 = vpop.f32.mrf.mxu0
      %v5326 = vadd.f32 0.0, %v5325
      %5327 = vmatprep.mubr.f32.mxu0 0.0
      %5328 = vmatmul.mubr.f32.gmra.mxu0 %v5031
      %v5329 = vpop.f32.mrf.mxu0
      %v5330 = vadd.f32 0.0, %v5329
      %v5331 = vpop.f32.mrf.mxu0
      %v5332 = vadd.f32 0.0, %v5331
      %5333 = vmatprep.mubr.f32.mxu0 0.0
      %5334 = vmatmul.mubr.f32.gmra.mxu0 %v5034
      %v5335 = vpop.f32.mrf.mxu0
      %v5336 = vadd.f32 0.0, %v5335
      %v5337 = vpop.f32.mrf.mxu0
      %v5338 = vadd.f32 0.0, %v5337
      %5339 = vmatprep.mubr.f32.mxu0 0.0
      %5340 = vmatmul.mubr.f32.gmra.mxu0 %v5037
      %v5341 = vpop.f32.mrf.mxu0
      %v5342 = vadd.f32 0.0, %v5341
      %v5343 = vpop.f32.mrf.mxu0
      %v5344 = vadd.f32 0.0, %v5343
      %5345 = vmatprep.mubr.f32.mxu0 0.0
      %5346 = vmatmul.mubr.f32.gmra.mxu0 %v5040
      %v5347 = vpop.f32.mrf.mxu0
      %v5348 = vadd.f32 0.0, %v5347
      %v5349 = vpop.f32.mrf.mxu0
      %v5350 = vadd.f32 0.0, %v5349
      %5351 = vmatprep.mubr.f32.mxu0 0.0
      %5352 = vmatmul.mubr.f32.gmra.mxu0 %v5043
      %v5353 = vpop.f32.mrf.mxu0
      %v5354 = vadd.f32 0.0, %v5353
      %v5355 = vpop.f32.mrf.mxu0
      %v5356 = vadd.f32 0.0, %v5355
      %5357 = vdwg.mxu0
      %v5358 = vmul.f32 %v4483, %v5119
      %v5359 = vmul.f32 %v4485, %v5121
      %v5360 = vmul.f32 %v4487, %v5125
      %v5361 = vmul.f32 %v4489, %v5127
      %v5362 = vmul.f32 %v4493, %v5131
      %v5363 = vmul.f32 %v4495, %v5133
      %v5364 = vmul.f32 %v4497, %v5137
      %v5365 = vmul.f32 %v4499, %v5139
      %v5366 = vmul.f32 %v4503, %v5143
      %v5367 = vmul.f32 %v4505, %v5145
      %v5368 = vmul.f32 %v4507, %v5149
      %v5369 = vmul.f32 %v4509, %v5151
      %v5370 = vmul.f32 %v4513, %v5155
      %v5371 = vmul.f32 %v4515, %v5157
      %v5372 = vmul.f32 %v4517, %v5161
      %v5373 = vmul.f32 %v4519, %v5163
      %v5374 = vadd.f32 %v5358, %v5312
      %v5375 = vadd.f32 %v5359, %v5314
      %v5376 = vadd.f32 %v5360, %v5318
      %v5377 = vadd.f32 %v5361, %v5320
      %v5378 = vadd.f32 %v5362, %v5324
      %v5379 = vadd.f32 %v5363, %v5326
      %v5380 = vadd.f32 %v5364, %v5330
      %v5381 = vadd.f32 %v5365, %v5332
      %v5382 = vadd.f32 %v5366, %v5336
      %v5383 = vadd.f32 %v5367, %v5338
      %v5384 = vadd.f32 %v5368, %v5342
      %v5385 = vadd.f32 %v5369, %v5344
      %v5386 = vadd.f32 %v5370, %v5348
      %v5387 = vadd.f32 %v5371, %v5350
      %v5388 = vadd.f32 %v5372, %v5354
      %v5389 = vadd.f32 %v5373, %v5356
      %vm5390 = vcmp.gt.f32.partialorder %v5374, 0.0
      %vm5391 = vcmp.gt.f32.partialorder %v5375, 0.0
      %vm5392 = vcmp.gt.f32.partialorder %v5376, 0.0
      %vm5393 = vcmp.gt.f32.partialorder %v5377, 0.0
      %vm5394 = vcmp.gt.f32.partialorder %v5378, 0.0
      %vm5395 = vcmp.gt.f32.partialorder %v5379, 0.0
      %vm5396 = vcmp.gt.f32.partialorder %v5380, 0.0
      %vm5397 = vcmp.gt.f32.partialorder %v5381, 0.0
      %vm5398 = vcmp.gt.f32.partialorder %v5382, 0.0
      %vm5399 = vcmp.gt.f32.partialorder %v5383, 0.0
      %vm5400 = vcmp.gt.f32.partialorder %v5384, 0.0
      %vm5401 = vcmp.gt.f32.partialorder %v5385, 0.0
      %vm5402 = vcmp.gt.f32.partialorder %v5386, 0.0
      %vm5403 = vcmp.gt.f32.partialorder %v5387, 0.0
      %vm5404 = vcmp.gt.f32.partialorder %v5388, 0.0
      %vm5405 = vcmp.gt.f32.partialorder %v5389, 0.0
      %v5406 = vmul.f32 %v5374, 0.2
      %v5407 = vmul.f32 %v5375, 0.2
      %v5408 = vmul.f32 %v5376, 0.2
      %v5409 = vmul.f32 %v5377, 0.2
      %v5410 = vmul.f32 %v5378, 0.2
      %v5411 = vmul.f32 %v5379, 0.2
      %v5412 = vmul.f32 %v5380, 0.2
      %v5413 = vmul.f32 %v5381, 0.2
      %v5414 = vmul.f32 %v5382, 0.2
      %v5415 = vmul.f32 %v5383, 0.2
      %v5416 = vmul.f32 %v5384, 0.2
      %v5417 = vmul.f32 %v5385, 0.2
      %v5418 = vmul.f32 %v5386, 0.2
      %v5419 = vmul.f32 %v5387, 0.2
      %v5420 = vmul.f32 %v5388, 0.2
      %v5421 = vmul.f32 %v5389, 0.2
      %v5422 = vsel %vm5390, %v5374, %v5406
      %v5423 = vsel %vm5391, %v5375, %v5407
      %v5424 = vsel %vm5392, %v5376, %v5408
      %v5425 = vsel %vm5393, %v5377, %v5409
      %v5426 = vsel %vm5394, %v5378, %v5410
      %v5427 = vsel %vm5395, %v5379, %v5411
      %v5428 = vsel %vm5396, %v5380, %v5412
      %v5429 = vsel %vm5397, %v5381, %v5413
      %v5430 = vsel %vm5398, %v5382, %v5414
      %v5431 = vsel %vm5399, %v5383, %v5415
      %v5432 = vsel %vm5400, %v5384, %v5416
      %v5433 = vsel %vm5401, %v5385, %v5417
      %v5434 = vsel %vm5402, %v5386, %v5418
      %v5435 = vsel %vm5403, %v5387, %v5419
      %v5436 = vsel %vm5404, %v5388, %v5420
      %v5437 = vsel %vm5405, %v5389, %v5421
      %v5438 = vpack.c.bf16 %v5424, %v5422
      %v5439 = vpack.c.bf16 %v5425, %v5423
      %v5440 = vpack.c.bf16 %v5428, %v5426
      %v5441 = vpack.c.bf16 %v5429, %v5427
      %v5442 = vpack.c.bf16 %v5432, %v5430
      %v5443 = vpack.c.bf16 %v5433, %v5431
      %v5444 = vpack.c.bf16 %v5436, %v5434
      %v5445 = vpack.c.bf16 %v5437, %v5435
      %v5446 = vld [vmem:[%s10] sm:$0xf]
      %v5447 = vld [vmem:[%s10 + $0x4] sm:$0xf]
      %v5448 = vld [vmem:[%s10 + $0x8] sm:$0xf]
      %v5449 = vld [vmem:[%s10 + $0xc] sm:$0xf]
      %v5450 = vld [vmem:[%s10 + $0x10] sm:$0xf]
      %v5451 = vld [vmem:[%s10 + $0x14] sm:$0xf]
      %v5452 = vld [vmem:[%s10 + $0x18] sm:$0xf]
      %v5453 = vld [vmem:[%s10 + $0x1c] sm:$0xf]
      %v5454 = vld [vmem:[%s10 + $0x20] sm:$0xf]
      %v5455 = vld [vmem:[%s10 + $0x24] sm:$0xf]
      %v5456 = vld [vmem:[%s10 + $0x28] sm:$0xf]
      %v5457 = vld [vmem:[%s10 + $0x2c] sm:$0xf]
      %v5458 = vld [vmem:[%s10 + $0x30] sm:$0xf]
      %v5459 = vld [vmem:[%s10 + $0x34] sm:$0xf]
      %v5460 = vld [vmem:[%s10 + $0x38] sm:$0xf]
      %v5461 = vld [vmem:[%s10 + $0x3c] sm:$0xf]
      %v5478 = vunpack.c.l.b16 %v5446
      %v5479 = vunpack.c.l.b16 %v5447
      %v5480 = vunpack.c.l.b16 %v5448
      %v5481 = vunpack.c.l.b16 %v5449
      %v5482 = vunpack.c.l.b16 %v5450
      %v5483 = vunpack.c.l.b16 %v5451
      %v5484 = vunpack.c.l.b16 %v5452
      %v5485 = vunpack.c.l.b16 %v5453
      %v5486 = vunpack.c.l.b16 %v5454
      %v5487 = vunpack.c.l.b16 %v5455
      %v5488 = vunpack.c.l.b16 %v5456
      %v5489 = vunpack.c.l.b16 %v5457
      %v5490 = vunpack.c.l.b16 %v5458
      %v5491 = vunpack.c.l.b16 %v5459
      %v5492 = vunpack.c.l.b16 %v5460
      %v5493 = vunpack.c.l.b16 %v5461
      %v5494 = vpack.c.b16 %v5479, %v5478
      %v5495 = vpack.c.b16 %v5481, %v5480
      %v5496 = vpack.c.b16 %v5483, %v5482
      %v5497 = vpack.c.b16 %v5485, %v5484
      %v5498 = vpack.c.b16 %v5487, %v5486
      %v5499 = vpack.c.b16 %v5489, %v5488
      %v5500 = vpack.c.b16 %v5491, %v5490
      %v5501 = vpack.c.b16 %v5493, %v5492
      %v5503 = vsel %vm4780, %v5494, 0
      %v5506 = vsel %vm4780, %v5495, 0
      %v5509 = vsel %vm4780, %v5496, 0
      %v5512 = vsel %vm4780, %v5497, 0
      %v5515 = vsel %vm4780, %v5498, 0
      %v5518 = vsel %vm4780, %v5499, 0
      %v5521 = vsel %vm4780, %v5500, 0
      %v5524 = vsel %vm4780, %v5501, 0
      %5526 = vmatprep.subr.bf16.mxu0 0
      %5527 = vmatpush1.bf16.msra.mxu0 0
      %5528 = vmatprep.subr.bf16.mxu0 0
      %5529 = vmatpush1.bf16.msra.mxu0 0
      %5530 = vmatprep.subr.bf16.mxu0 0
      %5531 = vmatpush1.bf16.msra.mxu0 0
      %5532 = vmatprep.subr.bf16.mxu0 0
      %5533 = vmatpush1.bf16.msra.mxu0 0
      %5534 = vmatprep.subr.bf16.mxu0 %v5445
      %5535 = vmatpush1.bf16.msra.mxu0 %v5444
      %5536 = vmatprep.subr.bf16.mxu0 %v5443
      %5537 = vmatpush1.bf16.msra.mxu0 %v5442
      %5538 = vmatprep.subr.bf16.mxu0 %v5441
      %5539 = vmatpush1.bf16.msra.mxu0 %v5440
      %5540 = vmatprep.subr.bf16.mxu0 %v5439
      %5541 = vmatpush1.bf16.msra.mxu0 %v5438
      %5542 = vmatprep.subr.bf16.mxu0 0
      %5543 = vmatpush2.bf16.msra.mxu0 0
      %5544 = vmatprep.subr.bf16.mxu0 0
      %5545 = vmatpush2.bf16.msra.mxu0 0
      %5546 = vmatprep.subr.bf16.mxu0 0
      %5547 = vmatpush2.bf16.msra.mxu0 0
      %5548 = vmatprep.subr.bf16.mxu0 0
      %5549 = vmatpush2.bf16.msra.mxu0 0
      %5550 = vmatprep.subr.bf16.mxu0 0
      %5551 = vmatpush2.bf16.msra.mxu0 0
      %5552 = vmatprep.subr.bf16.mxu0 0
      %5553 = vmatpush2.bf16.msra.mxu0 0
      %5554 = vmatprep.subr.bf16.mxu0 0
      %5555 = vmatpush2.bf16.msra.mxu0 0
      %5556 = vmatprep.subr.bf16.mxu0 0
      %5557 = vmatpush2.bf16.msra.mxu0 0
      %5558 = vmatprep.mubr.bf16.mxu0 0
      %5559 = vmatmul.mubr.bf16.gmra.mxu0 %v5503
      %v5560 = vpop.f32.mrf.mxu0
      %v5561 = vadd.f32 0.0, %v5560
      %v5562 = vpop.f32.mrf.mxu0
      %v5563 = vadd.f32 0.0, %v5562
      %v5564 = vpop.f32.mrf.mxu0
      %v5565 = vadd.f32 0.0, %v5564
      %v5566 = vpop.f32.mrf.mxu0
      %v5567 = vadd.f32 0.0, %v5566
      %5568 = vmatprep.mubr.bf16.mxu0 0
      %5569 = vmatmul.mubr.bf16.gmra.mxu0 %v5506
      %v5570 = vpop.f32.mrf.mxu0
      %v5571 = vadd.f32 0.0, %v5570
      %v5572 = vpop.f32.mrf.mxu0
      %v5573 = vadd.f32 0.0, %v5572
      %v5574 = vpop.f32.mrf.mxu0
      %v5575 = vadd.f32 0.0, %v5574
      %v5576 = vpop.f32.mrf.mxu0
      %v5577 = vadd.f32 0.0, %v5576
      %5578 = vmatprep.mubr.bf16.mxu0 0
      %5579 = vmatmul.mubr.bf16.gmra.mxu0 %v5509
      %v5580 = vpop.f32.mrf.mxu0
      %v5581 = vadd.f32 0.0, %v5580
      %v5582 = vpop.f32.mrf.mxu0
      %v5583 = vadd.f32 0.0, %v5582
      %v5584 = vpop.f32.mrf.mxu0
      %v5585 = vadd.f32 0.0, %v5584
      %v5586 = vpop.f32.mrf.mxu0
      %v5587 = vadd.f32 0.0, %v5586
      %5588 = vmatprep.mubr.bf16.mxu0 0
      %5589 = vmatmul.mubr.bf16.gmra.mxu0 %v5512
      %v5590 = vpop.f32.mrf.mxu0
      %v5591 = vadd.f32 0.0, %v5590
      %v5592 = vpop.f32.mrf.mxu0
      %v5593 = vadd.f32 0.0, %v5592
      %v5594 = vpop.f32.mrf.mxu0
      %v5595 = vadd.f32 0.0, %v5594
      %v5596 = vpop.f32.mrf.mxu0
      %v5597 = vadd.f32 0.0, %v5596
      %5598 = vmatprep.mubr.bf16.mxu0 0
      %5599 = vmatmul.mubr.bf16.gmra.mxu0 %v5515
      %v5600 = vpop.f32.mrf.mxu0
      %v5601 = vadd.f32 0.0, %v5600
      %v5602 = vpop.f32.mrf.mxu0
      %v5603 = vadd.f32 0.0, %v5602
      %v5604 = vpop.f32.mrf.mxu0
      %v5605 = vadd.f32 0.0, %v5604
      %v5606 = vpop.f32.mrf.mxu0
      %v5607 = vadd.f32 0.0, %v5606
      %5608 = vmatprep.mubr.bf16.mxu0 0
      %5609 = vmatmul.mubr.bf16.gmra.mxu0 %v5518
      %v5610 = vpop.f32.mrf.mxu0
      %v5611 = vadd.f32 0.0, %v5610
      %v5612 = vpop.f32.mrf.mxu0
      %v5613 = vadd.f32 0.0, %v5612
      %v5614 = vpop.f32.mrf.mxu0
      %v5615 = vadd.f32 0.0, %v5614
      %v5616 = vpop.f32.mrf.mxu0
      %v5617 = vadd.f32 0.0, %v5616
      %5618 = vmatprep.mubr.bf16.mxu0 0
      %5619 = vmatmul.mubr.bf16.gmra.mxu0 %v5521
      %v5620 = vpop.f32.mrf.mxu0
      %v5621 = vadd.f32 0.0, %v5620
      %v5622 = vpop.f32.mrf.mxu0
      %v5623 = vadd.f32 0.0, %v5622
      %v5624 = vpop.f32.mrf.mxu0
      %v5625 = vadd.f32 0.0, %v5624
      %v5626 = vpop.f32.mrf.mxu0
      %v5627 = vadd.f32 0.0, %v5626
      %5628 = vmatprep.mubr.bf16.mxu0 0
      %5629 = vmatmul.mubr.bf16.gmra.mxu0 %v5524
      %v5630 = vpop.f32.mrf.mxu0
      %v5631 = vadd.f32 0.0, %v5630
      %v5632 = vpop.f32.mrf.mxu0
      %v5633 = vadd.f32 0.0, %v5632
      %v5634 = vpop.f32.mrf.mxu0
      %v5635 = vadd.f32 0.0, %v5634
      %v5636 = vpop.f32.mrf.mxu0
      %v5637 = vadd.f32 0.0, %v5636
      %5638 = vdwg.mxu0
      %v5639 = vpack.c.bf16 %v5565, %v5561
      %v5640 = vpack.c.bf16 %v5567, %v5563
      %v5641 = vpack.c.bf16 %v5575, %v5571
      %v5642 = vpack.c.bf16 %v5577, %v5573
      %v5643 = vpack.c.bf16 %v5585, %v5581
      %v5644 = vpack.c.bf16 %v5587, %v5583
      %v5645 = vpack.c.bf16 %v5595, %v5591
      %v5646 = vpack.c.bf16 %v5597, %v5593
      %v5647 = vpack.c.bf16 %v5605, %v5601
      %v5648 = vpack.c.bf16 %v5607, %v5603
      %v5649 = vpack.c.bf16 %v5615, %v5611
      %v5650 = vpack.c.bf16 %v5617, %v5613
      %v5651 = vpack.c.bf16 %v5625, %v5621
      %v5652 = vpack.c.bf16 %v5627, %v5623
      %v5653 = vpack.c.bf16 %v5635, %v5631
      %v5654 = vpack.c.bf16 %v5637, %v5633
      %v5655 = vld [vmem:[%s11] sm:$0xff]
      %v5656 = vld [vmem:[%s11 + $0x8] sm:$0xff]
      %v5657 = vld [vmem:[%s11 + $0x10] sm:$0xff]
      %v5658 = vld [vmem:[%s11 + $0x18] sm:$0xff]
      %v5659 = vld [vmem:[%s11 + $0x20] sm:$0xff]
      %v5660 = vld [vmem:[%s11 + $0x28] sm:$0xff]
      %v5661 = vld [vmem:[%s11 + $0x30] sm:$0xff]
      %v5662 = vld [vmem:[%s11 + $0x38] sm:$0xff]
      %v5663 = vld [vmem:[%s11 + $0x40] sm:$0xff]
      %v5664 = vld [vmem:[%s11 + $0x48] sm:$0xff]
      %v5665 = vld [vmem:[%s11 + $0x50] sm:$0xff]
      %v5666 = vld [vmem:[%s11 + $0x58] sm:$0xff]
      %v5667 = vld [vmem:[%s11 + $0x60] sm:$0xff]
      %v5668 = vld [vmem:[%s11 + $0x68] sm:$0xff]
      %v5669 = vld [vmem:[%s11 + $0x70] sm:$0xff]
      %v5670 = vld [vmem:[%s11 + $0x78] sm:$0xff]
      %v5671 = vld [vmem:[%s11 + $0x80] sm:$0xff]
      %v5672 = vld [vmem:[%s11 + $0x88] sm:$0xff]
      %v5673 = vld [vmem:[%s11 + $0x90] sm:$0xff]
      %v5674 = vld [vmem:[%s11 + $0x98] sm:$0xff]
      %v5675 = vld [vmem:[%s11 + $0xa0] sm:$0xff]
      %v5676 = vld [vmem:[%s11 + $0xa8] sm:$0xff]
      %v5677 = vld [vmem:[%s11 + $0xb0] sm:$0xff]
      %v5678 = vld [vmem:[%s11 + $0xb8] sm:$0xff]
      %v5679 = vld [vmem:[%s11 + $0xc0] sm:$0xff]
      %v5680 = vld [vmem:[%s11 + $0xc8] sm:$0xff]
      %v5681 = vld [vmem:[%s11 + $0xd0] sm:$0xff]
      %v5682 = vld [vmem:[%s11 + $0xd8] sm:$0xff]
      %v5683 = vld [vmem:[%s11 + $0xe0] sm:$0xff]
      %v5684 = vld [vmem:[%s11 + $0xe8] sm:$0xff]
      %v5685 = vld [vmem:[%s11 + $0xf0] sm:$0xff]
      %v5686 = vld [vmem:[%s11 + $0xf8] sm:$0xff]
      %v5687 = vld [vmem:[%s11 + $0x100] sm:$0xff]
      %v5688 = vld [vmem:[%s11 + $0x108] sm:$0xff]
      %v5689 = vld [vmem:[%s11 + $0x110] sm:$0xff]
      %v5690 = vld [vmem:[%s11 + $0x118] sm:$0xff]
      %v5691 = vld [vmem:[%s11 + $0x120] sm:$0xff]
      %v5692 = vld [vmem:[%s11 + $0x128] sm:$0xff]
      %v5693 = vld [vmem:[%s11 + $0x130] sm:$0xff]
      %v5694 = vld [vmem:[%s11 + $0x138] sm:$0xff]
      %v5695 = vld [vmem:[%s11 + $0x140] sm:$0xff]
      %v5696 = vld [vmem:[%s11 + $0x148] sm:$0xff]
      %v5697 = vld [vmem:[%s11 + $0x150] sm:$0xff]
      %v5698 = vld [vmem:[%s11 + $0x158] sm:$0xff]
      %v5699 = vld [vmem:[%s11 + $0x160] sm:$0xff]
      %v5700 = vld [vmem:[%s11 + $0x168] sm:$0xff]
      %v5701 = vld [vmem:[%s11 + $0x170] sm:$0xff]
      %v5702 = vld [vmem:[%s11 + $0x178] sm:$0xff]
      %v5703 = vld [vmem:[%s11 + $0x180] sm:$0xff]
      %v5704 = vld [vmem:[%s11 + $0x188] sm:$0xff]
      %v5705 = vld [vmem:[%s11 + $0x190] sm:$0xff]
      %v5706 = vld [vmem:[%s11 + $0x198] sm:$0xff]
      %v5707 = vld [vmem:[%s11 + $0x1a0] sm:$0xff]
      %v5708 = vld [vmem:[%s11 + $0x1a8] sm:$0xff]
      %v5709 = vld [vmem:[%s11 + $0x1b0] sm:$0xff]
      %v5710 = vld [vmem:[%s11 + $0x1b8] sm:$0xff]
      %v5711 = vld [vmem:[%s11 + $0x1c0] sm:$0xff]
      %v5712 = vld [vmem:[%s11 + $0x1c8] sm:$0xff]
      %v5713 = vld [vmem:[%s11 + $0x1d0] sm:$0xff]
      %v5714 = vld [vmem:[%s11 + $0x1d8] sm:$0xff]
      %v5715 = vld [vmem:[%s11 + $0x1e0] sm:$0xff]
      %v5716 = vld [vmem:[%s11 + $0x1e8] sm:$0xff]
      %v5717 = vld [vmem:[%s11 + $0x1f0] sm:$0xff]
      %v5718 = vld [vmem:[%s11 + $0x1f8] sm:$0xff]
      %v5719 = vld [vmem:[%s11 + $0x200] sm:$0xff]
      %v5720 = vld [vmem:[%s11 + $0x208] sm:$0xff]
      %v5721 = vld [vmem:[%s11 + $0x210] sm:$0xff]
      %v5722 = vld [vmem:[%s11 + $0x218] sm:$0xff]
      %v5723 = vld [vmem:[%s11 + $0x220] sm:$0xff]
      %v5724 = vld [vmem:[%s11 + $0x228] sm:$0xff]
      %v5725 = vld [vmem:[%s11 + $0x230] sm:$0xff]
      %v5726 = vld [vmem:[%s11 + $0x238] sm:$0xff]
      %v5727 = vld [vmem:[%s11 + $0x240] sm:$0xff]
      %v5728 = vld [vmem:[%s11 + $0x248] sm:$0xff]
      %v5729 = vld [vmem:[%s11 + $0x250] sm:$0xff]
      %v5730 = vld [vmem:[%s11 + $0x258] sm:$0xff]
      %v5731 = vld [vmem:[%s11 + $0x260] sm:$0xff]
      %v5732 = vld [vmem:[%s11 + $0x268] sm:$0xff]
      %v5733 = vld [vmem:[%s11 + $0x270] sm:$0xff]
      %v5734 = vld [vmem:[%s11 + $0x278] sm:$0xff]
      %v5735 = vld [vmem:[%s11 + $0x280] sm:$0xff]
      %v5736 = vld [vmem:[%s11 + $0x288] sm:$0xff]
      %v5737 = vld [vmem:[%s11 + $0x290] sm:$0xff]
      %v5738 = vld [vmem:[%s11 + $0x298] sm:$0xff]
      %v5739 = vld [vmem:[%s11 + $0x2a0] sm:$0xff]
      %v5740 = vld [vmem:[%s11 + $0x2a8] sm:$0xff]
      %v5741 = vld [vmem:[%s11 + $0x2b0] sm:$0xff]
      %v5742 = vld [vmem:[%s11 + $0x2b8] sm:$0xff]
      %v5743 = vld [vmem:[%s11 + $0x2c0] sm:$0xff]
      %v5744 = vld [vmem:[%s11 + $0x2c8] sm:$0xff]
      %v5745 = vld [vmem:[%s11 + $0x2d0] sm:$0xff]
      %v5746 = vld [vmem:[%s11 + $0x2d8] sm:$0xff]
      %v5747 = vld [vmem:[%s11 + $0x2e0] sm:$0xff]
      %v5748 = vld [vmem:[%s11 + $0x2e8] sm:$0xff]
      %v5749 = vld [vmem:[%s11 + $0x2f0] sm:$0xff]
      %v5750 = vld [vmem:[%s11 + $0x2f8] sm:$0xff]
      %v5751 = vld [vmem:[%s11 + $0x300] sm:$0xff]
      %v5752 = vld [vmem:[%s11 + $0x308] sm:$0xff]
      %v5753 = vld [vmem:[%s11 + $0x310] sm:$0xff]
      %v5754 = vld [vmem:[%s11 + $0x318] sm:$0xff]
      %v5755 = vld [vmem:[%s11 + $0x320] sm:$0xff]
      %v5756 = vld [vmem:[%s11 + $0x328] sm:$0xff]
      %v5757 = vld [vmem:[%s11 + $0x330] sm:$0xff]
      %v5758 = vld [vmem:[%s11 + $0x338] sm:$0xff]
      %v5759 = vld [vmem:[%s11 + $0x340] sm:$0xff]
      %v5760 = vld [vmem:[%s11 + $0x348] sm:$0xff]
      %v5761 = vld [vmem:[%s11 + $0x350] sm:$0xff]
      %v5762 = vld [vmem:[%s11 + $0x358] sm:$0xff]
      %v5763 = vld [vmem:[%s11 + $0x360] sm:$0xff]
      %v5764 = vld [vmem:[%s11 + $0x368] sm:$0xff]
      %v5765 = vld [vmem:[%s11 + $0x370] sm:$0xff]
      %v5766 = vld [vmem:[%s11 + $0x378] sm:$0xff]
      %v5767 = vld [vmem:[%s11 + $0x380] sm:$0xff]
      %v5768 = vld [vmem:[%s11 + $0x388] sm:$0xff]
      %v5769 = vld [vmem:[%s11 + $0x390] sm:$0xff]
      %v5770 = vld [vmem:[%s11 + $0x398] sm:$0xff]
      %v5771 = vld [vmem:[%s11 + $0x3a0] sm:$0xff]
      %v5772 = vld [vmem:[%s11 + $0x3a8] sm:$0xff]
      %v5773 = vld [vmem:[%s11 + $0x3b0] sm:$0xff]
      %v5774 = vld [vmem:[%s11 + $0x3b8] sm:$0xff]
      %v5775 = vld [vmem:[%s11 + $0x3c0] sm:$0xff]
      %v5776 = vld [vmem:[%s11 + $0x3c8] sm:$0xff]
      %v5777 = vld [vmem:[%s11 + $0x3d0] sm:$0xff]
      %v5778 = vld [vmem:[%s11 + $0x3d8] sm:$0xff]
      %v5779 = vld [vmem:[%s11 + $0x3e0] sm:$0xff]
      %v5780 = vld [vmem:[%s11 + $0x3e8] sm:$0xff]
      %v5781 = vld [vmem:[%s11 + $0x3f0] sm:$0xff]
      %v5782 = vld [vmem:[%s11 + $0x3f8] sm:$0xff]
      %v5911 = vunpack.c.l.b16 %v5655
      %v5912 = vunpack.c.h.b16 %v5655
      %v5913 = vunpack.c.l.b16 %v5656
      %v5914 = vunpack.c.h.b16 %v5656
      %v5915 = vunpack.c.l.b16 %v5657
      %v5916 = vunpack.c.h.b16 %v5657
      %v5917 = vunpack.c.l.b16 %v5658
      %v5918 = vunpack.c.h.b16 %v5658
      %v5919 = vunpack.c.l.b16 %v5659
      %v5920 = vunpack.c.h.b16 %v5659
      %v5921 = vunpack.c.l.b16 %v5660
      %v5922 = vunpack.c.h.b16 %v5660
      %v5923 = vunpack.c.l.b16 %v5661
      %v5924 = vunpack.c.h.b16 %v5661
      %v5925 = vunpack.c.l.b16 %v5662
      %v5926 = vunpack.c.h.b16 %v5662
      %v5927 = vunpack.c.l.b16 %v5663
      %v5928 = vunpack.c.h.b16 %v5663
      %v5929 = vunpack.c.l.b16 %v5664
      %v5930 = vunpack.c.h.b16 %v5664
      %v5931 = vunpack.c.l.b16 %v5665
      %v5932 = vunpack.c.h.b16 %v5665
      %v5933 = vunpack.c.l.b16 %v5666
      %v5934 = vunpack.c.h.b16 %v5666
      %v5935 = vunpack.c.l.b16 %v5667
      %v5936 = vunpack.c.h.b16 %v5667
      %v5937 = vunpack.c.l.b16 %v5668
      %v5938 = vunpack.c.h.b16 %v5668
      %v5939 = vunpack.c.l.b16 %v5669
      %v5940 = vunpack.c.h.b16 %v5669
      %v5941 = vunpack.c.l.b16 %v5670
      %v5942 = vunpack.c.h.b16 %v5670
      %v5943 = vunpack.c.l.b16 %v5671
      %v5944 = vunpack.c.h.b16 %v5671
      %v5945 = vunpack.c.l.b16 %v5672
      %v5946 = vunpack.c.h.b16 %v5672
      %v5947 = vunpack.c.l.b16 %v5673
      %v5948 = vunpack.c.h.b16 %v5673
      %v5949 = vunpack.c.l.b16 %v5674
      %v5950 = vunpack.c.h.b16 %v5674
      %v5951 = vunpack.c.l.b16 %v5675
      %v5952 = vunpack.c.h.b16 %v5675
      %v5953 = vunpack.c.l.b16 %v5676
      %v5954 = vunpack.c.h.b16 %v5676
      %v5955 = vunpack.c.l.b16 %v5677
      %v5956 = vunpack.c.h.b16 %v5677
      %v5957 = vunpack.c.l.b16 %v5678
      %v5958 = vunpack.c.h.b16 %v5678
      %v5959 = vunpack.c.l.b16 %v5679
      %v5960 = vunpack.c.h.b16 %v5679
      %v5961 = vunpack.c.l.b16 %v5680
      %v5962 = vunpack.c.h.b16 %v5680
      %v5963 = vunpack.c.l.b16 %v5681
      %v5964 = vunpack.c.h.b16 %v5681
      %v5965 = vunpack.c.l.b16 %v5682
      %v5966 = vunpack.c.h.b16 %v5682
      %v5967 = vunpack.c.l.b16 %v5683
      %v5968 = vunpack.c.h.b16 %v5683
      %v5969 = vunpack.c.l.b16 %v5684
      %v5970 = vunpack.c.h.b16 %v5684
      %v5971 = vunpack.c.l.b16 %v5685
      %v5972 = vunpack.c.h.b16 %v5685
      %v5973 = vunpack.c.l.b16 %v5686
      %v5974 = vunpack.c.h.b16 %v5686
      %v5975 = vunpack.c.l.b16 %v5687
      %v5976 = vunpack.c.h.b16 %v5687
      %v5977 = vunpack.c.l.b16 %v5688
      %v5978 = vunpack.c.h.b16 %v5688
      %v5979 = vunpack.c.l.b16 %v5689
      %v5980 = vunpack.c.h.b16 %v5689
      %v5981 = vunpack.c.l.b16 %v5690
      %v5982 = vunpack.c.h.b16 %v5690
      %v5983 = vunpack.c.l.b16 %v5691
      %v5984 = vunpack.c.h.b16 %v5691
      %v5985 = vunpack.c.l.b16 %v5692
      %v5986 = vunpack.c.h.b16 %v5692
      %v5987 = vunpack.c.l.b16 %v5693
      %v5988 = vunpack.c.h.b16 %v5693
      %v5989 = vunpack.c.l.b16 %v5694
      %v5990 = vunpack.c.h.b16 %v5694
      %v5991 = vunpack.c.l.b16 %v5695
      %v5992 = vunpack.c.h.b16 %v5695
      %v5993 = vunpack.c.l.b16 %v5696
      %v5994 = vunpack.c.h.b16 %v5696
      %v5995 = vunpack.c.l.b16 %v5697
      %v5996 = vunpack.c.h.b16 %v5697
      %v5997 = vunpack.c.l.b16 %v5698
      %v5998 = vunpack.c.h.b16 %v5698
      %v5999 = vunpack.c.l.b16 %v5699
      %v6000 = vunpack.c.h.b16 %v5699
      %v6001 = vunpack.c.l.b16 %v5700
      %v6002 = vunpack.c.h.b16 %v5700
      %v6003 = vunpack.c.l.b16 %v5701
      %v6004 = vunpack.c.h.b16 %v5701
      %v6005 = vunpack.c.l.b16 %v5702
      %v6006 = vunpack.c.h.b16 %v5702
      %v6007 = vunpack.c.l.b16 %v5703
      %v6008 = vunpack.c.h.b16 %v5703
      %v6009 = vunpack.c.l.b16 %v5704
      %v6010 = vunpack.c.h.b16 %v5704
      %v6011 = vunpack.c.l.b16 %v5705
      %v6012 = vunpack.c.h.b16 %v5705
      %v6013 = vunpack.c.l.b16 %v5706
      %v6014 = vunpack.c.h.b16 %v5706
      %v6015 = vunpack.c.l.b16 %v5707
      %v6016 = vunpack.c.h.b16 %v5707
      %v6017 = vunpack.c.l.b16 %v5708
      %v6018 = vunpack.c.h.b16 %v5708
      %v6019 = vunpack.c.l.b16 %v5709
      %v6020 = vunpack.c.h.b16 %v5709
      %v6021 = vunpack.c.l.b16 %v5710
      %v6022 = vunpack.c.h.b16 %v5710
      %v6023 = vunpack.c.l.b16 %v5711
      %v6024 = vunpack.c.h.b16 %v5711
      %v6025 = vunpack.c.l.b16 %v5712
      %v6026 = vunpack.c.h.b16 %v5712
      %v6027 = vunpack.c.l.b16 %v5713
      %v6028 = vunpack.c.h.b16 %v5713
      %v6029 = vunpack.c.l.b16 %v5714
      %v6030 = vunpack.c.h.b16 %v5714
      %v6031 = vunpack.c.l.b16 %v5715
      %v6032 = vunpack.c.h.b16 %v5715
      %v6033 = vunpack.c.l.b16 %v5716
      %v6034 = vunpack.c.h.b16 %v5716
      %v6035 = vunpack.c.l.b16 %v5717
      %v6036 = vunpack.c.h.b16 %v5717
      %v6037 = vunpack.c.l.b16 %v5718
      %v6038 = vunpack.c.h.b16 %v5718
      %v6039 = vunpack.c.l.b16 %v5719
      %v6040 = vunpack.c.h.b16 %v5719
      %v6041 = vunpack.c.l.b16 %v5720
      %v6042 = vunpack.c.h.b16 %v5720
      %v6043 = vunpack.c.l.b16 %v5721
      %v6044 = vunpack.c.h.b16 %v5721
      %v6045 = vunpack.c.l.b16 %v5722
      %v6046 = vunpack.c.h.b16 %v5722
      %v6047 = vunpack.c.l.b16 %v5723
      %v6048 = vunpack.c.h.b16 %v5723
      %v6049 = vunpack.c.l.b16 %v5724
      %v6050 = vunpack.c.h.b16 %v5724
      %v6051 = vunpack.c.l.b16 %v5725
      %v6052 = vunpack.c.h.b16 %v5725
      %v6053 = vunpack.c.l.b16 %v5726
      %v6054 = vunpack.c.h.b16 %v5726
      %v6055 = vunpack.c.l.b16 %v5727
      %v6056 = vunpack.c.h.b16 %v5727
      %v6057 = vunpack.c.l.b16 %v5728
      %v6058 = vunpack.c.h.b16 %v5728
      %v6059 = vunpack.c.l.b16 %v5729
      %v6060 = vunpack.c.h.b16 %v5729
      %v6061 = vunpack.c.l.b16 %v5730
      %v6062 = vunpack.c.h.b16 %v5730
      %v6063 = vunpack.c.l.b16 %v5731
      %v6064 = vunpack.c.h.b16 %v5731
      %v6065 = vunpack.c.l.b16 %v5732
      %v6066 = vunpack.c.h.b16 %v5732
      %v6067 = vunpack.c.l.b16 %v5733
      %v6068 = vunpack.c.h.b16 %v5733
      %v6069 = vunpack.c.l.b16 %v5734
      %v6070 = vunpack.c.h.b16 %v5734
      %v6071 = vunpack.c.l.b16 %v5735
      %v6072 = vunpack.c.h.b16 %v5735
      %v6073 = vunpack.c.l.b16 %v5736
      %v6074 = vunpack.c.h.b16 %v5736
      %v6075 = vunpack.c.l.b16 %v5737
      %v6076 = vunpack.c.h.b16 %v5737
      %v6077 = vunpack.c.l.b16 %v5738
      %v6078 = vunpack.c.h.b16 %v5738
      %v6079 = vunpack.c.l.b16 %v5739
      %v6080 = vunpack.c.h.b16 %v5739
      %v6081 = vunpack.c.l.b16 %v5740
      %v6082 = vunpack.c.h.b16 %v5740
      %v6083 = vunpack.c.l.b16 %v5741
      %v6084 = vunpack.c.h.b16 %v5741
      %v6085 = vunpack.c.l.b16 %v5742
      %v6086 = vunpack.c.h.b16 %v5742
      %v6087 = vunpack.c.l.b16 %v5743
      %v6088 = vunpack.c.h.b16 %v5743
      %v6089 = vunpack.c.l.b16 %v5744
      %v6090 = vunpack.c.h.b16 %v5744
      %v6091 = vunpack.c.l.b16 %v5745
      %v6092 = vunpack.c.h.b16 %v5745
      %v6093 = vunpack.c.l.b16 %v5746
      %v6094 = vunpack.c.h.b16 %v5746
      %v6095 = vunpack.c.l.b16 %v5747
      %v6096 = vunpack.c.h.b16 %v5747
      %v6097 = vunpack.c.l.b16 %v5748
      %v6098 = vunpack.c.h.b16 %v5748
      %v6099 = vunpack.c.l.b16 %v5749
      %v6100 = vunpack.c.h.b16 %v5749
      %v6101 = vunpack.c.l.b16 %v5750
      %v6102 = vunpack.c.h.b16 %v5750
      %v6103 = vunpack.c.l.b16 %v5751
      %v6104 = vunpack.c.h.b16 %v5751
      %v6105 = vunpack.c.l.b16 %v5752
      %v6106 = vunpack.c.h.b16 %v5752
      %v6107 = vunpack.c.l.b16 %v5753
      %v6108 = vunpack.c.h.b16 %v5753
      %v6109 = vunpack.c.l.b16 %v5754
      %v6110 = vunpack.c.h.b16 %v5754
      %v6111 = vunpack.c.l.b16 %v5755
      %v6112 = vunpack.c.h.b16 %v5755
      %v6113 = vunpack.c.l.b16 %v5756
      %v6114 = vunpack.c.h.b16 %v5756
      %v6115 = vunpack.c.l.b16 %v5757
      %v6116 = vunpack.c.h.b16 %v5757
      %v6117 = vunpack.c.l.b16 %v5758
      %v6118 = vunpack.c.h.b16 %v5758
      %v6119 = vunpack.c.l.b16 %v5759
      %v6120 = vunpack.c.h.b16 %v5759
      %v6121 = vunpack.c.l.b16 %v5760
      %v6122 = vunpack.c.h.b16 %v5760
      %v6123 = vunpack.c.l.b16 %v5761
      %v6124 = vunpack.c.h.b16 %v5761
      %v6125 = vunpack.c.l.b16 %v5762
      %v6126 = vunpack.c.h.b16 %v5762
      %v6127 = vunpack.c.l.b16 %v5763
      %v6128 = vunpack.c.h.b16 %v5763
      %v6129 = vunpack.c.l.b16 %v5764
      %v6130 = vunpack.c.h.b16 %v5764
      %v6131 = vunpack.c.l.b16 %v5765
      %v6132 = vunpack.c.h.b16 %v5765
      %v6133 = vunpack.c.l.b16 %v5766
      %v6134 = vunpack.c.h.b16 %v5766
      %v6135 = vunpack.c.l.b16 %v5767
      %v6136 = vunpack.c.h.b16 %v5767
      %v6137 = vunpack.c.l.b16 %v5768
      %v6138 = vunpack.c.h.b16 %v5768
      %v6139 = vunpack.c.l.b16 %v5769
      %v6140 = vunpack.c.h.b16 %v5769
      %v6141 = vunpack.c.l.b16 %v5770
      %v6142 = vunpack.c.h.b16 %v5770
      %v6143 = vunpack.c.l.b16 %v5771
      %v6144 = vunpack.c.h.b16 %v5771
      %v6145 = vunpack.c.l.b16 %v5772
      %v6146 = vunpack.c.h.b16 %v5772
      %v6147 = vunpack.c.l.b16 %v5773
      %v6148 = vunpack.c.h.b16 %v5773
      %v6149 = vunpack.c.l.b16 %v5774
      %v6150 = vunpack.c.h.b16 %v5774
      %v6151 = vunpack.c.l.b16 %v5775
      %v6152 = vunpack.c.h.b16 %v5775
      %v6153 = vunpack.c.l.b16 %v5776
      %v6154 = vunpack.c.h.b16 %v5776
      %v6155 = vunpack.c.l.b16 %v5777
      %v6156 = vunpack.c.h.b16 %v5777
      %v6157 = vunpack.c.l.b16 %v5778
      %v6158 = vunpack.c.h.b16 %v5778
      %v6159 = vunpack.c.l.b16 %v5779
      %v6160 = vunpack.c.h.b16 %v5779
      %v6161 = vunpack.c.l.b16 %v5780
      %v6162 = vunpack.c.h.b16 %v5780
      %v6163 = vunpack.c.l.b16 %v5781
      %v6164 = vunpack.c.h.b16 %v5781
      %v6165 = vunpack.c.l.b16 %v5782
      %v6166 = vunpack.c.h.b16 %v5782
      %v6167 = vpack.c.b16 %v5913, %v5911
      %v6168 = vpack.c.b16 %v5914, %v5912
      %v6169 = vpack.c.b16 %v5917, %v5915
      %v6170 = vpack.c.b16 %v5918, %v5916
      %v6171 = vpack.c.b16 %v5921, %v5919
      %v6172 = vpack.c.b16 %v5922, %v5920
      %v6173 = vpack.c.b16 %v5925, %v5923
      %v6174 = vpack.c.b16 %v5926, %v5924
      %v6175 = vpack.c.b16 %v5929, %v5927
      %v6176 = vpack.c.b16 %v5930, %v5928
      %v6177 = vpack.c.b16 %v5933, %v5931
      %v6178 = vpack.c.b16 %v5934, %v5932
      %v6179 = vpack.c.b16 %v5937, %v5935
      %v6180 = vpack.c.b16 %v5938, %v5936
      %v6181 = vpack.c.b16 %v5941, %v5939
      %v6182 = vpack.c.b16 %v5942, %v5940
      %v6183 = vpack.c.b16 %v5945, %v5943
      %v6184 = vpack.c.b16 %v5946, %v5944
      %v6185 = vpack.c.b16 %v5949, %v5947
      %v6186 = vpack.c.b16 %v5950, %v5948
      %v6187 = vpack.c.b16 %v5953, %v5951
      %v6188 = vpack.c.b16 %v5954, %v5952
      %v6189 = vpack.c.b16 %v5957, %v5955
      %v6190 = vpack.c.b16 %v5958, %v5956
      %v6191 = vpack.c.b16 %v5961, %v5959
      %v6192 = vpack.c.b16 %v5962, %v5960
      %v6193 = vpack.c.b16 %v5965, %v5963
      %v6194 = vpack.c.b16 %v5966, %v5964
      %v6195 = vpack.c.b16 %v5969, %v5967
      %v6196 = vpack.c.b16 %v5970, %v5968
      %v6197 = vpack.c.b16 %v5973, %v5971
      %v6198 = vpack.c.b16 %v5974, %v5972
      %v6199 = vpack.c.b16 %v5977, %v5975
      %v6200 = vpack.c.b16 %v5978, %v5976
      %v6201 = vpack.c.b16 %v5981, %v5979
      %v6202 = vpack.c.b16 %v5982, %v5980
      %v6203 = vpack.c.b16 %v5985, %v5983
      %v6204 = vpack.c.b16 %v5986, %v5984
      %v6205 = vpack.c.b16 %v5989, %v5987
      %v6206 = vpack.c.b16 %v5990, %v5988
      %v6207 = vpack.c.b16 %v5993, %v5991
      %v6208 = vpack.c.b16 %v5994, %v5992
      %v6209 = vpack.c.b16 %v5997, %v5995
      %v6210 = vpack.c.b16 %v5998, %v5996
      %v6211 = vpack.c.b16 %v6001, %v5999
      %v6212 = vpack.c.b16 %v6002, %v6000
      %v6213 = vpack.c.b16 %v6005, %v6003
      %v6214 = vpack.c.b16 %v6006, %v6004
      %v6215 = vpack.c.b16 %v6009, %v6007
      %v6216 = vpack.c.b16 %v6010, %v6008
      %v6217 = vpack.c.b16 %v6013, %v6011
      %v6218 = vpack.c.b16 %v6014, %v6012
      %v6219 = vpack.c.b16 %v6017, %v6015
      %v6220 = vpack.c.b16 %v6018, %v6016
      %v6221 = vpack.c.b16 %v6021, %v6019
      %v6222 = vpack.c.b16 %v6022, %v6020
      %v6223 = vpack.c.b16 %v6025, %v6023
      %v6224 = vpack.c.b16 %v6026, %v6024
      %v6225 = vpack.c.b16 %v6029, %v6027
      %v6226 = vpack.c.b16 %v6030, %v6028
      %v6227 = vpack.c.b16 %v6033, %v6031
      %v6228 = vpack.c.b16 %v6034, %v6032
      %v6229 = vpack.c.b16 %v6037, %v6035
      %v6230 = vpack.c.b16 %v6038, %v6036
      %v6231 = vpack.c.b16 %v6041, %v6039
      %v6232 = vpack.c.b16 %v6042, %v6040
      %v6233 = vpack.c.b16 %v6045, %v6043
      %v6234 = vpack.c.b16 %v6046, %v6044
      %v6235 = vpack.c.b16 %v6049, %v6047
      %v6236 = vpack.c.b16 %v6050, %v6048
      %v6237 = vpack.c.b16 %v6053, %v6051
      %v6238 = vpack.c.b16 %v6054, %v6052
      %v6239 = vpack.c.b16 %v6057, %v6055
      %v6240 = vpack.c.b16 %v6058, %v6056
      %v6241 = vpack.c.b16 %v6061, %v6059
      %v6242 = vpack.c.b16 %v6062, %v6060
      %v6243 = vpack.c.b16 %v6065, %v6063
      %v6244 = vpack.c.b16 %v6066, %v6064
      %v6245 = vpack.c.b16 %v6069, %v6067
      %v6246 = vpack.c.b16 %v6070, %v6068
      %v6247 = vpack.c.b16 %v6073, %v6071
      %v6248 = vpack.c.b16 %v6074, %v6072
      %v6249 = vpack.c.b16 %v6077, %v6075
      %v6250 = vpack.c.b16 %v6078, %v6076
      %v6251 = vpack.c.b16 %v6081, %v6079
      %v6252 = vpack.c.b16 %v6082, %v6080
      %v6253 = vpack.c.b16 %v6085, %v6083
      %v6254 = vpack.c.b16 %v6086, %v6084
      %v6255 = vpack.c.b16 %v6089, %v6087
      %v6256 = vpack.c.b16 %v6090, %v6088
      %v6257 = vpack.c.b16 %v6093, %v6091
      %v6258 = vpack.c.b16 %v6094, %v6092
      %v6259 = vpack.c.b16 %v6097, %v6095
      %v6260 = vpack.c.b16 %v6098, %v6096
      %v6261 = vpack.c.b16 %v6101, %v6099
      %v6262 = vpack.c.b16 %v6102, %v6100
      %v6263 = vpack.c.b16 %v6105, %v6103
      %v6264 = vpack.c.b16 %v6106, %v6104
      %v6265 = vpack.c.b16 %v6109, %v6107
      %v6266 = vpack.c.b16 %v6110, %v6108
      %v6267 = vpack.c.b16 %v6113, %v6111
      %v6268 = vpack.c.b16 %v6114, %v6112
      %v6269 = vpack.c.b16 %v6117, %v6115
      %v6270 = vpack.c.b16 %v6118, %v6116
      %v6271 = vpack.c.b16 %v6121, %v6119
      %v6272 = vpack.c.b16 %v6122, %v6120
      %v6273 = vpack.c.b16 %v6125, %v6123
      %v6274 = vpack.c.b16 %v6126, %v6124
      %v6275 = vpack.c.b16 %v6129, %v6127
      %v6276 = vpack.c.b16 %v6130, %v6128
      %v6277 = vpack.c.b16 %v6133, %v6131
      %v6278 = vpack.c.b16 %v6134, %v6132
      %v6279 = vpack.c.b16 %v6137, %v6135
      %v6280 = vpack.c.b16 %v6138, %v6136
      %v6281 = vpack.c.b16 %v6141, %v6139
      %v6282 = vpack.c.b16 %v6142, %v6140
      %v6283 = vpack.c.b16 %v6145, %v6143
      %v6284 = vpack.c.b16 %v6146, %v6144
      %v6285 = vpack.c.b16 %v6149, %v6147
      %v6286 = vpack.c.b16 %v6150, %v6148
      %v6287 = vpack.c.b16 %v6153, %v6151
      %v6288 = vpack.c.b16 %v6154, %v6152
      %v6289 = vpack.c.b16 %v6157, %v6155
      %v6290 = vpack.c.b16 %v6158, %v6156
      %v6291 = vpack.c.b16 %v6161, %v6159
      %v6292 = vpack.c.b16 %v6162, %v6160
      %v6293 = vpack.c.b16 %v6165, %v6163
      %v6294 = vpack.c.b16 %v6166, %v6164
      %6423 = vmatprep.subr.bf16.mxu0 %v6182
      %6424 = vmatpush1.bf16.msra.mxu0 %v6181
      %6425 = vmatprep.subr.bf16.mxu0 %v6180
      %6426 = vmatpush1.bf16.msra.mxu0 %v6179
      %6427 = vmatprep.subr.bf16.mxu0 %v6178
      %6428 = vmatpush1.bf16.msra.mxu0 %v6177
      %6429 = vmatprep.subr.bf16.mxu0 %v6176
      %6430 = vmatpush1.bf16.msra.mxu0 %v6175
      %6431 = vmatprep.subr.bf16.mxu0 %v6174
      %6432 = vmatpush1.bf16.msra.mxu0 %v6173
      %6433 = vmatprep.subr.bf16.mxu0 %v6172
      %6434 = vmatpush1.bf16.msra.mxu0 %v6171
      %6435 = vmatprep.subr.bf16.mxu0 %v6170
      %6436 = vmatpush1.bf16.msra.mxu0 %v6169
      %6437 = vmatprep.subr.bf16.mxu0 %v6168
      %6438 = vmatpush1.bf16.msra.mxu0 %v6167
      %6439 = vmatprep.subr.bf16.mxu0 %v6198
      %6440 = vmatpush2.bf16.msra.mxu0 %v6197
      %6441 = vmatprep.subr.bf16.mxu0 %v6196
      %6442 = vmatpush2.bf16.msra.mxu0 %v6195
      %6443 = vmatprep.subr.bf16.mxu0 %v6194
      %6444 = vmatpush2.bf16.msra.mxu0 %v6193
      %6445 = vmatprep.subr.bf16.mxu0 %v6192
      %6446 = vmatpush2.bf16.msra.mxu0 %v6191
      %6447 = vmatprep.subr.bf16.mxu0 %v6190
      %6448 = vmatpush2.bf16.msra.mxu0 %v6189
      %6449 = vmatprep.subr.bf16.mxu0 %v6188
      %6450 = vmatpush2.bf16.msra.mxu0 %v6187
      %6451 = vmatprep.subr.bf16.mxu0 %v6186
      %6452 = vmatpush2.bf16.msra.mxu0 %v6185
      %6453 = vmatprep.subr.bf16.mxu0 %v6184
      %6454 = vmatpush2.bf16.msra.mxu0 %v6183
      %6455 = vmatprep.mubr.bf16.mxu0 %v5640
      %6456 = vmatmul.mubr.bf16.gmra.mxu0 %v5639
      %v6457 = vpop.f32.mrf.mxu0
      %v6458 = vadd.f32 0.0, %v6457
      %v6459 = vpop.f32.mrf.mxu0
      %v6460 = vadd.f32 0.0, %v6459
      %v6461 = vpop.f32.mrf.mxu0
      %v6462 = vadd.f32 0.0, %v6461
      %v6463 = vpop.f32.mrf.mxu0
      %v6464 = vadd.f32 0.0, %v6463
      %6465 = vmatprep.mubr.bf16.mxu0 %v5642
      %6466 = vmatmul.mubr.bf16.gmra.mxu0 %v5641
      %v6467 = vpop.f32.mrf.mxu0
      %v6468 = vadd.f32 0.0, %v6467
      %v6469 = vpop.f32.mrf.mxu0
      %v6470 = vadd.f32 0.0, %v6469
      %v6471 = vpop.f32.mrf.mxu0
      %v6472 = vadd.f32 0.0, %v6471
      %v6473 = vpop.f32.mrf.mxu0
      %v6474 = vadd.f32 0.0, %v6473
      %6475 = vdwg.mxu0
      %6476 = vmatprep.subr.bf16.mxu0 %v6214
      %6477 = vmatpush1.bf16.msra.mxu0 %v6213
      %6478 = vmatprep.subr.bf16.mxu0 %v6212
      %6479 = vmatpush1.bf16.msra.mxu0 %v6211
      %6480 = vmatprep.subr.bf16.mxu0 %v6210
      %6481 = vmatpush1.bf16.msra.mxu0 %v6209
      %6482 = vmatprep.subr.bf16.mxu0 %v6208
      %6483 = vmatpush1.bf16.msra.mxu0 %v6207
      %6484 = vmatprep.subr.bf16.mxu0 %v6206
      %6485 = vmatpush1.bf16.msra.mxu0 %v6205
      %6486 = vmatprep.subr.bf16.mxu0 %v6204
      %6487 = vmatpush1.bf16.msra.mxu0 %v6203
      %6488 = vmatprep.subr.bf16.mxu0 %v6202
      %6489 = vmatpush1.bf16.msra.mxu0 %v6201
      %6490 = vmatprep.subr.bf16.mxu0 %v6200
      %6491 = vmatpush1.bf16.msra.mxu0 %v6199
      %6492 = vmatprep.subr.bf16.mxu0 %v6230
      %6493 = vmatpush2.bf16.msra.mxu0 %v6229
      %6494 = vmatprep.subr.bf16.mxu0 %v6228
      %6495 = vmatpush2.bf16.msra.mxu0 %v6227
      %6496 = vmatprep.subr.bf16.mxu0 %v6226
      %6497 = vmatpush2.bf16.msra.mxu0 %v6225
      %6498 = vmatprep.subr.bf16.mxu0 %v6224
      %6499 = vmatpush2.bf16.msra.mxu0 %v6223
      %6500 = vmatprep.subr.bf16.mxu0 %v6222
      %6501 = vmatpush2.bf16.msra.mxu0 %v6221
      %6502 = vmatprep.subr.bf16.mxu0 %v6220
      %6503 = vmatpush2.bf16.msra.mxu0 %v6219
      %6504 = vmatprep.subr.bf16.mxu0 %v6218
      %6505 = vmatpush2.bf16.msra.mxu0 %v6217
      %6506 = vmatprep.subr.bf16.mxu0 %v6216
      %6507 = vmatpush2.bf16.msra.mxu0 %v6215
      %6508 = vmatprep.mubr.bf16.mxu0 %v5644
      %6509 = vmatmul.mubr.bf16.gmra.mxu0 %v5643
      %v6510 = vpop.f32.mrf.mxu0
      %v6511 = vadd.f32 %v6458, %v6510
      %v6512 = vpop.f32.mrf.mxu0
      %v6513 = vadd.f32 %v6460, %v6512
      %v6514 = vpop.f32.mrf.mxu0
      %v6515 = vadd.f32 %v6462, %v6514
      %v6516 = vpop.f32.mrf.mxu0
      %v6517 = vadd.f32 %v6464, %v6516
      %6518 = vmatprep.mubr.bf16.mxu0 %v5646
      %6519 = vmatmul.mubr.bf16.gmra.mxu0 %v5645
      %v6520 = vpop.f32.mrf.mxu0
      %v6521 = vadd.f32 %v6468, %v6520
      %v6522 = vpop.f32.mrf.mxu0
      %v6523 = vadd.f32 %v6470, %v6522
      %v6524 = vpop.f32.mrf.mxu0
      %v6525 = vadd.f32 %v6472, %v6524
      %v6526 = vpop.f32.mrf.mxu0
      %v6527 = vadd.f32 %v6474, %v6526
      %6528 = vdwg.mxu0
      %6529 = vmatprep.subr.bf16.mxu0 %v6246
      %6530 = vmatpush1.bf16.msra.mxu0 %v6245
      %6531 = vmatprep.subr.bf16.mxu0 %v6244
      %6532 = vmatpush1.bf16.msra.mxu0 %v6243
      %6533 = vmatprep.subr.bf16.mxu0 %v6242
      %6534 = vmatpush1.bf16.msra.mxu0 %v6241
      %6535 = vmatprep.subr.bf16.mxu0 %v6240
      %6536 = vmatpush1.bf16.msra.mxu0 %v6239
      %6537 = vmatprep.subr.bf16.mxu0 %v6238
      %6538 = vmatpush1.bf16.msra.mxu0 %v6237
      %6539 = vmatprep.subr.bf16.mxu0 %v6236
      %6540 = vmatpush1.bf16.msra.mxu0 %v6235
      %6541 = vmatprep.subr.bf16.mxu0 %v6234
      %6542 = vmatpush1.bf16.msra.mxu0 %v6233
      %6543 = vmatprep.subr.bf16.mxu0 %v6232
      %6544 = vmatpush1.bf16.msra.mxu0 %v6231
      %6545 = vmatprep.subr.bf16.mxu0 %v6262
      %6546 = vmatpush2.bf16.msra.mxu0 %v6261
      %6547 = vmatprep.subr.bf16.mxu0 %v6260
      %6548 = vmatpush2.bf16.msra.mxu0 %v6259
      %6549 = vmatprep.subr.bf16.mxu0 %v6258
      %6550 = vmatpush2.bf16.msra.mxu0 %v6257
      %6551 = vmatprep.subr.bf16.mxu0 %v6256
      %6552 = vmatpush2.bf16.msra.mxu0 %v6255
      %6553 = vmatprep.subr.bf16.mxu0 %v6254
      %6554 = vmatpush2.bf16.msra.mxu0 %v6253
      %6555 = vmatprep.subr.bf16.mxu0 %v6252
      %6556 = vmatpush2.bf16.msra.mxu0 %v6251
      %6557 = vmatprep.subr.bf16.mxu0 %v6250
      %6558 = vmatpush2.bf16.msra.mxu0 %v6249
      %6559 = vmatprep.subr.bf16.mxu0 %v6248
      %6560 = vmatpush2.bf16.msra.mxu0 %v6247
      %6561 = vmatprep.mubr.bf16.mxu0 %v5648
      %6562 = vmatmul.mubr.bf16.gmra.mxu0 %v5647
      %v6563 = vpop.f32.mrf.mxu0
      %v6564 = vadd.f32 %v6511, %v6563
      %v6565 = vpop.f32.mrf.mxu0
      %v6566 = vadd.f32 %v6513, %v6565
      %v6567 = vpop.f32.mrf.mxu0
      %v6568 = vadd.f32 %v6515, %v6567
      %v6569 = vpop.f32.mrf.mxu0
      %v6570 = vadd.f32 %v6517, %v6569
      %6571 = vmatprep.mubr.bf16.mxu0 %v5650
      %6572 = vmatmul.mubr.bf16.gmra.mxu0 %v5649
      %v6573 = vpop.f32.mrf.mxu0
      %v6574 = vadd.f32 %v6521, %v6573
      %v6575 = vpop.f32.mrf.mxu0
      %v6576 = vadd.f32 %v6523, %v6575
      %v6577 = vpop.f32.mrf.mxu0
      %v6578 = vadd.f32 %v6525, %v6577
      %v6579 = vpop.f32.mrf.mxu0
      %v6580 = vadd.f32 %v6527, %v6579
      %6581 = vdwg.mxu0
      %6582 = vmatprep.subr.bf16.mxu0 %v6278
      %6583 = vmatpush1.bf16.msra.mxu0 %v6277
      %6584 = vmatprep.subr.bf16.mxu0 %v6276
      %6585 = vmatpush1.bf16.msra.mxu0 %v6275
      %6586 = vmatprep.subr.bf16.mxu0 %v6274
      %6587 = vmatpush1.bf16.msra.mxu0 %v6273
      %6588 = vmatprep.subr.bf16.mxu0 %v6272
      %6589 = vmatpush1.bf16.msra.mxu0 %v6271
      %6590 = vmatprep.subr.bf16.mxu0 %v6270
      %6591 = vmatpush1.bf16.msra.mxu0 %v6269
      %6592 = vmatprep.subr.bf16.mxu0 %v6268
      %6593 = vmatpush1.bf16.msra.mxu0 %v6267
      %6594 = vmatprep.subr.bf16.mxu0 %v6266
      %6595 = vmatpush1.bf16.msra.mxu0 %v6265
      %6596 = vmatprep.subr.bf16.mxu0 %v6264
      %6597 = vmatpush1.bf16.msra.mxu0 %v6263
      %6598 = vmatprep.subr.bf16.mxu0 %v6294
      %6599 = vmatpush2.bf16.msra.mxu0 %v6293
      %6600 = vmatprep.subr.bf16.mxu0 %v6292
      %6601 = vmatpush2.bf16.msra.mxu0 %v6291
      %6602 = vmatprep.subr.bf16.mxu0 %v6290
      %6603 = vmatpush2.bf16.msra.mxu0 %v6289
      %6604 = vmatprep.subr.bf16.mxu0 %v6288
      %6605 = vmatpush2.bf16.msra.mxu0 %v6287
      %6606 = vmatprep.subr.bf16.mxu0 %v6286
      %6607 = vmatpush2.bf16.msra.mxu0 %v6285
      %6608 = vmatprep.subr.bf16.mxu0 %v6284
      %6609 = vmatpush2.bf16.msra.mxu0 %v6283
      %6610 = vmatprep.subr.bf16.mxu0 %v6282
      %6611 = vmatpush2.bf16.msra.mxu0 %v6281
      %6612 = vmatprep.subr.bf16.mxu0 %v6280
      %6613 = vmatpush2.bf16.msra.mxu0 %v6279
      %6614 = vmatprep.mubr.bf16.mxu0 %v5652
      %6615 = vmatmul.mubr.bf16.gmra.mxu0 %v5651
      %v6616 = vpop.f32.mrf.mxu0
      %v6617 = vadd.f32 %v6564, %v6616
      %v6618 = vpop.f32.mrf.mxu0
      %v6619 = vadd.f32 %v6566, %v6618
      %v6620 = vpop.f32.mrf.mxu0
      %v6621 = vadd.f32 %v6568, %v6620
      %v6622 = vpop.f32.mrf.mxu0
      %v6623 = vadd.f32 %v6570, %v6622
      %6624 = vmatprep.mubr.bf16.mxu0 %v5654
      %6625 = vmatmul.mubr.bf16.gmra.mxu0 %v5653
      %v6626 = vpop.f32.mrf.mxu0
      %v6627 = vadd.f32 %v6574, %v6626
      %v6628 = vpop.f32.mrf.mxu0
      %v6629 = vadd.f32 %v6576, %v6628
      %v6630 = vpop.f32.mrf.mxu0
      %v6631 = vadd.f32 %v6578, %v6630
      %v6632 = vpop.f32.mrf.mxu0
      %v6633 = vadd.f32 %v6580, %v6632
      %6634 = vdwg.mxu0
      %v6635 = vld [vmem:[%s12] sm:$0xff]
      %v6636 = vld [vmem:[%s12 + $0x8] sm:$0xff]
      %v6637 = vld [vmem:[%s12 + $0x10] sm:$0xff]
      %v6638 = vld [vmem:[%s12 + $0x18] sm:$0xff]
      %v6639 = vld [vmem:[%s12 + $0x20] sm:$0xff]
      %v6640 = vld [vmem:[%s12 + $0x28] sm:$0xff]
      %v6641 = vld [vmem:[%s12 + $0x30] sm:$0xff]
      %v6642 = vld [vmem:[%s12 + $0x38] sm:$0xff]
      %v6643 = vld [vmem:[%s12 + $0x40] sm:$0xff]
      %v6644 = vld [vmem:[%s12 + $0x48] sm:$0xff]
      %v6645 = vld [vmem:[%s12 + $0x50] sm:$0xff]
      %v6646 = vld [vmem:[%s12 + $0x58] sm:$0xff]
      %v6647 = vld [vmem:[%s12 + $0x60] sm:$0xff]
      %v6648 = vld [vmem:[%s12 + $0x68] sm:$0xff]
      %v6649 = vld [vmem:[%s12 + $0x70] sm:$0xff]
      %v6650 = vld [vmem:[%s12 + $0x78] sm:$0xff]
      %v6651 = vld [vmem:[%s12 + $0x80] sm:$0xff]
      %v6652 = vld [vmem:[%s12 + $0x88] sm:$0xff]
      %v6653 = vld [vmem:[%s12 + $0x90] sm:$0xff]
      %v6654 = vld [vmem:[%s12 + $0x98] sm:$0xff]
      %v6655 = vld [vmem:[%s12 + $0xa0] sm:$0xff]
      %v6656 = vld [vmem:[%s12 + $0xa8] sm:$0xff]
      %v6657 = vld [vmem:[%s12 + $0xb0] sm:$0xff]
      %v6658 = vld [vmem:[%s12 + $0xb8] sm:$0xff]
      %v6659 = vld [vmem:[%s12 + $0xc0] sm:$0xff]
      %v6660 = vld [vmem:[%s12 + $0xc8] sm:$0xff]
      %v6661 = vld [vmem:[%s12 + $0xd0] sm:$0xff]
      %v6662 = vld [vmem:[%s12 + $0xd8] sm:$0xff]
      %v6663 = vld [vmem:[%s12 + $0xe0] sm:$0xff]
      %v6664 = vld [vmem:[%s12 + $0xe8] sm:$0xff]
      %v6665 = vld [vmem:[%s12 + $0xf0] sm:$0xff]
      %v6666 = vld [vmem:[%s12 + $0xf8] sm:$0xff]
      %v6667 = vld [vmem:[%s14] sm:$0xf]
      %6668 = vmatprep.subr.mxu0 0.0
      %6669 = vmatpush1.msra.mxu0 %v6650
      %6670 = vmatprep.subr.mxu0 0.0
      %6671 = vmatpush1.msra.mxu0 %v6649
      %6672 = vmatprep.subr.mxu0 0.0
      %6673 = vmatpush1.msra.mxu0 %v6648
      %6674 = vmatprep.subr.mxu0 0.0
      %6675 = vmatpush1.msra.mxu0 %v6647
      %6676 = vmatprep.subr.mxu0 0.0
      %6677 = vmatpush1.msra.mxu0 %v6646
      %6678 = vmatprep.subr.mxu0 0.0
      %6679 = vmatpush1.msra.mxu0 %v6645
      %6680 = vmatprep.subr.mxu0 0.0
      %6681 = vmatpush1.msra.mxu0 %v6644
      %6682 = vmatprep.subr.mxu0 0.0
      %6683 = vmatpush1.msra.mxu0 %v6643
      %6684 = vmatprep.subr.mxu0 0.0
      %6685 = vmatpush1.msra.mxu0 %v6642
      %6686 = vmatprep.subr.mxu0 0.0
      %6687 = vmatpush1.msra.mxu0 %v6641
      %6688 = vmatprep.subr.mxu0 0.0
      %6689 = vmatpush1.msra.mxu0 %v6640
      %6690 = vmatprep.subr.mxu0 0.0
      %6691 = vmatpush1.msra.mxu0 %v6639
      %6692 = vmatprep.subr.mxu0 0.0
      %6693 = vmatpush1.msra.mxu0 %v6638
      %6694 = vmatprep.subr.mxu0 0.0
      %6695 = vmatpush1.msra.mxu0 %v6637
      %6696 = vmatprep.subr.mxu0 0.0
      %6697 = vmatpush1.msra.mxu0 %v6636
      %6698 = vmatprep.subr.mxu0 0.0
      %6699 = vmatpush1.msra.mxu0 %v6635
      %6700 = vmatprep.subr.mxu0 0.0
      %6701 = vmatpush2.msra.mxu0 %v6666
      %6702 = vmatprep.subr.mxu0 0.0
      %6703 = vmatpush2.msra.mxu0 %v6665
      %6704 = vmatprep.subr.mxu0 0.0
      %6705 = vmatpush2.msra.mxu0 %v6664
      %6706 = vmatprep.subr.mxu0 0.0
      %6707 = vmatpush2.msra.mxu0 %v6663
      %6708 = vmatprep.subr.mxu0 0.0
      %6709 = vmatpush2.msra.mxu0 %v6662
      %6710 = vmatprep.subr.mxu0 0.0
      %6711 = vmatpush2.msra.mxu0 %v6661
      %6712 = vmatprep.subr.mxu0 0.0
      %6713 = vmatpush2.msra.mxu0 %v6660
      %6714 = vmatprep.subr.mxu0 0.0
      %6715 = vmatpush2.msra.mxu0 %v6659
      %6716 = vmatprep.subr.mxu0 0.0
      %6717 = vmatpush2.msra.mxu0 %v6658
      %6718 = vmatprep.subr.mxu0 0.0
      %6719 = vmatpush2.msra.mxu0 %v6657
      %6720 = vmatprep.subr.mxu0 0.0
      %6721 = vmatpush2.msra.mxu0 %v6656
      %6722 = vmatprep.subr.mxu0 0.0
      %6723 = vmatpush2.msra.mxu0 %v6655
      %6724 = vmatprep.subr.mxu0 0.0
      %6725 = vmatpush2.msra.mxu0 %v6654
      %6726 = vmatprep.subr.mxu0 0.0
      %6727 = vmatpush2.msra.mxu0 %v6653
      %6728 = vmatprep.subr.mxu0 0.0
      %6729 = vmatpush2.msra.mxu0 %v6652
      %6730 = vmatprep.subr.mxu0 0.0
      %6731 = vmatpush2.msra.mxu0 %v6651
      %6732 = vmatprep.mubr.f32.mxu0 %v6619
      %6733 = vmatmul.mubr.f32.gmra.mxu0 %v6617
      %v6734 = vpop.f32.mrf.mxu0
      %v6735 = vadd.f32 0.0, %v6734
      %v6736 = vpop.f32.mrf.mxu0
      %6737 = vmatprep.mubr.f32.mxu0 %v6623
      %6738 = vmatmul.mubr.f32.gmra.mxu0 %v6621
      %v6739 = vpop.f32.mrf.mxu0
      %v6740 = vadd.f32 0.0, %v6739
      %v6741 = vpop.f32.mrf.mxu0
      %6742 = vmatprep.mubr.f32.mxu0 %v6629
      %6743 = vmatmul.mubr.f32.gmra.mxu0 %v6627
      %v6744 = vpop.f32.mrf.mxu0
      %v6745 = vadd.f32 0.0, %v6744
      %v6746 = vpop.f32.mrf.mxu0
      %6747 = vmatprep.mubr.f32.mxu0 %v6633
      %6748 = vmatmul.mubr.f32.gmra.mxu0 %v6631
      %v6749 = vpop.f32.mrf.mxu0
      %v6750 = vadd.f32 0.0, %v6749
      %v6751 = vpop.f32.mrf.mxu0
      %6752 = vdwg.mxu0
      %v6753 = vmul.f32 %v6617, %v6617
      %v6754 = vmul.f32 %v6619, %v6619
      %v6755 = vmul.f32 %v6621, %v6621
      %v6756 = vmul.f32 %v6623, %v6623
      %v6757 = vmul.f32 %v6627, %v6627
      %v6758 = vmul.f32 %v6629, %v6629
      %v6759 = vmul.f32 %v6631, %v6631
      %v6760 = vmul.f32 %v6633, %v6633
      %6761 = vmatprep.subr.mxu0 0.0
      %6762 = vmatpush1.msra.mxu0 %v6650
      %6763 = vmatprep.subr.mxu0 0.0
      %6764 = vmatpush1.msra.mxu0 %v6649
      %6765 = vmatprep.subr.mxu0 0.0
      %6766 = vmatpush1.msra.mxu0 %v6648
      %6767 = vmatprep.subr.mxu0 0.0
      %6768 = vmatpush1.msra.mxu0 %v6647
      %6769 = vmatprep.subr.mxu0 0.0
      %6770 = vmatpush1.msra.mxu0 %v6646
      %6771 = vmatprep.subr.mxu0 0.0
      %6772 = vmatpush1.msra.mxu0 %v6645
      %6773 = vmatprep.subr.mxu0 0.0
      %6774 = vmatpush1.msra.mxu0 %v6644
      %6775 = vmatprep.subr.mxu0 0.0
      %6776 = vmatpush1.msra.mxu0 %v6643
      %6777 = vmatprep.subr.mxu0 0.0
      %6778 = vmatpush1.msra.mxu0 %v6642
      %6779 = vmatprep.subr.mxu0 0.0
      %6780 = vmatpush1.msra.mxu0 %v6641
      %6781 = vmatprep.subr.mxu0 0.0
      %6782 = vmatpush1.msra.mxu0 %v6640
      %6783 = vmatprep.subr.mxu0 0.0
      %6784 = vmatpush1.msra.mxu0 %v6639
      %6785 = vmatprep.subr.mxu0 0.0
      %6786 = vmatpush1.msra.mxu0 %v6638
      %6787 = vmatprep.subr.mxu0 0.0
      %6788 = vmatpush1.msra.mxu0 %v6637
      %6789 = vmatprep.subr.mxu0 0.0
      %6790 = vmatpush1.msra.mxu0 %v6636
      %6791 = vmatprep.subr.mxu0 0.0
      %6792 = vmatpush1.msra.mxu0 %v6635
      %6793 = vmatprep.subr.mxu0 0.0
      %6794 = vmatpush2.msra.mxu0 %v6666
      %6795 = vmatprep.subr.mxu0 0.0
      %6796 = vmatpush2.msra.mxu0 %v6665
      %6797 = vmatprep.subr.mxu0 0.0
      %6798 = vmatpush2.msra.mxu0 %v6664
      %6799 = vmatprep.subr.mxu0 0.0
      %6800 = vmatpush2.msra.mxu0 %v6663
      %6801 = vmatprep.subr.mxu0 0.0
      %6802 = vmatpush2.msra.mxu0 %v6662
      %6803 = vmatprep.subr.mxu0 0.0
      %6804 = vmatpush2.msra.mxu0 %v6661
      %6805 = vmatprep.subr.mxu0 0.0
      %6806 = vmatpush2.msra.mxu0 %v6660
      %6807 = vmatprep.subr.mxu0 0.0
      %6808 = vmatpush2.msra.mxu0 %v6659
      %6809 = vmatprep.subr.mxu0 0.0
      %6810 = vmatpush2.msra.mxu0 %v6658
      %6811 = vmatprep.subr.mxu0 0.0
      %6812 = vmatpush2.msra.mxu0 %v6657
      %6813 = vmatprep.subr.mxu0 0.0
      %6814 = vmatpush2.msra.mxu0 %v6656
      %6815 = vmatprep.subr.mxu0 0.0
      %6816 = vmatpush2.msra.mxu0 %v6655
      %6817 = vmatprep.subr.mxu0 0.0
      %6818 = vmatpush2.msra.mxu0 %v6654
      %6819 = vmatprep.subr.mxu0 0.0
      %6820 = vmatpush2.msra.mxu0 %v6653
      %6821 = vmatprep.subr.mxu0 0.0
      %6822 = vmatpush2.msra.mxu0 %v6652
      %6823 = vmatprep.subr.mxu0 0.0
      %6824 = vmatpush2.msra.mxu0 %v6651
      %6825 = vmatprep.mubr.f32.mxu0 %v6754
      %6826 = vmatmul.mubr.f32.gmra.mxu0 %v6753
      %v6827 = vpop.f32.mrf.mxu0
      %v6828 = vadd.f32 0.0, %v6827
      %v6829 = vpop.f32.mrf.mxu0
      %6830 = vmatprep.mubr.f32.mxu0 %v6756
      %6831 = vmatmul.mubr.f32.gmra.mxu0 %v6755
      %v6832 = vpop.f32.mrf.mxu0
      %v6833 = vadd.f32 0.0, %v6832
      %v6834 = vpop.f32.mrf.mxu0
      %6835 = vmatprep.mubr.f32.mxu0 %v6758
      %6836 = vmatmul.mubr.f32.gmra.mxu0 %v6757
      %v6837 = vpop.f32.mrf.mxu0
      %v6838 = vadd.f32 0.0, %v6837
      %v6839 = vpop.f32.mrf.mxu0
      %6840 = vmatprep.mubr.f32.mxu0 %v6760
      %6841 = vmatmul.mubr.f32.gmra.mxu0 %v6759
      %v6842 = vpop.f32.mrf.mxu0
      %v6843 = vadd.f32 0.0, %v6842
      %v6844 = vpop.f32.mrf.mxu0
      %6845 = vdwg.mxu0
      %vm6846 = vcmask 261120
      %v6848 = vsel %vm6846, %v6667, 0
      %6850 = vmatprep.subr.mxu0 0.0
      %6851 = vmatpush1.msra.mxu0 0.0
      %6852 = vmatprep.subr.mxu0 0.0
      %6853 = vmatpush1.msra.mxu0 0.0
      %6854 = vmatprep.subr.mxu0 0.0
      %6855 = vmatpush1.msra.mxu0 0.0
      %6856 = vmatprep.subr.mxu0 0.0
      %6857 = vmatpush1.msra.mxu0 0.0
      %6858 = vmatprep.subr.mxu0 0.0
      %6859 = vmatpush1.msra.mxu0 0.0
      %6860 = vmatprep.subr.mxu0 0.0
      %6861 = vmatpush1.msra.mxu0 0.0
      %6862 = vmatprep.subr.mxu0 0.0
      %6863 = vmatpush1.msra.mxu0 0.0
      %6864 = vmatprep.subr.mxu0 0.0
      %6865 = vmatpush1.msra.mxu0 0.0
      %6866 = vmatprep.subr.mxu0 0.0
      %6867 = vmatpush1.msra.mxu0 0.0
      %6868 = vmatprep.subr.mxu0 0.0
      %6869 = vmatpush1.msra.mxu0 0.0
      %6870 = vmatprep.subr.mxu0 0.0
      %6871 = vmatpush1.msra.mxu0 0.0
      %6872 = vmatprep.subr.mxu0 0.0
      %6873 = vmatpush1.msra.mxu0 0.0
      %6874 = vmatprep.subr.mxu0 0.0
      %6875 = vmatpush1.msra.mxu0 %v6750
      %6876 = vmatprep.subr.mxu0 0.0
      %6877 = vmatpush1.msra.mxu0 %v6745
      %6878 = vmatprep.subr.mxu0 0.0
      %6879 = vmatpush1.msra.mxu0 %v6740
      %6880 = vmatprep.subr.mxu0 0.0
      %6881 = vmatpush1.msra.mxu0 %v6735
      %6882 = vmatprep.subr.mxu0 0.0
      %6883 = vmatpush2.msra.mxu0 0.0
      %6884 = vmatprep.subr.mxu0 0.0
      %6885 = vmatpush2.msra.mxu0 0.0
      %6886 = vmatprep.subr.mxu0 0.0
      %6887 = vmatpush2.msra.mxu0 0.0
      %6888 = vmatprep.subr.mxu0 0.0
      %6889 = vmatpush2.msra.mxu0 0.0
      %6890 = vmatprep.subr.mxu0 0.0
      %6891 = vmatpush2.msra.mxu0 0.0
      %6892 = vmatprep.subr.mxu0 0.0
      %6893 = vmatpush2.msra.mxu0 0.0
      %6894 = vmatprep.subr.mxu0 0.0
      %6895 = vmatpush2.msra.mxu0 0.0
      %6896 = vmatprep.subr.mxu0 0.0
      %6897 = vmatpush2.msra.mxu0 0.0
      %6898 = vmatprep.subr.mxu0 0.0
      %6899 = vmatpush2.msra.mxu0 0.0
      %6900 = vmatprep.subr.mxu0 0.0
      %6901 = vmatpush2.msra.mxu0 0.0
      %6902 = vmatprep.subr.mxu0 0.0
      %6903 = vmatpush2.msra.mxu0 0.0
      %6904 = vmatprep.subr.mxu0 0.0
      %6905 = vmatpush2.msra.mxu0 0.0
      %6906 = vmatprep.subr.mxu0 0.0
      %6907 = vmatpush2.msra.mxu0 0.0
      %6908 = vmatprep.subr.mxu0 0.0
      %6909 = vmatpush2.msra.mxu0 0.0
      %6910 = vmatprep.subr.mxu0 0.0
      %6911 = vmatpush2.msra.mxu0 0.0
      %6912 = vmatprep.subr.mxu0 0.0
      %6913 = vmatpush2.msra.mxu0 0.0
      %6914 = vmatprep.mubr.f32.mxu0 0.0
      %6915 = vmatmul.mubr.f32.gmra.mxu0 %v6848
      %v6916 = vpop.f32.mrf.mxu0
      %v6917 = vadd.f32 0.0, %v6916
      %v6918 = vpop.f32.mrf.mxu0
      %6919 = vdwg.mxu0
      %v6920 = vmul.f32 %v6917, 0.015625
      %6921 = vmatprep.subr.mxu0 0.0
      %6922 = vmatpush1.msra.mxu0 0.0
      %6923 = vmatprep.subr.mxu0 0.0
      %6924 = vmatpush1.msra.mxu0 0.0
      %6925 = vmatprep.subr.mxu0 0.0
      %6926 = vmatpush1.msra.mxu0 0.0
      %6927 = vmatprep.subr.mxu0 0.0
      %6928 = vmatpush1.msra.mxu0 0.0
      %6929 = vmatprep.subr.mxu0 0.0
      %6930 = vmatpush1.msra.mxu0 0.0
      %6931 = vmatprep.subr.mxu0 0.0
      %6932 = vmatpush1.msra.mxu0 0.0
      %6933 = vmatprep.subr.mxu0 0.0
      %6934 = vmatpush1.msra.mxu0 0.0
      %6935 = vmatprep.subr.mxu0 0.0
      %6936 = vmatpush1.msra.mxu0 0.0
      %6937 = vmatprep.subr.mxu0 0.0
      %6938 = vmatpush1.msra.mxu0 0.0
      %6939 = vmatprep.subr.mxu0 0.0
      %6940 = vmatpush1.msra.mxu0 0.0
      %6941 = vmatprep.subr.mxu0 0.0
      %6942 = vmatpush1.msra.mxu0 0.0
      %6943 = vmatprep.subr.mxu0 0.0
      %6944 = vmatpush1.msra.mxu0 0.0
      %6945 = vmatprep.subr.mxu0 0.0
      %6946 = vmatpush1.msra.mxu0 %v6843
      %6947 = vmatprep.subr.mxu0 0.0
      %6948 = vmatpush1.msra.mxu0 %v6838
      %6949 = vmatprep.subr.mxu0 0.0
      %6950 = vmatpush1.msra.mxu0 %v6833
      %6951 = vmatprep.subr.mxu0 0.0
      %6952 = vmatpush1.msra.mxu0 %v6828
      %6953 = vmatprep.subr.mxu0 0.0
      %6954 = vmatpush2.msra.mxu0 0.0
      %6955 = vmatprep.subr.mxu0 0.0
      %6956 = vmatpush2.msra.mxu0 0.0
      %6957 = vmatprep.subr.mxu0 0.0
      %6958 = vmatpush2.msra.mxu0 0.0
      %6959 = vmatprep.subr.mxu0 0.0
      %6960 = vmatpush2.msra.mxu0 0.0
      %6961 = vmatprep.subr.mxu0 0.0
      %6962 = vmatpush2.msra.mxu0 0.0
      %6963 = vmatprep.subr.mxu0 0.0
      %6964 = vmatpush2.msra.mxu0 0.0
      %6965 = vmatprep.subr.mxu0 0.0
      %6966 = vmatpush2.msra.mxu0 0.0
      %6967 = vmatprep.subr.mxu0 0.0
      %6968 = vmatpush2.msra.mxu0 0.0
      %6969 = vmatprep.subr.mxu0 0.0
      %6970 = vmatpush2.msra.mxu0 0.0
      %6971 = vmatprep.subr.mxu0 0.0
      %6972 = vmatpush2.msra.mxu0 0.0
      %6973 = vmatprep.subr.mxu0 0.0
      %6974 = vmatpush2.msra.mxu0 0.0
      %6975 = vmatprep.subr.mxu0 0.0
      %6976 = vmatpush2.msra.mxu0 0.0
      %6977 = vmatprep.subr.mxu0 0.0
      %6978 = vmatpush2.msra.mxu0 0.0
      %6979 = vmatprep.subr.mxu0 0.0
      %6980 = vmatpush2.msra.mxu0 0.0
      %6981 = vmatprep.subr.mxu0 0.0
      %6982 = vmatpush2.msra.mxu0 0.0
      %6983 = vmatprep.subr.mxu0 0.0
      %6984 = vmatpush2.msra.mxu0 0.0
      %6985 = vmatprep.mubr.f32.mxu0 0.0
      %6986 = vmatmul.mubr.f32.gmra.mxu0 %v6848
      %v6987 = vpop.f32.mrf.mxu0
      %v6988 = vadd.f32 0.0, %v6987
      %v6989 = vpop.f32.mrf.mxu0
      %6990 = vdwg.mxu0
      %v6991 = vmul.f32 %v6988, 0.015625
      %v6992 = vmul.f32 %v6920, %v6920
      %v6993 = vsub.f32 %v6991, %v6992
      %v6994 = vmax.f32 %v6993, 0.0
      %v6995 = vadd.f32 %v6994, 1e-05
      %v6996 = vrsqrt.pop %v6995
      %v6997 = vsub.f32 0.0, %v6920
      %v6998 = vmul.f32 %v6997, %v6996
      %v6999 = vld [vmem:[%s13] sm:$0xff]
      %v7000 = vld [vmem:[%s13 + $0x8] sm:$0xff]
      %v7001 = vld [vmem:[%s13 + $0x10] sm:$0xff]
      %v7002 = vld [vmem:[%s13 + $0x18] sm:$0xff]
      %v7003 = vld [vmem:[%s13 + $0x20] sm:$0xff]
      %v7004 = vld [vmem:[%s13 + $0x28] sm:$0xff]
      %v7005 = vld [vmem:[%s13 + $0x30] sm:$0xff]
      %v7006 = vld [vmem:[%s13 + $0x38] sm:$0xff]
      %v7007 = vld [vmem:[%s15] sm:$0xff]
      %v7008 = vld [vmem:[%s15 + $0x8] sm:$0xff]
      %v7009 = vld [vmem:[%s15 + $0x10] sm:$0xff]
      %v7010 = vld [vmem:[%s15 + $0x18] sm:$0xff]
      %v7012 = vsel %vm6846, %v6996, 0
      %7014 = vmatprep.subr.mxu0 0.0
      %7015 = vmatpush1.msra.mxu0 0.0
      %7016 = vmatprep.subr.mxu0 0.0
      %7017 = vmatpush1.msra.mxu0 0.0
      %7018 = vmatprep.subr.mxu0 0.0
      %7019 = vmatpush1.msra.mxu0 0.0
      %7020 = vmatprep.subr.mxu0 0.0
      %7021 = vmatpush1.msra.mxu0 0.0
      %7022 = vmatprep.subr.mxu0 0.0
      %7023 = vmatpush1.msra.mxu0 0.0
      %7024 = vmatprep.subr.mxu0 0.0
      %7025 = vmatpush1.msra.mxu0 0.0
      %7026 = vmatprep.subr.mxu0 0.0
      %7027 = vmatpush1.msra.mxu0 0.0
      %7028 = vmatprep.subr.mxu0 0.0
      %7029 = vmatpush1.msra.mxu0 0.0
      %7030 = vmatprep.subr.mxu0 0.0
      %7031 = vmatpush1.msra.mxu0 0.0
      %7032 = vmatprep.subr.mxu0 0.0
      %7033 = vmatpush1.msra.mxu0 0.0
      %7034 = vmatprep.subr.mxu0 0.0
      %7035 = vmatpush1.msra.mxu0 0.0
      %7036 = vmatprep.subr.mxu0 0.0
      %7037 = vmatpush1.msra.mxu0 0.0
      %7038 = vmatprep.subr.mxu0 %v7006
      %7039 = vmatpush1.msra.mxu0 %v7005
      %7040 = vmatprep.subr.mxu0 %v7004
      %7041 = vmatpush1.msra.mxu0 %v7003
      %7042 = vmatprep.subr.mxu0 %v7002
      %7043 = vmatpush1.msra.mxu0 %v7001
      %7044 = vmatprep.subr.mxu0 %v7000
      %7045 = vmatpush1.msra.mxu0 %v6999
      %7046 = vmatprep.subr.mxu0 0.0
      %7047 = vmatpush2.msra.mxu0 0.0
      %7048 = vmatprep.subr.mxu0 0.0
      %7049 = vmatpush2.msra.mxu0 0.0
      %7050 = vmatprep.subr.mxu0 0.0
      %7051 = vmatpush2.msra.mxu0 0.0
      %7052 = vmatprep.subr.mxu0 0.0
      %7053 = vmatpush2.msra.mxu0 0.0
      %7054 = vmatprep.subr.mxu0 0.0
      %7055 = vmatpush2.msra.mxu0 0.0
      %7056 = vmatprep.subr.mxu0 0.0
      %7057 = vmatpush2.msra.mxu0 0.0
      %7058 = vmatprep.subr.mxu0 0.0
      %7059 = vmatpush2.msra.mxu0 0.0
      %7060 = vmatprep.subr.mxu0 0.0
      %7061 = vmatpush2.msra.mxu0 0.0
      %7062 = vmatprep.subr.mxu0 0.0
      %7063 = vmatpush2.msra.mxu0 0.0
      %7064 = vmatprep.subr.mxu0 0.0
      %7065 = vmatpush2.msra.mxu0 0.0
      %7066 = vmatprep.subr.mxu0 0.0
      %7067 = vmatpush2.msra.mxu0 0.0
      %7068 = vmatprep.subr.mxu0 0.0
      %7069 = vmatpush2.msra.mxu0 0.0
      %7070 = vmatprep.subr.mxu0 0.0
      %7071 = vmatpush2.msra.mxu0 0.0
      %7072 = vmatprep.subr.mxu0 0.0
      %7073 = vmatpush2.msra.mxu0 0.0
      %7074 = vmatprep.subr.mxu0 0.0
      %7075 = vmatpush2.msra.mxu0 0.0
      %7076 = vmatprep.subr.mxu0 0.0
      %7077 = vmatpush2.msra.mxu0 0.0
      %7078 = vmatprep.mubr.f32.mxu0 0.0
      %7079 = vmatmul.mubr.f32.gmra.mxu0 %v7012
      %v7080 = vpop.f32.mrf.mxu0
      %v7081 = vadd.f32 0.0, %v7080
      %v7082 = vpop.f32.mrf.mxu0
      %v7083 = vadd.f32 0.0, %v7082
      %7084 = vdwg.mxu0
      %v7086 = vsel %vm5020, %v7007, 0
      %v7089 = vsel %vm5020, %v7008, 0
      %v7092 = vsel %vm5020, %v7009, 0
      %v7095 = vsel %vm5020, %v7010, 0
      %v7098 = vsel %vm5045, %v7081, 0
      %v7101 = vsel %vm5045, %v7083, 0
      %7103 = vmatprep.subr.mxu0 0.0
      %7104 = vmatpush1.msra.mxu0 0.0
      %7105 = vmatprep.subr.mxu0 0.0
      %7106 = vmatpush1.msra.mxu0 0.0
      %7107 = vmatprep.subr.mxu0 0.0
      %7108 = vmatpush1.msra.mxu0 0.0
      %7109 = vmatprep.subr.mxu0 0.0
      %7110 = vmatpush1.msra.mxu0 0.0
      %7111 = vmatprep.subr.mxu0 0.0
      %7112 = vmatpush1.msra.mxu0 0.0
      %7113 = vmatprep.subr.mxu0 0.0
      %7114 = vmatpush1.msra.mxu0 0.0
      %7115 = vmatprep.subr.mxu0 0.0
      %7116 = vmatpush1.msra.mxu0 0.0
      %7117 = vmatprep.subr.mxu0 0.0
      %7118 = vmatpush1.msra.mxu0 0.0
      %7119 = vmatprep.subr.mxu0 0.0
      %7120 = vmatpush1.msra.mxu0 0.0
      %7121 = vmatprep.subr.mxu0 0.0
      %7122 = vmatpush1.msra.mxu0 0.0
      %7123 = vmatprep.subr.mxu0 0.0
      %7124 = vmatpush1.msra.mxu0 0.0
      %7125 = vmatprep.subr.mxu0 0.0
      %7126 = vmatpush1.msra.mxu0 0.0
      %7127 = vmatprep.subr.mxu0 0.0
      %7128 = vmatpush1.msra.mxu0 0.0
      %7129 = vmatprep.subr.mxu0 0.0
      %7130 = vmatpush1.msra.mxu0 0.0
      %7131 = vmatprep.subr.mxu0 0.0
      %7132 = vmatpush1.msra.mxu0 0.0
      %7133 = vmatprep.subr.mxu0 %v7101
      %7134 = vmatpush1.msra.mxu0 %v7098
      %7135 = vmatprep.subr.mxu0 0.0
      %7136 = vmatpush2.msra.mxu0 0.0
      %7137 = vmatprep.subr.mxu0 0.0
      %7138 = vmatpush2.msra.mxu0 0.0
      %7139 = vmatprep.subr.mxu0 0.0
      %7140 = vmatpush2.msra.mxu0 0.0
      %7141 = vmatprep.subr.mxu0 0.0
      %7142 = vmatpush2.msra.mxu0 0.0
      %7143 = vmatprep.subr.mxu0 0.0
      %7144 = vmatpush2.msra.mxu0 0.0
      %7145 = vmatprep.subr.mxu0 0.0
      %7146 = vmatpush2.msra.mxu0 0.0
      %7147 = vmatprep.subr.mxu0 0.0
      %7148 = vmatpush2.msra.mxu0 0.0
      %7149 = vmatprep.subr.mxu0 0.0
      %7150 = vmatpush2.msra.mxu0 0.0
      %7151 = vmatprep.subr.mxu0 0.0
      %7152 = vmatpush2.msra.mxu0 0.0
      %7153 = vmatprep.subr.mxu0 0.0
      %7154 = vmatpush2.msra.mxu0 0.0
      %7155 = vmatprep.subr.mxu0 0.0
      %7156 = vmatpush2.msra.mxu0 0.0
      %7157 = vmatprep.subr.mxu0 0.0
      %7158 = vmatpush2.msra.mxu0 0.0
      %7159 = vmatprep.subr.mxu0 0.0
      %7160 = vmatpush2.msra.mxu0 0.0
      %7161 = vmatprep.subr.mxu0 0.0
      %7162 = vmatpush2.msra.mxu0 0.0
      %7163 = vmatprep.subr.mxu0 0.0
      %7164 = vmatpush2.msra.mxu0 0.0
      %7165 = vmatprep.subr.mxu0 0.0
      %7166 = vmatpush2.msra.mxu0 0.0
      %7167 = vmatprep.mubr.f32.mxu0 0.0
      %7168 = vmatmul.mubr.f32.gmra.mxu0 %v7086
      %v7169 = vpop.f32.mrf.mxu0
      %v7170 = vadd.f32 0.0, %v7169
      %v7171 = vpop.f32.mrf.mxu0
      %v7172 = vadd.f32 0.0, %v7171
      %7173 = vmatprep.mubr.f32.mxu0 0.0
      %7174 = vmatmul.mubr.f32.gmra.mxu0 %v7089
      %v7175 = vpop.f32.mrf.mxu0
      %v7176 = vadd.f32 0.0, %v7175
      %v7177 = vpop.f32.mrf.mxu0
      %v7178 = vadd.f32 0.0, %v7177
      %7179 = vmatprep.mubr.f32.mxu0 0.0
      %7180 = vmatmul.mubr.f32.gmra.mxu0 %v7092
      %v7181 = vpop.f32.mrf.mxu0
      %v7182 = vadd.f32 0.0, %v7181
      %v7183 = vpop.f32.mrf.mxu0
      %v7184 = vadd.f32 0.0, %v7183
      %7185 = vmatprep.mubr.f32.mxu0 0.0
      %7186 = vmatmul.mubr.f32.gmra.mxu0 %v7095
      %v7187 = vpop.f32.mrf.mxu0
      %v7188 = vadd.f32 0.0, %v7187
      %v7189 = vpop.f32.mrf.mxu0
      %v7190 = vadd.f32 0.0, %v7189
      %7191 = vdwg.mxu0
      %v7193 = vsel %vm6846, %v6998, 0
      %7195 = vmatprep.subr.mxu0 0.0
      %7196 = vmatpush1.msra.mxu0 0.0
      %7197 = vmatprep.subr.mxu0 0.0
      %7198 = vmatpush1.msra.mxu0 0.0
      %7199 = vmatprep.subr.mxu0 0.0
      %7200 = vmatpush1.msra.mxu0 0.0
      %7201 = vmatprep.subr.mxu0 0.0
      %7202 = vmatpush1.msra.mxu0 0.0
      %7203 = vmatprep.subr.mxu0 0.0
      %7204 = vmatpush1.msra.mxu0 0.0
      %7205 = vmatprep.subr.mxu0 0.0
      %7206 = vmatpush1.msra.mxu0 0.0
      %7207 = vmatprep.subr.mxu0 0.0
      %7208 = vmatpush1.msra.mxu0 0.0
      %7209 = vmatprep.subr.mxu0 0.0
      %7210 = vmatpush1.msra.mxu0 0.0
      %7211 = vmatprep.subr.mxu0 0.0
      %7212 = vmatpush1.msra.mxu0 0.0
      %7213 = vmatprep.subr.mxu0 0.0
      %7214 = vmatpush1.msra.mxu0 0.0
      %7215 = vmatprep.subr.mxu0 0.0
      %7216 = vmatpush1.msra.mxu0 0.0
      %7217 = vmatprep.subr.mxu0 0.0
      %7218 = vmatpush1.msra.mxu0 0.0
      %7219 = vmatprep.subr.mxu0 %v7006
      %7220 = vmatpush1.msra.mxu0 %v7005
      %7221 = vmatprep.subr.mxu0 %v7004
      %7222 = vmatpush1.msra.mxu0 %v7003
      %7223 = vmatprep.subr.mxu0 %v7002
      %7224 = vmatpush1.msra.mxu0 %v7001
      %7225 = vmatprep.subr.mxu0 %v7000
      %7226 = vmatpush1.msra.mxu0 %v6999
      %7227 = vmatprep.subr.mxu0 0.0
      %7228 = vmatpush2.msra.mxu0 0.0
      %7229 = vmatprep.subr.mxu0 0.0
      %7230 = vmatpush2.msra.mxu0 0.0
      %7231 = vmatprep.subr.mxu0 0.0
      %7232 = vmatpush2.msra.mxu0 0.0
      %7233 = vmatprep.subr.mxu0 0.0
      %7234 = vmatpush2.msra.mxu0 0.0
      %7235 = vmatprep.subr.mxu0 0.0
      %7236 = vmatpush2.msra.mxu0 0.0
      %7237 = vmatprep.subr.mxu0 0.0
      %7238 = vmatpush2.msra.mxu0 0.0
      %7239 = vmatprep.subr.mxu0 0.0
      %7240 = vmatpush2.msra.mxu0 0.0
      %7241 = vmatprep.subr.mxu0 0.0
      %7242 = vmatpush2.msra.mxu0 0.0
      %7243 = vmatprep.subr.mxu0 0.0
      %7244 = vmatpush2.msra.mxu0 0.0
      %7245 = vmatprep.subr.mxu0 0.0
      %7246 = vmatpush2.msra.mxu0 0.0
      %7247 = vmatprep.subr.mxu0 0.0
      %7248 = vmatpush2.msra.mxu0 0.0
      %7249 = vmatprep.subr.mxu0 0.0
      %7250 = vmatpush2.msra.mxu0 0.0
      %7251 = vmatprep.subr.mxu0 0.0
      %7252 = vmatpush2.msra.mxu0 0.0
      %7253 = vmatprep.subr.mxu0 0.0
      %7254 = vmatpush2.msra.mxu0 0.0
      %7255 = vmatprep.subr.mxu0 0.0
      %7256 = vmatpush2.msra.mxu0 0.0
      %7257 = vmatprep.subr.mxu0 0.0
      %7258 = vmatpush2.msra.mxu0 0.0
      %7259 = vmatprep.mubr.f32.mxu0 0.0
      %7260 = vmatmul.mubr.f32.gmra.mxu0 %v7193
      %v7261 = vpop.f32.mrf.mxu0
      %v7262 = vadd.f32 0.0, %v7261
      %v7263 = vpop.f32.mrf.mxu0
      %v7264 = vadd.f32 0.0, %v7263
      %7265 = vdwg.mxu0
      %v7267 = vsel %vm5045, %v7262, 0
      %v7270 = vsel %vm5045, %v7264, 0
      %7272 = vmatprep.subr.mxu0 0.0
      %7273 = vmatpush1.msra.mxu0 0.0
      %7274 = vmatprep.subr.mxu0 0.0
      %7275 = vmatpush1.msra.mxu0 0.0
      %7276 = vmatprep.subr.mxu0 0.0
      %7277 = vmatpush1.msra.mxu0 0.0
      %7278 = vmatprep.subr.mxu0 0.0
      %7279 = vmatpush1.msra.mxu0 0.0
      %7280 = vmatprep.subr.mxu0 0.0
      %7281 = vmatpush1.msra.mxu0 0.0
      %7282 = vmatprep.subr.mxu0 0.0
      %7283 = vmatpush1.msra.mxu0 0.0
      %7284 = vmatprep.subr.mxu0 0.0
      %7285 = vmatpush1.msra.mxu0 0.0
      %7286 = vmatprep.subr.mxu0 0.0
      %7287 = vmatpush1.msra.mxu0 0.0
      %7288 = vmatprep.subr.mxu0 0.0
      %7289 = vmatpush1.msra.mxu0 0.0
      %7290 = vmatprep.subr.mxu0 0.0
      %7291 = vmatpush1.msra.mxu0 0.0
      %7292 = vmatprep.subr.mxu0 0.0
      %7293 = vmatpush1.msra.mxu0 0.0
      %7294 = vmatprep.subr.mxu0 0.0
      %7295 = vmatpush1.msra.mxu0 0.0
      %7296 = vmatprep.subr.mxu0 0.0
      %7297 = vmatpush1.msra.mxu0 0.0
      %7298 = vmatprep.subr.mxu0 0.0
      %7299 = vmatpush1.msra.mxu0 0.0
      %7300 = vmatprep.subr.mxu0 0.0
      %7301 = vmatpush1.msra.mxu0 0.0
      %7302 = vmatprep.subr.mxu0 %v7270
      %7303 = vmatpush1.msra.mxu0 %v7267
      %7304 = vmatprep.subr.mxu0 0.0
      %7305 = vmatpush2.msra.mxu0 0.0
      %7306 = vmatprep.subr.mxu0 0.0
      %7307 = vmatpush2.msra.mxu0 0.0
      %7308 = vmatprep.subr.mxu0 0.0
      %7309 = vmatpush2.msra.mxu0 0.0
      %7310 = vmatprep.subr.mxu0 0.0
      %7311 = vmatpush2.msra.mxu0 0.0
      %7312 = vmatprep.subr.mxu0 0.0
      %7313 = vmatpush2.msra.mxu0 0.0
      %7314 = vmatprep.subr.mxu0 0.0
      %7315 = vmatpush2.msra.mxu0 0.0
      %7316 = vmatprep.subr.mxu0 0.0
      %7317 = vmatpush2.msra.mxu0 0.0
      %7318 = vmatprep.subr.mxu0 0.0
      %7319 = vmatpush2.msra.mxu0 0.0
      %7320 = vmatprep.subr.mxu0 0.0
      %7321 = vmatpush2.msra.mxu0 0.0
      %7322 = vmatprep.subr.mxu0 0.0
      %7323 = vmatpush2.msra.mxu0 0.0
      %7324 = vmatprep.subr.mxu0 0.0
      %7325 = vmatpush2.msra.mxu0 0.0
      %7326 = vmatprep.subr.mxu0 0.0
      %7327 = vmatpush2.msra.mxu0 0.0
      %7328 = vmatprep.subr.mxu0 0.0
      %7329 = vmatpush2.msra.mxu0 0.0
      %7330 = vmatprep.subr.mxu0 0.0
      %7331 = vmatpush2.msra.mxu0 0.0
      %7332 = vmatprep.subr.mxu0 0.0
      %7333 = vmatpush2.msra.mxu0 0.0
      %7334 = vmatprep.subr.mxu0 0.0
      %7335 = vmatpush2.msra.mxu0 0.0
      %7336 = vmatprep.mubr.f32.mxu0 0.0
      %7337 = vmatmul.mubr.f32.gmra.mxu0 %v7086
      %v7338 = vpop.f32.mrf.mxu0
      %v7339 = vadd.f32 0.0, %v7338
      %v7340 = vpop.f32.mrf.mxu0
      %v7341 = vadd.f32 0.0, %v7340
      %7342 = vmatprep.mubr.f32.mxu0 0.0
      %7343 = vmatmul.mubr.f32.gmra.mxu0 %v7089
      %v7344 = vpop.f32.mrf.mxu0
      %v7345 = vadd.f32 0.0, %v7344
      %v7346 = vpop.f32.mrf.mxu0
      %v7347 = vadd.f32 0.0, %v7346
      %7348 = vmatprep.mubr.f32.mxu0 0.0
      %7349 = vmatmul.mubr.f32.gmra.mxu0 %v7092
      %v7350 = vpop.f32.mrf.mxu0
      %v7351 = vadd.f32 0.0, %v7350
      %v7352 = vpop.f32.mrf.mxu0
      %v7353 = vadd.f32 0.0, %v7352
      %7354 = vmatprep.mubr.f32.mxu0 0.0
      %7355 = vmatmul.mubr.f32.gmra.mxu0 %v7095
      %v7356 = vpop.f32.mrf.mxu0
      %v7357 = vadd.f32 0.0, %v7356
      %v7358 = vpop.f32.mrf.mxu0
      %v7359 = vadd.f32 0.0, %v7358
      %7360 = vdwg.mxu0
      %v7361 = vmul.f32 %v6617, %v7170
      %v7362 = vmul.f32 %v6619, %v7172
      %v7363 = vmul.f32 %v6621, %v7176
      %v7364 = vmul.f32 %v6623, %v7178
      %v7365 = vmul.f32 %v6627, %v7182
      %v7366 = vmul.f32 %v6629, %v7184
      %v7367 = vmul.f32 %v6631, %v7188
      %v7368 = vmul.f32 %v6633, %v7190
      %v7369 = vadd.f32 %v7361, %v7339
      %v7370 = vadd.f32 %v7362, %v7341
      %v7371 = vadd.f32 %v7363, %v7345
      %v7372 = vadd.f32 %v7364, %v7347
      %v7373 = vadd.f32 %v7365, %v7351
      %v7374 = vadd.f32 %v7366, %v7353
      %v7375 = vadd.f32 %v7367, %v7357
      %v7376 = vadd.f32 %v7368, %v7359
      %vm7377 = vcmp.gt.f32.partialorder %v7369, 0.0
      %vm7378 = vcmp.gt.f32.partialorder %v7370, 0.0
      %vm7379 = vcmp.gt.f32.partialorder %v7371, 0.0
      %vm7380 = vcmp.gt.f32.partialorder %v7372, 0.0
      %vm7381 = vcmp.gt.f32.partialorder %v7373, 0.0
      %vm7382 = vcmp.gt.f32.partialorder %v7374, 0.0
      %vm7383 = vcmp.gt.f32.partialorder %v7375, 0.0
      %vm7384 = vcmp.gt.f32.partialorder %v7376, 0.0
      %v7385 = vmul.f32 %v7369, 0.2
      %v7386 = vmul.f32 %v7370, 0.2
      %v7387 = vmul.f32 %v7371, 0.2
      %v7388 = vmul.f32 %v7372, 0.2
      %v7389 = vmul.f32 %v7373, 0.2
      %v7390 = vmul.f32 %v7374, 0.2
      %v7391 = vmul.f32 %v7375, 0.2
      %v7392 = vmul.f32 %v7376, 0.2
      %v7393 = vsel %vm7377, %v7369, %v7385
      %v7394 = vsel %vm7378, %v7370, %v7386
      %v7395 = vsel %vm7379, %v7371, %v7387
      %v7396 = vsel %vm7380, %v7372, %v7388
      %v7397 = vsel %vm7381, %v7373, %v7389
      %v7398 = vsel %vm7382, %v7374, %v7390
      %v7399 = vsel %vm7383, %v7375, %v7391
      %v7400 = vsel %vm7384, %v7376, %v7392
      %v7401 = vpack.c.bf16 %v7395, %v7393
      %v7402 = vpack.c.bf16 %v7396, %v7394
      %v7403 = vpack.c.bf16 %v7399, %v7397
      %v7404 = vpack.c.bf16 %v7400, %v7398
      %v7405 = vld [vmem:[%s16] sm:$0xf]
      %v7406 = vld [vmem:[%s16 + $0x4] sm:$0xf]
      %v7407 = vld [vmem:[%s16 + $0x8] sm:$0xf]
      %v7408 = vld [vmem:[%s16 + $0xc] sm:$0xf]
      %v7409 = vld [vmem:[%s16 + $0x10] sm:$0xf]
      %v7410 = vld [vmem:[%s16 + $0x14] sm:$0xf]
      %v7411 = vld [vmem:[%s16 + $0x18] sm:$0xf]
      %v7412 = vld [vmem:[%s16 + $0x1c] sm:$0xf]
      %v7421 = vunpack.c.l.b16 %v7405
      %v7422 = vunpack.c.l.b16 %v7406
      %v7423 = vunpack.c.l.b16 %v7407
      %v7424 = vunpack.c.l.b16 %v7408
      %v7425 = vunpack.c.l.b16 %v7409
      %v7426 = vunpack.c.l.b16 %v7410
      %v7427 = vunpack.c.l.b16 %v7411
      %v7428 = vunpack.c.l.b16 %v7412
      %v7429 = vpack.c.b16 %v7422, %v7421
      %v7430 = vpack.c.b16 %v7424, %v7423
      %v7431 = vpack.c.b16 %v7426, %v7425
      %v7432 = vpack.c.b16 %v7428, %v7427
      %v7434 = vsel %vm6846, %v7429, 0
      %v7437 = vsel %vm6846, %v7430, 0
      %v7440 = vsel %vm6846, %v7431, 0
      %v7443 = vsel %vm6846, %v7432, 0
      %7445 = vmatprep.subr.bf16.mxu0 0
      %7446 = vmatpush1.bf16.msra.mxu0 0
      %7447 = vmatprep.subr.bf16.mxu0 0
      %7448 = vmatpush1.bf16.msra.mxu0 0
      %7449 = vmatprep.subr.bf16.mxu0 0
      %7450 = vmatpush1.bf16.msra.mxu0 0
      %7451 = vmatprep.subr.bf16.mxu0 0
      %7452 = vmatpush1.bf16.msra.mxu0 0
      %7453 = vmatprep.subr.bf16.mxu0 0
      %7454 = vmatpush1.bf16.msra.mxu0 0
      %7455 = vmatprep.subr.bf16.mxu0 0
      %7456 = vmatpush1.bf16.msra.mxu0 0
      %7457 = vmatprep.subr.bf16.mxu0 %v7404
      %7458 = vmatpush1.bf16.msra.mxu0 %v7403
      %7459 = vmatprep.subr.bf16.mxu0 %v7402
      %7460 = vmatpush1.bf16.msra.mxu0 %v7401
      %7461 = vmatprep.subr.bf16.mxu0 0
      %7462 = vmatpush2.bf16.msra.mxu0 0
      %7463 = vmatprep.subr.bf16.mxu0 0
      %7464 = vmatpush2.bf16.msra.mxu0 0
      %7465 = vmatprep.subr.bf16.mxu0 0
      %7466 = vmatpush2.bf16.msra.mxu0 0
      %7467 = vmatprep.subr.bf16.mxu0 0
      %7468 = vmatpush2.bf16.msra.mxu0 0
      %7469 = vmatprep.subr.bf16.mxu0 0
      %7470 = vmatpush2.bf16.msra.mxu0 0
      %7471 = vmatprep.subr.bf16.mxu0 0
      %7472 = vmatpush2.bf16.msra.mxu0 0
      %7473 = vmatprep.subr.bf16.mxu0 0
      %7474 = vmatpush2.bf16.msra.mxu0 0
      %7475 = vmatprep.subr.bf16.mxu0 0
      %7476 = vmatpush2.bf16.msra.mxu0 0
      %7477 = vmatprep.mubr.bf16.mxu0 0
      %7478 = vmatmul.mubr.bf16.gmra.mxu0 %v7434
      %v7479 = vpop.f32.mrf.mxu0
      %v7480 = vadd.f32 0.0, %v7479
      %v7481 = vpop.f32.mrf.mxu0
      %v7482 = vadd.f32 0.0, %v7481
      %v7483 = vpop.f32.mrf.mxu0
      %v7484 = vadd.f32 0.0, %v7483
      %v7485 = vpop.f32.mrf.mxu0
      %v7486 = vadd.f32 0.0, %v7485
      %7487 = vmatprep.mubr.bf16.mxu0 0
      %7488 = vmatmul.mubr.bf16.gmra.mxu0 %v7437
      %v7489 = vpop.f32.mrf.mxu0
      %v7490 = vadd.f32 0.0, %v7489
      %v7491 = vpop.f32.mrf.mxu0
      %v7492 = vadd.f32 0.0, %v7491
      %v7493 = vpop.f32.mrf.mxu0
      %v7494 = vadd.f32 0.0, %v7493
      %v7495 = vpop.f32.mrf.mxu0
      %v7496 = vadd.f32 0.0, %v7495
      %7497 = vmatprep.mubr.bf16.mxu0 0
      %7498 = vmatmul.mubr.bf16.gmra.mxu0 %v7440
      %v7499 = vpop.f32.mrf.mxu0
      %v7500 = vadd.f32 0.0, %v7499
      %v7501 = vpop.f32.mrf.mxu0
      %v7502 = vadd.f32 0.0, %v7501
      %v7503 = vpop.f32.mrf.mxu0
      %v7504 = vadd.f32 0.0, %v7503
      %v7505 = vpop.f32.mrf.mxu0
      %v7506 = vadd.f32 0.0, %v7505
      %7507 = vmatprep.mubr.bf16.mxu0 0
      %7508 = vmatmul.mubr.bf16.gmra.mxu0 %v7443
      %v7509 = vpop.f32.mrf.mxu0
      %v7510 = vadd.f32 0.0, %v7509
      %v7511 = vpop.f32.mrf.mxu0
      %v7512 = vadd.f32 0.0, %v7511
      %v7513 = vpop.f32.mrf.mxu0
      %v7514 = vadd.f32 0.0, %v7513
      %v7515 = vpop.f32.mrf.mxu0
      %v7516 = vadd.f32 0.0, %v7515
      %7517 = vdwg.mxu0
      %v7518 = vpack.c.bf16 %v7484, %v7480
      %v7519 = vpack.c.bf16 %v7486, %v7482
      %v7520 = vpack.c.bf16 %v7494, %v7490
      %v7521 = vpack.c.bf16 %v7496, %v7492
      %v7522 = vpack.c.bf16 %v7504, %v7500
      %v7523 = vpack.c.bf16 %v7506, %v7502
      %v7524 = vpack.c.bf16 %v7514, %v7510
      %v7525 = vpack.c.bf16 %v7516, %v7512
      %v7526 = vld [vmem:[%s17] sm:$0xff]
      %v7527 = vld [vmem:[%s17 + $0x8] sm:$0xff]
      %v7528 = vld [vmem:[%s17 + $0x10] sm:$0xff]
      %v7529 = vld [vmem:[%s17 + $0x18] sm:$0xff]
      %v7530 = vld [vmem:[%s17 + $0x20] sm:$0xff]
      %v7531 = vld [vmem:[%s17 + $0x28] sm:$0xff]
      %v7532 = vld [vmem:[%s17 + $0x30] sm:$0xff]
      %v7533 = vld [vmem:[%s17 + $0x38] sm:$0xff]
      %v7534 = vld [vmem:[%s17 + $0x40] sm:$0xff]
      %v7535 = vld [vmem:[%s17 + $0x48] sm:$0xff]
      %v7536 = vld [vmem:[%s17 + $0x50] sm:$0xff]
      %v7537 = vld [vmem:[%s17 + $0x58] sm:$0xff]
      %v7538 = vld [vmem:[%s17 + $0x60] sm:$0xff]
      %v7539 = vld [vmem:[%s17 + $0x68] sm:$0xff]
      %v7540 = vld [vmem:[%s17 + $0x70] sm:$0xff]
      %v7541 = vld [vmem:[%s17 + $0x78] sm:$0xff]
      %v7542 = vld [vmem:[%s17 + $0x80] sm:$0xff]
      %v7543 = vld [vmem:[%s17 + $0x88] sm:$0xff]
      %v7544 = vld [vmem:[%s17 + $0x90] sm:$0xff]
      %v7545 = vld [vmem:[%s17 + $0x98] sm:$0xff]
      %v7546 = vld [vmem:[%s17 + $0xa0] sm:$0xff]
      %v7547 = vld [vmem:[%s17 + $0xa8] sm:$0xff]
      %v7548 = vld [vmem:[%s17 + $0xb0] sm:$0xff]
      %v7549 = vld [vmem:[%s17 + $0xb8] sm:$0xff]
      %v7550 = vld [vmem:[%s17 + $0xc0] sm:$0xff]
      %v7551 = vld [vmem:[%s17 + $0xc8] sm:$0xff]
      %v7552 = vld [vmem:[%s17 + $0xd0] sm:$0xff]
      %v7553 = vld [vmem:[%s17 + $0xd8] sm:$0xff]
      %v7554 = vld [vmem:[%s17 + $0xe0] sm:$0xff]
      %v7555 = vld [vmem:[%s17 + $0xe8] sm:$0xff]
      %v7556 = vld [vmem:[%s17 + $0xf0] sm:$0xff]
      %v7557 = vld [vmem:[%s17 + $0xf8] sm:$0xff]
      %v7558 = vld [vmem:[%s17 + $0x100] sm:$0xff]
      %v7559 = vld [vmem:[%s17 + $0x108] sm:$0xff]
      %v7560 = vld [vmem:[%s17 + $0x110] sm:$0xff]
      %v7561 = vld [vmem:[%s17 + $0x118] sm:$0xff]
      %v7562 = vld [vmem:[%s17 + $0x120] sm:$0xff]
      %v7563 = vld [vmem:[%s17 + $0x128] sm:$0xff]
      %v7564 = vld [vmem:[%s17 + $0x130] sm:$0xff]
      %v7565 = vld [vmem:[%s17 + $0x138] sm:$0xff]
      %v7566 = vld [vmem:[%s17 + $0x140] sm:$0xff]
      %v7567 = vld [vmem:[%s17 + $0x148] sm:$0xff]
      %v7568 = vld [vmem:[%s17 + $0x150] sm:$0xff]
      %v7569 = vld [vmem:[%s17 + $0x158] sm:$0xff]
      %v7570 = vld [vmem:[%s17 + $0x160] sm:$0xff]
      %v7571 = vld [vmem:[%s17 + $0x168] sm:$0xff]
      %v7572 = vld [vmem:[%s17 + $0x170] sm:$0xff]
      %v7573 = vld [vmem:[%s17 + $0x178] sm:$0xff]
      %v7574 = vld [vmem:[%s17 + $0x180] sm:$0xff]
      %v7575 = vld [vmem:[%s17 + $0x188] sm:$0xff]
      %v7576 = vld [vmem:[%s17 + $0x190] sm:$0xff]
      %v7577 = vld [vmem:[%s17 + $0x198] sm:$0xff]
      %v7578 = vld [vmem:[%s17 + $0x1a0] sm:$0xff]
      %v7579 = vld [vmem:[%s17 + $0x1a8] sm:$0xff]
      %v7580 = vld [vmem:[%s17 + $0x1b0] sm:$0xff]
      %v7581 = vld [vmem:[%s17 + $0x1b8] sm:$0xff]
      %v7582 = vld [vmem:[%s17 + $0x1c0] sm:$0xff]
      %v7583 = vld [vmem:[%s17 + $0x1c8] sm:$0xff]
      %v7584 = vld [vmem:[%s17 + $0x1d0] sm:$0xff]
      %v7585 = vld [vmem:[%s17 + $0x1d8] sm:$0xff]
      %v7586 = vld [vmem:[%s17 + $0x1e0] sm:$0xff]
      %v7587 = vld [vmem:[%s17 + $0x1e8] sm:$0xff]
      %v7588 = vld [vmem:[%s17 + $0x1f0] sm:$0xff]
      %v7589 = vld [vmem:[%s17 + $0x1f8] sm:$0xff]
      %v7590 = vld [vmem:[%s17 + $0x200] sm:$0xff]
      %v7591 = vld [vmem:[%s17 + $0x208] sm:$0xff]
      %v7592 = vld [vmem:[%s17 + $0x210] sm:$0xff]
      %v7593 = vld [vmem:[%s17 + $0x218] sm:$0xff]
      %v7594 = vld [vmem:[%s17 + $0x220] sm:$0xff]
      %v7595 = vld [vmem:[%s17 + $0x228] sm:$0xff]
      %v7596 = vld [vmem:[%s17 + $0x230] sm:$0xff]
      %v7597 = vld [vmem:[%s17 + $0x238] sm:$0xff]
      %v7598 = vld [vmem:[%s17 + $0x240] sm:$0xff]
      %v7599 = vld [vmem:[%s17 + $0x248] sm:$0xff]
      %v7600 = vld [vmem:[%s17 + $0x250] sm:$0xff]
      %v7601 = vld [vmem:[%s17 + $0x258] sm:$0xff]
      %v7602 = vld [vmem:[%s17 + $0x260] sm:$0xff]
      %v7603 = vld [vmem:[%s17 + $0x268] sm:$0xff]
      %v7604 = vld [vmem:[%s17 + $0x270] sm:$0xff]
      %v7605 = vld [vmem:[%s17 + $0x278] sm:$0xff]
      %v7606 = vld [vmem:[%s17 + $0x280] sm:$0xff]
      %v7607 = vld [vmem:[%s17 + $0x288] sm:$0xff]
      %v7608 = vld [vmem:[%s17 + $0x290] sm:$0xff]
      %v7609 = vld [vmem:[%s17 + $0x298] sm:$0xff]
      %v7610 = vld [vmem:[%s17 + $0x2a0] sm:$0xff]
      %v7611 = vld [vmem:[%s17 + $0x2a8] sm:$0xff]
      %v7612 = vld [vmem:[%s17 + $0x2b0] sm:$0xff]
      %v7613 = vld [vmem:[%s17 + $0x2b8] sm:$0xff]
      %v7614 = vld [vmem:[%s17 + $0x2c0] sm:$0xff]
      %v7615 = vld [vmem:[%s17 + $0x2c8] sm:$0xff]
      %v7616 = vld [vmem:[%s17 + $0x2d0] sm:$0xff]
      %v7617 = vld [vmem:[%s17 + $0x2d8] sm:$0xff]
      %v7618 = vld [vmem:[%s17 + $0x2e0] sm:$0xff]
      %v7619 = vld [vmem:[%s17 + $0x2e8] sm:$0xff]
      %v7620 = vld [vmem:[%s17 + $0x2f0] sm:$0xff]
      %v7621 = vld [vmem:[%s17 + $0x2f8] sm:$0xff]
      %v7622 = vld [vmem:[%s17 + $0x300] sm:$0xff]
      %v7623 = vld [vmem:[%s17 + $0x308] sm:$0xff]
      %v7624 = vld [vmem:[%s17 + $0x310] sm:$0xff]
      %v7625 = vld [vmem:[%s17 + $0x318] sm:$0xff]
      %v7626 = vld [vmem:[%s17 + $0x320] sm:$0xff]
      %v7627 = vld [vmem:[%s17 + $0x328] sm:$0xff]
      %v7628 = vld [vmem:[%s17 + $0x330] sm:$0xff]
      %v7629 = vld [vmem:[%s17 + $0x338] sm:$0xff]
      %v7630 = vld [vmem:[%s17 + $0x340] sm:$0xff]
      %v7631 = vld [vmem:[%s17 + $0x348] sm:$0xff]
      %v7632 = vld [vmem:[%s17 + $0x350] sm:$0xff]
      %v7633 = vld [vmem:[%s17 + $0x358] sm:$0xff]
      %v7634 = vld [vmem:[%s17 + $0x360] sm:$0xff]
      %v7635 = vld [vmem:[%s17 + $0x368] sm:$0xff]
      %v7636 = vld [vmem:[%s17 + $0x370] sm:$0xff]
      %v7637 = vld [vmem:[%s17 + $0x378] sm:$0xff]
      %v7638 = vld [vmem:[%s17 + $0x380] sm:$0xff]
      %v7639 = vld [vmem:[%s17 + $0x388] sm:$0xff]
      %v7640 = vld [vmem:[%s17 + $0x390] sm:$0xff]
      %v7641 = vld [vmem:[%s17 + $0x398] sm:$0xff]
      %v7642 = vld [vmem:[%s17 + $0x3a0] sm:$0xff]
      %v7643 = vld [vmem:[%s17 + $0x3a8] sm:$0xff]
      %v7644 = vld [vmem:[%s17 + $0x3b0] sm:$0xff]
      %v7645 = vld [vmem:[%s17 + $0x3b8] sm:$0xff]
      %v7646 = vld [vmem:[%s17 + $0x3c0] sm:$0xff]
      %v7647 = vld [vmem:[%s17 + $0x3c8] sm:$0xff]
      %v7648 = vld [vmem:[%s17 + $0x3d0] sm:$0xff]
      %v7649 = vld [vmem:[%s17 + $0x3d8] sm:$0xff]
      %v7650 = vld [vmem:[%s17 + $0x3e0] sm:$0xff]
      %v7651 = vld [vmem:[%s17 + $0x3e8] sm:$0xff]
      %v7652 = vld [vmem:[%s17 + $0x3f0] sm:$0xff]
      %v7653 = vld [vmem:[%s17 + $0x3f8] sm:$0xff]
      %v7782 = vunpack.c.l.b16 %v7526
      %v7783 = vunpack.c.h.b16 %v7526
      %v7784 = vunpack.c.l.b16 %v7527
      %v7785 = vunpack.c.h.b16 %v7527
      %v7786 = vunpack.c.l.b16 %v7528
      %v7787 = vunpack.c.h.b16 %v7528
      %v7788 = vunpack.c.l.b16 %v7529
      %v7789 = vunpack.c.h.b16 %v7529
      %v7790 = vunpack.c.l.b16 %v7530
      %v7791 = vunpack.c.h.b16 %v7530
      %v7792 = vunpack.c.l.b16 %v7531
      %v7793 = vunpack.c.h.b16 %v7531
      %v7794 = vunpack.c.l.b16 %v7532
      %v7795 = vunpack.c.h.b16 %v7532
      %v7796 = vunpack.c.l.b16 %v7533
      %v7797 = vunpack.c.h.b16 %v7533
      %v7798 = vunpack.c.l.b16 %v7534
      %v7799 = vunpack.c.h.b16 %v7534
      %v7800 = vunpack.c.l.b16 %v7535
      %v7801 = vunpack.c.h.b16 %v7535
      %v7802 = vunpack.c.l.b16 %v7536
      %v7803 = vunpack.c.h.b16 %v7536
      %v7804 = vunpack.c.l.b16 %v7537
      %v7805 = vunpack.c.h.b16 %v7537
      %v7806 = vunpack.c.l.b16 %v7538
      %v7807 = vunpack.c.h.b16 %v7538
      %v7808 = vunpack.c.l.b16 %v7539
      %v7809 = vunpack.c.h.b16 %v7539
      %v7810 = vunpack.c.l.b16 %v7540
      %v7811 = vunpack.c.h.b16 %v7540
      %v7812 = vunpack.c.l.b16 %v7541
      %v7813 = vunpack.c.h.b16 %v7541
      %v7814 = vunpack.c.l.b16 %v7542
      %v7815 = vunpack.c.h.b16 %v7542
      %v7816 = vunpack.c.l.b16 %v7543
      %v7817 = vunpack.c.h.b16 %v7543
      %v7818 = vunpack.c.l.b16 %v7544
      %v7819 = vunpack.c.h.b16 %v7544
      %v7820 = vunpack.c.l.b16 %v7545
      %v7821 = vunpack.c.h.b16 %v7545
      %v7822 = vunpack.c.l.b16 %v7546
      %v7823 = vunpack.c.h.b16 %v7546
      %v7824 = vunpack.c.l.b16 %v7547
      %v7825 = vunpack.c.h.b16 %v7547
      %v7826 = vunpack.c.l.b16 %v7548
      %v7827 = vunpack.c.h.b16 %v7548
      %v7828 = vunpack.c.l.b16 %v7549
      %v7829 = vunpack.c.h.b16 %v7549
      %v7830 = vunpack.c.l.b16 %v7550
      %v7831 = vunpack.c.h.b16 %v7550
      %v7832 = vunpack.c.l.b16 %v7551
      %v7833 = vunpack.c.h.b16 %v7551
      %v7834 = vunpack.c.l.b16 %v7552
      %v7835 = vunpack.c.h.b16 %v7552
      %v7836 = vunpack.c.l.b16 %v7553
      %v7837 = vunpack.c.h.b16 %v7553
      %v7838 = vunpack.c.l.b16 %v7554
      %v7839 = vunpack.c.h.b16 %v7554
      %v7840 = vunpack.c.l.b16 %v7555
      %v7841 = vunpack.c.h.b16 %v7555
      %v7842 = vunpack.c.l.b16 %v7556
      %v7843 = vunpack.c.h.b16 %v7556
      %v7844 = vunpack.c.l.b16 %v7557
      %v7845 = vunpack.c.h.b16 %v7557
      %v7846 = vunpack.c.l.b16 %v7558
      %v7847 = vunpack.c.h.b16 %v7558
      %v7848 = vunpack.c.l.b16 %v7559
      %v7849 = vunpack.c.h.b16 %v7559
      %v7850 = vunpack.c.l.b16 %v7560
      %v7851 = vunpack.c.h.b16 %v7560
      %v7852 = vunpack.c.l.b16 %v7561
      %v7853 = vunpack.c.h.b16 %v7561
      %v7854 = vunpack.c.l.b16 %v7562
      %v7855 = vunpack.c.h.b16 %v7562
      %v7856 = vunpack.c.l.b16 %v7563
      %v7857 = vunpack.c.h.b16 %v7563
      %v7858 = vunpack.c.l.b16 %v7564
      %v7859 = vunpack.c.h.b16 %v7564
      %v7860 = vunpack.c.l.b16 %v7565
      %v7861 = vunpack.c.h.b16 %v7565
      %v7862 = vunpack.c.l.b16 %v7566
      %v7863 = vunpack.c.h.b16 %v7566
      %v7864 = vunpack.c.l.b16 %v7567
      %v7865 = vunpack.c.h.b16 %v7567
      %v7866 = vunpack.c.l.b16 %v7568
      %v7867 = vunpack.c.h.b16 %v7568
      %v7868 = vunpack.c.l.b16 %v7569
      %v7869 = vunpack.c.h.b16 %v7569
      %v7870 = vunpack.c.l.b16 %v7570
      %v7871 = vunpack.c.h.b16 %v7570
      %v7872 = vunpack.c.l.b16 %v7571
      %v7873 = vunpack.c.h.b16 %v7571
      %v7874 = vunpack.c.l.b16 %v7572
      %v7875 = vunpack.c.h.b16 %v7572
      %v7876 = vunpack.c.l.b16 %v7573
      %v7877 = vunpack.c.h.b16 %v7573
      %v7878 = vunpack.c.l.b16 %v7574
      %v7879 = vunpack.c.h.b16 %v7574
      %v7880 = vunpack.c.l.b16 %v7575
      %v7881 = vunpack.c.h.b16 %v7575
      %v7882 = vunpack.c.l.b16 %v7576
      %v7883 = vunpack.c.h.b16 %v7576
      %v7884 = vunpack.c.l.b16 %v7577
      %v7885 = vunpack.c.h.b16 %v7577
      %v7886 = vunpack.c.l.b16 %v7578
      %v7887 = vunpack.c.h.b16 %v7578
      %v7888 = vunpack.c.l.b16 %v7579
      %v7889 = vunpack.c.h.b16 %v7579
      %v7890 = vunpack.c.l.b16 %v7580
      %v7891 = vunpack.c.h.b16 %v7580
      %v7892 = vunpack.c.l.b16 %v7581
      %v7893 = vunpack.c.h.b16 %v7581
      %v7894 = vunpack.c.l.b16 %v7582
      %v7895 = vunpack.c.h.b16 %v7582
      %v7896 = vunpack.c.l.b16 %v7583
      %v7897 = vunpack.c.h.b16 %v7583
      %v7898 = vunpack.c.l.b16 %v7584
      %v7899 = vunpack.c.h.b16 %v7584
      %v7900 = vunpack.c.l.b16 %v7585
      %v7901 = vunpack.c.h.b16 %v7585
      %v7902 = vunpack.c.l.b16 %v7586
      %v7903 = vunpack.c.h.b16 %v7586
      %v7904 = vunpack.c.l.b16 %v7587
      %v7905 = vunpack.c.h.b16 %v7587
      %v7906 = vunpack.c.l.b16 %v7588
      %v7907 = vunpack.c.h.b16 %v7588
      %v7908 = vunpack.c.l.b16 %v7589
      %v7909 = vunpack.c.h.b16 %v7589
      %v7910 = vunpack.c.l.b16 %v7590
      %v7911 = vunpack.c.h.b16 %v7590
      %v7912 = vunpack.c.l.b16 %v7591
      %v7913 = vunpack.c.h.b16 %v7591
      %v7914 = vunpack.c.l.b16 %v7592
      %v7915 = vunpack.c.h.b16 %v7592
      %v7916 = vunpack.c.l.b16 %v7593
      %v7917 = vunpack.c.h.b16 %v7593
      %v7918 = vunpack.c.l.b16 %v7594
      %v7919 = vunpack.c.h.b16 %v7594
      %v7920 = vunpack.c.l.b16 %v7595
      %v7921 = vunpack.c.h.b16 %v7595
      %v7922 = vunpack.c.l.b16 %v7596
      %v7923 = vunpack.c.h.b16 %v7596
      %v7924 = vunpack.c.l.b16 %v7597
      %v7925 = vunpack.c.h.b16 %v7597
      %v7926 = vunpack.c.l.b16 %v7598
      %v7927 = vunpack.c.h.b16 %v7598
      %v7928 = vunpack.c.l.b16 %v7599
      %v7929 = vunpack.c.h.b16 %v7599
      %v7930 = vunpack.c.l.b16 %v7600
      %v7931 = vunpack.c.h.b16 %v7600
      %v7932 = vunpack.c.l.b16 %v7601
      %v7933 = vunpack.c.h.b16 %v7601
      %v7934 = vunpack.c.l.b16 %v7602
      %v7935 = vunpack.c.h.b16 %v7602
      %v7936 = vunpack.c.l.b16 %v7603
      %v7937 = vunpack.c.h.b16 %v7603
      %v7938 = vunpack.c.l.b16 %v7604
      %v7939 = vunpack.c.h.b16 %v7604
      %v7940 = vunpack.c.l.b16 %v7605
      %v7941 = vunpack.c.h.b16 %v7605
      %v7942 = vunpack.c.l.b16 %v7606
      %v7943 = vunpack.c.h.b16 %v7606
      %v7944 = vunpack.c.l.b16 %v7607
      %v7945 = vunpack.c.h.b16 %v7607
      %v7946 = vunpack.c.l.b16 %v7608
      %v7947 = vunpack.c.h.b16 %v7608
      %v7948 = vunpack.c.l.b16 %v7609
      %v7949 = vunpack.c.h.b16 %v7609
      %v7950 = vunpack.c.l.b16 %v7610
      %v7951 = vunpack.c.h.b16 %v7610
      %v7952 = vunpack.c.l.b16 %v7611
      %v7953 = vunpack.c.h.b16 %v7611
      %v7954 = vunpack.c.l.b16 %v7612
      %v7955 = vunpack.c.h.b16 %v7612
      %v7956 = vunpack.c.l.b16 %v7613
      %v7957 = vunpack.c.h.b16 %v7613
      %v7958 = vunpack.c.l.b16 %v7614
      %v7959 = vunpack.c.h.b16 %v7614
      %v7960 = vunpack.c.l.b16 %v7615
      %v7961 = vunpack.c.h.b16 %v7615
      %v7962 = vunpack.c.l.b16 %v7616
      %v7963 = vunpack.c.h.b16 %v7616
      %v7964 = vunpack.c.l.b16 %v7617
      %v7965 = vunpack.c.h.b16 %v7617
      %v7966 = vunpack.c.l.b16 %v7618
      %v7967 = vunpack.c.h.b16 %v7618
      %v7968 = vunpack.c.l.b16 %v7619
      %v7969 = vunpack.c.h.b16 %v7619
      %v7970 = vunpack.c.l.b16 %v7620
      %v7971 = vunpack.c.h.b16 %v7620
      %v7972 = vunpack.c.l.b16 %v7621
      %v7973 = vunpack.c.h.b16 %v7621
      %v7974 = vunpack.c.l.b16 %v7622
      %v7975 = vunpack.c.h.b16 %v7622
      %v7976 = vunpack.c.l.b16 %v7623
      %v7977 = vunpack.c.h.b16 %v7623
      %v7978 = vunpack.c.l.b16 %v7624
      %v7979 = vunpack.c.h.b16 %v7624
      %v7980 = vunpack.c.l.b16 %v7625
      %v7981 = vunpack.c.h.b16 %v7625
      %v7982 = vunpack.c.l.b16 %v7626
      %v7983 = vunpack.c.h.b16 %v7626
      %v7984 = vunpack.c.l.b16 %v7627
      %v7985 = vunpack.c.h.b16 %v7627
      %v7986 = vunpack.c.l.b16 %v7628
      %v7987 = vunpack.c.h.b16 %v7628
      %v7988 = vunpack.c.l.b16 %v7629
      %v7989 = vunpack.c.h.b16 %v7629
      %v7990 = vunpack.c.l.b16 %v7630
      %v7991 = vunpack.c.h.b16 %v7630
      %v7992 = vunpack.c.l.b16 %v7631
      %v7993 = vunpack.c.h.b16 %v7631
      %v7994 = vunpack.c.l.b16 %v7632
      %v7995 = vunpack.c.h.b16 %v7632
      %v7996 = vunpack.c.l.b16 %v7633
      %v7997 = vunpack.c.h.b16 %v7633
      %v7998 = vunpack.c.l.b16 %v7634
      %v7999 = vunpack.c.h.b16 %v7634
      %v8000 = vunpack.c.l.b16 %v7635
      %v8001 = vunpack.c.h.b16 %v7635
      %v8002 = vunpack.c.l.b16 %v7636
      %v8003 = vunpack.c.h.b16 %v7636
      %v8004 = vunpack.c.l.b16 %v7637
      %v8005 = vunpack.c.h.b16 %v7637
      %v8006 = vunpack.c.l.b16 %v7638
      %v8007 = vunpack.c.h.b16 %v7638
      %v8008 = vunpack.c.l.b16 %v7639
      %v8009 = vunpack.c.h.b16 %v7639
      %v8010 = vunpack.c.l.b16 %v7640
      %v8011 = vunpack.c.h.b16 %v7640
      %v8012 = vunpack.c.l.b16 %v7641
      %v8013 = vunpack.c.h.b16 %v7641
      %v8014 = vunpack.c.l.b16 %v7642
      %v8015 = vunpack.c.h.b16 %v7642
      %v8016 = vunpack.c.l.b16 %v7643
      %v8017 = vunpack.c.h.b16 %v7643
      %v8018 = vunpack.c.l.b16 %v7644
      %v8019 = vunpack.c.h.b16 %v7644
      %v8020 = vunpack.c.l.b16 %v7645
      %v8021 = vunpack.c.h.b16 %v7645
      %v8022 = vunpack.c.l.b16 %v7646
      %v8023 = vunpack.c.h.b16 %v7646
      %v8024 = vunpack.c.l.b16 %v7647
      %v8025 = vunpack.c.h.b16 %v7647
      %v8026 = vunpack.c.l.b16 %v7648
      %v8027 = vunpack.c.h.b16 %v7648
      %v8028 = vunpack.c.l.b16 %v7649
      %v8029 = vunpack.c.h.b16 %v7649
      %v8030 = vunpack.c.l.b16 %v7650
      %v8031 = vunpack.c.h.b16 %v7650
      %v8032 = vunpack.c.l.b16 %v7651
      %v8033 = vunpack.c.h.b16 %v7651
      %v8034 = vunpack.c.l.b16 %v7652
      %v8035 = vunpack.c.h.b16 %v7652
      %v8036 = vunpack.c.l.b16 %v7653
      %v8037 = vunpack.c.h.b16 %v7653
      %v8038 = vpack.c.b16 %v7784, %v7782
      %v8039 = vpack.c.b16 %v7785, %v7783
      %v8040 = vpack.c.b16 %v7788, %v7786
      %v8041 = vpack.c.b16 %v7789, %v7787
      %v8042 = vpack.c.b16 %v7792, %v7790
      %v8043 = vpack.c.b16 %v7793, %v7791
      %v8044 = vpack.c.b16 %v7796, %v7794
      %v8045 = vpack.c.b16 %v7797, %v7795
      %v8046 = vpack.c.b16 %v7800, %v7798
      %v8047 = vpack.c.b16 %v7801, %v7799
      %v8048 = vpack.c.b16 %v7804, %v7802
      %v8049 = vpack.c.b16 %v7805, %v7803
      %v8050 = vpack.c.b16 %v7808, %v7806
      %v8051 = vpack.c.b16 %v7809, %v7807
      %v8052 = vpack.c.b16 %v7812, %v7810
      %v8053 = vpack.c.b16 %v7813, %v7811
      %v8054 = vpack.c.b16 %v7816, %v7814
      %v8055 = vpack.c.b16 %v7817, %v7815
      %v8056 = vpack.c.b16 %v7820, %v7818
      %v8057 = vpack.c.b16 %v7821, %v7819
      %v8058 = vpack.c.b16 %v7824, %v7822
      %v8059 = vpack.c.b16 %v7825, %v7823
      %v8060 = vpack.c.b16 %v7828, %v7826
      %v8061 = vpack.c.b16 %v7829, %v7827
      %v8062 = vpack.c.b16 %v7832, %v7830
      %v8063 = vpack.c.b16 %v7833, %v7831
      %v8064 = vpack.c.b16 %v7836, %v7834
      %v8065 = vpack.c.b16 %v7837, %v7835
      %v8066 = vpack.c.b16 %v7840, %v7838
      %v8067 = vpack.c.b16 %v7841, %v7839
      %v8068 = vpack.c.b16 %v7844, %v7842
      %v8069 = vpack.c.b16 %v7845, %v7843
      %v8070 = vpack.c.b16 %v7848, %v7846
      %v8071 = vpack.c.b16 %v7849, %v7847
      %v8072 = vpack.c.b16 %v7852, %v7850
      %v8073 = vpack.c.b16 %v7853, %v7851
      %v8074 = vpack.c.b16 %v7856, %v7854
      %v8075 = vpack.c.b16 %v7857, %v7855
      %v8076 = vpack.c.b16 %v7860, %v7858
      %v8077 = vpack.c.b16 %v7861, %v7859
      %v8078 = vpack.c.b16 %v7864, %v7862
      %v8079 = vpack.c.b16 %v7865, %v7863
      %v8080 = vpack.c.b16 %v7868, %v7866
      %v8081 = vpack.c.b16 %v7869, %v7867
      %v8082 = vpack.c.b16 %v7872, %v7870
      %v8083 = vpack.c.b16 %v7873, %v7871
      %v8084 = vpack.c.b16 %v7876, %v7874
      %v8085 = vpack.c.b16 %v7877, %v7875
      %v8086 = vpack.c.b16 %v7880, %v7878
      %v8087 = vpack.c.b16 %v7881, %v7879
      %v8088 = vpack.c.b16 %v7884, %v7882
      %v8089 = vpack.c.b16 %v7885, %v7883
      %v8090 = vpack.c.b16 %v7888, %v7886
      %v8091 = vpack.c.b16 %v7889, %v7887
      %v8092 = vpack.c.b16 %v7892, %v7890
      %v8093 = vpack.c.b16 %v7893, %v7891
      %v8094 = vpack.c.b16 %v7896, %v7894
      %v8095 = vpack.c.b16 %v7897, %v7895
      %v8096 = vpack.c.b16 %v7900, %v7898
      %v8097 = vpack.c.b16 %v7901, %v7899
      %v8098 = vpack.c.b16 %v7904, %v7902
      %v8099 = vpack.c.b16 %v7905, %v7903
      %v8100 = vpack.c.b16 %v7908, %v7906
      %v8101 = vpack.c.b16 %v7909, %v7907
      %v8102 = vpack.c.b16 %v7912, %v7910
      %v8103 = vpack.c.b16 %v7913, %v7911
      %v8104 = vpack.c.b16 %v7916, %v7914
      %v8105 = vpack.c.b16 %v7917, %v7915
      %v8106 = vpack.c.b16 %v7920, %v7918
      %v8107 = vpack.c.b16 %v7921, %v7919
      %v8108 = vpack.c.b16 %v7924, %v7922
      %v8109 = vpack.c.b16 %v7925, %v7923
      %v8110 = vpack.c.b16 %v7928, %v7926
      %v8111 = vpack.c.b16 %v7929, %v7927
      %v8112 = vpack.c.b16 %v7932, %v7930
      %v8113 = vpack.c.b16 %v7933, %v7931
      %v8114 = vpack.c.b16 %v7936, %v7934
      %v8115 = vpack.c.b16 %v7937, %v7935
      %v8116 = vpack.c.b16 %v7940, %v7938
      %v8117 = vpack.c.b16 %v7941, %v7939
      %v8118 = vpack.c.b16 %v7944, %v7942
      %v8119 = vpack.c.b16 %v7945, %v7943
      %v8120 = vpack.c.b16 %v7948, %v7946
      %v8121 = vpack.c.b16 %v7949, %v7947
      %v8122 = vpack.c.b16 %v7952, %v7950
      %v8123 = vpack.c.b16 %v7953, %v7951
      %v8124 = vpack.c.b16 %v7956, %v7954
      %v8125 = vpack.c.b16 %v7957, %v7955
      %v8126 = vpack.c.b16 %v7960, %v7958
      %v8127 = vpack.c.b16 %v7961, %v7959
      %v8128 = vpack.c.b16 %v7964, %v7962
      %v8129 = vpack.c.b16 %v7965, %v7963
      %v8130 = vpack.c.b16 %v7968, %v7966
      %v8131 = vpack.c.b16 %v7969, %v7967
      %v8132 = vpack.c.b16 %v7972, %v7970
      %v8133 = vpack.c.b16 %v7973, %v7971
      %v8134 = vpack.c.b16 %v7976, %v7974
      %v8135 = vpack.c.b16 %v7977, %v7975
      %v8136 = vpack.c.b16 %v7980, %v7978
      %v8137 = vpack.c.b16 %v7981, %v7979
      %v8138 = vpack.c.b16 %v7984, %v7982
      %v8139 = vpack.c.b16 %v7985, %v7983
      %v8140 = vpack.c.b16 %v7988, %v7986
      %v8141 = vpack.c.b16 %v7989, %v7987
      %v8142 = vpack.c.b16 %v7992, %v7990
      %v8143 = vpack.c.b16 %v7993, %v7991
      %v8144 = vpack.c.b16 %v7996, %v7994
      %v8145 = vpack.c.b16 %v7997, %v7995
      %v8146 = vpack.c.b16 %v8000, %v7998
      %v8147 = vpack.c.b16 %v8001, %v7999
      %v8148 = vpack.c.b16 %v8004, %v8002
      %v8149 = vpack.c.b16 %v8005, %v8003
      %v8150 = vpack.c.b16 %v8008, %v8006
      %v8151 = vpack.c.b16 %v8009, %v8007
      %v8152 = vpack.c.b16 %v8012, %v8010
      %v8153 = vpack.c.b16 %v8013, %v8011
      %v8154 = vpack.c.b16 %v8016, %v8014
      %v8155 = vpack.c.b16 %v8017, %v8015
      %v8156 = vpack.c.b16 %v8020, %v8018
      %v8157 = vpack.c.b16 %v8021, %v8019
      %v8158 = vpack.c.b16 %v8024, %v8022
      %v8159 = vpack.c.b16 %v8025, %v8023
      %v8160 = vpack.c.b16 %v8028, %v8026
      %v8161 = vpack.c.b16 %v8029, %v8027
      %v8162 = vpack.c.b16 %v8032, %v8030
      %v8163 = vpack.c.b16 %v8033, %v8031
      %v8164 = vpack.c.b16 %v8036, %v8034
      %v8165 = vpack.c.b16 %v8037, %v8035
      %8294 = vmatprep.subr.bf16.mxu0 %v8053
      %8295 = vmatpush1.bf16.msra.mxu0 %v8052
      %8296 = vmatprep.subr.bf16.mxu0 %v8051
      %8297 = vmatpush1.bf16.msra.mxu0 %v8050
      %8298 = vmatprep.subr.bf16.mxu0 %v8049
      %8299 = vmatpush1.bf16.msra.mxu0 %v8048
      %8300 = vmatprep.subr.bf16.mxu0 %v8047
      %8301 = vmatpush1.bf16.msra.mxu0 %v8046
      %8302 = vmatprep.subr.bf16.mxu0 %v8045
      %8303 = vmatpush1.bf16.msra.mxu0 %v8044
      %8304 = vmatprep.subr.bf16.mxu0 %v8043
      %8305 = vmatpush1.bf16.msra.mxu0 %v8042
      %8306 = vmatprep.subr.bf16.mxu0 %v8041
      %8307 = vmatpush1.bf16.msra.mxu0 %v8040
      %8308 = vmatprep.subr.bf16.mxu0 %v8039
      %8309 = vmatpush1.bf16.msra.mxu0 %v8038
      %8310 = vmatprep.subr.bf16.mxu0 %v8069
      %8311 = vmatpush2.bf16.msra.mxu0 %v8068
      %8312 = vmatprep.subr.bf16.mxu0 %v8067
      %8313 = vmatpush2.bf16.msra.mxu0 %v8066
      %8314 = vmatprep.subr.bf16.mxu0 %v8065
      %8315 = vmatpush2.bf16.msra.mxu0 %v8064
      %8316 = vmatprep.subr.bf16.mxu0 %v8063
      %8317 = vmatpush2.bf16.msra.mxu0 %v8062
      %8318 = vmatprep.subr.bf16.mxu0 %v8061
      %8319 = vmatpush2.bf16.msra.mxu0 %v8060
      %8320 = vmatprep.subr.bf16.mxu0 %v8059
      %8321 = vmatpush2.bf16.msra.mxu0 %v8058
      %8322 = vmatprep.subr.bf16.mxu0 %v8057
      %8323 = vmatpush2.bf16.msra.mxu0 %v8056
      %8324 = vmatprep.subr.bf16.mxu0 %v8055
      %8325 = vmatpush2.bf16.msra.mxu0 %v8054
      %8326 = vmatprep.mubr.bf16.mxu0 %v7519
      %8327 = vmatmul.mubr.bf16.gmra.mxu0 %v7518
      %v8328 = vpop.f32.mrf.mxu0
      %v8329 = vadd.f32 0.0, %v8328
      %v8330 = vpop.f32.mrf.mxu0
      %v8331 = vadd.f32 0.0, %v8330
      %v8332 = vpop.f32.mrf.mxu0
      %v8333 = vadd.f32 0.0, %v8332
      %v8334 = vpop.f32.mrf.mxu0
      %v8335 = vadd.f32 0.0, %v8334
      %8336 = vdwg.mxu0
      %8337 = vmatprep.subr.bf16.mxu0 %v8085
      %8338 = vmatpush1.bf16.msra.mxu0 %v8084
      %8339 = vmatprep.subr.bf16.mxu0 %v8083
      %8340 = vmatpush1.bf16.msra.mxu0 %v8082
      %8341 = vmatprep.subr.bf16.mxu0 %v8081
      %8342 = vmatpush1.bf16.msra.mxu0 %v8080
      %8343 = vmatprep.subr.bf16.mxu0 %v8079
      %8344 = vmatpush1.bf16.msra.mxu0 %v8078
      %8345 = vmatprep.subr.bf16.mxu0 %v8077
      %8346 = vmatpush1.bf16.msra.mxu0 %v8076
      %8347 = vmatprep.subr.bf16.mxu0 %v8075
      %8348 = vmatpush1.bf16.msra.mxu0 %v8074
      %8349 = vmatprep.subr.bf16.mxu0 %v8073
      %8350 = vmatpush1.bf16.msra.mxu0 %v8072
      %8351 = vmatprep.subr.bf16.mxu0 %v8071
      %8352 = vmatpush1.bf16.msra.mxu0 %v8070
      %8353 = vmatprep.subr.bf16.mxu0 %v8101
      %8354 = vmatpush2.bf16.msra.mxu0 %v8100
      %8355 = vmatprep.subr.bf16.mxu0 %v8099
      %8356 = vmatpush2.bf16.msra.mxu0 %v8098
      %8357 = vmatprep.subr.bf16.mxu0 %v8097
      %8358 = vmatpush2.bf16.msra.mxu0 %v8096
      %8359 = vmatprep.subr.bf16.mxu0 %v8095
      %8360 = vmatpush2.bf16.msra.mxu0 %v8094
      %8361 = vmatprep.subr.bf16.mxu0 %v8093
      %8362 = vmatpush2.bf16.msra.mxu0 %v8092
      %8363 = vmatprep.subr.bf16.mxu0 %v8091
      %8364 = vmatpush2.bf16.msra.mxu0 %v8090
      %8365 = vmatprep.subr.bf16.mxu0 %v8089
      %8366 = vmatpush2.bf16.msra.mxu0 %v8088
      %8367 = vmatprep.subr.bf16.mxu0 %v8087
      %8368 = vmatpush2.bf16.msra.mxu0 %v8086
      %8369 = vmatprep.mubr.bf16.mxu0 %v7521
      %8370 = vmatmul.mubr.bf16.gmra.mxu0 %v7520
      %v8371 = vpop.f32.mrf.mxu0
      %v8372 = vadd.f32 %v8329, %v8371
      %v8373 = vpop.f32.mrf.mxu0
      %v8374 = vadd.f32 %v8331, %v8373
      %v8375 = vpop.f32.mrf.mxu0
      %v8376 = vadd.f32 %v8333, %v8375
      %v8377 = vpop.f32.mrf.mxu0
      %v8378 = vadd.f32 %v8335, %v8377
      %8379 = vdwg.mxu0
      %8380 = vmatprep.subr.bf16.mxu0 %v8117
      %8381 = vmatpush1.bf16.msra.mxu0 %v8116
      %8382 = vmatprep.subr.bf16.mxu0 %v8115
      %8383 = vmatpush1.bf16.msra.mxu0 %v8114
      %8384 = vmatprep.subr.bf16.mxu0 %v8113
      %8385 = vmatpush1.bf16.msra.mxu0 %v8112
      %8386 = vmatprep.subr.bf16.mxu0 %v8111
      %8387 = vmatpush1.bf16.msra.mxu0 %v8110
      %8388 = vmatprep.subr.bf16.mxu0 %v8109
      %8389 = vmatpush1.bf16.msra.mxu0 %v8108
      %8390 = vmatprep.subr.bf16.mxu0 %v8107
      %8391 = vmatpush1.bf16.msra.mxu0 %v8106
      %8392 = vmatprep.subr.bf16.mxu0 %v8105
      %8393 = vmatpush1.bf16.msra.mxu0 %v8104
      %8394 = vmatprep.subr.bf16.mxu0 %v8103
      %8395 = vmatpush1.bf16.msra.mxu0 %v8102
      %8396 = vmatprep.subr.bf16.mxu0 %v8133
      %8397 = vmatpush2.bf16.msra.mxu0 %v8132
      %8398 = vmatprep.subr.bf16.mxu0 %v8131
      %8399 = vmatpush2.bf16.msra.mxu0 %v8130
      %8400 = vmatprep.subr.bf16.mxu0 %v8129
      %8401 = vmatpush2.bf16.msra.mxu0 %v8128
      %8402 = vmatprep.subr.bf16.mxu0 %v8127
      %8403 = vmatpush2.bf16.msra.mxu0 %v8126
      %8404 = vmatprep.subr.bf16.mxu0 %v8125
      %8405 = vmatpush2.bf16.msra.mxu0 %v8124
      %8406 = vmatprep.subr.bf16.mxu0 %v8123
      %8407 = vmatpush2.bf16.msra.mxu0 %v8122
      %8408 = vmatprep.subr.bf16.mxu0 %v8121
      %8409 = vmatpush2.bf16.msra.mxu0 %v8120
      %8410 = vmatprep.subr.bf16.mxu0 %v8119
      %8411 = vmatpush2.bf16.msra.mxu0 %v8118
      %8412 = vmatprep.mubr.bf16.mxu0 %v7523
      %8413 = vmatmul.mubr.bf16.gmra.mxu0 %v7522
      %v8414 = vpop.f32.mrf.mxu0
      %v8415 = vadd.f32 %v8372, %v8414
      %v8416 = vpop.f32.mrf.mxu0
      %v8417 = vadd.f32 %v8374, %v8416
      %v8418 = vpop.f32.mrf.mxu0
      %v8419 = vadd.f32 %v8376, %v8418
      %v8420 = vpop.f32.mrf.mxu0
      %v8421 = vadd.f32 %v8378, %v8420
      %8422 = vdwg.mxu0
      %8423 = vmatprep.subr.bf16.mxu0 %v8149
      %8424 = vmatpush1.bf16.msra.mxu0 %v8148
      %8425 = vmatprep.subr.bf16.mxu0 %v8147
      %8426 = vmatpush1.bf16.msra.mxu0 %v8146
      %8427 = vmatprep.subr.bf16.mxu0 %v8145
      %8428 = vmatpush1.bf16.msra.mxu0 %v8144
      %8429 = vmatprep.subr.bf16.mxu0 %v8143
      %8430 = vmatpush1.bf16.msra.mxu0 %v8142
      %8431 = vmatprep.subr.bf16.mxu0 %v8141
      %8432 = vmatpush1.bf16.msra.mxu0 %v8140
      %8433 = vmatprep.subr.bf16.mxu0 %v8139
      %8434 = vmatpush1.bf16.msra.mxu0 %v8138
      %8435 = vmatprep.subr.bf16.mxu0 %v8137
      %8436 = vmatpush1.bf16.msra.mxu0 %v8136
      %8437 = vmatprep.subr.bf16.mxu0 %v8135
      %8438 = vmatpush1.bf16.msra.mxu0 %v8134
      %8439 = vmatprep.subr.bf16.mxu0 %v8165
      %8440 = vmatpush2.bf16.msra.mxu0 %v8164
      %8441 = vmatprep.subr.bf16.mxu0 %v8163
      %8442 = vmatpush2.bf16.msra.mxu0 %v8162
      %8443 = vmatprep.subr.bf16.mxu0 %v8161
      %8444 = vmatpush2.bf16.msra.mxu0 %v8160
      %8445 = vmatprep.subr.bf16.mxu0 %v8159
      %8446 = vmatpush2.bf16.msra.mxu0 %v8158
      %8447 = vmatprep.subr.bf16.mxu0 %v8157
      %8448 = vmatpush2.bf16.msra.mxu0 %v8156
      %8449 = vmatprep.subr.bf16.mxu0 %v8155
      %8450 = vmatpush2.bf16.msra.mxu0 %v8154
      %8451 = vmatprep.subr.bf16.mxu0 %v8153
      %8452 = vmatpush2.bf16.msra.mxu0 %v8152
      %8453 = vmatprep.subr.bf16.mxu0 %v8151
      %8454 = vmatpush2.bf16.msra.mxu0 %v8150
      %8455 = vmatprep.mubr.bf16.mxu0 %v7525
      %8456 = vmatmul.mubr.bf16.gmra.mxu0 %v7524
      %v8457 = vpop.f32.mrf.mxu0
      %v8458 = vadd.f32 %v8415, %v8457
      %v8459 = vpop.f32.mrf.mxu0
      %v8460 = vadd.f32 %v8417, %v8459
      %v8461 = vpop.f32.mrf.mxu0
      %v8462 = vadd.f32 %v8419, %v8461
      %v8463 = vpop.f32.mrf.mxu0
      %v8464 = vadd.f32 %v8421, %v8463
      %8465 = vdwg.mxu0
      %v8466 = vld [vmem:[%s18] sm:$0xff]
      %v8467 = vld [vmem:[%s18 + $0x8] sm:$0xff]
      %v8468 = vld [vmem:[%s18 + $0x10] sm:$0xff]
      %v8469 = vld [vmem:[%s18 + $0x18] sm:$0xff]
      %v8470 = vld [vmem:[%s18 + $0x20] sm:$0xff]
      %v8471 = vld [vmem:[%s18 + $0x28] sm:$0xff]
      %v8472 = vld [vmem:[%s18 + $0x30] sm:$0xff]
      %v8473 = vld [vmem:[%s18 + $0x38] sm:$0xff]
      %v8474 = vld [vmem:[%s18 + $0x40] sm:$0xff]
      %v8475 = vld [vmem:[%s18 + $0x48] sm:$0xff]
      %v8476 = vld [vmem:[%s18 + $0x50] sm:$0xff]
      %v8477 = vld [vmem:[%s18 + $0x58] sm:$0xff]
      %v8478 = vld [vmem:[%s18 + $0x60] sm:$0xff]
      %v8479 = vld [vmem:[%s18 + $0x68] sm:$0xff]
      %v8480 = vld [vmem:[%s18 + $0x70] sm:$0xff]
      %v8481 = vld [vmem:[%s18 + $0x78] sm:$0xff]
      %v8482 = vld [vmem:[%s18 + $0x80] sm:$0xff]
      %v8483 = vld [vmem:[%s18 + $0x88] sm:$0xff]
      %v8484 = vld [vmem:[%s18 + $0x90] sm:$0xff]
      %v8485 = vld [vmem:[%s18 + $0x98] sm:$0xff]
      %v8486 = vld [vmem:[%s18 + $0xa0] sm:$0xff]
      %v8487 = vld [vmem:[%s18 + $0xa8] sm:$0xff]
      %v8488 = vld [vmem:[%s18 + $0xb0] sm:$0xff]
      %v8489 = vld [vmem:[%s18 + $0xb8] sm:$0xff]
      %v8490 = vld [vmem:[%s18 + $0xc0] sm:$0xff]
      %v8491 = vld [vmem:[%s18 + $0xc8] sm:$0xff]
      %v8492 = vld [vmem:[%s18 + $0xd0] sm:$0xff]
      %v8493 = vld [vmem:[%s18 + $0xd8] sm:$0xff]
      %v8494 = vld [vmem:[%s18 + $0xe0] sm:$0xff]
      %v8495 = vld [vmem:[%s18 + $0xe8] sm:$0xff]
      %v8496 = vld [vmem:[%s18 + $0xf0] sm:$0xff]
      %v8497 = vld [vmem:[%s18 + $0xf8] sm:$0xff]
      %v8498 = vld [vmem:[%s20] sm:$0xf]
      %8499 = vmatprep.subr.mxu0 0.0
      %8500 = vmatpush1.msra.mxu0 %v8481
      %8501 = vmatprep.subr.mxu0 0.0
      %8502 = vmatpush1.msra.mxu0 %v8480
      %8503 = vmatprep.subr.mxu0 0.0
      %8504 = vmatpush1.msra.mxu0 %v8479
      %8505 = vmatprep.subr.mxu0 0.0
      %8506 = vmatpush1.msra.mxu0 %v8478
      %8507 = vmatprep.subr.mxu0 0.0
      %8508 = vmatpush1.msra.mxu0 %v8477
      %8509 = vmatprep.subr.mxu0 0.0
      %8510 = vmatpush1.msra.mxu0 %v8476
      %8511 = vmatprep.subr.mxu0 0.0
      %8512 = vmatpush1.msra.mxu0 %v8475
      %8513 = vmatprep.subr.mxu0 0.0
      %8514 = vmatpush1.msra.mxu0 %v8474
      %8515 = vmatprep.subr.mxu0 0.0
      %8516 = vmatpush1.msra.mxu0 %v8473
      %8517 = vmatprep.subr.mxu0 0.0
      %8518 = vmatpush1.msra.mxu0 %v8472
      %8519 = vmatprep.subr.mxu0 0.0
      %8520 = vmatpush1.msra.mxu0 %v8471
      %8521 = vmatprep.subr.mxu0 0.0
      %8522 = vmatpush1.msra.mxu0 %v8470
      %8523 = vmatprep.subr.mxu0 0.0
      %8524 = vmatpush1.msra.mxu0 %v8469
      %8525 = vmatprep.subr.mxu0 0.0
      %8526 = vmatpush1.msra.mxu0 %v8468
      %8527 = vmatprep.subr.mxu0 0.0
      %8528 = vmatpush1.msra.mxu0 %v8467
      %8529 = vmatprep.subr.mxu0 0.0
      %8530 = vmatpush1.msra.mxu0 %v8466
      %8531 = vmatprep.subr.mxu0 0.0
      %8532 = vmatpush2.msra.mxu0 %v8497
      %8533 = vmatprep.subr.mxu0 0.0
      %8534 = vmatpush2.msra.mxu0 %v8496
      %8535 = vmatprep.subr.mxu0 0.0
      %8536 = vmatpush2.msra.mxu0 %v8495
      %8537 = vmatprep.subr.mxu0 0.0
      %8538 = vmatpush2.msra.mxu0 %v8494
      %8539 = vmatprep.subr.mxu0 0.0
      %8540 = vmatpush2.msra.mxu0 %v8493
      %8541 = vmatprep.subr.mxu0 0.0
      %8542 = vmatpush2.msra.mxu0 %v8492
      %8543 = vmatprep.subr.mxu0 0.0
      %8544 = vmatpush2.msra.mxu0 %v8491
      %8545 = vmatprep.subr.mxu0 0.0
      %8546 = vmatpush2.msra.mxu0 %v8490
      %8547 = vmatprep.subr.mxu0 0.0
      %8548 = vmatpush2.msra.mxu0 %v8489
      %8549 = vmatprep.subr.mxu0 0.0
      %8550 = vmatpush2.msra.mxu0 %v8488
      %8551 = vmatprep.subr.mxu0 0.0
      %8552 = vmatpush2.msra.mxu0 %v8487
      %8553 = vmatprep.subr.mxu0 0.0
      %8554 = vmatpush2.msra.mxu0 %v8486
      %8555 = vmatprep.subr.mxu0 0.0
      %8556 = vmatpush2.msra.mxu0 %v8485
      %8557 = vmatprep.subr.mxu0 0.0
      %8558 = vmatpush2.msra.mxu0 %v8484
      %8559 = vmatprep.subr.mxu0 0.0
      %8560 = vmatpush2.msra.mxu0 %v8483
      %8561 = vmatprep.subr.mxu0 0.0
      %8562 = vmatpush2.msra.mxu0 %v8482
      %8563 = vmatprep.mubr.f32.mxu0 %v8460
      %8564 = vmatmul.mubr.f32.gmra.mxu0 %v8458
      %v8565 = vpop.f32.mrf.mxu0
      %v8566 = vadd.f32 0.0, %v8565
      %v8567 = vpop.f32.mrf.mxu0
      %8568 = vmatprep.mubr.f32.mxu0 %v8464
      %8569 = vmatmul.mubr.f32.gmra.mxu0 %v8462
      %v8570 = vpop.f32.mrf.mxu0
      %v8571 = vadd.f32 0.0, %v8570
      %v8572 = vpop.f32.mrf.mxu0
      %8573 = vdwg.mxu0
      %v8574 = vmul.f32 %v8458, %v8458
      %v8575 = vmul.f32 %v8460, %v8460
      %v8576 = vmul.f32 %v8462, %v8462
      %v8577 = vmul.f32 %v8464, %v8464
      %8578 = vmatprep.subr.mxu0 0.0
      %8579 = vmatpush1.msra.mxu0 %v8481
      %8580 = vmatprep.subr.mxu0 0.0
      %8581 = vmatpush1.msra.mxu0 %v8480
      %8582 = vmatprep.subr.mxu0 0.0
      %8583 = vmatpush1.msra.mxu0 %v8479
      %8584 = vmatprep.subr.mxu0 0.0
      %8585 = vmatpush1.msra.mxu0 %v8478
      %8586 = vmatprep.subr.mxu0 0.0
      %8587 = vmatpush1.msra.mxu0 %v8477
      %8588 = vmatprep.subr.mxu0 0.0
      %8589 = vmatpush1.msra.mxu0 %v8476
      %8590 = vmatprep.subr.mxu0 0.0
      %8591 = vmatpush1.msra.mxu0 %v8475
      %8592 = vmatprep.subr.mxu0 0.0
      %8593 = vmatpush1.msra.mxu0 %v8474
      %8594 = vmatprep.subr.mxu0 0.0
      %8595 = vmatpush1.msra.mxu0 %v8473
      %8596 = vmatprep.subr.mxu0 0.0
      %8597 = vmatpush1.msra.mxu0 %v8472
      %8598 = vmatprep.subr.mxu0 0.0
      %8599 = vmatpush1.msra.mxu0 %v8471
      %8600 = vmatprep.subr.mxu0 0.0
      %8601 = vmatpush1.msra.mxu0 %v8470
      %8602 = vmatprep.subr.mxu0 0.0
      %8603 = vmatpush1.msra.mxu0 %v8469
      %8604 = vmatprep.subr.mxu0 0.0
      %8605 = vmatpush1.msra.mxu0 %v8468
      %8606 = vmatprep.subr.mxu0 0.0
      %8607 = vmatpush1.msra.mxu0 %v8467
      %8608 = vmatprep.subr.mxu0 0.0
      %8609 = vmatpush1.msra.mxu0 %v8466
      %8610 = vmatprep.subr.mxu0 0.0
      %8611 = vmatpush2.msra.mxu0 %v8497
      %8612 = vmatprep.subr.mxu0 0.0
      %8613 = vmatpush2.msra.mxu0 %v8496
      %8614 = vmatprep.subr.mxu0 0.0
      %8615 = vmatpush2.msra.mxu0 %v8495
      %8616 = vmatprep.subr.mxu0 0.0
      %8617 = vmatpush2.msra.mxu0 %v8494
      %8618 = vmatprep.subr.mxu0 0.0
      %8619 = vmatpush2.msra.mxu0 %v8493
      %8620 = vmatprep.subr.mxu0 0.0
      %8621 = vmatpush2.msra.mxu0 %v8492
      %8622 = vmatprep.subr.mxu0 0.0
      %8623 = vmatpush2.msra.mxu0 %v8491
      %8624 = vmatprep.subr.mxu0 0.0
      %8625 = vmatpush2.msra.mxu0 %v8490
      %8626 = vmatprep.subr.mxu0 0.0
      %8627 = vmatpush2.msra.mxu0 %v8489
      %8628 = vmatprep.subr.mxu0 0.0
      %8629 = vmatpush2.msra.mxu0 %v8488
      %8630 = vmatprep.subr.mxu0 0.0
      %8631 = vmatpush2.msra.mxu0 %v8487
      %8632 = vmatprep.subr.mxu0 0.0
      %8633 = vmatpush2.msra.mxu0 %v8486
      %8634 = vmatprep.subr.mxu0 0.0
      %8635 = vmatpush2.msra.mxu0 %v8485
      %8636 = vmatprep.subr.mxu0 0.0
      %8637 = vmatpush2.msra.mxu0 %v8484
      %8638 = vmatprep.subr.mxu0 0.0
      %8639 = vmatpush2.msra.mxu0 %v8483
      %8640 = vmatprep.subr.mxu0 0.0
      %8641 = vmatpush2.msra.mxu0 %v8482
      %8642 = vmatprep.mubr.f32.mxu0 %v8575
      %8643 = vmatmul.mubr.f32.gmra.mxu0 %v8574
      %v8644 = vpop.f32.mrf.mxu0
      %v8645 = vadd.f32 0.0, %v8644
      %v8646 = vpop.f32.mrf.mxu0
      %8647 = vmatprep.mubr.f32.mxu0 %v8577
      %8648 = vmatmul.mubr.f32.gmra.mxu0 %v8576
      %v8649 = vpop.f32.mrf.mxu0
      %v8650 = vadd.f32 0.0, %v8649
      %v8651 = vpop.f32.mrf.mxu0
      %8652 = vdwg.mxu0
      %v8654 = vsel %vm4945, %v8498, 0
      %8656 = vmatprep.subr.mxu0 0.0
      %8657 = vmatpush1.msra.mxu0 0.0
      %8658 = vmatprep.subr.mxu0 0.0
      %8659 = vmatpush1.msra.mxu0 0.0
      %8660 = vmatprep.subr.mxu0 0.0
      %8661 = vmatpush1.msra.mxu0 0.0
      %8662 = vmatprep.subr.mxu0 0.0
      %8663 = vmatpush1.msra.mxu0 0.0
      %8664 = vmatprep.subr.mxu0 0.0
      %8665 = vmatpush1.msra.mxu0 0.0
      %8666 = vmatprep.subr.mxu0 0.0
      %8667 = vmatpush1.msra.mxu0 0.0
      %8668 = vmatprep.subr.mxu0 0.0
      %8669 = vmatpush1.msra.mxu0 0.0
      %8670 = vmatprep.subr.mxu0 0.0
      %8671 = vmatpush1.msra.mxu0 0.0
      %8672 = vmatprep.subr.mxu0 0.0
      %8673 = vmatpush1.msra.mxu0 0.0
      %8674 = vmatprep.subr.mxu0 0.0
      %8675 = vmatpush1.msra.mxu0 0.0
      %8676 = vmatprep.subr.mxu0 0.0
      %8677 = vmatpush1.msra.mxu0 0.0
      %8678 = vmatprep.subr.mxu0 0.0
      %8679 = vmatpush1.msra.mxu0 0.0
      %8680 = vmatprep.subr.mxu0 0.0
      %8681 = vmatpush1.msra.mxu0 0.0
      %8682 = vmatprep.subr.mxu0 0.0
      %8683 = vmatpush1.msra.mxu0 0.0
      %8684 = vmatprep.subr.mxu0 0.0
      %8685 = vmatpush1.msra.mxu0 %v8571
      %8686 = vmatprep.subr.mxu0 0.0
      %8687 = vmatpush1.msra.mxu0 %v8566
      %8688 = vmatprep.subr.mxu0 0.0
      %8689 = vmatpush2.msra.mxu0 0.0
      %8690 = vmatprep.subr.mxu0 0.0
      %8691 = vmatpush2.msra.mxu0 0.0
      %8692 = vmatprep.subr.mxu0 0.0
      %8693 = vmatpush2.msra.mxu0 0.0
      %8694 = vmatprep.subr.mxu0 0.0
      %8695 = vmatpush2.msra.mxu0 0.0
      %8696 = vmatprep.subr.mxu0 0.0
      %8697 = vmatpush2.msra.mxu0 0.0
      %8698 = vmatprep.subr.mxu0 0.0
      %8699 = vmatpush2.msra.mxu0 0.0
      %8700 = vmatprep.subr.mxu0 0.0
      %8701 = vmatpush2.msra.mxu0 0.0
      %8702 = vmatprep.subr.mxu0 0.0
      %8703 = vmatpush2.msra.mxu0 0.0
      %8704 = vmatprep.subr.mxu0 0.0
      %8705 = vmatpush2.msra.mxu0 0.0
      %8706 = vmatprep.subr.mxu0 0.0
      %8707 = vmatpush2.msra.mxu0 0.0
      %8708 = vmatprep.subr.mxu0 0.0
      %8709 = vmatpush2.msra.mxu0 0.0
      %8710 = vmatprep.subr.mxu0 0.0
      %8711 = vmatpush2.msra.mxu0 0.0
      %8712 = vmatprep.subr.mxu0 0.0
      %8713 = vmatpush2.msra.mxu0 0.0
      %8714 = vmatprep.subr.mxu0 0.0
      %8715 = vmatpush2.msra.mxu0 0.0
      %8716 = vmatprep.subr.mxu0 0.0
      %8717 = vmatpush2.msra.mxu0 0.0
      %8718 = vmatprep.subr.mxu0 0.0
      %8719 = vmatpush2.msra.mxu0 0.0
      %8720 = vmatprep.mubr.f32.mxu0 0.0
      %8721 = vmatmul.mubr.f32.gmra.mxu0 %v8654
      %v8722 = vpop.f32.mrf.mxu0
      %v8723 = vadd.f32 0.0, %v8722
      %v8724 = vpop.f32.mrf.mxu0
      %8725 = vdwg.mxu0
      %v8726 = vmul.f32 %v8723, 0.0625
      %8727 = vmatprep.subr.mxu0 0.0
      %8728 = vmatpush1.msra.mxu0 0.0
      %8729 = vmatprep.subr.mxu0 0.0
      %8730 = vmatpush1.msra.mxu0 0.0
      %8731 = vmatprep.subr.mxu0 0.0
      %8732 = vmatpush1.msra.mxu0 0.0
      %8733 = vmatprep.subr.mxu0 0.0
      %8734 = vmatpush1.msra.mxu0 0.0
      %8735 = vmatprep.subr.mxu0 0.0
      %8736 = vmatpush1.msra.mxu0 0.0
      %8737 = vmatprep.subr.mxu0 0.0
      %8738 = vmatpush1.msra.mxu0 0.0
      %8739 = vmatprep.subr.mxu0 0.0
      %8740 = vmatpush1.msra.mxu0 0.0
      %8741 = vmatprep.subr.mxu0 0.0
      %8742 = vmatpush1.msra.mxu0 0.0
      %8743 = vmatprep.subr.mxu0 0.0
      %8744 = vmatpush1.msra.mxu0 0.0
      %8745 = vmatprep.subr.mxu0 0.0
      %8746 = vmatpush1.msra.mxu0 0.0
      %8747 = vmatprep.subr.mxu0 0.0
      %8748 = vmatpush1.msra.mxu0 0.0
      %8749 = vmatprep.subr.mxu0 0.0
      %8750 = vmatpush1.msra.mxu0 0.0
      %8751 = vmatprep.subr.mxu0 0.0
      %8752 = vmatpush1.msra.mxu0 0.0
      %8753 = vmatprep.subr.mxu0 0.0
      %8754 = vmatpush1.msra.mxu0 0.0
      %8755 = vmatprep.subr.mxu0 0.0
      %8756 = vmatpush1.msra.mxu0 %v8650
      %8757 = vmatprep.subr.mxu0 0.0
      %8758 = vmatpush1.msra.mxu0 %v8645
      %8759 = vmatprep.subr.mxu0 0.0
      %8760 = vmatpush2.msra.mxu0 0.0
      %8761 = vmatprep.subr.mxu0 0.0
      %8762 = vmatpush2.msra.mxu0 0.0
      %8763 = vmatprep.subr.mxu0 0.0
      %8764 = vmatpush2.msra.mxu0 0.0
      %8765 = vmatprep.subr.mxu0 0.0
      %8766 = vmatpush2.msra.mxu0 0.0
      %8767 = vmatprep.subr.mxu0 0.0
      %8768 = vmatpush2.msra.mxu0 0.0
      %8769 = vmatprep.subr.mxu0 0.0
      %8770 = vmatpush2.msra.mxu0 0.0
      %8771 = vmatprep.subr.mxu0 0.0
      %8772 = vmatpush2.msra.mxu0 0.0
      %8773 = vmatprep.subr.mxu0 0.0
      %8774 = vmatpush2.msra.mxu0 0.0
      %8775 = vmatprep.subr.mxu0 0.0
      %8776 = vmatpush2.msra.mxu0 0.0
      %8777 = vmatprep.subr.mxu0 0.0
      %8778 = vmatpush2.msra.mxu0 0.0
      %8779 = vmatprep.subr.mxu0 0.0
      %8780 = vmatpush2.msra.mxu0 0.0
      %8781 = vmatprep.subr.mxu0 0.0
      %8782 = vmatpush2.msra.mxu0 0.0
      %8783 = vmatprep.subr.mxu0 0.0
      %8784 = vmatpush2.msra.mxu0 0.0
      %8785 = vmatprep.subr.mxu0 0.0
      %8786 = vmatpush2.msra.mxu0 0.0
      %8787 = vmatprep.subr.mxu0 0.0
      %8788 = vmatpush2.msra.mxu0 0.0
      %8789 = vmatprep.subr.mxu0 0.0
      %8790 = vmatpush2.msra.mxu0 0.0
      %8791 = vmatprep.mubr.f32.mxu0 0.0
      %8792 = vmatmul.mubr.f32.gmra.mxu0 %v8654
      %v8793 = vpop.f32.mrf.mxu0
      %v8794 = vadd.f32 0.0, %v8793
      %v8795 = vpop.f32.mrf.mxu0
      %8796 = vdwg.mxu0
      %v8797 = vmul.f32 %v8794, 0.0625
      %v8798 = vmul.f32 %v8726, %v8726
      %v8799 = vsub.f32 %v8797, %v8798
      %v8800 = vmax.f32 %v8799, 0.0
      %v8801 = vadd.f32 %v8800, 1e-05
      %v8802 = vrsqrt.pop %v8801
      %v8803 = vsub.f32 0.0, %v8726
      %v8804 = vmul.f32 %v8803, %v8802
      %v8805 = vld [vmem:[%s19] sm:$0xff]
      %v8806 = vld [vmem:[%s19 + $0x8] sm:$0xff]
      %v8807 = vld [vmem:[%s19 + $0x10] sm:$0xff]
      %v8808 = vld [vmem:[%s19 + $0x18] sm:$0xff]
      %v8809 = vld [vmem:[%s19 + $0x20] sm:$0xff]
      %v8810 = vld [vmem:[%s19 + $0x28] sm:$0xff]
      %v8811 = vld [vmem:[%s19 + $0x30] sm:$0xff]
      %v8812 = vld [vmem:[%s19 + $0x38] sm:$0xff]
      %v8813 = vld [vmem:[%s19 + $0x40] sm:$0xff]
      %v8814 = vld [vmem:[%s19 + $0x48] sm:$0xff]
      %v8815 = vld [vmem:[%s19 + $0x50] sm:$0xff]
      %v8816 = vld [vmem:[%s19 + $0x58] sm:$0xff]
      %v8817 = vld [vmem:[%s19 + $0x60] sm:$0xff]
      %v8818 = vld [vmem:[%s19 + $0x68] sm:$0xff]
      %v8819 = vld [vmem:[%s19 + $0x70] sm:$0xff]
      %v8820 = vld [vmem:[%s19 + $0x78] sm:$0xff]
      %v8821 = vld [vmem:[%s21] sm:$0xff]
      %v8822 = vld [vmem:[%s21 + $0x8] sm:$0xff]
      %v8824 = vsel %vm4780, %v8802, 0
      %8826 = vmatprep.subr.mxu0 0.0
      %8827 = vmatpush1.msra.mxu0 0.0
      %8828 = vmatprep.subr.mxu0 0.0
      %8829 = vmatpush1.msra.mxu0 0.0
      %8830 = vmatprep.subr.mxu0 0.0
      %8831 = vmatpush1.msra.mxu0 0.0
      %8832 = vmatprep.subr.mxu0 0.0
      %8833 = vmatpush1.msra.mxu0 0.0
      %8834 = vmatprep.subr.mxu0 0.0
      %8835 = vmatpush1.msra.mxu0 0.0
      %8836 = vmatprep.subr.mxu0 0.0
      %8837 = vmatpush1.msra.mxu0 0.0
      %8838 = vmatprep.subr.mxu0 0.0
      %8839 = vmatpush1.msra.mxu0 0.0
      %8840 = vmatprep.subr.mxu0 0.0
      %8841 = vmatpush1.msra.mxu0 0.0
      %8842 = vmatprep.subr.mxu0 %v8820
      %8843 = vmatpush1.msra.mxu0 %v8819
      %8844 = vmatprep.subr.mxu0 %v8818
      %8845 = vmatpush1.msra.mxu0 %v8817
      %8846 = vmatprep.subr.mxu0 %v8816
      %8847 = vmatpush1.msra.mxu0 %v8815
      %8848 = vmatprep.subr.mxu0 %v8814
      %8849 = vmatpush1.msra.mxu0 %v8813
      %8850 = vmatprep.subr.mxu0 %v8812
      %8851 = vmatpush1.msra.mxu0 %v8811
      %8852 = vmatprep.subr.mxu0 %v8810
      %8853 = vmatpush1.msra.mxu0 %v8809
      %8854 = vmatprep.subr.mxu0 %v8808
      %8855 = vmatpush1.msra.mxu0 %v8807
      %8856 = vmatprep.subr.mxu0 %v8806
      %8857 = vmatpush1.msra.mxu0 %v8805
      %8858 = vmatprep.subr.mxu0 0.0
      %8859 = vmatpush2.msra.mxu0 0.0
      %8860 = vmatprep.subr.mxu0 0.0
      %8861 = vmatpush2.msra.mxu0 0.0
      %8862 = vmatprep.subr.mxu0 0.0
      %8863 = vmatpush2.msra.mxu0 0.0
      %8864 = vmatprep.subr.mxu0 0.0
      %8865 = vmatpush2.msra.mxu0 0.0
      %8866 = vmatprep.subr.mxu0 0.0
      %8867 = vmatpush2.msra.mxu0 0.0
      %8868 = vmatprep.subr.mxu0 0.0
      %8869 = vmatpush2.msra.mxu0 0.0
      %8870 = vmatprep.subr.mxu0 0.0
      %8871 = vmatpush2.msra.mxu0 0.0
      %8872 = vmatprep.subr.mxu0 0.0
      %8873 = vmatpush2.msra.mxu0 0.0
      %8874 = vmatprep.subr.mxu0 0.0
      %8875 = vmatpush2.msra.mxu0 0.0
      %8876 = vmatprep.subr.mxu0 0.0
      %8877 = vmatpush2.msra.mxu0 0.0
      %8878 = vmatprep.subr.mxu0 0.0
      %8879 = vmatpush2.msra.mxu0 0.0
      %8880 = vmatprep.subr.mxu0 0.0
      %8881 = vmatpush2.msra.mxu0 0.0
      %8882 = vmatprep.subr.mxu0 0.0
      %8883 = vmatpush2.msra.mxu0 0.0
      %8884 = vmatprep.subr.mxu0 0.0
      %8885 = vmatpush2.msra.mxu0 0.0
      %8886 = vmatprep.subr.mxu0 0.0
      %8887 = vmatpush2.msra.mxu0 0.0
      %8888 = vmatprep.subr.mxu0 0.0
      %8889 = vmatpush2.msra.mxu0 0.0
      %8890 = vmatprep.mubr.f32.mxu0 0.0
      %8891 = vmatmul.mubr.f32.gmra.mxu0 %v8824
      %v8892 = vpop.f32.mrf.mxu0
      %v8893 = vadd.f32 0.0, %v8892
      %v8894 = vpop.f32.mrf.mxu0
      %v8895 = vadd.f32 0.0, %v8894
      %8896 = vdwg.mxu0
      %v8898 = vsel %vm5020, %v8821, 0
      %v8901 = vsel %vm5020, %v8822, 0
      %v8904 = vsel %vm5045, %v8893, 0
      %v8907 = vsel %vm5045, %v8895, 0
      %8909 = vmatprep.subr.mxu0 0.0
      %8910 = vmatpush1.msra.mxu0 0.0
      %8911 = vmatprep.subr.mxu0 0.0
      %8912 = vmatpush1.msra.mxu0 0.0
      %8913 = vmatprep.subr.mxu0 0.0
      %8914 = vmatpush1.msra.mxu0 0.0
      %8915 = vmatprep.subr.mxu0 0.0
      %8916 = vmatpush1.msra.mxu0 0.0
      %8917 = vmatprep.subr.mxu0 0.0
      %8918 = vmatpush1.msra.mxu0 0.0
      %8919 = vmatprep.subr.mxu0 0.0
      %8920 = vmatpush1.msra.mxu0 0.0
      %8921 = vmatprep.subr.mxu0 0.0
      %8922 = vmatpush1.msra.mxu0 0.0
      %8923 = vmatprep.subr.mxu0 0.0
      %8924 = vmatpush1.msra.mxu0 0.0
      %8925 = vmatprep.subr.mxu0 0.0
      %8926 = vmatpush1.msra.mxu0 0.0
      %8927 = vmatprep.subr.mxu0 0.0
      %8928 = vmatpush1.msra.mxu0 0.0
      %8929 = vmatprep.subr.mxu0 0.0
      %8930 = vmatpush1.msra.mxu0 0.0
      %8931 = vmatprep.subr.mxu0 0.0
      %8932 = vmatpush1.msra.mxu0 0.0
      %8933 = vmatprep.subr.mxu0 0.0
      %8934 = vmatpush1.msra.mxu0 0.0
      %8935 = vmatprep.subr.mxu0 0.0
      %8936 = vmatpush1.msra.mxu0 0.0
      %8937 = vmatprep.subr.mxu0 0.0
      %8938 = vmatpush1.msra.mxu0 0.0
      %8939 = vmatprep.subr.mxu0 %v8907
      %8940 = vmatpush1.msra.mxu0 %v8904
      %8941 = vmatprep.subr.mxu0 0.0
      %8942 = vmatpush2.msra.mxu0 0.0
      %8943 = vmatprep.subr.mxu0 0.0
      %8944 = vmatpush2.msra.mxu0 0.0
      %8945 = vmatprep.subr.mxu0 0.0
      %8946 = vmatpush2.msra.mxu0 0.0
      %8947 = vmatprep.subr.mxu0 0.0
      %8948 = vmatpush2.msra.mxu0 0.0
      %8949 = vmatprep.subr.mxu0 0.0
      %8950 = vmatpush2.msra.mxu0 0.0
      %8951 = vmatprep.subr.mxu0 0.0
      %8952 = vmatpush2.msra.mxu0 0.0
      %8953 = vmatprep.subr.mxu0 0.0
      %8954 = vmatpush2.msra.mxu0 0.0
      %8955 = vmatprep.subr.mxu0 0.0
      %8956 = vmatpush2.msra.mxu0 0.0
      %8957 = vmatprep.subr.mxu0 0.0
      %8958 = vmatpush2.msra.mxu0 0.0
      %8959 = vmatprep.subr.mxu0 0.0
      %8960 = vmatpush2.msra.mxu0 0.0
      %8961 = vmatprep.subr.mxu0 0.0
      %8962 = vmatpush2.msra.mxu0 0.0
      %8963 = vmatprep.subr.mxu0 0.0
      %8964 = vmatpush2.msra.mxu0 0.0
      %8965 = vmatprep.subr.mxu0 0.0
      %8966 = vmatpush2.msra.mxu0 0.0
      %8967 = vmatprep.subr.mxu0 0.0
      %8968 = vmatpush2.msra.mxu0 0.0
      %8969 = vmatprep.subr.mxu0 0.0
      %8970 = vmatpush2.msra.mxu0 0.0
      %8971 = vmatprep.subr.mxu0 0.0
      %8972 = vmatpush2.msra.mxu0 0.0
      %8973 = vmatprep.mubr.f32.mxu0 0.0
      %8974 = vmatmul.mubr.f32.gmra.mxu0 %v8898
      %v8975 = vpop.f32.mrf.mxu0
      %v8976 = vadd.f32 0.0, %v8975
      %v8977 = vpop.f32.mrf.mxu0
      %v8978 = vadd.f32 0.0, %v8977
      %8979 = vmatprep.mubr.f32.mxu0 0.0
      %8980 = vmatmul.mubr.f32.gmra.mxu0 %v8901
      %v8981 = vpop.f32.mrf.mxu0
      %v8982 = vadd.f32 0.0, %v8981
      %v8983 = vpop.f32.mrf.mxu0
      %v8984 = vadd.f32 0.0, %v8983
      %8985 = vdwg.mxu0
      %v8987 = vsel %vm4780, %v8804, 0
      %8989 = vmatprep.subr.mxu0 0.0
      %8990 = vmatpush1.msra.mxu0 0.0
      %8991 = vmatprep.subr.mxu0 0.0
      %8992 = vmatpush1.msra.mxu0 0.0
      %8993 = vmatprep.subr.mxu0 0.0
      %8994 = vmatpush1.msra.mxu0 0.0
      %8995 = vmatprep.subr.mxu0 0.0
      %8996 = vmatpush1.msra.mxu0 0.0
      %8997 = vmatprep.subr.mxu0 0.0
      %8998 = vmatpush1.msra.mxu0 0.0
      %8999 = vmatprep.subr.mxu0 0.0
      %9000 = vmatpush1.msra.mxu0 0.0
      %9001 = vmatprep.subr.mxu0 0.0
      %9002 = vmatpush1.msra.mxu0 0.0
      %9003 = vmatprep.subr.mxu0 0.0
      %9004 = vmatpush1.msra.mxu0 0.0
      %9005 = vmatprep.subr.mxu0 %v8820
      %9006 = vmatpush1.msra.mxu0 %v8819
      %9007 = vmatprep.subr.mxu0 %v8818
      %9008 = vmatpush1.msra.mxu0 %v8817
      %9009 = vmatprep.subr.mxu0 %v8816
      %9010 = vmatpush1.msra.mxu0 %v8815
      %9011 = vmatprep.subr.mxu0 %v8814
      %9012 = vmatpush1.msra.mxu0 %v8813
      %9013 = vmatprep.subr.mxu0 %v8812
      %9014 = vmatpush1.msra.mxu0 %v8811
      %9015 = vmatprep.subr.mxu0 %v8810
      %9016 = vmatpush1.msra.mxu0 %v8809
      %9017 = vmatprep.subr.mxu0 %v8808
      %9018 = vmatpush1.msra.mxu0 %v8807
      %9019 = vmatprep.subr.mxu0 %v8806
      %9020 = vmatpush1.msra.mxu0 %v8805
      %9021 = vmatprep.subr.mxu0 0.0
      %9022 = vmatpush2.msra.mxu0 0.0
      %9023 = vmatprep.subr.mxu0 0.0
      %9024 = vmatpush2.msra.mxu0 0.0
      %9025 = vmatprep.subr.mxu0 0.0
      %9026 = vmatpush2.msra.mxu0 0.0
      %9027 = vmatprep.subr.mxu0 0.0
      %9028 = vmatpush2.msra.mxu0 0.0
      %9029 = vmatprep.subr.mxu0 0.0
      %9030 = vmatpush2.msra.mxu0 0.0
      %9031 = vmatprep.subr.mxu0 0.0
      %9032 = vmatpush2.msra.mxu0 0.0
      %9033 = vmatprep.subr.mxu0 0.0
      %9034 = vmatpush2.msra.mxu0 0.0
      %9035 = vmatprep.subr.mxu0 0.0
      %9036 = vmatpush2.msra.mxu0 0.0
      %9037 = vmatprep.subr.mxu0 0.0
      %9038 = vmatpush2.msra.mxu0 0.0
      %9039 = vmatprep.subr.mxu0 0.0
      %9040 = vmatpush2.msra.mxu0 0.0
      %9041 = vmatprep.subr.mxu0 0.0
      %9042 = vmatpush2.msra.mxu0 0.0
      %9043 = vmatprep.subr.mxu0 0.0
      %9044 = vmatpush2.msra.mxu0 0.0
      %9045 = vmatprep.subr.mxu0 0.0
      %9046 = vmatpush2.msra.mxu0 0.0
      %9047 = vmatprep.subr.mxu0 0.0
      %9048 = vmatpush2.msra.mxu0 0.0
      %9049 = vmatprep.subr.mxu0 0.0
      %9050 = vmatpush2.msra.mxu0 0.0
      %9051 = vmatprep.subr.mxu0 0.0
      %9052 = vmatpush2.msra.mxu0 0.0
      %9053 = vmatprep.mubr.f32.mxu0 0.0
      %9054 = vmatmul.mubr.f32.gmra.mxu0 %v8987
      %v9055 = vpop.f32.mrf.mxu0
      %v9056 = vadd.f32 0.0, %v9055
      %v9057 = vpop.f32.mrf.mxu0
      %v9058 = vadd.f32 0.0, %v9057
      %9059 = vdwg.mxu0
      %v9061 = vsel %vm5045, %v9056, 0
      %v9064 = vsel %vm5045, %v9058, 0
      %9066 = vmatprep.subr.mxu0 0.0
      %9067 = vmatpush1.msra.mxu0 0.0
      %9068 = vmatprep.subr.mxu0 0.0
      %9069 = vmatpush1.msra.mxu0 0.0
      %9070 = vmatprep.subr.mxu0 0.0
      %9071 = vmatpush1.msra.mxu0 0.0
      %9072 = vmatprep.subr.mxu0 0.0
      %9073 = vmatpush1.msra.mxu0 0.0
      %9074 = vmatprep.subr.mxu0 0.0
      %9075 = vmatpush1.msra.mxu0 0.0
      %9076 = vmatprep.subr.mxu0 0.0
      %9077 = vmatpush1.msra.mxu0 0.0
      %9078 = vmatprep.subr.mxu0 0.0
      %9079 = vmatpush1.msra.mxu0 0.0
      %9080 = vmatprep.subr.mxu0 0.0
      %9081 = vmatpush1.msra.mxu0 0.0
      %9082 = vmatprep.subr.mxu0 0.0
      %9083 = vmatpush1.msra.mxu0 0.0
      %9084 = vmatprep.subr.mxu0 0.0
      %9085 = vmatpush1.msra.mxu0 0.0
      %9086 = vmatprep.subr.mxu0 0.0
      %9087 = vmatpush1.msra.mxu0 0.0
      %9088 = vmatprep.subr.mxu0 0.0
      %9089 = vmatpush1.msra.mxu0 0.0
      %9090 = vmatprep.subr.mxu0 0.0
      %9091 = vmatpush1.msra.mxu0 0.0
      %9092 = vmatprep.subr.mxu0 0.0
      %9093 = vmatpush1.msra.mxu0 0.0
      %9094 = vmatprep.subr.mxu0 0.0
      %9095 = vmatpush1.msra.mxu0 0.0
      %9096 = vmatprep.subr.mxu0 %v9064
      %9097 = vmatpush1.msra.mxu0 %v9061
      %9098 = vmatprep.subr.mxu0 0.0
      %9099 = vmatpush2.msra.mxu0 0.0
      %9100 = vmatprep.subr.mxu0 0.0
      %9101 = vmatpush2.msra.mxu0 0.0
      %9102 = vmatprep.subr.mxu0 0.0
      %9103 = vmatpush2.msra.mxu0 0.0
      %9104 = vmatprep.subr.mxu0 0.0
      %9105 = vmatpush2.msra.mxu0 0.0
      %9106 = vmatprep.subr.mxu0 0.0
      %9107 = vmatpush2.msra.mxu0 0.0
      %9108 = vmatprep.subr.mxu0 0.0
      %9109 = vmatpush2.msra.mxu0 0.0
      %9110 = vmatprep.subr.mxu0 0.0
      %9111 = vmatpush2.msra.mxu0 0.0
      %9112 = vmatprep.subr.mxu0 0.0
      %9113 = vmatpush2.msra.mxu0 0.0
      %9114 = vmatprep.subr.mxu0 0.0
      %9115 = vmatpush2.msra.mxu0 0.0
      %9116 = vmatprep.subr.mxu0 0.0
      %9117 = vmatpush2.msra.mxu0 0.0
      %9118 = vmatprep.subr.mxu0 0.0
      %9119 = vmatpush2.msra.mxu0 0.0
      %9120 = vmatprep.subr.mxu0 0.0
      %9121 = vmatpush2.msra.mxu0 0.0
      %9122 = vmatprep.subr.mxu0 0.0
      %9123 = vmatpush2.msra.mxu0 0.0
      %9124 = vmatprep.subr.mxu0 0.0
      %9125 = vmatpush2.msra.mxu0 0.0
      %9126 = vmatprep.subr.mxu0 0.0
      %9127 = vmatpush2.msra.mxu0 0.0
      %9128 = vmatprep.subr.mxu0 0.0
      %9129 = vmatpush2.msra.mxu0 0.0
      %9130 = vmatprep.mubr.f32.mxu0 0.0
      %9131 = vmatmul.mubr.f32.gmra.mxu0 %v8898
      %v9132 = vpop.f32.mrf.mxu0
      %v9133 = vadd.f32 0.0, %v9132
      %v9134 = vpop.f32.mrf.mxu0
      %v9135 = vadd.f32 0.0, %v9134
      %9136 = vmatprep.mubr.f32.mxu0 0.0
      %9137 = vmatmul.mubr.f32.gmra.mxu0 %v8901
      %v9138 = vpop.f32.mrf.mxu0
      %v9139 = vadd.f32 0.0, %v9138
      %v9140 = vpop.f32.mrf.mxu0
      %v9141 = vadd.f32 0.0, %v9140
      %9142 = vdwg.mxu0
      %v9143 = vmul.f32 %v8458, %v8976
      %v9144 = vmul.f32 %v8460, %v8978
      %v9145 = vmul.f32 %v8462, %v8982
      %v9146 = vmul.f32 %v8464, %v8984
      %v9147 = vadd.f32 %v9143, %v9133
      %v9148 = vadd.f32 %v9144, %v9135
      %v9149 = vadd.f32 %v9145, %v9139
      %v9150 = vadd.f32 %v9146, %v9141
      %vm9151 = vcmp.gt.f32.partialorder %v9147, 0.0
      %vm9152 = vcmp.gt.f32.partialorder %v9148, 0.0
      %vm9153 = vcmp.gt.f32.partialorder %v9149, 0.0
      %vm9154 = vcmp.gt.f32.partialorder %v9150, 0.0
      %v9155 = vmul.f32 %v9147, 0.2
      %v9156 = vmul.f32 %v9148, 0.2
      %v9157 = vmul.f32 %v9149, 0.2
      %v9158 = vmul.f32 %v9150, 0.2
      %v9159 = vsel %vm9151, %v9147, %v9155
      %v9160 = vsel %vm9152, %v9148, %v9156
      %v9161 = vsel %vm9153, %v9149, %v9157
      %v9162 = vsel %vm9154, %v9150, %v9158
      %v9163 = vld [vmem:[%s22] sm:$0xff]
      %v9164 = vld [vmem:[%s22 + $0x8] sm:$0xff]
      %v9165 = vld [vmem:[%s22 + $0x10] sm:$0xff]
      %v9166 = vld [vmem:[%s22 + $0x18] sm:$0xff]
      %v9167 = vmul.f32 %v9159, %v9163
      %v9168 = vmul.f32 %v9160, %v9164
      %v9169 = vmul.f32 %v9161, %v9165
      %v9170 = vmul.f32 %v9162, %v9166
      %v9171 = vld [vmem:[%s23] sm:$0xf]
      %v9173 = vsel %vm4945, %v9171, 0
      %9175 = vmatprep.subr.mxu0 0.0
      %9176 = vmatpush1.msra.mxu0 0.0
      %9177 = vmatprep.subr.mxu0 0.0
      %9178 = vmatpush1.msra.mxu0 0.0
      %9179 = vmatprep.subr.mxu0 0.0
      %9180 = vmatpush1.msra.mxu0 0.0
      %9181 = vmatprep.subr.mxu0 0.0
      %9182 = vmatpush1.msra.mxu0 0.0
      %9183 = vmatprep.subr.mxu0 0.0
      %9184 = vmatpush1.msra.mxu0 0.0
      %9185 = vmatprep.subr.mxu0 0.0
      %9186 = vmatpush1.msra.mxu0 0.0
      %9187 = vmatprep.subr.mxu0 0.0
      %9188 = vmatpush1.msra.mxu0 0.0
      %9189 = vmatprep.subr.mxu0 0.0
      %9190 = vmatpush1.msra.mxu0 0.0
      %9191 = vmatprep.subr.mxu0 0.0
      %9192 = vmatpush1.msra.mxu0 0.0
      %9193 = vmatprep.subr.mxu0 0.0
      %9194 = vmatpush1.msra.mxu0 0.0
      %9195 = vmatprep.subr.mxu0 0.0
      %9196 = vmatpush1.msra.mxu0 0.0
      %9197 = vmatprep.subr.mxu0 0.0
      %9198 = vmatpush1.msra.mxu0 0.0
      %9199 = vmatprep.subr.mxu0 0.0
      %9200 = vmatpush1.msra.mxu0 0.0
      %9201 = vmatprep.subr.mxu0 0.0
      %9202 = vmatpush1.msra.mxu0 0.0
      %9203 = vmatprep.subr.mxu0 %v9170
      %9204 = vmatpush1.msra.mxu0 %v9169
      %9205 = vmatprep.subr.mxu0 %v9168
      %9206 = vmatpush1.msra.mxu0 %v9167
      %9207 = vmatprep.subr.mxu0 0.0
      %9208 = vmatpush2.msra.mxu0 0.0
      %9209 = vmatprep.subr.mxu0 0.0
      %9210 = vmatpush2.msra.mxu0 0.0
      %9211 = vmatprep.subr.mxu0 0.0
      %9212 = vmatpush2.msra.mxu0 0.0
      %9213 = vmatprep.subr.mxu0 0.0
      %9214 = vmatpush2.msra.mxu0 0.0
      %9215 = vmatprep.subr.mxu0 0.0
      %9216 = vmatpush2.msra.mxu0 0.0
      %9217 = vmatprep.subr.mxu0 0.0
      %9218 = vmatpush2.msra.mxu0 0.0
      %9219 = vmatprep.subr.mxu0 0.0
      %9220 = vmatpush2.msra.mxu0 0.0
      %9221 = vmatprep.subr.mxu0 0.0
      %9222 = vmatpush2.msra.mxu0 0.0
      %9223 = vmatprep.subr.mxu0 0.0
      %9224 = vmatpush2.msra.mxu0 0.0
      %9225 = vmatprep.subr.mxu0 0.0
      %9226 = vmatpush2.msra.mxu0 0.0
      %9227 = vmatprep.subr.mxu0 0.0
      %9228 = vmatpush2.msra.mxu0 0.0
      %9229 = vmatprep.subr.mxu0 0.0
      %9230 = vmatpush2.msra.mxu0 0.0
      %9231 = vmatprep.subr.mxu0 0.0
      %9232 = vmatpush2.msra.mxu0 0.0
      %9233 = vmatprep.subr.mxu0 0.0
      %9234 = vmatpush2.msra.mxu0 0.0
      %9235 = vmatprep.subr.mxu0 0.0
      %9236 = vmatpush2.msra.mxu0 0.0
      %9237 = vmatprep.subr.mxu0 0.0
      %9238 = vmatpush2.msra.mxu0 0.0
      %9239 = vmatprep.mubr.f32.mxu0 0.0
      %9240 = vmatmul.mubr.f32.gmra.mxu0 %v9173
      %v9241 = vpop.f32.mrf.mxu0
      %v9242 = vadd.f32 0.0, %v9241
      %v9243 = vpop.f32.mrf.mxu0
      %v9244 = vadd.f32 0.0, %v9243
      %9245 = vdwg.mxu0
      %v9246 = vsel %vm5045, %v9242, 0.0
      %v9247 = vsel %vm5045, %v9244, 0.0
      %v9248 = vadd.f32 %v9246, %v9247
      %9249 = vadd.xlane.f32.xlu0 %v9248
      %v9250 = vpop.xlane.xlu0 %9249
      %v9251 = vld [vmem:[#allocation2] sm:$0x1]
      %v9253 = vlaneseq
      %v9254 = vshrl.u32 %v9253, 7
      %v9255 = vsub.s32 0, %v9254
      %v9256 = vrot.slane %v9251, %v9255
      %v9258 = vadd.f32 %v9250, %v9256
      %vm9259 = vcmask 3072
      %9260 = vst.msk [vmem:[%s769] sm:$0xf] %vm9259, %v9258
      %p9261 = scmp.lt.s32.totalorder %s38, 1
      %s9262 = scalar_select %p9261, %s38, 1
      %s9263 = smul.addr %s9262, 4
      %s9264 = scalar_lea.vmem %s25, %s9263
      // Predicated region
      $region121: #{critic_forward.1} parent=119 // pred_check
        %p9265 = pneg %p586
      $region122: #{critic_forward.1} parent=119 // pred_check_branch
        %9267 = sbr.rel (%p9265) target = $region124
      $region123: #{critic_forward.1} parent=119 // pred_region
        _
      $region124: #{critic_forward.1} parent=119 // pred_fallthru
        _
    $region120: #{critic_forward.1} parent=5 // pred_fallthru
      _
    %p9268 = scmp.le.s32.totalorder 2, %s33
    // Predicated region
    $region125: #{critic_forward.1} parent=5 // pred_check
      %p9269 = pneg %p9268
    $region126: #{critic_forward.1} parent=5 // pred_check_branch
      %9271 = sbr.rel (%p9269) target = $region128
    $region127: #{critic_forward.1} parent=5 // pred_region
      %s9272 = ssub.s32 %s33, 2
      // Predicated region
      $region129: #{critic_forward.1} parent=127 // pred_check
        %p9273 = pneg %p592
      $region130: #{critic_forward.1} parent=127 // pred_check_branch
        %9275 = sbr.rel (%p9273) target = $region132
      $region131: #{critic_forward.1} parent=127 // pred_region
        %p9276 = scmp.lt.s32.totalorder %s39, 1
        %s9277 = scalar_select %p9276, %s39, 1
        %s9278 = smul.addr %s9277, 4
        %s9279 = scalar_lea.vmem %s25, %s9278
      $region132: #{critic_forward.1} parent=127 // pred_fallthru
        _
    $region128: #{critic_forward.1} parent=5 // pred_fallthru
      _
  $region6: #{critic_forward.1} parent=0 // loop_footer
    %s37 = sadd.s32 1, %s33
  $region7: #{critic_forward.1} parent=0 // loop_footer_branch
    %32 = sbr.rel target = $region3
  $region8: #{critic_forward.1} parent=0 // loop_exit
    _

</llo_original>
